<compile_context>
chip_gen: v7x
topology: tpu7x:2x2x1
jax: 0.10.0
libtpu: 0.0.40
codegen_flags: <defaults>
</compile_context>

<pallas_src>
import jax
import jax.numpy as jnp
import numpy as np
from jax import lax
from jax.experimental import pallas as pl
from jax.experimental.pallas import tpu as pltpu

EPS = 1e-5      # PyTorch BatchNorm3d default eps
LANE = 128      # TPU lane width


def _round_up(x, m):
    return (x + m - 1) // m * m


# ---------------------------------------------------------------------------
# Pass 1: 3x3x3 conv via implicit im2col (27 shifted MXU matmuls) + partial
#         BatchNorm statistics (per-tile sum and sum-of-squares).
# ---------------------------------------------------------------------------
def _conv3x3_stats_kernel(x0_ref, x1_ref, x2_ref, w_ref, y_ref, stats_ref):
    # x{0,1,2}: (1, 1, H+2, W+2, Cin)  padded-input depth slices d, d+1, d+2
    # w:        (27, Cin, Cp) bf16, VMEM-resident, tap order t = kd*9 + kh*3 + kw
    # y:        (1, 1, H, W, Cp) f32  raw conv output (bias dropped: cancelled by BN)
    # stats:    (1, 1, 2, Cp) f32     per-tile [sum, sum_sq] over the H*W voxels
    _, _, H, W, Cp = y_ref.shape
    cin = x0_ref.shape[-1]
    slabs = (x0_ref[0, 0], x1_ref[0, 0], x2_ref[0, 0])     # each (H+2, W+2, Cin)

    acc = jnp.zeros((H * W, Cp), jnp.float32)
    for kd in range(3):
        xs = slabs[kd]
        for kh in range(3):
            for kw in range(3):
                patch = xs[kh:kh + H, kw:kw + W, :].reshape(H * W, cin)
                acc = acc + jnp.dot(patch.astype(jnp.bfloat16),
                                    w_ref[kd * 9 + kh * 3 + kw],
                                    preferred_element_type=jnp.float32)

    y_ref[...] = acc.reshape(1, 1, H, W, Cp)
    psum = jnp.sum(acc, axis=0, keepdims=True)              # (1, Cp)
    psq = jnp.sum(acc * acc, axis=0, keepdims=True)         # (1, Cp)
    stats_ref[...] = jnp.concatenate([psum, psq], axis=0).reshape(1, 1, 2, Cp)


def _conv3x3_with_stats(xpad, w_taps):
    N, Dp2, Hp2, Wp2, Cin = xpad.shape
    D, H, W = Dp2 - 2, Hp2 - 2, Wp2 - 2
    Cp = w_taps.shape[-1]

    flops = 2 * N * D * H * W * 27 * Cin * Cp
    bytes_accessed = (4 * (3 * xpad.size + N * D * H * W * Cp + N * D * 2 * Cp)
                      + 2 * w_taps.size)

    return pl.pallas_call(
        _conv3x3_stats_kernel,
        out_shape=(jax.ShapeDtypeStruct((N, D, H, W, Cp), jnp.float32),
                   jax.ShapeDtypeStruct((N, D, 2, Cp), jnp.float32)),
        grid=(N, D),
        in_specs=[
            pl.BlockSpec((1, 1, Hp2, Wp2, Cin), lambda n, d: (n, d, 0, 0, 0)),
            pl.BlockSpec((1, 1, Hp2, Wp2, Cin), lambda n, d: (n, d + 1, 0, 0, 0)),
            pl.BlockSpec((1, 1, Hp2, Wp2, Cin), lambda n, d: (n, d + 2, 0, 0, 0)),
            pl.BlockSpec((27, Cin, Cp), lambda n, d: (0, 0, 0)),
        ],
        out_specs=(
            pl.BlockSpec((1, 1, H, W, Cp), lambda n, d: (n, d, 0, 0, 0)),
            pl.BlockSpec((1, 1, 2, Cp), lambda n, d: (n, d, 0, 0)),
        ),
        compiler_params=pltpu.CompilerParams(
            dimension_semantics=("parallel", "parallel"),
            vmem_limit_bytes=32 * 1024 * 1024),
        cost_estimate=pl.CostEstimate(flops=flops, transcendentals=0,
                                      bytes_accessed=bytes_accessed),
    )(xpad, xpad, xpad, w_taps)


# ---------------------------------------------------------------------------
# Pass 2: elementwise normalize (y*scale + shift) + ReLU, lane-dense output.
# ---------------------------------------------------------------------------
def _bn_relu_kernel(y_ref, ss_ref, o_ref):
    y = y_ref[...]                 # (1, 1, H, W, Cp) f32
    scale = ss_ref[0:1, :]         # (1, Cp)
    shift = ss_ref[1:2, :]         # (1, Cp)
    o_ref[...] = jnp.maximum(y * scale + shift, 0.0)


def _bn_relu(y, scale_shift):
    N, D, H, W, Cp = y.shape
    return pl.pallas_call(
        _bn_relu_kernel,
        out_shape=jax.ShapeDtypeStruct((N, D, H, W, Cp), jnp.float32),
        grid=(N, D),
        in_specs=[
            pl.BlockSpec((1, 1, H, W, Cp), lambda n, d: (n, d, 0, 0, 0)),
            pl.BlockSpec((2, Cp), lambda n, d: (0, 0)),
        ],
        out_specs=pl.BlockSpec((1, 1, H, W, Cp), lambda n, d: (n, d, 0, 0, 0)),
        compiler_params=pltpu.CompilerParams(
            dimension_semantics=("parallel", "parallel"),
            vmem_limit_bytes=32 * 1024 * 1024),
    )(y, scale_shift)


# ---------------------------------------------------------------------------
# Glue: weight reordering / channel padding / layer composition (plain JAX).
# ---------------------------------------------------------------------------
def _weights_to_taps(w_pt, cin_pad, cout_pad):
    """PyTorch (Cout, Cin, 3, 3, 3) -> (27, cin_pad, cout_pad) bf16, taps (kd,kh,kw)."""
    cout, cin = w_pt.shape[0], w_pt.shape[1]
    w = jnp.transpose(w_pt, (2, 3, 4, 1, 0)).reshape(27, cin, cout)
    w = jnp.pad(w, ((0, 0), (0, cin_pad - cin), (0, cout_pad - cout)))
    return w.astype(jnp.bfloat16)


def _pad_channels(v, cp):
    return jnp.pad(v, (0, cp - v.shape[0]))


def _conv_bn_relu_layer(x_ndhwc, w_taps, gamma_p, beta_p):
    """(N, D, H, W, Cin) f32 -> (N, D, H, W, Cp) f32; padded channels stay exactly 0."""
    N, D, H, W, _ = x_ndhwc.shape
    xpad = jnp.pad(x_ndhwc, ((0, 0), (1, 1), (1, 1), (1, 1), (0, 0)))
    y, stats = _conv3x3_with_stats(xpad, w_taps)

    m = float(N * D * H * W)
    s = jnp.sum(stats[:, :, 0, :], axis=(0, 1))              # (Cp,)
    sq = jnp.sum(stats[:, :, 1, :], axis=(0, 1))             # (Cp,)
    mean = s / m
    var = jnp.maximum(sq / m - mean * mean, 0.0)              # biased (training-mode) var
    scale = gamma_p * lax.rsqrt(var + EPS)                    # gamma folded into rsqrt
    shift = beta_p - mean * scale
    scale_shift = jnp.stack([scale, shift], axis=0)           # (2, Cp)
    return _bn_relu(y, scale_shift)


def double_conv3d(x_ncdhw, params):
    """Forward pass of DoubleConv3D.  Input/output are NCDHW (PyTorch layout)."""
    N, Cin, D, H, W = x_ncdhw.shape
    c1 = params["w1"].shape[0]
    c2 = params["w2"].shape[0]
    cin_p = _round_up(Cin, 8)          # sublane-friendly contraction for conv1
    cp1 = _round_up(c1, LANE)          # lane-dense intermediate / conv2 contraction
    cp2 = _round_up(c2, LANE)          # lane-dense final conv output

    x = jnp.transpose(x_ncdhw, (0, 2, 3, 4, 1))               # -> NDHWC
    x = jnp.pad(x, ((0, 0), (0, 0), (0, 0), (0, 0), (0, cin_p - Cin)))

    # NOTE: conv biases b1/b2 are mathematically cancelled by training-mode
    # BatchNorm mean subtraction, so they are not passed to the kernels.
    w1 = _weights_to_taps(params["w1"], cin_p, cp1)
    y = _conv_bn_relu_layer(x, w1,
                            _pad_channels(params["g1"], cp1),
                            _pad_channels(params["be1"], cp1))

    w2 = _weights_to_taps(params["w2"], cp1, cp2)
    z = _conv_bn_relu_layer(y, w2,
                            _pad_channels(params["g2"], cp2),
                            _pad_channels(params["be2"], cp2))

    return jnp.transpose(z[..., :c2], (0, 4, 1, 2, 3))        # -> NCDHW


# ---------------------------------------------------------------------------
# Pure-JAX reference (bf16 conv operands to match the kernel's MXU precision;
# bias included to demonstrate it is exactly cancelled by batch-stat BN).
# ---------------------------------------------------------------------------
def _ref_conv_bn_relu(x_ndhwc, w_pt, b, g, be):
    y = lax.conv_general_dilated(
        x_ndhwc.astype(jnp.bfloat16),
        jnp.transpose(w_pt, (2, 3, 4, 1, 0)).astype(jnp.bfloat16),   # DHWIO
        window_strides=(1, 1, 1), padding="SAME",
        dimension_numbers=("NDHWC", "DHWIO", "NDHWC"),
        preferred_element_type=jnp.float32)
    y = y + b
    mean = jnp.mean(y, axis=(0, 1, 2, 3), keepdims=True)
    var = jnp.mean((y - mean) ** 2, axis=(0, 1, 2, 3), keepdims=True)
    y = (y - mean) * lax.rsqrt(var + EPS) * g + be
    return jnp.maximum(y, 0.0)


def ref_double_conv3d(x_ncdhw, params):
    x = jnp.transpose(x_ncdhw, (0, 2, 3, 4, 1))
    y = _ref_conv_bn_relu(x, params["w1"], params["b1"], params["g1"], params["be1"])
    z = _ref_conv_bn_relu(y, params["w2"], params["b2"], params["g2"], params["be2"])
    return jnp.transpose(z, (0, 4, 1, 2, 3))


# ---------------------------------------------------------------------------
if __name__ == "__main__":
    key = jax.random.PRNGKey(0)
    ks = jax.random.split(key, 10)

    N, Cin, Cout, D, H, W = 2, 4, 8, 8, 8, 8
    x = jax.random.normal(ks[0], (N, Cin, D, H, W), jnp.float32)

    params = {
        # Conv3d(Cin, Cout, 3, padding=1)
        "w1": 0.1 * jax.random.normal(ks[1], (Cout, Cin, 3, 3, 3), jnp.float32),
        "b1": 0.05 * jax.random.normal(ks[2], (Cout,), jnp.float32),
        # BatchNorm3d(Cout)
        "g1": 1.0 + 0.1 * jax.random.normal(ks[3], (Cout,), jnp.float32),
        "be1": 0.05 * jax.random.normal(ks[4], (Cout,), jnp.float32),
        # Conv3d(Cout, Cout, 3, padding=1)
        "w2": 0.1 * jax.random.normal(ks[5], (Cout, Cout, 3, 3, 3), jnp.float32),
        "b2": 0.05 * jax.random.normal(ks[6], (Cout,), jnp.float32),
        # BatchNorm3d(Cout)
        "g2": 1.0 + 0.1 * jax.random.normal(ks[7], (Cout,), jnp.float32),
        "be2": 0.05 * jax.random.normal(ks[8], (Cout,), jnp.float32),
    }

    out = jax.jit(double_conv3d)(x, params)
    out = jax.block_until_ready(out)
    assert out.shape == (N, Cout, D, H, W), out.shape

    ref = jax.block_until_ready(ref_double_conv3d(x, params))
    # bf16 MXU operands (kernel and reference both) -> slightly loosened tolerance.
    np.testing.assert_allclose(np.asarray(out), np.asarray(ref), atol=2e-2, rtol=2e-2)

    print("KERNEL_OK")
</pallas_src>

<mosaic_0001>
module attributes {stable_mosaic.version = 11 : i64} {
  func.func @_conv3x3_stats_kernel(%arg0: i32, %arg1: i32, %arg2: memref<1x1x10x10x8xf32, #tpu.memory_space<vmem>>, %arg3: memref<1x1x10x10x8xf32, #tpu.memory_space<vmem>>, %arg4: memref<1x1x10x10x8xf32, #tpu.memory_space<vmem>>, %arg5: memref<27x8x128xbf16, #tpu.memory_space<vmem>>, %arg6: memref<1x1x8x8x128xf32, #tpu.memory_space<vmem>>, %arg7: memref<1x1x2x128xf32, #tpu.memory_space<vmem>>) attributes {dimension_semantics = [#tpu.dimension_semantics<parallel>, #tpu.dimension_semantics<parallel>], iteration_bounds = array<i64: 2, 8>, scalar_prefetch = 0 : i64, scratch_operands = 0 : i64, tpu.core_type = #tpu.core_type<tc>, window_params = [{transform_indices = @transform_0, window_bounds = array<i64: 1, 1, 10, 10, 8>}, {transform_indices = @transform_1, window_bounds = array<i64: 1, 1, 10, 10, 8>}, {transform_indices = @transform_2, window_bounds = array<i64: 1, 1, 10, 10, 8>}, {pipeline_mode = #tpu.pipeline_mode<synchronous>, transform_indices = @transform_3, window_bounds = array<i64: 27, 8, 128>}, {transform_indices = @transform_4, window_bounds = array<i64: 1, 1, 8, 8, 128>}, {transform_indices = @transform_5, window_bounds = array<i64: 1, 1, 2, 128>}]} {
    %c0 = arith.constant 0 : index
    %c0_0 = arith.constant 0 : index
    %c0_1 = arith.constant 0 : index
    %c0_2 = arith.constant 0 : index
    %c0_3 = arith.constant 0 : index
    %0 = vector.load %arg2[%c0, %c0_0, %c0_1, %c0_2, %c0_3] : memref<1x1x10x10x8xf32, #tpu.memory_space<vmem>>, vector<1x1x10x10x8xf32>
    %1 = vector.shape_cast %0 : vector<1x1x10x10x8xf32> to vector<10x10x8xf32>
    %c0_4 = arith.constant 0 : index
    %c0_5 = arith.constant 0 : index
    %c0_6 = arith.constant 0 : index
    %c0_7 = arith.constant 0 : index
    %c0_8 = arith.constant 0 : index
    %2 = vector.load %arg3[%c0_4, %c0_5, %c0_6, %c0_7, %c0_8] : memref<1x1x10x10x8xf32, #tpu.memory_space<vmem>>, vector<1x1x10x10x8xf32>
    %3 = vector.shape_cast %2 : vector<1x1x10x10x8xf32> to vector<10x10x8xf32>
    %c0_9 = arith.constant 0 : index
    %c0_10 = arith.constant 0 : index
    %c0_11 = arith.constant 0 : index
    %c0_12 = arith.constant 0 : index
    %c0_13 = arith.constant 0 : index
    %4 = vector.load %arg4[%c0_9, %c0_10, %c0_11, %c0_12, %c0_13] : memref<1x1x10x10x8xf32, #tpu.memory_space<vmem>>, vector<1x1x10x10x8xf32>
    %5 = vector.shape_cast %4 : vector<1x1x10x10x8xf32> to vector<10x10x8xf32>
    %cst = arith.constant 0.000000e+00 : f32
    %6 = vector.broadcast %cst : f32 to vector<64x128xf32>
    %7 = vector.extract_strided_slice %1 {offsets = [0, 0, 0], sizes = [8, 8, 8], strides = [1, 1, 1]} : vector<10x10x8xf32> to vector<8x8x8xf32>
    %8 = vector.shape_cast %7 : vector<8x8x8xf32> to vector<64x8xf32>
    %9 = arith.truncf %8 : vector<64x8xf32> to vector<64x8xbf16>
    %c0_14 = arith.constant 0 : index
    %c0_15 = arith.constant 0 : index
    %c0_16 = arith.constant 0 : index
    %10 = vector.load %arg5[%c0_14, %c0_15, %c0_16] : memref<27x8x128xbf16, #tpu.memory_space<vmem>>, vector<1x8x128xbf16>
    %11 = vector.shape_cast %10 : vector<1x8x128xbf16> to vector<8x128xbf16>
    %cst_17 = arith.constant dense<0.000000e+00> : vector<64x128xf32>
    %12 = tpu.matmul %9, %11, %cst_17 {dimension_numbers = #tpu.dot_dimension_numbers<[1], [0], [0], [1], [0, 0, 1, 1], [], []>} : vector<64x8xbf16>, vector<8x128xbf16>, vector<64x128xf32> -> vector<64x128xf32>
    %13 = arith.addf %6, %12 : vector<64x128xf32>
    %14 = vector.extract_strided_slice %1 {offsets = [0, 1, 0], sizes = [8, 8, 8], strides = [1, 1, 1]} : vector<10x10x8xf32> to vector<8x8x8xf32>
    %15 = vector.shape_cast %14 : vector<8x8x8xf32> to vector<64x8xf32>
    %16 = arith.truncf %15 : vector<64x8xf32> to vector<64x8xbf16>
    %c1 = arith.constant 1 : index
    %c0_18 = arith.constant 0 : index
    %c0_19 = arith.constant 0 : index
    %17 = vector.load %arg5[%c1, %c0_18, %c0_19] : memref<27x8x128xbf16, #tpu.memory_space<vmem>>, vector<1x8x128xbf16>
    %18 = vector.shape_cast %17 : vector<1x8x128xbf16> to vector<8x128xbf16>
    %cst_20 = arith.constant dense<0.000000e+00> : vector<64x128xf32>
    %19 = tpu.matmul %16, %18, %cst_20 {dimension_numbers = #tpu.dot_dimension_numbers<[1], [0], [0], [1], [0, 0, 1, 1], [], []>} : vector<64x8xbf16>, vector<8x128xbf16>, vector<64x128xf32> -> vector<64x128xf32>
    %20 = arith.addf %13, %19 : vector<64x128xf32>
    %21 = vector.extract_strided_slice %1 {offsets = [0, 2, 0], sizes = [8, 8, 8], strides = [1, 1, 1]} : vector<10x10x8xf32> to vector<8x8x8xf32>
    %22 = vector.shape_cast %21 : vector<8x8x8xf32> to vector<64x8xf32>
    %23 = arith.truncf %22 : vector<64x8xf32> to vector<64x8xbf16>
    %c2 = arith.constant 2 : index
    %c0_21 = arith.constant 0 : index
    %c0_22 = arith.constant 0 : index
    %24 = vector.load %arg5[%c2, %c0_21, %c0_22] : memref<27x8x128xbf16, #tpu.memory_space<vmem>>, vector<1x8x128xbf16>
    %25 = vector.shape_cast %24 : vector<1x8x128xbf16> to vector<8x128xbf16>
    %cst_23 = arith.constant dense<0.000000e+00> : vector<64x128xf32>
    %26 = tpu.matmul %23, %25, %cst_23 {dimension_numbers = #tpu.dot_dimension_numbers<[1], [0], [0], [1], [0, 0, 1, 1], [], []>} : vector<64x8xbf16>, vector<8x128xbf16>, vector<64x128xf32> -> vector<64x128xf32>
    %27 = arith.addf %20, %26 : vector<64x128xf32>
    %28 = vector.extract_strided_slice %1 {offsets = [1, 0, 0], sizes = [8, 8, 8], strides = [1, 1, 1]} : vector<10x10x8xf32> to vector<8x8x8xf32>
    %29 = vector.shape_cast %28 : vector<8x8x8xf32> to vector<64x8xf32>
    %30 = arith.truncf %29 : vector<64x8xf32> to vector<64x8xbf16>
    %c3 = arith.constant 3 : index
    %c0_24 = arith.constant 0 : index
    %c0_25 = arith.constant 0 : index
    %31 = vector.load %arg5[%c3, %c0_24, %c0_25] : memref<27x8x128xbf16, #tpu.memory_space<vmem>>, vector<1x8x128xbf16>
    %32 = vector.shape_cast %31 : vector<1x8x128xbf16> to vector<8x128xbf16>
    %cst_26 = arith.constant dense<0.000000e+00> : vector<64x128xf32>
    %33 = tpu.matmul %30, %32, %cst_26 {dimension_numbers = #tpu.dot_dimension_numbers<[1], [0], [0], [1], [0, 0, 1, 1], [], []>} : vector<64x8xbf16>, vector<8x128xbf16>, vector<64x128xf32> -> vector<64x128xf32>
    %34 = arith.addf %27, %33 : vector<64x128xf32>
    %35 = vector.extract_strided_slice %1 {offsets = [1, 1, 0], sizes = [8, 8, 8], strides = [1, 1, 1]} : vector<10x10x8xf32> to vector<8x8x8xf32>
    %36 = vector.shape_cast %35 : vector<8x8x8xf32> to vector<64x8xf32>
    %37 = arith.truncf %36 : vector<64x8xf32> to vector<64x8xbf16>
    %c4 = arith.constant 4 : index
    %c0_27 = arith.constant 0 : index
    %c0_28 = arith.constant 0 : index
    %38 = vector.load %arg5[%c4, %c0_27, %c0_28] : memref<27x8x128xbf16, #tpu.memory_space<vmem>>, vector<1x8x128xbf16>
    %39 = vector.shape_cast %38 : vector<1x8x128xbf16> to vector<8x128xbf16>
    %cst_29 = arith.constant dense<0.000000e+00> : vector<64x128xf32>
    %40 = tpu.matmul %37, %39, %cst_29 {dimension_numbers = #tpu.dot_dimension_numbers<[1], [0], [0], [1], [0, 0, 1, 1], [], []>} : vector<64x8xbf16>, vector<8x128xbf16>, vector<64x128xf32> -> vector<64x128xf32>
    %41 = arith.addf %34, %40 : vector<64x128xf32>
    %42 = vector.extract_strided_slice %1 {offsets = [1, 2, 0], sizes = [8, 8, 8], strides = [1, 1, 1]} : vector<10x10x8xf32> to vector<8x8x8xf32>
    %43 = vector.shape_cast %42 : vector<8x8x8xf32> to vector<64x8xf32>
    %44 = arith.truncf %43 : vector<64x8xf32> to vector<64x8xbf16>
    %c5 = arith.constant 5 : index
    %c0_30 = arith.constant 0 : index
    %c0_31 = arith.constant 0 : index
    %45 = vector.load %arg5[%c5, %c0_30, %c0_31] : memref<27x8x128xbf16, #tpu.memory_space<vmem>>, vector<1x8x128xbf16>
    %46 = vector.shape_cast %45 : vector<1x8x128xbf16> to vector<8x128xbf16>
    %cst_32 = arith.constant dense<0.000000e+00> : vector<64x128xf32>
    %47 = tpu.matmul %44, %46, %cst_32 {dimension_numbers = #tpu.dot_dimension_numbers<[1], [0], [0], [1], [0, 0, 1, 1], [], []>} : vector<64x8xbf16>, vector<8x128xbf16>, vector<64x128xf32> -> vector<64x128xf32>
    %48 = arith.addf %41, %47 : vector<64x128xf32>
    %49 = vector.extract_strided_slice %1 {offsets = [2, 0, 0], sizes = [8, 8, 8], strides = [1, 1, 1]} : vector<10x10x8xf32> to vector<8x8x8xf32>
    %50 = vector.shape_cast %49 : vector<8x8x8xf32> to vector<64x8xf32>
    %51 = arith.truncf %50 : vector<64x8xf32> to vector<64x8xbf16>
    %c6 = arith.constant 6 : index
    %c0_33 = arith.constant 0 : index
    %c0_34 = arith.constant 0 : index
    %52 = vector.load %arg5[%c6, %c0_33, %c0_34] : memref<27x8x128xbf16, #tpu.memory_space<vmem>>, vector<1x8x128xbf16>
    %53 = vector.shape_cast %52 : vector<1x8x128xbf16> to vector<8x128xbf16>
    %cst_35 = arith.constant dense<0.000000e+00> : vector<64x128xf32>
    %54 = tpu.matmul %51, %53, %cst_35 {dimension_numbers = #tpu.dot_dimension_numbers<[1], [0], [0], [1], [0, 0, 1, 1], [], []>} : vector<64x8xbf16>, vector<8x128xbf16>, vector<64x128xf32> -> vector<64x128xf32>
    %55 = arith.addf %48, %54 : vector<64x128xf32>
    %56 = vector.extract_strided_slice %1 {offsets = [2, 1, 0], sizes = [8, 8, 8], strides = [1, 1, 1]} : vector<10x10x8xf32> to vector<8x8x8xf32>
    %57 = vector.shape_cast %56 : vector<8x8x8xf32> to vector<64x8xf32>
    %58 = arith.truncf %57 : vector<64x8xf32> to vector<64x8xbf16>
    %c7 = arith.constant 7 : index
    %c0_36 = arith.constant 0 : index
    %c0_37 = arith.constant 0 : index
    %59 = vector.load %arg5[%c7, %c0_36, %c0_37] : memref<27x8x128xbf16, #tpu.memory_space<vmem>>, vector<1x8x128xbf16>
    %60 = vector.shape_cast %59 : vector<1x8x128xbf16> to vector<8x128xbf16>
    %cst_38 = arith.constant dense<0.000000e+00> : vector<64x128xf32>
    %61 = tpu.matmul %58, %60, %cst_38 {dimension_numbers = #tpu.dot_dimension_numbers<[1], [0], [0], [1], [0, 0, 1, 1], [], []>} : vector<64x8xbf16>, vector<8x128xbf16>, vector<64x128xf32> -> vector<64x128xf32>
    %62 = arith.addf %55, %61 : vector<64x128xf32>
    %63 = vector.extract_strided_slice %1 {offsets = [2, 2, 0], sizes = [8, 8, 8], strides = [1, 1, 1]} : vector<10x10x8xf32> to vector<8x8x8xf32>
    %64 = vector.shape_cast %63 : vector<8x8x8xf32> to vector<64x8xf32>
    %65 = arith.truncf %64 : vector<64x8xf32> to vector<64x8xbf16>
    %c8 = arith.constant 8 : index
    %c0_39 = arith.constant 0 : index
    %c0_40 = arith.constant 0 : index
    %66 = vector.load %arg5[%c8, %c0_39, %c0_40] : memref<27x8x128xbf16, #tpu.memory_space<vmem>>, vector<1x8x128xbf16>
    %67 = vector.shape_cast %66 : vector<1x8x128xbf16> to vector<8x128xbf16>
    %cst_41 = arith.constant dense<0.000000e+00> : vector<64x128xf32>
    %68 = tpu.matmul %65, %67, %cst_41 {dimension_numbers = #tpu.dot_dimension_numbers<[1], [0], [0], [1], [0, 0, 1, 1], [], []>} : vector<64x8xbf16>, vector<8x128xbf16>, vector<64x128xf32> -> vector<64x128xf32>
    %69 = arith.addf %62, %68 : vector<64x128xf32>
    %70 = vector.extract_strided_slice %3 {offsets = [0, 0, 0], sizes = [8, 8, 8], strides = [1, 1, 1]} : vector<10x10x8xf32> to vector<8x8x8xf32>
    %71 = vector.shape_cast %70 : vector<8x8x8xf32> to vector<64x8xf32>
    %72 = arith.truncf %71 : vector<64x8xf32> to vector<64x8xbf16>
    %c9 = arith.constant 9 : index
    %c0_42 = arith.constant 0 : index
    %c0_43 = arith.constant 0 : index
    %73 = vector.load %arg5[%c9, %c0_42, %c0_43] : memref<27x8x128xbf16, #tpu.memory_space<vmem>>, vector<1x8x128xbf16>
    %74 = vector.shape_cast %73 : vector<1x8x128xbf16> to vector<8x128xbf16>
    %cst_44 = arith.constant dense<0.000000e+00> : vector<64x128xf32>
    %75 = tpu.matmul %72, %74, %cst_44 {dimension_numbers = #tpu.dot_dimension_numbers<[1], [0], [0], [1], [0, 0, 1, 1], [], []>} : vector<64x8xbf16>, vector<8x128xbf16>, vector<64x128xf32> -> vector<64x128xf32>
    %76 = arith.addf %69, %75 : vector<64x128xf32>
    %77 = vector.extract_strided_slice %3 {offsets = [0, 1, 0], sizes = [8, 8, 8], strides = [1, 1, 1]} : vector<10x10x8xf32> to vector<8x8x8xf32>
    %78 = vector.shape_cast %77 : vector<8x8x8xf32> to vector<64x8xf32>
    %79 = arith.truncf %78 : vector<64x8xf32> to vector<64x8xbf16>
    %c10 = arith.constant 10 : index
    %c0_45 = arith.constant 0 : index
    %c0_46 = arith.constant 0 : index
    %80 = vector.load %arg5[%c10, %c0_45, %c0_46] : memref<27x8x128xbf16, #tpu.memory_space<vmem>>, vector<1x8x128xbf16>
    %81 = vector.shape_cast %80 : vector<1x8x128xbf16> to vector<8x128xbf16>
    %cst_47 = arith.constant dense<0.000000e+00> : vector<64x128xf32>
    %82 = tpu.matmul %79, %81, %cst_47 {dimension_numbers = #tpu.dot_dimension_numbers<[1], [0], [0], [1], [0, 0, 1, 1], [], []>} : vector<64x8xbf16>, vector<8x128xbf16>, vector<64x128xf32> -> vector<64x128xf32>
    %83 = arith.addf %76, %82 : vector<64x128xf32>
    %84 = vector.extract_strided_slice %3 {offsets = [0, 2, 0], sizes = [8, 8, 8], strides = [1, 1, 1]} : vector<10x10x8xf32> to vector<8x8x8xf32>
    %85 = vector.shape_cast %84 : vector<8x8x8xf32> to vector<64x8xf32>
    %86 = arith.truncf %85 : vector<64x8xf32> to vector<64x8xbf16>
    %c11 = arith.constant 11 : index
    %c0_48 = arith.constant 0 : index
    %c0_49 = arith.constant 0 : index
    %87 = vector.load %arg5[%c11, %c0_48, %c0_49] : memref<27x8x128xbf16, #tpu.memory_space<vmem>>, vector<1x8x128xbf16>
    %88 = vector.shape_cast %87 : vector<1x8x128xbf16> to vector<8x128xbf16>
    %cst_50 = arith.constant dense<0.000000e+00> : vector<64x128xf32>
    %89 = tpu.matmul %86, %88, %cst_50 {dimension_numbers = #tpu.dot_dimension_numbers<[1], [0], [0], [1], [0, 0, 1, 1], [], []>} : vector<64x8xbf16>, vector<8x128xbf16>, vector<64x128xf32> -> vector<64x128xf32>
    %90 = arith.addf %83, %89 : vector<64x128xf32>
    %91 = vector.extract_strided_slice %3 {offsets = [1, 0, 0], sizes = [8, 8, 8], strides = [1, 1, 1]} : vector<10x10x8xf32> to vector<8x8x8xf32>
    %92 = vector.shape_cast %91 : vector<8x8x8xf32> to vector<64x8xf32>
    %93 = arith.truncf %92 : vector<64x8xf32> to vector<64x8xbf16>
    %c12 = arith.constant 12 : index
    %c0_51 = arith.constant 0 : index
    %c0_52 = arith.constant 0 : index
    %94 = vector.load %arg5[%c12, %c0_51, %c0_52] : memref<27x8x128xbf16, #tpu.memory_space<vmem>>, vector<1x8x128xbf16>
    %95 = vector.shape_cast %94 : vector<1x8x128xbf16> to vector<8x128xbf16>
    %cst_53 = arith.constant dense<0.000000e+00> : vector<64x128xf32>
    %96 = tpu.matmul %93, %95, %cst_53 {dimension_numbers = #tpu.dot_dimension_numbers<[1], [0], [0], [1], [0, 0, 1, 1], [], []>} : vector<64x8xbf16>, vector<8x128xbf16>, vector<64x128xf32> -> vector<64x128xf32>
    %97 = arith.addf %90, %96 : vector<64x128xf32>
    %98 = vector.extract_strided_slice %3 {offsets = [1, 1, 0], sizes = [8, 8, 8], strides = [1, 1, 1]} : vector<10x10x8xf32> to vector<8x8x8xf32>
    %99 = vector.shape_cast %98 : vector<8x8x8xf32> to vector<64x8xf32>
    %100 = arith.truncf %99 : vector<64x8xf32> to vector<64x8xbf16>
    %c13 = arith.constant 13 : index
    %c0_54 = arith.constant 0 : index
    %c0_55 = arith.constant 0 : index
    %101 = vector.load %arg5[%c13, %c0_54, %c0_55] : memref<27x8x128xbf16, #tpu.memory_space<vmem>>, vector<1x8x128xbf16>
    %102 = vector.shape_cast %101 : vector<1x8x128xbf16> to vector<8x128xbf16>
    %cst_56 = arith.constant dense<0.000000e+00> : vector<64x128xf32>
    %103 = tpu.matmul %100, %102, %cst_56 {dimension_numbers = #tpu.dot_dimension_numbers<[1], [0], [0], [1], [0, 0, 1, 1], [], []>} : vector<64x8xbf16>, vector<8x128xbf16>, vector<64x128xf32> -> vector<64x128xf32>
    %104 = arith.addf %97, %103 : vector<64x128xf32>
    %105 = vector.extract_strided_slice %3 {offsets = [1, 2, 0], sizes = [8, 8, 8], strides = [1, 1, 1]} : vector<10x10x8xf32> to vector<8x8x8xf32>
    %106 = vector.shape_cast %105 : vector<8x8x8xf32> to vector<64x8xf32>
    %107 = arith.truncf %106 : vector<64x8xf32> to vector<64x8xbf16>
    %c14 = arith.constant 14 : index
    %c0_57 = arith.constant 0 : index
    %c0_58 = arith.constant 0 : index
    %108 = vector.load %arg5[%c14, %c0_57, %c0_58] : memref<27x8x128xbf16, #tpu.memory_space<vmem>>, vector<1x8x128xbf16>
    %109 = vector.shape_cast %108 : vector<1x8x128xbf16> to vector<8x128xbf16>
    %cst_59 = arith.constant dense<0.000000e+00> : vector<64x128xf32>
    %110 = tpu.matmul %107, %109, %cst_59 {dimension_numbers = #tpu.dot_dimension_numbers<[1], [0], [0], [1], [0, 0, 1, 1], [], []>} : vector<64x8xbf16>, vector<8x128xbf16>, vector<64x128xf32> -> vector<64x128xf32>
    %111 = arith.addf %104, %110 : vector<64x128xf32>
    %112 = vector.extract_strided_slice %3 {offsets = [2, 0, 0], sizes = [8, 8, 8], strides = [1, 1, 1]} : vector<10x10x8xf32> to vector<8x8x8xf32>
    %113 = vector.shape_cast %112 : vector<8x8x8xf32> to vector<64x8xf32>
    %114 = arith.truncf %113 : vector<64x8xf32> to vector<64x8xbf16>
    %c15 = arith.constant 15 : index
    %c0_60 = arith.constant 0 : index
    %c0_61 = arith.constant 0 : index
    %115 = vector.load %arg5[%c15, %c0_60, %c0_61] : memref<27x8x128xbf16, #tpu.memory_space<vmem>>, vector<1x8x128xbf16>
    %116 = vector.shape_cast %115 : vector<1x8x128xbf16> to vector<8x128xbf16>
    %cst_62 = arith.constant dense<0.000000e+00> : vector<64x128xf32>
    %117 = tpu.matmul %114, %116, %cst_62 {dimension_numbers = #tpu.dot_dimension_numbers<[1], [0], [0], [1], [0, 0, 1, 1], [], []>} : vector<64x8xbf16>, vector<8x128xbf16>, vector<64x128xf32> -> vector<64x128xf32>
    %118 = arith.addf %111, %117 : vector<64x128xf32>
    %119 = vector.extract_strided_slice %3 {offsets = [2, 1, 0], sizes = [8, 8, 8], strides = [1, 1, 1]} : vector<10x10x8xf32> to vector<8x8x8xf32>
    %120 = vector.shape_cast %119 : vector<8x8x8xf32> to vector<64x8xf32>
    %121 = arith.truncf %120 : vector<64x8xf32> to vector<64x8xbf16>
    %c16 = arith.constant 16 : index
    %c0_63 = arith.constant 0 : index
    %c0_64 = arith.constant 0 : index
    %122 = vector.load %arg5[%c16, %c0_63, %c0_64] : memref<27x8x128xbf16, #tpu.memory_space<vmem>>, vector<1x8x128xbf16>
    %123 = vector.shape_cast %122 : vector<1x8x128xbf16> to vector<8x128xbf16>
    %cst_65 = arith.constant dense<0.000000e+00> : vector<64x128xf32>
    %124 = tpu.matmul %121, %123, %cst_65 {dimension_numbers = #tpu.dot_dimension_numbers<[1], [0], [0], [1], [0, 0, 1, 1], [], []>} : vector<64x8xbf16>, vector<8x128xbf16>, vector<64x128xf32> -> vector<64x128xf32>
    %125 = arith.addf %118, %124 : vector<64x128xf32>
    %126 = vector.extract_strided_slice %3 {offsets = [2, 2, 0], sizes = [8, 8, 8], strides = [1, 1, 1]} : vector<10x10x8xf32> to vector<8x8x8xf32>
    %127 = vector.shape_cast %126 : vector<8x8x8xf32> to vector<64x8xf32>
    %128 = arith.truncf %127 : vector<64x8xf32> to vector<64x8xbf16>
    %c17 = arith.constant 17 : index
    %c0_66 = arith.constant 0 : index
    %c0_67 = arith.constant 0 : index
    %129 = vector.load %arg5[%c17, %c0_66, %c0_67] : memref<27x8x128xbf16, #tpu.memory_space<vmem>>, vector<1x8x128xbf16>
    %130 = vector.shape_cast %129 : vector<1x8x128xbf16> to vector<8x128xbf16>
    %cst_68 = arith.constant dense<0.000000e+00> : vector<64x128xf32>
    %131 = tpu.matmul %128, %130, %cst_68 {dimension_numbers = #tpu.dot_dimension_numbers<[1], [0], [0], [1], [0, 0, 1, 1], [], []>} : vector<64x8xbf16>, vector<8x128xbf16>, vector<64x128xf32> -> vector<64x128xf32>
    %132 = arith.addf %125, %131 : vector<64x128xf32>
    %133 = vector.extract_strided_slice %5 {offsets = [0, 0, 0], sizes = [8, 8, 8], strides = [1, 1, 1]} : vector<10x10x8xf32> to vector<8x8x8xf32>
    %134 = vector.shape_cast %133 : vector<8x8x8xf32> to vector<64x8xf32>
    %135 = arith.truncf %134 : vector<64x8xf32> to vector<64x8xbf16>
    %c18 = arith.constant 18 : index
    %c0_69 = arith.constant 0 : index
    %c0_70 = arith.constant 0 : index
    %136 = vector.load %arg5[%c18, %c0_69, %c0_70] : memref<27x8x128xbf16, #tpu.memory_space<vmem>>, vector<1x8x128xbf16>
    %137 = vector.shape_cast %136 : vector<1x8x128xbf16> to vector<8x128xbf16>
    %cst_71 = arith.constant dense<0.000000e+00> : vector<64x128xf32>
    %138 = tpu.matmul %135, %137, %cst_71 {dimension_numbers = #tpu.dot_dimension_numbers<[1], [0], [0], [1], [0, 0, 1, 1], [], []>} : vector<64x8xbf16>, vector<8x128xbf16>, vector<64x128xf32> -> vector<64x128xf32>
    %139 = arith.addf %132, %138 : vector<64x128xf32>
    %140 = vector.extract_strided_slice %5 {offsets = [0, 1, 0], sizes = [8, 8, 8], strides = [1, 1, 1]} : vector<10x10x8xf32> to vector<8x8x8xf32>
    %141 = vector.shape_cast %140 : vector<8x8x8xf32> to vector<64x8xf32>
    %142 = arith.truncf %141 : vector<64x8xf32> to vector<64x8xbf16>
    %c19 = arith.constant 19 : index
    %c0_72 = arith.constant 0 : index
    %c0_73 = arith.constant 0 : index
    %143 = vector.load %arg5[%c19, %c0_72, %c0_73] : memref<27x8x128xbf16, #tpu.memory_space<vmem>>, vector<1x8x128xbf16>
    %144 = vector.shape_cast %143 : vector<1x8x128xbf16> to vector<8x128xbf16>
    %cst_74 = arith.constant dense<0.000000e+00> : vector<64x128xf32>
    %145 = tpu.matmul %142, %144, %cst_74 {dimension_numbers = #tpu.dot_dimension_numbers<[1], [0], [0], [1], [0, 0, 1, 1], [], []>} : vector<64x8xbf16>, vector<8x128xbf16>, vector<64x128xf32> -> vector<64x128xf32>
    %146 = arith.addf %139, %145 : vector<64x128xf32>
    %147 = vector.extract_strided_slice %5 {offsets = [0, 2, 0], sizes = [8, 8, 8], strides = [1, 1, 1]} : vector<10x10x8xf32> to vector<8x8x8xf32>
    %148 = vector.shape_cast %147 : vector<8x8x8xf32> to vector<64x8xf32>
    %149 = arith.truncf %148 : vector<64x8xf32> to vector<64x8xbf16>
    %c20 = arith.constant 20 : index
    %c0_75 = arith.constant 0 : index
    %c0_76 = arith.constant 0 : index
    %150 = vector.load %arg5[%c20, %c0_75, %c0_76] : memref<27x8x128xbf16, #tpu.memory_space<vmem>>, vector<1x8x128xbf16>
    %151 = vector.shape_cast %150 : vector<1x8x128xbf16> to vector<8x128xbf16>
    %cst_77 = arith.constant dense<0.000000e+00> : vector<64x128xf32>
    %152 = tpu.matmul %149, %151, %cst_77 {dimension_numbers = #tpu.dot_dimension_numbers<[1], [0], [0], [1], [0, 0, 1, 1], [], []>} : vector<64x8xbf16>, vector<8x128xbf16>, vector<64x128xf32> -> vector<64x128xf32>
    %153 = arith.addf %146, %152 : vector<64x128xf32>
    %154 = vector.extract_strided_slice %5 {offsets = [1, 0, 0], sizes = [8, 8, 8], strides = [1, 1, 1]} : vector<10x10x8xf32> to vector<8x8x8xf32>
    %155 = vector.shape_cast %154 : vector<8x8x8xf32> to vector<64x8xf32>
    %156 = arith.truncf %155 : vector<64x8xf32> to vector<64x8xbf16>
    %c21 = arith.constant 21 : index
    %c0_78 = arith.constant 0 : index
    %c0_79 = arith.constant 0 : index
    %157 = vector.load %arg5[%c21, %c0_78, %c0_79] : memref<27x8x128xbf16, #tpu.memory_space<vmem>>, vector<1x8x128xbf16>
    %158 = vector.shape_cast %157 : vector<1x8x128xbf16> to vector<8x128xbf16>
    %cst_80 = arith.constant dense<0.000000e+00> : vector<64x128xf32>
    %159 = tpu.matmul %156, %158, %cst_80 {dimension_numbers = #tpu.dot_dimension_numbers<[1], [0], [0], [1], [0, 0, 1, 1], [], []>} : vector<64x8xbf16>, vector<8x128xbf16>, vector<64x128xf32> -> vector<64x128xf32>
    %160 = arith.addf %153, %159 : vector<64x128xf32>
    %161 = vector.extract_strided_slice %5 {offsets = [1, 1, 0], sizes = [8, 8, 8], strides = [1, 1, 1]} : vector<10x10x8xf32> to vector<8x8x8xf32>
    %162 = vector.shape_cast %161 : vector<8x8x8xf32> to vector<64x8xf32>
    %163 = arith.truncf %162 : vector<64x8xf32> to vector<64x8xbf16>
    %c22 = arith.constant 22 : index
    %c0_81 = arith.constant 0 : index
    %c0_82 = arith.constant 0 : index
    %164 = vector.load %arg5[%c22, %c0_81, %c0_82] : memref<27x8x128xbf16, #tpu.memory_space<vmem>>, vector<1x8x128xbf16>
    %165 = vector.shape_cast %164 : vector<1x8x128xbf16> to vector<8x128xbf16>
    %cst_83 = arith.constant dense<0.000000e+00> : vector<64x128xf32>
    %166 = tpu.matmul %163, %165, %cst_83 {dimension_numbers = #tpu.dot_dimension_numbers<[1], [0], [0], [1], [0, 0, 1, 1], [], []>} : vector<64x8xbf16>, vector<8x128xbf16>, vector<64x128xf32> -> vector<64x128xf32>
    %167 = arith.addf %160, %166 : vector<64x128xf32>
    %168 = vector.extract_strided_slice %5 {offsets = [1, 2, 0], sizes = [8, 8, 8], strides = [1, 1, 1]} : vector<10x10x8xf32> to vector<8x8x8xf32>
    %169 = vector.shape_cast %168 : vector<8x8x8xf32> to vector<64x8xf32>
    %170 = arith.truncf %169 : vector<64x8xf32> to vector<64x8xbf16>
    %c23 = arith.constant 23 : index
    %c0_84 = arith.constant 0 : index
    %c0_85 = arith.constant 0 : index
    %171 = vector.load %arg5[%c23, %c0_84, %c0_85] : memref<27x8x128xbf16, #tpu.memory_space<vmem>>, vector<1x8x128xbf16>
    %172 = vector.shape_cast %171 : vector<1x8x128xbf16> to vector<8x128xbf16>
    %cst_86 = arith.constant dense<0.000000e+00> : vector<64x128xf32>
    %173 = tpu.matmul %170, %172, %cst_86 {dimension_numbers = #tpu.dot_dimension_numbers<[1], [0], [0], [1], [0, 0, 1, 1], [], []>} : vector<64x8xbf16>, vector<8x128xbf16>, vector<64x128xf32> -> vector<64x128xf32>
    %174 = arith.addf %167, %173 : vector<64x128xf32>
    %175 = vector.extract_strided_slice %5 {offsets = [2, 0, 0], sizes = [8, 8, 8], strides = [1, 1, 1]} : vector<10x10x8xf32> to vector<8x8x8xf32>
    %176 = vector.shape_cast %175 : vector<8x8x8xf32> to vector<64x8xf32>
    %177 = arith.truncf %176 : vector<64x8xf32> to vector<64x8xbf16>
    %c24 = arith.constant 24 : index
    %c0_87 = arith.constant 0 : index
    %c0_88 = arith.constant 0 : index
    %178 = vector.load %arg5[%c24, %c0_87, %c0_88] : memref<27x8x128xbf16, #tpu.memory_space<vmem>>, vector<1x8x128xbf16>
    %179 = vector.shape_cast %178 : vector<1x8x128xbf16> to vector<8x128xbf16>
    %cst_89 = arith.constant dense<0.000000e+00> : vector<64x128xf32>
    %180 = tpu.matmul %177, %179, %cst_89 {dimension_numbers = #tpu.dot_dimension_numbers<[1], [0], [0], [1], [0, 0, 1, 1], [], []>} : vector<64x8xbf16>, vector<8x128xbf16>, vector<64x128xf32> -> vector<64x128xf32>
    %181 = arith.addf %174, %180 : vector<64x128xf32>
    %182 = vector.extract_strided_slice %5 {offsets = [2, 1, 0], sizes = [8, 8, 8], strides = [1, 1, 1]} : vector<10x10x8xf32> to vector<8x8x8xf32>
    %183 = vector.shape_cast %182 : vector<8x8x8xf32> to vector<64x8xf32>
    %184 = arith.truncf %183 : vector<64x8xf32> to vector<64x8xbf16>
    %c25 = arith.constant 25 : index
    %c0_90 = arith.constant 0 : index
    %c0_91 = arith.constant 0 : index
    %185 = vector.load %arg5[%c25, %c0_90, %c0_91] : memref<27x8x128xbf16, #tpu.memory_space<vmem>>, vector<1x8x128xbf16>
    %186 = vector.shape_cast %185 : vector<1x8x128xbf16> to vector<8x128xbf16>
    %cst_92 = arith.constant dense<0.000000e+00> : vector<64x128xf32>
    %187 = tpu.matmul %184, %186, %cst_92 {dimension_numbers = #tpu.dot_dimension_numbers<[1], [0], [0], [1], [0, 0, 1, 1], [], []>} : vector<64x8xbf16>, vector<8x128xbf16>, vector<64x128xf32> -> vector<64x128xf32>
    %188 = arith.addf %181, %187 : vector<64x128xf32>
    %189 = vector.extract_strided_slice %5 {offsets = [2, 2, 0], sizes = [8, 8, 8], strides = [1, 1, 1]} : vector<10x10x8xf32> to vector<8x8x8xf32>
    %190 = vector.shape_cast %189 : vector<8x8x8xf32> to vector<64x8xf32>
    %191 = arith.truncf %190 : vector<64x8xf32> to vector<64x8xbf16>
    %c26 = arith.constant 26 : index
    %c0_93 = arith.constant 0 : index
    %c0_94 = arith.constant 0 : index
    %192 = vector.load %arg5[%c26, %c0_93, %c0_94] : memref<27x8x128xbf16, #tpu.memory_space<vmem>>, vector<1x8x128xbf16>
    %193 = vector.shape_cast %192 : vector<1x8x128xbf16> to vector<8x128xbf16>
    %cst_95 = arith.constant dense<0.000000e+00> : vector<64x128xf32>
    %194 = tpu.matmul %191, %193, %cst_95 {dimension_numbers = #tpu.dot_dimension_numbers<[1], [0], [0], [1], [0, 0, 1, 1], [], []>} : vector<64x8xbf16>, vector<8x128xbf16>, vector<64x128xf32> -> vector<64x128xf32>
    %195 = arith.addf %188, %194 : vector<64x128xf32>
    %196 = vector.shape_cast %195 : vector<64x128xf32> to vector<1x1x8x8x128xf32>
    %c0_96 = arith.constant 0 : index
    %c0_97 = arith.constant 0 : index
    %c0_98 = arith.constant 0 : index
    %c0_99 = arith.constant 0 : index
    %c0_100 = arith.constant 0 : index
    %197 = vector.load %arg6[%c0_96, %c0_97, %c0_98, %c0_99, %c0_100] : memref<1x1x8x8x128xf32, #tpu.memory_space<vmem>>, vector<1x1x8x8x128xf32>
    tpu.vector_store %arg6[%c0_96, %c0_97, %c0_98, %c0_99, %c0_100], %196 {strides = array<i32>} : memref<1x1x8x8x128xf32, #tpu.memory_space<vmem>>, vector<1x1x8x8x128xf32>,
    %cst_101 = arith.constant dense<0.000000e+00> : vector<128xf32>
    %198 = vector.multi_reduction <add>, %195, %cst_101 [0] : vector<64x128xf32> to vector<128xf32>
    %199 = vector.shape_cast %198 : vector<128xf32> to vector<1x128xf32>
    %200 = arith.mulf %195, %195 : vector<64x128xf32>
    %cst_102 = arith.constant dense<0.000000e+00> : vector<128xf32>
    %201 = vector.multi_reduction <add>, %200, %cst_102 [0] : vector<64x128xf32> to vector<128xf32>
    %202 = vector.shape_cast %201 : vector<128xf32> to vector<1x128xf32>
    %203 = tpu.concatenate %199, %202 in 0 : vector<1x128xf32>, vector<1x128xf32> -> vector<2x128xf32>
    %204 = vector.shape_cast %203 : vector<2x128xf32> to vector<1x1x2x128xf32>
    %c0_103 = arith.constant 0 : index
    %c0_104 = arith.constant 0 : index
    %c0_105 = arith.constant 0 : index
    %c0_106 = arith.constant 0 : index
    %205 = vector.load %arg7[%c0_103, %c0_104, %c0_105, %c0_106] : memref<1x1x2x128xf32, #tpu.memory_space<vmem>>, vector<1x1x2x128xf32>
    tpu.vector_store %arg7[%c0_103, %c0_104, %c0_105, %c0_106], %204 {strides = array<i32>} : memref<1x1x2x128xf32, #tpu.memory_space<vmem>>, vector<1x1x2x128xf32>,
    return
  }
  func.func @transform_0(%arg0: i32, %arg1: i32) -> (i32, i32, i32, i32, i32) {
    %c0_i32 = arith.constant 0 : i32
    %c0_i32_0 = arith.constant 0 : i32
    %c0_i32_1 = arith.constant 0 : i32
    %c0_i32_2 = arith.constant 0 : i32
    return %arg0, %arg1, %c0_i32, %c0_i32_0, %c0_i32_1 : i32, i32, i32, i32, i32
  }
  func.func @transform_1(%arg0: i32, %arg1: i32) -> (i32, i32, i32, i32, i32) {
    %c1_i32 = arith.constant 1 : i32
    %0 = arith.addi %arg1, %c1_i32 : i32
    %c0_i32 = arith.constant 0 : i32
    %c0_i32_0 = arith.constant 0 : i32
    %c0_i32_1 = arith.constant 0 : i32
    %c0_i32_2 = arith.constant 0 : i32
    return %arg0, %0, %c0_i32, %c0_i32_0, %c0_i32_1 : i32, i32, i32, i32, i32
  }
  func.func @transform_2(%arg0: i32, %arg1: i32) -> (i32, i32, i32, i32, i32) {
    %c2_i32 = arith.constant 2 : i32
    %0 = arith.addi %arg1, %c2_i32 : i32
    %c0_i32 = arith.constant 0 : i32
    %c0_i32_0 = arith.constant 0 : i32
    %c0_i32_1 = arith.constant 0 : i32
    %c0_i32_2 = arith.constant 0 : i32
    return %arg0, %0, %c0_i32, %c0_i32_0, %c0_i32_1 : i32, i32, i32, i32, i32
  }
  func.func @transform_3(%arg0: i32, %arg1: i32) -> (i32, i32, i32) {
    %c0_i32 = arith.constant 0 : i32
    %c0_i32_0 = arith.constant 0 : i32
    %c0_i32_1 = arith.constant 0 : i32
    %c0_i32_2 = arith.constant 0 : i32
    return %c0_i32, %c0_i32_0, %c0_i32_1 : i32, i32, i32
  }
  func.func @transform_4(%arg0: i32, %arg1: i32) -> (i32, i32, i32, i32, i32) {
    %c0_i32 = arith.constant 0 : i32
    %c0_i32_0 = arith.constant 0 : i32
    %c0_i32_1 = arith.constant 0 : i32
    %c0_i32_2 = arith.constant 0 : i32
    return %arg0, %arg1, %c0_i32, %c0_i32_0, %c0_i32_1 : i32, i32, i32, i32, i32
  }
  func.func @transform_5(%arg0: i32, %arg1: i32) -> (i32, i32, i32, i32) {
    %c0_i32 = arith.constant 0 : i32
    %c0_i32_0 = arith.constant 0 : i32
    %c0_i32_1 = arith.constant 0 : i32
    return %arg0, %arg1, %c0_i32, %c0_i32_0 : i32, i32, i32, i32
  }
}

module attributes {stable_mosaic.version = 11 : i64} {
  func.func @_bn_relu_kernel(%arg0: i32, %arg1: i32, %arg2: memref<1x1x8x8x128xf32, #tpu.memory_space<vmem>>, %arg3: memref<2x128xf32, #tpu.memory_space<vmem>>, %arg4: memref<1x1x8x8x128xf32, #tpu.memory_space<vmem>>) attributes {dimension_semantics = [#tpu.dimension_semantics<parallel>, #tpu.dimension_semantics<parallel>], iteration_bounds = array<i64: 2, 8>, scalar_prefetch = 0 : i64, scratch_operands = 0 : i64, tpu.core_type = #tpu.core_type<tc>, window_params = [{transform_indices = @transform_0, window_bounds = array<i64: 1, 1, 8, 8, 128>}, {pipeline_mode = #tpu.pipeline_mode<synchronous>, transform_indices = @transform_1, window_bounds = array<i64: 2, 128>}, {transform_indices = @transform_2, window_bounds = array<i64: 1, 1, 8, 8, 128>}]} {
    %c0 = arith.constant 0 : index
    %c0_0 = arith.constant 0 : index
    %c0_1 = arith.constant 0 : index
    %c0_2 = arith.constant 0 : index
    %c0_3 = arith.constant 0 : index
    %0 = vector.load %arg2[%c0, %c0_0, %c0_1, %c0_2, %c0_3] : memref<1x1x8x8x128xf32, #tpu.memory_space<vmem>>, vector<1x1x8x8x128xf32>
    %c0_4 = arith.constant 0 : index
    %c0_5 = arith.constant 0 : index
    %1 = vector.load %arg3[%c0_4, %c0_5] : memref<2x128xf32, #tpu.memory_space<vmem>>, vector<1x128xf32>
    %c1 = arith.constant 1 : index
    %c0_6 = arith.constant 0 : index
    %2 = vector.load %arg3[%c1, %c0_6] : memref<2x128xf32, #tpu.memory_space<vmem>>, vector<1x128xf32>
    %3 = vector.shape_cast %1 : vector<1x128xf32> to vector<1x1x1x1x128xf32>
    %4 = vector.broadcast %3 : vector<1x1x1x1x128xf32> to vector<1x1x8x8x128xf32>
    %5 = arith.mulf %0, %4 : vector<1x1x8x8x128xf32>
    %6 = vector.shape_cast %2 : vector<1x128xf32> to vector<1x1x1x1x128xf32>
    %7 = vector.broadcast %6 : vector<1x1x1x1x128xf32> to vector<1x1x8x8x128xf32>
    %8 = arith.addf %5, %7 : vector<1x1x8x8x128xf32>
    %cst = arith.constant 0.000000e+00 : f32
    %9 = vector.broadcast %cst : f32 to vector<1x1x8x8x128xf32>
    %10 = arith.maximumf %8, %9 : vector<1x1x8x8x128xf32>
    %c0_7 = arith.constant 0 : index
    %c0_8 = arith.constant 0 : index
    %c0_9 = arith.constant 0 : index
    %c0_10 = arith.constant 0 : index
    %c0_11 = arith.constant 0 : index
    %11 = vector.load %arg4[%c0_7, %c0_8, %c0_9, %c0_10, %c0_11] : memref<1x1x8x8x128xf32, #tpu.memory_space<vmem>>, vector<1x1x8x8x128xf32>
    tpu.vector_store %arg4[%c0_7, %c0_8, %c0_9, %c0_10, %c0_11], %10 {strides = array<i32>} : memref<1x1x8x8x128xf32, #tpu.memory_space<vmem>>, vector<1x1x8x8x128xf32>,
    return
  }
  func.func @transform_0(%arg0: i32, %arg1: i32) -> (i32, i32, i32, i32, i32) {
    %c0_i32 = arith.constant 0 : i32
    %c0_i32_0 = arith.constant 0 : i32
    %c0_i32_1 = arith.constant 0 : i32
    %c0_i32_2 = arith.constant 0 : i32
    return %arg0, %arg1, %c0_i32, %c0_i32_0, %c0_i32_1 : i32, i32, i32, i32, i32
  }
  func.func @transform_1(%arg0: i32, %arg1: i32) -> (i32, i32) {
    %c0_i32 = arith.constant 0 : i32
    %c0_i32_0 = arith.constant 0 : i32
    %c0_i32_1 = arith.constant 0 : i32
    return %c0_i32, %c0_i32_0 : i32, i32
  }
  func.func @transform_2(%arg0: i32, %arg1: i32) -> (i32, i32, i32, i32, i32) {
    %c0_i32 = arith.constant 0 : i32
    %c0_i32_0 = arith.constant 0 : i32
    %c0_i32_1 = arith.constant 0 : i32
    %c0_i32_2 = arith.constant 0 : i32
    return %arg0, %arg1, %c0_i32, %c0_i32_0, %c0_i32_1 : i32, i32, i32, i32, i32
  }
}

module attributes {stable_mosaic.version = 11 : i64} {
  func.func @_conv3x3_stats_kernel(%arg0: i32, %arg1: i32, %arg2: memref<1x1x10x10x128xf32, #tpu.memory_space<vmem>>, %arg3: memref<1x1x10x10x128xf32, #tpu.memory_space<vmem>>, %arg4: memref<1x1x10x10x128xf32, #tpu.memory_space<vmem>>, %arg5: memref<27x128x128xbf16, #tpu.memory_space<vmem>>, %arg6: memref<1x1x8x8x128xf32, #tpu.memory_space<vmem>>, %arg7: memref<1x1x2x128xf32, #tpu.memory_space<vmem>>) attributes {dimension_semantics = [#tpu.dimension_semantics<parallel>, #tpu.dimension_semantics<parallel>], iteration_bounds = array<i64: 2, 8>, scalar_prefetch = 0 : i64, scratch_operands = 0 : i64, tpu.core_type = #tpu.core_type<tc>, window_params = [{transform_indices = @transform_0, window_bounds = array<i64: 1, 1, 10, 10, 128>}, {transform_indices = @transform_1, window_bounds = array<i64: 1, 1, 10, 10, 128>}, {transform_indices = @transform_2, window_bounds = array<i64: 1, 1, 10, 10, 128>}, {pipeline_mode = #tpu.pipeline_mode<synchronous>, transform_indices = @transform_3, window_bounds = array<i64: 27, 128, 128>}, {transform_indices = @transform_4, window_bounds = array<i64: 1, 1, 8, 8, 128>}, {transform_indices = @transform_5, window_bounds = array<i64: 1, 1, 2, 128>}]} {
    %c0 = arith.constant 0 : index
    %c0_0 = arith.constant 0 : index
    %c0_1 = arith.constant 0 : index
    %c0_2 = arith.constant 0 : index
    %c0_3 = arith.constant 0 : index
    %0 = vector.load %arg2[%c0, %c0_0, %c0_1, %c0_2, %c0_3] : memref<1x1x10x10x128xf32, #tpu.memory_space<vmem>>, vector<1x1x10x10x128xf32>
    %1 = vector.shape_cast %0 : vector<1x1x10x10x128xf32> to vector<10x10x128xf32>
    %c0_4 = arith.constant 0 : index
    %c0_5 = arith.constant 0 : index
    %c0_6 = arith.constant 0 : index
    %c0_7 = arith.constant 0 : index
    %c0_8 = arith.constant 0 : index
    %2 = vector.load %arg3[%c0_4, %c0_5, %c0_6, %c0_7, %c0_8] : memref<1x1x10x10x128xf32, #tpu.memory_space<vmem>>, vector<1x1x10x10x128xf32>
    %3 = vector.shape_cast %2 : vector<1x1x10x10x128xf32> to vector<10x10x128xf32>
    %c0_9 = arith.constant 0 : index
    %c0_10 = arith.constant 0 : index
    %c0_11 = arith.constant 0 : index
    %c0_12 = arith.constant 0 : index
    %c0_13 = arith.constant 0 : index
    %4 = vector.load %arg4[%c0_9, %c0_10, %c0_11, %c0_12, %c0_13] : memref<1x1x10x10x128xf32, #tpu.memory_space<vmem>>, vector<1x1x10x10x128xf32>
    %5 = vector.shape_cast %4 : vector<1x1x10x10x128xf32> to vector<10x10x128xf32>
    %cst = arith.constant 0.000000e+00 : f32
    %6 = vector.broadcast %cst : f32 to vector<64x128xf32>
    %7 = vector.extract_strided_slice %1 {offsets = [0, 0, 0], sizes = [8, 8, 128], strides = [1, 1, 1]} : vector<10x10x128xf32> to vector<8x8x128xf32>
    %8 = vector.shape_cast %7 : vector<8x8x128xf32> to vector<64x128xf32>
    %9 = arith.truncf %8 : vector<64x128xf32> to vector<64x128xbf16>
    %c0_14 = arith.constant 0 : index
    %c0_15 = arith.constant 0 : index
    %c0_16 = arith.constant 0 : index
    %10 = vector.load %arg5[%c0_14, %c0_15, %c0_16] : memref<27x128x128xbf16, #tpu.memory_space<vmem>>, vector<1x128x128xbf16>
    %11 = vector.shape_cast %10 : vector<1x128x128xbf16> to vector<128x128xbf16>
    %cst_17 = arith.constant dense<0.000000e+00> : vector<64x128xf32>
    %12 = tpu.matmul %9, %11, %cst_17 {dimension_numbers = #tpu.dot_dimension_numbers<[1], [0], [0], [1], [0, 0, 1, 1], [], []>} : vector<64x128xbf16>, vector<128x128xbf16>, vector<64x128xf32> -> vector<64x128xf32>
    %13 = arith.addf %6, %12 : vector<64x128xf32>
    %14 = vector.extract_strided_slice %1 {offsets = [0, 1, 0], sizes = [8, 8, 128], strides = [1, 1, 1]} : vector<10x10x128xf32> to vector<8x8x128xf32>
    %15 = vector.shape_cast %14 : vector<8x8x128xf32> to vector<64x128xf32>
    %16 = arith.truncf %15 : vector<64x128xf32> to vector<64x128xbf16>
    %c1 = arith.constant 1 : index
    %c0_18 = arith.constant 0 : index
    %c0_19 = arith.constant 0 : index
    %17 = vector.load %arg5[%c1, %c0_18, %c0_19] : memref<27x128x128xbf16, #tpu.memory_space<vmem>>, vector<1x128x128xbf16>
    %18 = vector.shape_cast %17 : vector<1x128x128xbf16> to vector<128x128xbf16>
    %cst_20 = arith.constant dense<0.000000e+00> : vector<64x128xf32>
    %19 = tpu.matmul %16, %18, %cst_20 {dimension_numbers = #tpu.dot_dimension_numbers<[1], [0], [0], [1], [0, 0, 1, 1], [], []>} : vector<64x128xbf16>, vector<128x128xbf16>, vector<64x128xf32> -> vector<64x128xf32>
    %20 = arith.addf %13, %19 : vector<64x128xf32>
    %21 = vector.extract_strided_slice %1 {offsets = [0, 2, 0], sizes = [8, 8, 128], strides = [1, 1, 1]} : vector<10x10x128xf32> to vector<8x8x128xf32>
    %22 = vector.shape_cast %21 : vector<8x8x128xf32> to vector<64x128xf32>
    %23 = arith.truncf %22 : vector<64x128xf32> to vector<64x128xbf16>
    %c2 = arith.constant 2 : index
    %c0_21 = arith.constant 0 : index
    %c0_22 = arith.constant 0 : index
    %24 = vector.load %arg5[%c2, %c0_21, %c0_22] : memref<27x128x128xbf16, #tpu.memory_space<vmem>>, vector<1x128x128xbf16>
    %25 = vector.shape_cast %24 : vector<1x128x128xbf16> to vector<128x128xbf16>
    %cst_23 = arith.constant dense<0.000000e+00> : vector<64x128xf32>
    %26 = tpu.matmul %23, %25, %cst_23 {dimension_numbers = #tpu.dot_dimension_numbers<[1], [0], [0], [1], [0, 0, 1, 1], [], []>} : vector<64x128xbf16>, vector<128x128xbf16>, vector<64x128xf32> -> vector<64x128xf32>
    %27 = arith.addf %20, %26 : vector<64x128xf32>
    %28 = vector.extract_strided_slice %1 {offsets = [1, 0, 0], sizes = [8, 8, 128], strides = [1, 1, 1]} : vector<10x10x128xf32> to vector<8x8x128xf32>
    %29 = vector.shape_cast %28 : vector<8x8x128xf32> to vector<64x128xf32>
    %30 = arith.truncf %29 : vector<64x128xf32> to vector<64x128xbf16>
    %c3 = arith.constant 3 : index
    %c0_24 = arith.constant 0 : index
    %c0_25 = arith.constant 0 : index
    %31 = vector.load %arg5[%c3, %c0_24, %c0_25] : memref<27x128x128xbf16, #tpu.memory_space<vmem>>, vector<1x128x128xbf16>
    %32 = vector.shape_cast %31 : vector<1x128x128xbf16> to vector<128x128xbf16>
    %cst_26 = arith.constant dense<0.000000e+00> : vector<64x128xf32>
    %33 = tpu.matmul %30, %32, %cst_26 {dimension_numbers = #tpu.dot_dimension_numbers<[1], [0], [0], [1], [0, 0, 1, 1], [], []>} : vector<64x128xbf16>, vector<128x128xbf16>, vector<64x128xf32> -> vector<64x128xf32>
    %34 = arith.addf %27, %33 : vector<64x128xf32>
    %35 = vector.extract_strided_slice %1 {offsets = [1, 1, 0], sizes = [8, 8, 128], strides = [1, 1, 1]} : vector<10x10x128xf32> to vector<8x8x128xf32>
    %36 = vector.shape_cast %35 : vector<8x8x128xf32> to vector<64x128xf32>
    %37 = arith.truncf %36 : vector<64x128xf32> to vector<64x128xbf16>
    %c4 = arith.constant 4 : index
    %c0_27 = arith.constant 0 : index
    %c0_28 = arith.constant 0 : index
    %38 = vector.load %arg5[%c4, %c0_27, %c0_28] : memref<27x128x128xbf16, #tpu.memory_space<vmem>>, vector<1x128x128xbf16>
    %39 = vector.shape_cast %38 : vector<1x128x128xbf16> to vector<128x128xbf16>
    %cst_29 = arith.constant dense<0.000000e+00> : vector<64x128xf32>
    %40 = tpu.matmul %37, %39, %cst_29 {dimension_numbers = #tpu.dot_dimension_numbers<[1], [0], [0], [1], [0, 0, 1, 1], [], []>} : vector<64x128xbf16>, vector<128x128xbf16>, vector<64x128xf32> -> vector<64x128xf32>
    %41 = arith.addf %34, %40 : vector<64x128xf32>
    %42 = vector.extract_strided_slice %1 {offsets = [1, 2, 0], sizes = [8, 8, 128], strides = [1, 1, 1]} : vector<10x10x128xf32> to vector<8x8x128xf32>
    %43 = vector.shape_cast %42 : vector<8x8x128xf32> to vector<64x128xf32>
    %44 = arith.truncf %43 : vector<64x128xf32> to vector<64x128xbf16>
    %c5 = arith.constant 5 : index
    %c0_30 = arith.constant 0 : index
    %c0_31 = arith.constant 0 : index
    %45 = vector.load %arg5[%c5, %c0_30, %c0_31] : memref<27x128x128xbf16, #tpu.memory_space<vmem>>, vector<1x128x128xbf16>
    %46 = vector.shape_cast %45 : vector<1x128x128xbf16> to vector<128x128xbf16>
    %cst_32 = arith.constant dense<0.000000e+00> : vector<64x128xf32>
    %47 = tpu.matmul %44, %46, %cst_32 {dimension_numbers = #tpu.dot_dimension_numbers<[1], [0], [0], [1], [0, 0, 1, 1], [], []>} : vector<64x128xbf16>, vector<128x128xbf16>, vector<64x128xf32> -> vector<64x128xf32>
    %48 = arith.addf %41, %47 : vector<64x128xf32>
    %49 = vector.extract_strided_slice %1 {offsets = [2, 0, 0], sizes = [8, 8, 128], strides = [1, 1, 1]} : vector<10x10x128xf32> to vector<8x8x128xf32>
    %50 = vector.shape_cast %49 : vector<8x8x128xf32> to vector<64x128xf32>
    %51 = arith.truncf %50 : vector<64x128xf32> to vector<64x128xbf16>
    %c6 = arith.constant 6 : index
    %c0_33 = arith.constant 0 : index
    %c0_34 = arith.constant 0 : index
    %52 = vector.load %arg5[%c6, %c0_33, %c0_34] : memref<27x128x128xbf16, #tpu.memory_space<vmem>>, vector<1x128x128xbf16>
    %53 = vector.shape_cast %52 : vector<1x128x128xbf16> to vector<128x128xbf16>
    %cst_35 = arith.constant dense<0.000000e+00> : vector<64x128xf32>
    %54 = tpu.matmul %51, %53, %cst_35 {dimension_numbers = #tpu.dot_dimension_numbers<[1], [0], [0], [1], [0, 0, 1, 1], [], []>} : vector<64x128xbf16>, vector<128x128xbf16>, vector<64x128xf32> -> vector<64x128xf32>
    %55 = arith.addf %48, %54 : vector<64x128xf32>
    %56 = vector.extract_strided_slice %1 {offsets = [2, 1, 0], sizes = [8, 8, 128], strides = [1, 1, 1]} : vector<10x10x128xf32> to vector<8x8x128xf32>
    %57 = vector.shape_cast %56 : vector<8x8x128xf32> to vector<64x128xf32>
    %58 = arith.truncf %57 : vector<64x128xf32> to vector<64x128xbf16>
    %c7 = arith.constant 7 : index
    %c0_36 = arith.constant 0 : index
    %c0_37 = arith.constant 0 : index
    %59 = vector.load %arg5[%c7, %c0_36, %c0_37] : memref<27x128x128xbf16, #tpu.memory_space<vmem>>, vector<1x128x128xbf16>
    %60 = vector.shape_cast %59 : vector<1x128x128xbf16> to vector<128x128xbf16>
    %cst_38 = arith.constant dense<0.000000e+00> : vector<64x128xf32>
    %61 = tpu.matmul %58, %60, %cst_38 {dimension_numbers = #tpu.dot_dimension_numbers<[1], [0], [0], [1], [0, 0, 1, 1], [], []>} : vector<64x128xbf16>, vector<128x128xbf16>, vector<64x128xf32> -> vector<64x128xf32>
    %62 = arith.addf %55, %61 : vector<64x128xf32>
    %63 = vector.extract_strided_slice %1 {offsets = [2, 2, 0], sizes = [8, 8, 128], strides = [1, 1, 1]} : vector<10x10x128xf32> to vector<8x8x128xf32>
    %64 = vector.shape_cast %63 : vector<8x8x128xf32> to vector<64x128xf32>
    %65 = arith.truncf %64 : vector<64x128xf32> to vector<64x128xbf16>
    %c8 = arith.constant 8 : index
    %c0_39 = arith.constant 0 : index
    %c0_40 = arith.constant 0 : index
    %66 = vector.load %arg5[%c8, %c0_39, %c0_40] : memref<27x128x128xbf16, #tpu.memory_space<vmem>>, vector<1x128x128xbf16>
    %67 = vector.shape_cast %66 : vector<1x128x128xbf16> to vector<128x128xbf16>
    %cst_41 = arith.constant dense<0.000000e+00> : vector<64x128xf32>
    %68 = tpu.matmul %65, %67, %cst_41 {dimension_numbers = #tpu.dot_dimension_numbers<[1], [0], [0], [1], [0, 0, 1, 1], [], []>} : vector<64x128xbf16>, vector<128x128xbf16>, vector<64x128xf32> -> vector<64x128xf32>
    %69 = arith.addf %62, %68 : vector<64x128xf32>
    %70 = vector.extract_strided_slice %3 {offsets = [0, 0, 0], sizes = [8, 8, 128], strides = [1, 1, 1]} : vector<10x10x128xf32> to vector<8x8x128xf32>
    %71 = vector.shape_cast %70 : vector<8x8x128xf32> to vector<64x128xf32>
    %72 = arith.truncf %71 : vector<64x128xf32> to vector<64x128xbf16>
    %c9 = arith.constant 9 : index
    %c0_42 = arith.constant 0 : index
    %c0_43 = arith.constant 0 : index
    %73 = vector.load %arg5[%c9, %c0_42, %c0_43] : memref<27x128x128xbf16, #tpu.memory_space<vmem>>, vector<1x128x128xbf16>
    %74 = vector.shape_cast %73 : vector<1x128x128xbf16> to vector<128x128xbf16>
    %cst_44 = arith.constant dense<0.000000e+00> : vector<64x128xf32>
    %75 = tpu.matmul %72, %74, %cst_44 {dimension_numbers = #tpu.dot_dimension_numbers<[1], [0], [0], [1], [0, 0, 1, 1], [], []>} : vector<64x128xbf16>, vector<128x128xbf16>, vector<64x128xf32> -> vector<64x128xf32>
    %76 = arith.addf %69, %75 : vector<64x128xf32>
    %77 = vector.extract_strided_slice %3 {offsets = [0, 1, 0], sizes = [8, 8, 128], strides = [1, 1, 1]} : vector<10x10x128xf32> to vector<8x8x128xf32>
    %78 = vector.shape_cast %77 : vector<8x8x128xf32> to vector<64x128xf32>
    %79 = arith.truncf %78 : vector<64x128xf32> to vector<64x128xbf16>
    %c10 = arith.constant 10 : index
    %c0_45 = arith.constant 0 : index
    %c0_46 = arith.constant 0 : index
    %80 = vector.load %arg5[%c10, %c0_45, %c0_46] : memref<27x128x128xbf16, #tpu.memory_space<vmem>>, vector<1x128x128xbf16>
    %81 = vector.shape_cast %80 : vector<1x128x128xbf16> to vector<128x128xbf16>
    %cst_47 = arith.constant dense<0.000000e+00> : vector<64x128xf32>
    %82 = tpu.matmul %79, %81, %cst_47 {dimension_numbers = #tpu.dot_dimension_numbers<[1], [0], [0], [1], [0, 0, 1, 1], [], []>} : vector<64x128xbf16>, vector<128x128xbf16>, vector<64x128xf32> -> vector<64x128xf32>
    %83 = arith.addf %76, %82 : vector<64x128xf32>
    %84 = vector.extract_strided_slice %3 {offsets = [0, 2, 0], sizes = [8, 8, 128], strides = [1, 1, 1]} : vector<10x10x128xf32> to vector<8x8x128xf32>
    %85 = vector.shape_cast %84 : vector<8x8x128xf32> to vector<64x128xf32>
    %86 = arith.truncf %85 : vector<64x128xf32> to vector<64x128xbf16>
    %c11 = arith.constant 11 : index
    %c0_48 = arith.constant 0 : index
    %c0_49 = arith.constant 0 : index
    %87 = vector.load %arg5[%c11, %c0_48, %c0_49] : memref<27x128x128xbf16, #tpu.memory_space<vmem>>, vector<1x128x128xbf16>
    %88 = vector.shape_cast %87 : vector<1x128x128xbf16> to vector<128x128xbf16>
    %cst_50 = arith.constant dense<0.000000e+00> : vector<64x128xf32>
    %89 = tpu.matmul %86, %88, %cst_50 {dimension_numbers = #tpu.dot_dimension_numbers<[1], [0], [0], [1], [0, 0, 1, 1], [], []>} : vector<64x128xbf16>, vector<128x128xbf16>, vector<64x128xf32> -> vector<64x128xf32>
    %90 = arith.addf %83, %89 : vector<64x128xf32>
    %91 = vector.extract_strided_slice %3 {offsets = [1, 0, 0], sizes = [8, 8, 128], strides = [1, 1, 1]} : vector<10x10x128xf32> to vector<8x8x128xf32>
    %92 = vector.shape_cast %91 : vector<8x8x128xf32> to vector<64x128xf32>
    %93 = arith.truncf %92 : vector<64x128xf32> to vector<64x128xbf16>
    %c12 = arith.constant 12 : index
    %c0_51 = arith.constant 0 : index
    %c0_52 = arith.constant 0 : index
    %94 = vector.load %arg5[%c12, %c0_51, %c0_52] : memref<27x128x128xbf16, #tpu.memory_space<vmem>>, vector<1x128x128xbf16>
    %95 = vector.shape_cast %94 : vector<1x128x128xbf16> to vector<128x128xbf16>
    %cst_53 = arith.constant dense<0.000000e+00> : vector<64x128xf32>
    %96 = tpu.matmul %93, %95, %cst_53 {dimension_numbers = #tpu.dot_dimension_numbers<[1], [0], [0], [1], [0, 0, 1, 1], [], []>} : vector<64x128xbf16>, vector<128x128xbf16>, vector<64x128xf32> -> vector<64x128xf32>
    %97 = arith.addf %90, %96 : vector<64x128xf32>
    %98 = vector.extract_strided_slice %3 {offsets = [1, 1, 0], sizes = [8, 8, 128], strides = [1, 1, 1]} : vector<10x10x128xf32> to vector<8x8x128xf32>
    %99 = vector.shape_cast %98 : vector<8x8x128xf32> to vector<64x128xf32>
    %100 = arith.truncf %99 : vector<64x128xf32> to vector<64x128xbf16>
    %c13 = arith.constant 13 : index
    %c0_54 = arith.constant 0 : index
    %c0_55 = arith.constant 0 : index
    %101 = vector.load %arg5[%c13, %c0_54, %c0_55] : memref<27x128x128xbf16, #tpu.memory_space<vmem>>, vector<1x128x128xbf16>
    %102 = vector.shape_cast %101 : vector<1x128x128xbf16> to vector<128x128xbf16>
    %cst_56 = arith.constant dense<0.000000e+00> : vector<64x128xf32>
    %103 = tpu.matmul %100, %102, %cst_56 {dimension_numbers = #tpu.dot_dimension_numbers<[1], [0], [0], [1], [0, 0, 1, 1], [], []>} : vector<64x128xbf16>, vector<128x128xbf16>, vector<64x128xf32> -> vector<64x128xf32>
    %104 = arith.addf %97, %103 : vector<64x128xf32>
    %105 = vector.extract_strided_slice %3 {offsets = [1, 2, 0], sizes = [8, 8, 128], strides = [1, 1, 1]} : vector<10x10x128xf32> to vector<8x8x128xf32>
    %106 = vector.shape_cast %105 : vector<8x8x128xf32> to vector<64x128xf32>
    %107 = arith.truncf %106 : vector<64x128xf32> to vector<64x128xbf16>
    %c14 = arith.constant 14 : index
    %c0_57 = arith.constant 0 : index
    %c0_58 = arith.constant 0 : index
    %108 = vector.load %arg5[%c14, %c0_57, %c0_58] : memref<27x128x128xbf16, #tpu.memory_space<vmem>>, vector<1x128x128xbf16>
    %109 = vector.shape_cast %108 : vector<1x128x128xbf16> to vector<128x128xbf16>
    %cst_59 = arith.constant dense<0.000000e+00> : vector<64x128xf32>
    %110 = tpu.matmul %107, %109, %cst_59 {dimension_numbers = #tpu.dot_dimension_numbers<[1], [0], [0], [1], [0, 0, 1, 1], [], []>} : vector<64x128xbf16>, vector<128x128xbf16>, vector<64x128xf32> -> vector<64x128xf32>
    %111 = arith.addf %104, %110 : vector<64x128xf32>
    %112 = vector.extract_strided_slice %3 {offsets = [2, 0, 0], sizes = [8, 8, 128], strides = [1, 1, 1]} : vector<10x10x128xf32> to vector<8x8x128xf32>
    %113 = vector.shape_cast %112 : vector<8x8x128xf32> to vector<64x128xf32>
    %114 = arith.truncf %113 : vector<64x128xf32> to vector<64x128xbf16>
    %c15 = arith.constant 15 : index
    %c0_60 = arith.constant 0 : index
    %c0_61 = arith.constant 0 : index
    %115 = vector.load %arg5[%c15, %c0_60, %c0_61] : memref<27x128x128xbf16, #tpu.memory_space<vmem>>, vector<1x128x128xbf16>
    %116 = vector.shape_cast %115 : vector<1x128x128xbf16> to vector<128x128xbf16>
    %cst_62 = arith.constant dense<0.000000e+00> : vector<64x128xf32>
    %117 = tpu.matmul %114, %116, %cst_62 {dimension_numbers = #tpu.dot_dimension_numbers<[1], [0], [0], [1], [0, 0, 1, 1], [], []>} : vector<64x128xbf16>, vector<128x128xbf16>, vector<64x128xf32> -> vector<64x128xf32>
    %118 = arith.addf %111, %117 : vector<64x128xf32>
    %119 = vector.extract_strided_slice %3 {offsets = [2, 1, 0], sizes = [8, 8, 128], strides = [1, 1, 1]} : vector<10x10x128xf32> to vector<8x8x128xf32>
    %120 = vector.shape_cast %119 : vector<8x8x128xf32> to vector<64x128xf32>
    %121 = arith.truncf %120 : vector<64x128xf32> to vector<64x128xbf16>
    %c16 = arith.constant 16 : index
    %c0_63 = arith.constant 0 : index
    %c0_64 = arith.constant 0 : index
    %122 = vector.load %arg5[%c16, %c0_63, %c0_64] : memref<27x128x128xbf16, #tpu.memory_space<vmem>>, vector<1x128x128xbf16>
    %123 = vector.shape_cast %122 : vector<1x128x128xbf16> to vector<128x128xbf16>
    %cst_65 = arith.constant dense<0.000000e+00> : vector<64x128xf32>
    %124 = tpu.matmul %121, %123, %cst_65 {dimension_numbers = #tpu.dot_dimension_numbers<[1], [0], [0], [1], [0, 0, 1, 1], [], []>} : vector<64x128xbf16>, vector<128x128xbf16>, vector<64x128xf32> -> vector<64x128xf32>
    %125 = arith.addf %118, %124 : vector<64x128xf32>
    %126 = vector.extract_strided_slice %3 {offsets = [2, 2, 0], sizes = [8, 8, 128], strides = [1, 1, 1]} : vector<10x10x128xf32> to vector<8x8x128xf32>
    %127 = vector.shape_cast %126 : vector<8x8x128xf32> to vector<64x128xf32>
    %128 = arith.truncf %127 : vector<64x128xf32> to vector<64x128xbf16>
    %c17 = arith.constant 17 : index
    %c0_66 = arith.constant 0 : index
    %c0_67 = arith.constant 0 : index
    %129 = vector.load %arg5[%c17, %c0_66, %c0_67] : memref<27x128x128xbf16, #tpu.memory_space<vmem>>, vector<1x128x128xbf16>
    %130 = vector.shape_cast %129 : vector<1x128x128xbf16> to vector<128x128xbf16>
    %cst_68 = arith.constant dense<0.000000e+00> : vector<64x128xf32>
    %131 = tpu.matmul %128, %130, %cst_68 {dimension_numbers = #tpu.dot_dimension_numbers<[1], [0], [0], [1], [0, 0, 1, 1], [], []>} : vector<64x128xbf16>, vector<128x128xbf16>, vector<64x128xf32> -> vector<64x128xf32>
    %132 = arith.addf %125, %131 : vector<64x128xf32>
    %133 = vector.extract_strided_slice %5 {offsets = [0, 0, 0], sizes = [8, 8, 128], strides = [1, 1, 1]} : vector<10x10x128xf32> to vector<8x8x128xf32>
    %134 = vector.shape_cast %133 : vector<8x8x128xf32> to vector<64x128xf32>
    %135 = arith.truncf %134 : vector<64x128xf32> to vector<64x128xbf16>
    %c18 = arith.constant 18 : index
    %c0_69 = arith.constant 0 : index
    %c0_70 = arith.constant 0 : index
    %136 = vector.load %arg5[%c18, %c0_69, %c0_70] : memref<27x128x128xbf16, #tpu.memory_space<vmem>>, vector<1x128x128xbf16>
    %137 = vector.shape_cast %136 : vector<1x128x128xbf16> to vector<128x128xbf16>
    %cst_71 = arith.constant dense<0.000000e+00> : vector<64x128xf32>
    %138 = tpu.matmul %135, %137, %cst_71 {dimension_numbers = #tpu.dot_dimension_numbers<[1], [0], [0], [1], [0, 0, 1, 1], [], []>} : vector<64x128xbf16>, vector<128x128xbf16>, vector<64x128xf32> -> vector<64x128xf32>
    %139 = arith.addf %132, %138 : vector<64x128xf32>
    %140 = vector.extract_strided_slice %5 {offsets = [0, 1, 0], sizes = [8, 8, 128], strides = [1, 1, 1]} : vector<10x10x128xf32> to vector<8x8x128xf32>
    %141 = vector.shape_cast %140 : vector<8x8x128xf32> to vector<64x128xf32>
    %142 = arith.truncf %141 : vector<64x128xf32> to vector<64x128xbf16>
    %c19 = arith.constant 19 : index
    %c0_72 = arith.constant 0 : index
    %c0_73 = arith.constant 0 : index
    %143 = vector.load %arg5[%c19, %c0_72, %c0_73] : memref<27x128x128xbf16, #tpu.memory_space<vmem>>, vector<1x128x128xbf16>
    %144 = vector.shape_cast %143 : vector<1x128x128xbf16> to vector<128x128xbf16>
    %cst_74 = arith.constant dense<0.000000e+00> : vector<64x128xf32>
    %145 = tpu.matmul %142, %144, %cst_74 {dimension_numbers = #tpu.dot_dimension_numbers<[1], [0], [0], [1], [0, 0, 1, 1], [], []>} : vector<64x128xbf16>, vector<128x128xbf16>, vector<64x128xf32> -> vector<64x128xf32>
    %146 = arith.addf %139, %145 : vector<64x128xf32>
    %147 = vector.extract_strided_slice %5 {offsets = [0, 2, 0], sizes = [8, 8, 128], strides = [1, 1, 1]} : vector<10x10x128xf32> to vector<8x8x128xf32>
    %148 = vector.shape_cast %147 : vector<8x8x128xf32> to vector<64x128xf32>
    %149 = arith.truncf %148 : vector<64x128xf32> to vector<64x128xbf16>
    %c20 = arith.constant 20 : index
    %c0_75 = arith.constant 0 : index
    %c0_76 = arith.constant 0 : index
    %150 = vector.load %arg5[%c20, %c0_75, %c0_76] : memref<27x128x128xbf16, #tpu.memory_space<vmem>>, vector<1x128x128xbf16>
    %151 = vector.shape_cast %150 : vector<1x128x128xbf16> to vector<128x128xbf16>
    %cst_77 = arith.constant dense<0.000000e+00> : vector<64x128xf32>
    %152 = tpu.matmul %149, %151, %cst_77 {dimension_numbers = #tpu.dot_dimension_numbers<[1], [0], [0], [1], [0, 0, 1, 1], [], []>} : vector<64x128xbf16>, vector<128x128xbf16>, vector<64x128xf32> -> vector<64x128xf32>
    %153 = arith.addf %146, %152 : vector<64x128xf32>
    %154 = vector.extract_strided_slice %5 {offsets = [1, 0, 0], sizes = [8, 8, 128], strides = [1, 1, 1]} : vector<10x10x128xf32> to vector<8x8x128xf32>
    %155 = vector.shape_cast %154 : vector<8x8x128xf32> to vector<64x128xf32>
    %156 = arith.truncf %155 : vector<64x128xf32> to vector<64x128xbf16>
    %c21 = arith.constant 21 : index
    %c0_78 = arith.constant 0 : index
    %c0_79 = arith.constant 0 : index
    %157 = vector.load %arg5[%c21, %c0_78, %c0_79] : memref<27x128x128xbf16, #tpu.memory_space<vmem>>, vector<1x128x128xbf16>
    %158 = vector.shape_cast %157 : vector<1x128x128xbf16> to vector<128x128xbf16>
    %cst_80 = arith.constant dense<0.000000e+00> : vector<64x128xf32>
    %159 = tpu.matmul %156, %158, %cst_80 {dimension_numbers = #tpu.dot_dimension_numbers<[1], [0], [0], [1], [0, 0, 1, 1], [], []>} : vector<64x128xbf16>, vector<128x128xbf16>, vector<64x128xf32> -> vector<64x128xf32>
    %160 = arith.addf %153, %159 : vector<64x128xf32>
    %161 = vector.extract_strided_slice %5 {offsets = [1, 1, 0], sizes = [8, 8, 128], strides = [1, 1, 1]} : vector<10x10x128xf32> to vector<8x8x128xf32>
    %162 = vector.shape_cast %161 : vector<8x8x128xf32> to vector<64x128xf32>
    %163 = arith.truncf %162 : vector<64x128xf32> to vector<64x128xbf16>
    %c22 = arith.constant 22 : index
    %c0_81 = arith.constant 0 : index
    %c0_82 = arith.constant 0 : index
    %164 = vector.load %arg5[%c22, %c0_81, %c0_82] : memref<27x128x128xbf16, #tpu.memory_space<vmem>>, vector<1x128x128xbf16>
    %165 = vector.shape_cast %164 : vector<1x128x128xbf16> to vector<128x128xbf16>
    %cst_83 = arith.constant dense<0.000000e+00> : vector<64x128xf32>
    %166 = tpu.matmul %163, %165, %cst_83 {dimension_numbers = #tpu.dot_dimension_numbers<[1], [0], [0], [1], [0, 0, 1, 1], [], []>} : vector<64x128xbf16>, vector<128x128xbf16>, vector<64x128xf32> -> vector<64x128xf32>
    %167 = arith.addf %160, %166 : vector<64x128xf32>
    %168 = vector.extract_strided_slice %5 {offsets = [1, 2, 0], sizes = [8, 8, 128], strides = [1, 1, 1]} : vector<10x10x128xf32> to vector<8x8x128xf32>
    %169 = vector.shape_cast %168 : vector<8x8x128xf32> to vector<64x128xf32>
    %170 = arith.truncf %169 : vector<64x128xf32> to vector<64x128xbf16>
    %c23 = arith.constant 23 : index
    %c0_84 = arith.constant 0 : index
    %c0_85 = arith.constant 0 : index
    %171 = vector.load %arg5[%c23, %c0_84, %c0_85] : memref<27x128x128xbf16, #tpu.memory_space<vmem>>, vector<1x128x128xbf16>
    %172 = vector.shape_cast %171 : vector<1x128x128xbf16> to vector<128x128xbf16>
    %cst_86 = arith.constant dense<0.000000e+00> : vector<64x128xf32>
    %173 = tpu.matmul %170, %172, %cst_86 {dimension_numbers = #tpu.dot_dimension_numbers<[1], [0], [0], [1], [0, 0, 1, 1], [], []>} : vector<64x128xbf16>, vector<128x128xbf16>, vector<64x128xf32> -> vector<64x128xf32>
    %174 = arith.addf %167, %173 : vector<64x128xf32>
    %175 = vector.extract_strided_slice %5 {offsets = [2, 0, 0], sizes = [8, 8, 128], strides = [1, 1, 1]} : vector<10x10x128xf32> to vector<8x8x128xf32>
    %176 = vector.shape_cast %175 : vector<8x8x128xf32> to vector<64x128xf32>
    %177 = arith.truncf %176 : vector<64x128xf32> to vector<64x128xbf16>
    %c24 = arith.constant 24 : index
    %c0_87 = arith.constant 0 : index
    %c0_88 = arith.constant 0 : index
    %178 = vector.load %arg5[%c24, %c0_87, %c0_88] : memref<27x128x128xbf16, #tpu.memory_space<vmem>>, vector<1x128x128xbf16>
    %179 = vector.shape_cast %178 : vector<1x128x128xbf16> to vector<128x128xbf16>
    %cst_89 = arith.constant dense<0.000000e+00> : vector<64x128xf32>
    %180 = tpu.matmul %177, %179, %cst_89 {dimension_numbers = #tpu.dot_dimension_numbers<[1], [0], [0], [1], [0, 0, 1, 1], [], []>} : vector<64x128xbf16>, vector<128x128xbf16>, vector<64x128xf32> -> vector<64x128xf32>
    %181 = arith.addf %174, %180 : vector<64x128xf32>
    %182 = vector.extract_strided_slice %5 {offsets = [2, 1, 0], sizes = [8, 8, 128], strides = [1, 1, 1]} : vector<10x10x128xf32> to vector<8x8x128xf32>
    %183 = vector.shape_cast %182 : vector<8x8x128xf32> to vector<64x128xf32>
    %184 = arith.truncf %183 : vector<64x128xf32> to vector<64x128xbf16>
    %c25 = arith.constant 25 : index
    %c0_90 = arith.constant 0 : index
    %c0_91 = arith.constant 0 : index
    %185 = vector.load %arg5[%c25, %c0_90, %c0_91] : memref<27x128x128xbf16, #tpu.memory_space<vmem>>, vector<1x128x128xbf16>
    %186 = vector.shape_cast %185 : vector<1x128x128xbf16> to vector<128x128xbf16>
    %cst_92 = arith.constant dense<0.000000e+00> : vector<64x128xf32>
    %187 = tpu.matmul %184, %186, %cst_92 {dimension_numbers = #tpu.dot_dimension_numbers<[1], [0], [0], [1], [0, 0, 1, 1], [], []>} : vector<64x128xbf16>, vector<128x128xbf16>, vector<64x128xf32> -> vector<64x128xf32>
    %188 = arith.addf %181, %187 : vector<64x128xf32>
    %189 = vector.extract_strided_slice %5 {offsets = [2, 2, 0], sizes = [8, 8, 128], strides = [1, 1, 1]} : vector<10x10x128xf32> to vector<8x8x128xf32>
    %190 = vector.shape_cast %189 : vector<8x8x128xf32> to vector<64x128xf32>
    %191 = arith.truncf %190 : vector<64x128xf32> to vector<64x128xbf16>
    %c26 = arith.constant 26 : index
    %c0_93 = arith.constant 0 : index
    %c0_94 = arith.constant 0 : index
    %192 = vector.load %arg5[%c26, %c0_93, %c0_94] : memref<27x128x128xbf16, #tpu.memory_space<vmem>>, vector<1x128x128xbf16>
    %193 = vector.shape_cast %192 : vector<1x128x128xbf16> to vector<128x128xbf16>
    %cst_95 = arith.constant dense<0.000000e+00> : vector<64x128xf32>
    %194 = tpu.matmul %191, %193, %cst_95 {dimension_numbers = #tpu.dot_dimension_numbers<[1], [0], [0], [1], [0, 0, 1, 1], [], []>} : vector<64x128xbf16>, vector<128x128xbf16>, vector<64x128xf32> -> vector<64x128xf32>
    %195 = arith.addf %188, %194 : vector<64x128xf32>
    %196 = vector.shape_cast %195 : vector<64x128xf32> to vector<1x1x8x8x128xf32>
    %c0_96 = arith.constant 0 : index
    %c0_97 = arith.constant 0 : index
    %c0_98 = arith.constant 0 : index
    %c0_99 = arith.constant 0 : index
    %c0_100 = arith.constant 0 : index
    %197 = vector.load %arg6[%c0_96, %c0_97, %c0_98, %c0_99, %c0_100] : memref<1x1x8x8x128xf32, #tpu.memory_space<vmem>>, vector<1x1x8x8x128xf32>
    tpu.vector_store %arg6[%c0_96, %c0_97, %c0_98, %c0_99, %c0_100], %196 {strides = array<i32>} : memref<1x1x8x8x128xf32, #tpu.memory_space<vmem>>, vector<1x1x8x8x128xf32>,
    %cst_101 = arith.constant dense<0.000000e+00> : vector<128xf32>
    %198 = vector.multi_reduction <add>, %195, %cst_101 [0] : vector<64x128xf32> to vector<128xf32>
    %199 = vector.shape_cast %198 : vector<128xf32> to vector<1x128xf32>
    %200 = arith.mulf %195, %195 : vector<64x128xf32>
    %cst_102 = arith.constant dense<0.000000e+00> : vector<128xf32>
    %201 = vector.multi_reduction <add>, %200, %cst_102 [0] : vector<64x128xf32> to vector<128xf32>
    %202 = vector.shape_cast %201 : vector<128xf32> to vector<1x128xf32>
    %203 = tpu.concatenate %199, %202 in 0 : vector<1x128xf32>, vector<1x128xf32> -> vector<2x128xf32>
    %204 = vector.shape_cast %203 : vector<2x128xf32> to vector<1x1x2x128xf32>
    %c0_103 = arith.constant 0 : index
    %c0_104 = arith.constant 0 : index
    %c0_105 = arith.constant 0 : index
    %c0_106 = arith.constant 0 : index
    %205 = vector.load %arg7[%c0_103, %c0_104, %c0_105, %c0_106] : memref<1x1x2x128xf32, #tpu.memory_space<vmem>>, vector<1x1x2x128xf32>
    tpu.vector_store %arg7[%c0_103, %c0_104, %c0_105, %c0_106], %204 {strides = array<i32>} : memref<1x1x2x128xf32, #tpu.memory_space<vmem>>, vector<1x1x2x128xf32>,
    return
  }
  func.func @transform_0(%arg0: i32, %arg1: i32) -> (i32, i32, i32, i32, i32) {
    %c0_i32 = arith.constant 0 : i32
    %c0_i32_0 = arith.constant 0 : i32
    %c0_i32_1 = arith.constant 0 : i32
    %c0_i32_2 = arith.constant 0 : i32
    return %arg0, %arg1, %c0_i32, %c0_i32_0, %c0_i32_1 : i32, i32, i32, i32, i32
  }
  func.func @transform_1(%arg0: i32, %arg1: i32) -> (i32, i32, i32, i32, i32) {
    %c1_i32 = arith.constant 1 : i32
    %0 = arith.addi %arg1, %c1_i32 : i32
    %c0_i32 = arith.constant 0 : i32
    %c0_i32_0 = arith.constant 0 : i32
    %c0_i32_1 = arith.constant 0 : i32
    %c0_i32_2 = arith.constant 0 : i32
    return %arg0, %0, %c0_i32, %c0_i32_0, %c0_i32_1 : i32, i32, i32, i32, i32
  }
  func.func @transform_2(%arg0: i32, %arg1: i32) -> (i32, i32, i32, i32, i32) {
    %c2_i32 = arith.constant 2 : i32
    %0 = arith.addi %arg1, %c2_i32 : i32
    %c0_i32 = arith.constant 0 : i32
    %c0_i32_0 = arith.constant 0 : i32
    %c0_i32_1 = arith.constant 0 : i32
    %c0_i32_2 = arith.constant 0 : i32
    return %arg0, %0, %c0_i32, %c0_i32_0, %c0_i32_1 : i32, i32, i32, i32, i32
  }
  func.func @transform_3(%arg0: i32, %arg1: i32) -> (i32, i32, i32) {
    %c0_i32 = arith.constant 0 : i32
    %c0_i32_0 = arith.constant 0 : i32
    %c0_i32_1 = arith.constant 0 : i32
    %c0_i32_2 = arith.constant 0 : i32
    return %c0_i32, %c0_i32_0, %c0_i32_1 : i32, i32, i32
  }
  func.func @transform_4(%arg0: i32, %arg1: i32) -> (i32, i32, i32, i32, i32) {
    %c0_i32 = arith.constant 0 : i32
    %c0_i32_0 = arith.constant 0 : i32
    %c0_i32_1 = arith.constant 0 : i32
    %c0_i32_2 = arith.constant 0 : i32
    return %arg0, %arg1, %c0_i32, %c0_i32_0, %c0_i32_1 : i32, i32, i32, i32, i32
  }
  func.func @transform_5(%arg0: i32, %arg1: i32) -> (i32, i32, i32, i32) {
    %c0_i32 = arith.constant 0 : i32
    %c0_i32_0 = arith.constant 0 : i32
    %c0_i32_1 = arith.constant 0 : i32
    return %arg0, %arg1, %c0_i32, %c0_i32_0 : i32, i32, i32, i32
  }
}

</mosaic_0001>

<llo_original>
// kernel: double_conv3d.5
$region0: #{double_conv3d.5}
  #allocation0 [shape = 'u32[]', space=smem, size = 0x4, offset = 0x4, fixed_abs, tag = 'smem constant byte address 0x4 - core index']
  #allocation1 [shape = 'u32[144,128]{1,0:T(1,128)}', space=vmem, size = 0x12000, scoped, tag = 'internal scratch']
  %s0 = inlined_call_operand.vmem [shape: f32[2,8,8,8,128], index: 0, kind: input, shape index: {}]
  %s1 = inlined_call_operand.vmem [shape: f32[2,128], index: 1, kind: input, shape index: {}]
  %s2 = inlined_call_operand.vmem [shape: f32[2,8,8,8,128], index: 2, kind: output, shape index: {}]
  %s3 = sld [smem:[#allocation0]]
  $region41: #{double_conv3d.5} parent=0
    _
  %s5 = ssub.s32 1, %s3
  %s6 = scalar_select 0, %s5, %s3
  loop: start=0, step=1, limit=18
  $region2: #{double_conv3d.5} parent=0 // loop_pre_header
    _
  $region3: #{double_conv3d.5} parent=0 // loop_header
    %s8 = sphi 0, %s12
    %p9 = scmp.ge.s32.totalorder %s8, 18
    %s15 = sphi 0, %s27
    %s16 = sphi 0, %s23
    %s17 = sphi 0, %s15
    %s18 = sphi 0, %s16
    %s19 = sphi 0, %s17
    %s20 = sphi 0, %s18
    %s32 = sphi 0, %s34
    %s35 = sphi 0, %s32
    %s36 = sphi 0, %s35
    %s52 = sphi 0, %s36
    %s56 = sphi 0, %s56
    %s58 = sphi 0, %s56
    %s59 = sphi 0, %s58
    %s73 = sphi 0, %s59
    %s81 = sphi 0, %s83
    %s84 = sphi 0, %s81
    %s85 = sphi 0, %s84
    %s101 = sphi 0, %s85
  $region4: #{double_conv3d.5} parent=0 // loop_header_branch
    %11 = sbr.rel (%p9) target = $region8
  $region5: #{double_conv3d.5} parent=0 // loop_body
    %s13 = ssub.s32 %s8, 1
    %s14 = ssub.s32 %s8, 2
    %s21 = sadd.s32 1, %s16
    %p22 = scmp.ge.s32.totalorder %s21, 8
    %s23 = scalar_select %p22, 0, %s21
    %s24 = sadd.s32 1, %s15
    %s25 = scalar_select %p22, %s24, %s15
    %p26 = scmp.ge.s32.totalorder %s25, 2
    %s27 = scalar_select %p26, 0, %s25
    %s28 = ssub.s32 %s15, %s27
    %s29 = ssub.s32 %s16, %s23
    %s30 = sor.u32 %s28, %s29
    %p31 = scmp.eq.s32.totalorder %s30, 0
    %s33 = sadd.s32 %s32, 1
    %s34 = scalar_select %p31, %s32, %s33
    %p37 = pneg %p31
    %p38 = scmp.eq.s32.totalorder %s8, 15
    %p39 = por %p37, %p38
    %p40 = scmp.ne.s32.totalorder %s32, %s35
    %p41 = scmp.eq.s32.totalorder %s8, 0
    %p42 = por %p40, %p41
    %p43 = scmp.ne.s32.totalorder %s32, %s35
    %p44 = scmp.eq.s32.totalorder %s13, 15
    %p45 = por %p43, %p44
    %p46 = scmp.ne.s32.totalorder %s35, %s36
    %p47 = scmp.eq.s32.totalorder %s13, 0
    %p48 = por %p46, %p47
    %p49 = scmp.ne.s32.totalorder %s35, %s36
    %p50 = scmp.eq.s32.totalorder %s14, 15
    %p51 = por %p49, %p50
    %p53 = scmp.ne.s32.totalorder %s36, %s52
    %p54 = scmp.eq.s32.totalorder %s14, 0
    %p55 = por %p53, %p54
    %s57 = sadd.s32 %s56, 1
    %p60 = scmp.eq.s32.totalorder %s8, 15
    %p61 = scmp.ne.s32.totalorder %s56, %s58
    %p62 = scmp.eq.s32.totalorder %s8, 0
    %p63 = por %p61, %p62
    %p64 = scmp.ne.s32.totalorder %s56, %s58
    %p65 = scmp.eq.s32.totalorder %s13, 15
    %p66 = por %p64, %p65
    %p67 = scmp.ne.s32.totalorder %s58, %s59
    %p68 = scmp.eq.s32.totalorder %s13, 0
    %p69 = por %p67, %p68
    %p70 = scmp.ne.s32.totalorder %s58, %s59
    %p71 = scmp.eq.s32.totalorder %s14, 15
    %p72 = por %p70, %p71
    %p74 = scmp.ne.s32.totalorder %s59, %s73
    %p75 = scmp.eq.s32.totalorder %s14, 0
    %p76 = por %p74, %p75
    %s77 = ssub.s32 %s15, %s27
    %s78 = ssub.s32 %s16, %s23
    %s79 = sor.u32 %s77, %s78
    %p80 = scmp.eq.s32.totalorder %s79, 0
    %s82 = sadd.s32 %s81, 1
    %s83 = scalar_select %p80, %s81, %s82
    %p86 = pneg %p80
    %p87 = scmp.eq.s32.totalorder %s8, 15
    %p88 = por %p86, %p87
    %p89 = scmp.ne.s32.totalorder %s81, %s84
    %p90 = scmp.eq.s32.totalorder %s8, 0
    %p91 = por %p89, %p90
    %p92 = scmp.ne.s32.totalorder %s81, %s84
    %p93 = scmp.eq.s32.totalorder %s13, 15
    %p94 = por %p92, %p93
    %p95 = scmp.ne.s32.totalorder %s84, %s85
    %p96 = scmp.eq.s32.totalorder %s13, 0
    %p97 = por %p95, %p96
    %p98 = scmp.ne.s32.totalorder %s84, %s85
    %p99 = scmp.eq.s32.totalorder %s14, 15
    %p100 = por %p98, %p99
    %p102 = scmp.ne.s32.totalorder %s85, %s101
    %p103 = scmp.eq.s32.totalorder %s14, 0
    %p104 = por %p102, %p103
    %p105 = scmp.le.s32.totalorder 1, %s8
    %p106 = scmp.lt.s32.totalorder %s8, 17
    %p107 = pnand %p105, %p106
    %p108 = pneg %p107
    // Predicated region
    $region9: #{double_conv3d.5} parent=5 // pred_check
      _
    $region10: #{double_conv3d.5} parent=5 // pred_check_branch
      %110 = sbr.rel (%p107) target = $region12
    $region11: #{double_conv3d.5} parent=5 // pred_region
      %s111 = ssub.s32 %s8, 1
      // Predicated region
      $region13: #{double_conv3d.5} parent=11 // pred_check
        %p112 = pneg %p69
      $region14: #{double_conv3d.5} parent=11 // pred_check_branch
        %114 = sbr.rel (%p112) target = $region16
      $region15: #{double_conv3d.5} parent=11 // pred_region
        _
      $region16: #{double_conv3d.5} parent=11 // pred_fallthru
        _
    $region12: #{double_conv3d.5} parent=5 // pred_fallthru
      _
    %p115 = scmp.lt.s32.totalorder %s8, 16
    // Predicated region
    $region17: #{double_conv3d.5} parent=5 // pred_check
      %p116 = pneg %p115
    $region18: #{double_conv3d.5} parent=5 // pred_check_branch
      %118 = sbr.rel (%p116) target = $region20
    $region19: #{double_conv3d.5} parent=5 // pred_region
      // Predicated region
      $region21: #{double_conv3d.5} parent=19 // pred_check
        %p119 = pneg %p42
      $region22: #{double_conv3d.5} parent=19 // pred_check_branch
        %121 = sbr.rel (%p119) target = $region24
      $region23: #{double_conv3d.5} parent=19 // pred_region
        %p122 = scmp.lt.s32.totalorder %s15, 1
        %s123 = scalar_select %p122, %s15, 1
        %p124 = scmp.lt.s32.totalorder %s16, 7
        %s125 = scalar_select %p124, %s16, 7
        %s126 = smul.addr %s125, 8
        %s127 = smul.addr %s123, 64
        %s128 = sadd.s32 %s126, %s127
        %s129 = smul.addr %s128, 8
        %s130 = scalar_lea.vmem %s0, %s129
      $region24: #{double_conv3d.5} parent=19 // pred_fallthru
        _
    $region20: #{double_conv3d.5} parent=5 // pred_fallthru
      _
    %p131 = scmp.le.s32.totalorder 1, %s8
    %p132 = scmp.lt.s32.totalorder %s8, 17
    %p133 = pnand %p131, %p132
    %p134 = pneg %p133
    // Predicated region
    $region25: #{double_conv3d.5} parent=5 // pred_check
      _
    $region26: #{double_conv3d.5} parent=5 // pred_check_branch
      %136 = sbr.rel (%p133) target = $region28
    $region27: #{double_conv3d.5} parent=5 // pred_region
      %s137 = ssub.s32 %s8, 1
      %p138 = scmp.lt.s32.totalorder %s17, 1
      %s139 = scalar_select %p138, %s17, 1
      %p140 = scmp.lt.s32.totalorder %s18, 7
      %s141 = scalar_select %p140, %s18, 7
      %s142 = smul.addr %s141, 8
      %s143 = smul.addr %s139, 64
      %s144 = sadd.s32 %s142, %s143
      %s145 = smul.addr %s144, 8
      %s146 = scalar_lea.vmem %s0, %s145
      %p147 = pneg %p48
      %p148 = pneg %p45
      %p149 = pneg %p69
      %p150 = pneg %p66
      %p151 = pneg %p97
      %p152 = pneg %p94
      %p153 = scmp.lt.s32.totalorder %s17, 1
      %s154 = scalar_select %p153, %s17, 1
      %p155 = scmp.lt.s32.totalorder %s18, 7
      %s156 = scalar_select %p155, %s18, 7
      %s157 = smul.addr %s156, 8
      %s158 = smul.addr %s154, 64
      %s159 = sadd.s32 %s157, %s158
      %s160 = smul.addr %s159, 8
      %s161 = scalar_lea.vmem %s2, %s160
      %p162 = scmp.lt.s32.totalorder %s17, 1
      %s163 = scalar_select %p162, %s17, 1
      %p164 = scmp.lt.s32.totalorder %s18, 7
      %s165 = scalar_select %p164, %s18, 7
      %s166 = smul.addr %s165, 8
      %s167 = smul.addr %s163, 64
      %s168 = sadd.s32 %s166, %s167
      %s169 = smul.addr %s168, 8
      %s170 = scalar_lea.vmem %s0, %s169
      %p171 = scmp.lt.s32.totalorder %s17, 1
      %s172 = scalar_select %p171, %s17, 1
      %p173 = scmp.lt.s32.totalorder %s18, 7
      %s174 = scalar_select %p173, %s18, 7
      %s175 = smul.addr %s174, 8
      %s176 = smul.addr %s172, 64
      %s177 = sadd.s32 %s175, %s176
      %s178 = smul.addr %s177, 8
      %s179 = scalar_lea.vmem %s2, %s178
      %v180 = vld [vmem:[%s170] sm:$0xff]
      %v181 = vld [vmem:[%s170 + $0x8] sm:$0xff]
      %v182 = vld [vmem:[%s170 + $0x10] sm:$0xff]
      %v183 = vld [vmem:[%s170 + $0x18] sm:$0xff]
      %v184 = vld [vmem:[%s170 + $0x20] sm:$0xff]
      %v185 = vld [vmem:[%s170 + $0x28] sm:$0xff]
      %v186 = vld [vmem:[%s170 + $0x30] sm:$0xff]
      %v187 = vld [vmem:[%s170 + $0x38] sm:$0xff]
      %v188 = vld [vmem:[%s1] sm:$0x1]
      %v189 = vld [vmem:[%s1 + $0x1] sm:$0x1]
      %v190 = vlaneseq
      %v191 = vshrl.u32 %v190, 7
      %v192 = vsub.s32 0, %v191
      %v193 = vrot.slane %v188, %v192
      %v194 = vmul.f32 %v180, %v193
      %v195 = vmul.f32 %v181, %v193
      %v196 = vmul.f32 %v182, %v193
      %v197 = vmul.f32 %v183, %v193
      %v198 = vmul.f32 %v184, %v193
      %v199 = vmul.f32 %v185, %v193
      %v200 = vmul.f32 %v186, %v193
      %v201 = vmul.f32 %v187, %v193
      %v202 = vlaneseq
      %v203 = vshrl.u32 %v202, 7
      %v204 = vsub.s32 0, %v203
      %v205 = vrot.slane %v189, %v204
      %v206 = vadd.f32 %v194, %v205
      %v207 = vadd.f32 %v195, %v205
      %v208 = vadd.f32 %v196, %v205
      %v209 = vadd.f32 %v197, %v205
      %v210 = vadd.f32 %v198, %v205
      %v211 = vadd.f32 %v199, %v205
      %v212 = vadd.f32 %v200, %v205
      %v213 = vadd.f32 %v201, %v205
      %v214 = vmax.f32 %v206, 0.0
      %v215 = vmax.f32 %v207, 0.0
      %v216 = vmax.f32 %v208, 0.0
      %v217 = vmax.f32 %v209, 0.0
      %v218 = vmax.f32 %v210, 0.0
      %v219 = vmax.f32 %v211, 0.0
      %v220 = vmax.f32 %v212, 0.0
      %v221 = vmax.f32 %v213, 0.0
      %222 = vst [vmem:[%s179] sm:$0xff] %v214
      %223 = vst [vmem:[%s179 + $0x8] sm:$0xff] %v215
      %224 = vst [vmem:[%s179 + $0x10] sm:$0xff] %v216
      %225 = vst [vmem:[%s179 + $0x18] sm:$0xff] %v217
      %226 = vst [vmem:[%s179 + $0x20] sm:$0xff] %v218
      %227 = vst [vmem:[%s179 + $0x28] sm:$0xff] %v219
      %228 = vst [vmem:[%s179 + $0x30] sm:$0xff] %v220
      %229 = vst [vmem:[%s179 + $0x38] sm:$0xff] %v221
      %p230 = scmp.lt.s32.totalorder %s17, 1
      %s231 = scalar_select %p230, %s17, 1
      %p232 = scmp.lt.s32.totalorder %s18, 7
      %s233 = scalar_select %p232, %s18, 7
      %s234 = smul.addr %s233, 8
      %s235 = smul.addr %s231, 64
      %s236 = sadd.s32 %s234, %s235
      %s237 = smul.addr %s236, 8
      %s238 = scalar_lea.vmem %s2, %s237
      // Predicated region
      $region29: #{double_conv3d.5} parent=27 // pred_check
        %p239 = pneg %p94
      $region30: #{double_conv3d.5} parent=27 // pred_check_branch
        %241 = sbr.rel (%p239) target = $region32
      $region31: #{double_conv3d.5} parent=27 // pred_region
        _
      $region32: #{double_conv3d.5} parent=27 // pred_fallthru
        _
    $region28: #{double_conv3d.5} parent=5 // pred_fallthru
      _
    %p242 = scmp.le.s32.totalorder 2, %s8
    // Predicated region
    $region33: #{double_conv3d.5} parent=5 // pred_check
      %p243 = pneg %p242
    $region34: #{double_conv3d.5} parent=5 // pred_check_branch
      %245 = sbr.rel (%p243) target = $region36
    $region35: #{double_conv3d.5} parent=5 // pred_region
      %s246 = ssub.s32 %s8, 2
      // Predicated region
      $region37: #{double_conv3d.5} parent=35 // pred_check
        %p247 = pneg %p100
      $region38: #{double_conv3d.5} parent=35 // pred_check_branch
        %249 = sbr.rel (%p247) target = $region40
      $region39: #{double_conv3d.5} parent=35 // pred_region
        %p250 = scmp.lt.s32.totalorder %s19, 1
        %s251 = scalar_select %p250, %s19, 1
        %p252 = scmp.lt.s32.totalorder %s20, 7
        %s253 = scalar_select %p252, %s20, 7
        %s254 = smul.addr %s253, 8
        %s255 = smul.addr %s251, 64
        %s256 = sadd.s32 %s254, %s255
        %s257 = smul.addr %s256, 8
        %s258 = scalar_lea.vmem %s2, %s257
      $region40: #{double_conv3d.5} parent=35 // pred_fallthru
        _
    $region36: #{double_conv3d.5} parent=5 // pred_fallthru
      _
  $region6: #{double_conv3d.5} parent=0 // loop_footer
    %s12 = sadd.s32 1, %s8
  $region7: #{double_conv3d.5} parent=0 // loop_footer_branch
    %7 = sbr.rel target = $region3
  $region8: #{double_conv3d.5} parent=0 // loop_exit
    _

// kernel: double_conv3d.4
$region0: #{double_conv3d.4}
  #allocation0 [shape = 'u32[]', space=smem, size = 0x4, offset = 0x4, fixed_abs, tag = 'smem constant byte address 0x4 - core index']
  #allocation1 [shape = 'u32[144,128]{1,0:T(1,128)}', space=vmem, size = 0x12000, scoped, tag = 'internal scratch']
  %s0 = inlined_call_operand.vmem [shape: f32[2,10,10,10,8], index: 0, kind: input, shape index: {}, may-alias: {0,1,2}]
  %s1 = inlined_call_operand.vmem [shape: f32[2,10,10,10,8], index: 1, kind: input, shape index: {}, may-alias: {0,1,2}]
  %s2 = inlined_call_operand.vmem [shape: f32[2,10,10,10,8], index: 2, kind: input, shape index: {}, may-alias: {0,1,2}]
  %s3 = inlined_call_operand.vmem [shape: bf16[27,8,128], index: 3, kind: input, shape index: {}]
  %s4 = inlined_call_operand.vmem [shape: f32[2,8,8,8,128], index: 4, kind: output, shape index: {0}]
  %s5 = inlined_call_operand.vmem [shape: f32[2,8,2,128], index: 5, kind: output, shape index: {1}]
  %6 = xla_tuple %s4, %s5
  %s7 = sld [smem:[#allocation0]]
  $region57: #{double_conv3d.4} parent=0
    _
  %s9 = ssub.s32 1, %s7
  %s10 = scalar_select 0, %s9, %s7
  loop: start=0, step=1, limit=18
  $region2: #{double_conv3d.4} parent=0 // loop_pre_header
    _
  $region3: #{double_conv3d.4} parent=0 // loop_header
    %s12 = sphi 0, %s16
    %p13 = scmp.ge.s32.totalorder %s12, 18
    %s19 = sphi 0, %s31
    %s20 = sphi 0, %s27
    %s21 = sphi 0, %s19
    %s22 = sphi 0, %s20
    %s23 = sphi 0, %s21
    %s24 = sphi 0, %s22
    %s36 = sphi 0, %s38
    %s39 = sphi 0, %s36
    %s40 = sphi 0, %s39
    %s56 = sphi 0, %s40
    %s66 = sphi 0, %s68
    %s69 = sphi 0, %s66
    %s70 = sphi 0, %s69
    %s86 = sphi 0, %s70
    %s96 = sphi 0, %s98
    %s99 = sphi 0, %s96
    %s100 = sphi 0, %s99
    %s116 = sphi 0, %s100
    %s120 = sphi 0, %s120
    %s122 = sphi 0, %s120
    %s123 = sphi 0, %s122
    %s137 = sphi 0, %s123
    %s145 = sphi 0, %s147
    %s148 = sphi 0, %s145
    %s149 = sphi 0, %s148
    %s165 = sphi 0, %s149
    %s173 = sphi 0, %s175
    %s176 = sphi 0, %s173
    %s177 = sphi 0, %s176
    %s193 = sphi 0, %s177
  $region4: #{double_conv3d.4} parent=0 // loop_header_branch
    %15 = sbr.rel (%p13) target = $region8
  $region5: #{double_conv3d.4} parent=0 // loop_body
    %s17 = ssub.s32 %s12, 1
    %s18 = ssub.s32 %s12, 2
    %s25 = sadd.s32 1, %s20
    %p26 = scmp.ge.s32.totalorder %s25, 8
    %s27 = scalar_select %p26, 0, %s25
    %s28 = sadd.s32 1, %s19
    %s29 = scalar_select %p26, %s28, %s19
    %p30 = scmp.ge.s32.totalorder %s29, 2
    %s31 = scalar_select %p30, 0, %s29
    %s32 = ssub.s32 %s19, %s31
    %s33 = ssub.s32 %s20, %s27
    %s34 = sor.u32 %s32, %s33
    %p35 = scmp.eq.s32.totalorder %s34, 0
    %s37 = sadd.s32 %s36, 1
    %s38 = scalar_select %p35, %s36, %s37
    %p41 = pneg %p35
    %p42 = scmp.eq.s32.totalorder %s12, 15
    %p43 = por %p41, %p42
    %p44 = scmp.ne.s32.totalorder %s36, %s39
    %p45 = scmp.eq.s32.totalorder %s12, 0
    %p46 = por %p44, %p45
    %p47 = scmp.ne.s32.totalorder %s36, %s39
    %p48 = scmp.eq.s32.totalorder %s17, 15
    %p49 = por %p47, %p48
    %p50 = scmp.ne.s32.totalorder %s39, %s40
    %p51 = scmp.eq.s32.totalorder %s17, 0
    %p52 = por %p50, %p51
    %p53 = scmp.ne.s32.totalorder %s39, %s40
    %p54 = scmp.eq.s32.totalorder %s18, 15
    %p55 = por %p53, %p54
    %p57 = scmp.ne.s32.totalorder %s40, %s56
    %p58 = scmp.eq.s32.totalorder %s18, 0
    %p59 = por %p57, %p58
    %s60 = sadd.s32 %s20, 1
    %s61 = sadd.s32 %s27, 1
    %s62 = ssub.s32 %s19, %s31
    %s63 = ssub.s32 %s60, %s61
    %s64 = sor.u32 %s62, %s63
    %p65 = scmp.eq.s32.totalorder %s64, 0
    %s67 = sadd.s32 %s66, 1
    %s68 = scalar_select %p65, %s66, %s67
    %p71 = pneg %p65
    %p72 = scmp.eq.s32.totalorder %s12, 15
    %p73 = por %p71, %p72
    %p74 = scmp.ne.s32.totalorder %s66, %s69
    %p75 = scmp.eq.s32.totalorder %s12, 0
    %p76 = por %p74, %p75
    %p77 = scmp.ne.s32.totalorder %s66, %s69
    %p78 = scmp.eq.s32.totalorder %s17, 15
    %p79 = por %p77, %p78
    %p80 = scmp.ne.s32.totalorder %s69, %s70
    %p81 = scmp.eq.s32.totalorder %s17, 0
    %p82 = por %p80, %p81
    %p83 = scmp.ne.s32.totalorder %s69, %s70
    %p84 = scmp.eq.s32.totalorder %s18, 15
    %p85 = por %p83, %p84
    %p87 = scmp.ne.s32.totalorder %s70, %s86
    %p88 = scmp.eq.s32.totalorder %s18, 0
    %p89 = por %p87, %p88
    %s90 = sadd.s32 %s20, 2
    %s91 = sadd.s32 %s27, 2
    %s92 = ssub.s32 %s19, %s31
    %s93 = ssub.s32 %s90, %s91
    %s94 = sor.u32 %s92, %s93
    %p95 = scmp.eq.s32.totalorder %s94, 0
    %s97 = sadd.s32 %s96, 1
    %s98 = scalar_select %p95, %s96, %s97
    %p101 = pneg %p95
    %p102 = scmp.eq.s32.totalorder %s12, 15
    %p103 = por %p101, %p102
    %p104 = scmp.ne.s32.totalorder %s96, %s99
    %p105 = scmp.eq.s32.totalorder %s12, 0
    %p106 = por %p104, %p105
    %p107 = scmp.ne.s32.totalorder %s96, %s99
    %p108 = scmp.eq.s32.totalorder %s17, 15
    %p109 = por %p107, %p108
    %p110 = scmp.ne.s32.totalorder %s99, %s100
    %p111 = scmp.eq.s32.totalorder %s17, 0
    %p112 = por %p110, %p111
    %p113 = scmp.ne.s32.totalorder %s99, %s100
    %p114 = scmp.eq.s32.totalorder %s18, 15
    %p115 = por %p113, %p114
    %p117 = scmp.ne.s32.totalorder %s100, %s116
    %p118 = scmp.eq.s32.totalorder %s18, 0
    %p119 = por %p117, %p118
    %s121 = sadd.s32 %s120, 1
    %p124 = scmp.eq.s32.totalorder %s12, 15
    %p125 = scmp.ne.s32.totalorder %s120, %s122
    %p126 = scmp.eq.s32.totalorder %s12, 0
    %p127 = por %p125, %p126
    %p128 = scmp.ne.s32.totalorder %s120, %s122
    %p129 = scmp.eq.s32.totalorder %s17, 15
    %p130 = por %p128, %p129
    %p131 = scmp.ne.s32.totalorder %s122, %s123
    %p132 = scmp.eq.s32.totalorder %s17, 0
    %p133 = por %p131, %p132
    %p134 = scmp.ne.s32.totalorder %s122, %s123
    %p135 = scmp.eq.s32.totalorder %s18, 15
    %p136 = por %p134, %p135
    %p138 = scmp.ne.s32.totalorder %s123, %s137
    %p139 = scmp.eq.s32.totalorder %s18, 0
    %p140 = por %p138, %p139
    %s141 = ssub.s32 %s19, %s31
    %s142 = ssub.s32 %s20, %s27
    %s143 = sor.u32 %s141, %s142
    %p144 = scmp.eq.s32.totalorder %s143, 0
    %s146 = sadd.s32 %s145, 1
    %s147 = scalar_select %p144, %s145, %s146
    %p150 = pneg %p144
    %p151 = scmp.eq.s32.totalorder %s12, 15
    %p152 = por %p150, %p151
    %p153 = scmp.ne.s32.totalorder %s145, %s148
    %p154 = scmp.eq.s32.totalorder %s12, 0
    %p155 = por %p153, %p154
    %p156 = scmp.ne.s32.totalorder %s145, %s148
    %p157 = scmp.eq.s32.totalorder %s17, 15
    %p158 = por %p156, %p157
    %p159 = scmp.ne.s32.totalorder %s148, %s149
    %p160 = scmp.eq.s32.totalorder %s17, 0
    %p161 = por %p159, %p160
    %p162 = scmp.ne.s32.totalorder %s148, %s149
    %p163 = scmp.eq.s32.totalorder %s18, 15
    %p164 = por %p162, %p163
    %p166 = scmp.ne.s32.totalorder %s149, %s165
    %p167 = scmp.eq.s32.totalorder %s18, 0
    %p168 = por %p166, %p167
    %s169 = ssub.s32 %s19, %s31
    %s170 = ssub.s32 %s20, %s27
    %s171 = sor.u32 %s169, %s170
    %p172 = scmp.eq.s32.totalorder %s171, 0
    %s174 = sadd.s32 %s173, 1
    %s175 = scalar_select %p172, %s173, %s174
    %p178 = pneg %p172
    %p179 = scmp.eq.s32.totalorder %s12, 15
    %p180 = por %p178, %p179
    %p181 = scmp.ne.s32.totalorder %s173, %s176
    %p182 = scmp.eq.s32.totalorder %s12, 0
    %p183 = por %p181, %p182
    %p184 = scmp.ne.s32.totalorder %s173, %s176
    %p185 = scmp.eq.s32.totalorder %s17, 15
    %p186 = por %p184, %p185
    %p187 = scmp.ne.s32.totalorder %s176, %s177
    %p188 = scmp.eq.s32.totalorder %s17, 0
    %p189 = por %p187, %p188
    %p190 = scmp.ne.s32.totalorder %s176, %s177
    %p191 = scmp.eq.s32.totalorder %s18, 15
    %p192 = por %p190, %p191
    %p194 = scmp.ne.s32.totalorder %s177, %s193
    %p195 = scmp.eq.s32.totalorder %s18, 0
    %p196 = por %p194, %p195
    %p197 = scmp.le.s32.totalorder 1, %s12
    %p198 = scmp.lt.s32.totalorder %s12, 17
    %p199 = pnand %p197, %p198
    %p200 = pneg %p199
    // Predicated region
    $region9: #{double_conv3d.4} parent=5 // pred_check
      _
    $region10: #{double_conv3d.4} parent=5 // pred_check_branch
      %202 = sbr.rel (%p199) target = $region12
    $region11: #{double_conv3d.4} parent=5 // pred_region
      %s203 = ssub.s32 %s12, 1
      // Predicated region
      $region13: #{double_conv3d.4} parent=11 // pred_check
        %p204 = pneg %p133
      $region14: #{double_conv3d.4} parent=11 // pred_check_branch
        %206 = sbr.rel (%p204) target = $region16
      $region15: #{double_conv3d.4} parent=11 // pred_region
        _
      $region16: #{double_conv3d.4} parent=11 // pred_fallthru
        _
    $region12: #{double_conv3d.4} parent=5 // pred_fallthru
      _
    %p207 = scmp.lt.s32.totalorder %s12, 16
    // Predicated region
    $region17: #{double_conv3d.4} parent=5 // pred_check
      %p208 = pneg %p207
    $region18: #{double_conv3d.4} parent=5 // pred_check_branch
      %210 = sbr.rel (%p208) target = $region20
    $region19: #{double_conv3d.4} parent=5 // pred_region
      // Predicated region
      $region21: #{double_conv3d.4} parent=19 // pred_check
        %p211 = pneg %p46
      $region22: #{double_conv3d.4} parent=19 // pred_check_branch
        %213 = sbr.rel (%p211) target = $region24
      $region23: #{double_conv3d.4} parent=19 // pred_region
        %p214 = scmp.lt.s32.totalorder %s19, 1
        %s215 = scalar_select %p214, %s19, 1
        %p216 = scmp.lt.s32.totalorder %s20, 9
        %s217 = scalar_select %p216, %s20, 9
        %s218 = smul.addr %s217, 20
        %s219 = smul.addr %s215, 200
        %s220 = sadd.s32 %s218, %s219
        %s221 = smul.addr %s220, 8
        %s222 = scalar_lea.vmem %s0, %s221
      $region24: #{double_conv3d.4} parent=19 // pred_fallthru
        _
      // Predicated region
      $region25: #{double_conv3d.4} parent=19 // pred_check
        %p223 = pneg %p76
      $region26: #{double_conv3d.4} parent=19 // pred_check_branch
        %225 = sbr.rel (%p223) target = $region28
      $region27: #{double_conv3d.4} parent=19 // pred_region
        %s226 = sadd.s32 %s20, 1
        %p227 = scmp.lt.s32.totalorder %s19, 1
        %s228 = scalar_select %p227, %s19, 1
        %p229 = scmp.lt.s32.totalorder %s226, 9
        %s230 = scalar_select %p229, %s226, 9
        %s231 = smul.addr %s230, 20
        %s232 = smul.addr %s228, 200
        %s233 = sadd.s32 %s231, %s232
        %s234 = smul.addr %s233, 8
        %s235 = scalar_lea.vmem %s1, %s234
        %s236 = sadd.s32 %s20, 1
      $region28: #{double_conv3d.4} parent=19 // pred_fallthru
        _
      // Predicated region
      $region29: #{double_conv3d.4} parent=19 // pred_check
        %p237 = pneg %p106
      $region30: #{double_conv3d.4} parent=19 // pred_check_branch
        %239 = sbr.rel (%p237) target = $region32
      $region31: #{double_conv3d.4} parent=19 // pred_region
        %s240 = sadd.s32 %s20, 2
        %p241 = scmp.lt.s32.totalorder %s19, 1
        %s242 = scalar_select %p241, %s19, 1
        %p243 = scmp.lt.s32.totalorder %s240, 9
        %s244 = scalar_select %p243, %s240, 9
        %s245 = smul.addr %s244, 20
        %s246 = smul.addr %s242, 200
        %s247 = sadd.s32 %s245, %s246
        %s248 = smul.addr %s247, 8
        %s249 = scalar_lea.vmem %s2, %s248
        %s250 = sadd.s32 %s20, 2
      $region32: #{double_conv3d.4} parent=19 // pred_fallthru
        _
    $region20: #{double_conv3d.4} parent=5 // pred_fallthru
      _
    %p251 = scmp.le.s32.totalorder 1, %s12
    %p252 = scmp.lt.s32.totalorder %s12, 17
    %p253 = pnand %p251, %p252
    %p254 = pneg %p253
    // Predicated region
    $region33: #{double_conv3d.4} parent=5 // pred_check
      _
    $region34: #{double_conv3d.4} parent=5 // pred_check_branch
      %256 = sbr.rel (%p253) target = $region36
    $region35: #{double_conv3d.4} parent=5 // pred_region
      %s257 = ssub.s32 %s12, 1
      %p258 = scmp.lt.s32.totalorder %s21, 1
      %s259 = scalar_select %p258, %s21, 1
      %p260 = scmp.lt.s32.totalorder %s22, 9
      %s261 = scalar_select %p260, %s22, 9
      %s262 = smul.addr %s261, 20
      %s263 = smul.addr %s259, 200
      %s264 = sadd.s32 %s262, %s263
      %s265 = smul.addr %s264, 8
      %s266 = scalar_lea.vmem %s0, %s265
      %p267 = pneg %p52
      %p268 = pneg %p49
      %s269 = sadd.s32 %s22, 1
      %p270 = scmp.lt.s32.totalorder %s21, 1
      %s271 = scalar_select %p270, %s21, 1
      %p272 = scmp.lt.s32.totalorder %s269, 9
      %s273 = scalar_select %p272, %s269, 9
      %s274 = smul.addr %s273, 20
      %s275 = smul.addr %s271, 200
      %s276 = sadd.s32 %s274, %s275
      %s277 = smul.addr %s276, 8
      %s278 = scalar_lea.vmem %s1, %s277
      %p279 = pneg %p82
      %p280 = pneg %p79
      %s281 = sadd.s32 %s22, 2
      %p282 = scmp.lt.s32.totalorder %s21, 1
      %s283 = scalar_select %p282, %s21, 1
      %p284 = scmp.lt.s32.totalorder %s281, 9
      %s285 = scalar_select %p284, %s281, 9
      %s286 = smul.addr %s285, 20
      %s287 = smul.addr %s283, 200
      %s288 = sadd.s32 %s286, %s287
      %s289 = smul.addr %s288, 8
      %s290 = scalar_lea.vmem %s2, %s289
      %p291 = pneg %p112
      %p292 = pneg %p109
      %p293 = pneg %p133
      %p294 = pneg %p130
      %p295 = pneg %p161
      %p296 = pneg %p158
      %p297 = scmp.lt.s32.totalorder %s21, 1
      %s298 = scalar_select %p297, %s21, 1
      %p299 = scmp.lt.s32.totalorder %s22, 7
      %s300 = scalar_select %p299, %s22, 7
      %s301 = smul.addr %s300, 8
      %s302 = smul.addr %s298, 64
      %s303 = sadd.s32 %s301, %s302
      %s304 = smul.addr %s303, 8
      %s305 = scalar_lea.vmem %s4, %s304
      %p306 = pneg %p189
      %p307 = pneg %p186
      %p308 = scmp.lt.s32.totalorder %s21, 1
      %s309 = scalar_select %p308, %s21, 1
      %p310 = scmp.lt.s32.totalorder %s22, 7
      %s311 = scalar_select %p310, %s22, 7
      %s312 = smul.addr %s309, 8
      %s313 = sadd.s32 %s311, %s312
      %s314 = smul.addr %s313, 2
      %s315 = scalar_lea.vmem %s5, %s314
      %p316 = scmp.lt.s32.totalorder %s21, 1
      %s317 = scalar_select %p316, %s21, 1
      %p318 = scmp.lt.s32.totalorder %s22, 9
      %s319 = scalar_select %p318, %s22, 9
      %s320 = smul.addr %s319, 20
      %s321 = smul.addr %s317, 200
      %s322 = sadd.s32 %s320, %s321
      %s323 = smul.addr %s322, 8
      %s324 = scalar_lea.vmem %s0, %s323
      %s325 = sadd.s32 %s22, 1
      %p326 = scmp.lt.s32.totalorder %s21, 1
      %s327 = scalar_select %p326, %s21, 1
      %p328 = scmp.lt.s32.totalorder %s325, 9
      %s329 = scalar_select %p328, %s325, 9
      %s330 = smul.addr %s329, 20
      %s331 = smul.addr %s327, 200
      %s332 = sadd.s32 %s330, %s331
      %s333 = smul.addr %s332, 8
      %s334 = scalar_lea.vmem %s1, %s333
      %s335 = sadd.s32 %s22, 1
      %s336 = sadd.s32 %s22, 2
      %p337 = scmp.lt.s32.totalorder %s21, 1
      %s338 = scalar_select %p337, %s21, 1
      %p339 = scmp.lt.s32.totalorder %s336, 9
      %s340 = scalar_select %p339, %s336, 9
      %s341 = smul.addr %s340, 20
      %s342 = smul.addr %s338, 200
      %s343 = sadd.s32 %s341, %s342
      %s344 = smul.addr %s343, 8
      %s345 = scalar_lea.vmem %s2, %s344
      %s346 = sadd.s32 %s22, 2
      %p347 = scmp.lt.s32.totalorder %s21, 1
      %s348 = scalar_select %p347, %s21, 1
      %p349 = scmp.lt.s32.totalorder %s22, 7
      %s350 = scalar_select %p349, %s22, 7
      %s351 = smul.addr %s350, 8
      %s352 = smul.addr %s348, 64
      %s353 = sadd.s32 %s351, %s352
      %s354 = smul.addr %s353, 8
      %s355 = scalar_lea.vmem %s4, %s354
      %p356 = scmp.lt.s32.totalorder %s21, 1
      %s357 = scalar_select %p356, %s21, 1
      %p358 = scmp.lt.s32.totalorder %s22, 7
      %s359 = scalar_select %p358, %s22, 7
      %s360 = smul.addr %s357, 8
      %s361 = sadd.s32 %s359, %s360
      %s362 = smul.addr %s361, 2
      %s363 = scalar_lea.vmem %s5, %s362
      %v365 = vld [vmem:[%s324] sm:$0xff]
      %v366 = vld [vmem:[%s324 + $0x8] sm:$0x3]
      %v367 = vld [vmem:[%s324 + $0x10] sm:$0xff]
      %v368 = vld [vmem:[%s324 + $0x18] sm:$0x3]
      %v369 = vld [vmem:[%s324 + $0x20] sm:$0xff]
      %v370 = vld [vmem:[%s324 + $0x28] sm:$0x3]
      %v371 = vld [vmem:[%s324 + $0x30] sm:$0xff]
      %v372 = vld [vmem:[%s324 + $0x38] sm:$0x3]
      %v373 = vld [vmem:[%s324 + $0x40] sm:$0xff]
      %v374 = vld [vmem:[%s324 + $0x48] sm:$0x3]
      %v375 = vld [vmem:[%s324 + $0x50] sm:$0xff]
      %v376 = vld [vmem:[%s324 + $0x58] sm:$0x3]
      %v377 = vld [vmem:[%s324 + $0x60] sm:$0xff]
      %v378 = vld [vmem:[%s324 + $0x68] sm:$0x3]
      %v379 = vld [vmem:[%s324 + $0x70] sm:$0xff]
      %v380 = vld [vmem:[%s324 + $0x78] sm:$0x3]
      %v381 = vld [vmem:[%s324 + $0x80] sm:$0xff]
      %v382 = vld [vmem:[%s324 + $0x88] sm:$0x3]
      %v383 = vld [vmem:[%s324 + $0x90] sm:$0xff]
      %v384 = vld [vmem:[%s324 + $0x98] sm:$0x3]
      %v385 = vld [vmem:[%s334] sm:$0xff]
      %v386 = vld [vmem:[%s334 + $0x8] sm:$0x3]
      %v387 = vld [vmem:[%s334 + $0x10] sm:$0xff]
      %v388 = vld [vmem:[%s334 + $0x18] sm:$0x3]
      %v389 = vld [vmem:[%s334 + $0x20] sm:$0xff]
      %v390 = vld [vmem:[%s334 + $0x28] sm:$0x3]
      %v391 = vld [vmem:[%s334 + $0x30] sm:$0xff]
      %v392 = vld [vmem:[%s334 + $0x38] sm:$0x3]
      %v393 = vld [vmem:[%s334 + $0x40] sm:$0xff]
      %v394 = vld [vmem:[%s334 + $0x48] sm:$0x3]
      %v395 = vld [vmem:[%s334 + $0x50] sm:$0xff]
      %v396 = vld [vmem:[%s334 + $0x58] sm:$0x3]
      %v397 = vld [vmem:[%s334 + $0x60] sm:$0xff]
      %v398 = vld [vmem:[%s334 + $0x68] sm:$0x3]
      %v399 = vld [vmem:[%s334 + $0x70] sm:$0xff]
      %v400 = vld [vmem:[%s334 + $0x78] sm:$0x3]
      %v401 = vld [vmem:[%s334 + $0x80] sm:$0xff]
      %v402 = vld [vmem:[%s334 + $0x88] sm:$0x3]
      %v403 = vld [vmem:[%s334 + $0x90] sm:$0xff]
      %v404 = vld [vmem:[%s334 + $0x98] sm:$0x3]
      %v405 = vld [vmem:[%s345] sm:$0xff]
      %v406 = vld [vmem:[%s345 + $0x8] sm:$0x3]
      %v407 = vld [vmem:[%s345 + $0x10] sm:$0xff]
      %v408 = vld [vmem:[%s345 + $0x18] sm:$0x3]
      %v409 = vld [vmem:[%s345 + $0x20] sm:$0xff]
      %v410 = vld [vmem:[%s345 + $0x28] sm:$0x3]
      %v411 = vld [vmem:[%s345 + $0x30] sm:$0xff]
      %v412 = vld [vmem:[%s345 + $0x38] sm:$0x3]
      %v413 = vld [vmem:[%s345 + $0x40] sm:$0xff]
      %v414 = vld [vmem:[%s345 + $0x48] sm:$0x3]
      %v415 = vld [vmem:[%s345 + $0x50] sm:$0xff]
      %v416 = vld [vmem:[%s345 + $0x58] sm:$0x3]
      %v417 = vld [vmem:[%s345 + $0x60] sm:$0xff]
      %v418 = vld [vmem:[%s345 + $0x68] sm:$0x3]
      %v419 = vld [vmem:[%s345 + $0x70] sm:$0xff]
      %v420 = vld [vmem:[%s345 + $0x78] sm:$0x3]
      %v421 = vld [vmem:[%s345 + $0x80] sm:$0xff]
      %v422 = vld [vmem:[%s345 + $0x88] sm:$0x3]
      %v423 = vld [vmem:[%s345 + $0x90] sm:$0xff]
      %v424 = vld [vmem:[%s345 + $0x98] sm:$0x3]
      %v425 = vpack.c.bf16 %v367, %v365
      %v426 = vpack.c.bf16 %v371, %v369
      %v427 = vpack.c.bf16 %v375, %v373
      %v428 = vpack.c.bf16 %v379, %v377
      %v429 = vld [vmem:[%s3] sm:$0xf]
      %vm446 = vcmask 1046528
      %v447 = vrot.slane %v365, 1
      %v448 = vrot.slane %v366, 1
      %v449 = vsel %vm446, %v447, %v448
      %v450 = vrot.slane %v367, 1
      %v451 = vrot.slane %v368, 1
      %v452 = vsel %vm446, %v450, %v451
      %v453 = vrot.slane %v369, 1
      %v454 = vrot.slane %v370, 1
      %v455 = vsel %vm446, %v453, %v454
      %v456 = vrot.slane %v371, 1
      %v457 = vrot.slane %v372, 1
      %v458 = vsel %vm446, %v456, %v457
      %v459 = vrot.slane %v373, 1
      %v460 = vrot.slane %v374, 1
      %v461 = vsel %vm446, %v459, %v460
      %v462 = vrot.slane %v375, 1
      %v463 = vrot.slane %v376, 1
      %v464 = vsel %vm446, %v462, %v463
      %v465 = vrot.slane %v377, 1
      %v466 = vrot.slane %v378, 1
      %v467 = vsel %vm446, %v465, %v466
      %v468 = vrot.slane %v379, 1
      %v469 = vrot.slane %v380, 1
      %v470 = vsel %vm446, %v468, %v469
      %v479 = vpack.c.bf16 %v452, %v449
      %v480 = vpack.c.bf16 %v458, %v455
      %v481 = vpack.c.bf16 %v464, %v461
      %v482 = vpack.c.bf16 %v470, %v467
      %s483 = scalar_lea.vmem %s3, 4
      %v484 = vld [vmem:[%s483] sm:$0xf]
      %vm485 = vcmask 64512
      %v487 = vsel %vm485, %v479, 0
      %v490 = vsel %vm485, %v480, 0
      %v493 = vsel %vm485, %v481, 0
      %v496 = vsel %vm485, %v482, 0
      %vm498 = vcmask 1043456
      %v500 = vsel %vm498, %v484, 0
      %502 = vmatprep.subr.bf16.mxu0 0
      %503 = vmatpush1.bf16.msra.mxu0 %v500
      %504 = vmatprep.subr.bf16.mxu0 0
      %505 = vmatpush1.bf16.msra.mxu0 0
      %506 = vmatprep.subr.bf16.mxu0 0
      %507 = vmatpush1.bf16.msra.mxu0 0
      %508 = vmatprep.subr.bf16.mxu0 0
      %509 = vmatpush1.bf16.msra.mxu0 0
      %510 = vmatprep.subr.bf16.mxu0 0
      %511 = vmatpush1.bf16.msra.mxu0 0
      %512 = vmatprep.subr.bf16.mxu0 0
      %513 = vmatpush1.bf16.msra.mxu0 0
      %514 = vmatprep.subr.bf16.mxu0 0
      %515 = vmatpush1.bf16.msra.mxu0 0
      %516 = vmatprep.subr.bf16.mxu0 0
      %517 = vmatpush1.bf16.msra.mxu0 0
      %518 = vmatprep.subr.bf16.mxu0 0
      %519 = vmatpush1.bf16.msra.mxu0 0
      %520 = vmatprep.subr.bf16.mxu0 0
      %521 = vmatpush1.bf16.msra.mxu0 0
      %522 = vmatprep.subr.bf16.mxu0 0
      %523 = vmatpush1.bf16.msra.mxu0 0
      %524 = vmatprep.subr.bf16.mxu0 0
      %525 = vmatpush1.bf16.msra.mxu0 0
      %526 = vmatprep.subr.bf16.mxu0 0
      %527 = vmatpush1.bf16.msra.mxu0 0
      %528 = vmatprep.subr.bf16.mxu0 0
      %529 = vmatpush1.bf16.msra.mxu0 0
      %530 = vmatprep.subr.bf16.mxu0 0
      %531 = vmatpush1.bf16.msra.mxu0 0
      %532 = vmatprep.subr.bf16.mxu0 0
      %533 = vmatpush1.bf16.msra.mxu0 0
      %534 = vmatprep.mubr.bf16.mxu0 0
      %535 = vmatmul.mubr.bf16.gmra.mrb[0].mxu0 %v487
      %v536 = vpop.f32.mrb[0].mxu0
      %v537 = vadd.f32 0.0, %v536
      %v538 = vpop.f32.mrb[0].mxu0
      %v539 = vpop.f32.mrb[0].mxu0
      %v540 = vadd.f32 0.0, %v539
      %v541 = vpop.f32.mrb[0].mxu0
      %542 = vmatprep.mubr.bf16.mxu0 0
      %543 = vmatmul.mubr.bf16.gmra.mrb[0].mxu0 %v490
      %v544 = vpop.f32.mrb[0].mxu0
      %v545 = vadd.f32 0.0, %v544
      %v546 = vpop.f32.mrb[0].mxu0
      %v547 = vpop.f32.mrb[0].mxu0
      %v548 = vadd.f32 0.0, %v547
      %v549 = vpop.f32.mrb[0].mxu0
      %550 = vmatprep.mubr.bf16.mxu0 0
      %551 = vmatmul.mubr.bf16.gmra.mrb[0].mxu0 %v493
      %v552 = vpop.f32.mrb[0].mxu0
      %v553 = vadd.f32 0.0, %v552
      %v554 = vpop.f32.mrb[0].mxu0
      %v555 = vpop.f32.mrb[0].mxu0
      %v556 = vadd.f32 0.0, %v555
      %v557 = vpop.f32.mrb[0].mxu0
      %558 = vmatprep.mubr.bf16.mxu0 0
      %559 = vmatmul.mubr.bf16.gmra.mrb[0].mxu0 %v496
      %v560 = vpop.f32.mrb[0].mxu0
      %v561 = vadd.f32 0.0, %v560
      %v562 = vpop.f32.mrb[0].mxu0
      %v563 = vpop.f32.mrb[0].mxu0
      %v564 = vadd.f32 0.0, %v563
      %v565 = vpop.f32.mrb[0].mxu0
      %566 = vdwg.mxu0
      %v568 = vsel %vm485, %v425, 0
      %v571 = vsel %vm485, %v426, 0
      %v574 = vsel %vm485, %v427, 0
      %v577 = vsel %vm485, %v428, 0
      %v580 = vsel %vm498, %v429, 0
      %582 = vmatprep.subr.bf16.mxu0 0
      %583 = vmatpush1.bf16.msra.mxu0 %v580
      %584 = vmatprep.subr.bf16.mxu0 0
      %585 = vmatpush1.bf16.msra.mxu0 0
      %586 = vmatprep.subr.bf16.mxu0 0
      %587 = vmatpush1.bf16.msra.mxu0 0
      %588 = vmatprep.subr.bf16.mxu0 0
      %589 = vmatpush1.bf16.msra.mxu0 0
      %590 = vmatprep.subr.bf16.mxu0 0
      %591 = vmatpush1.bf16.msra.mxu0 0
      %592 = vmatprep.subr.bf16.mxu0 0
      %593 = vmatpush1.bf16.msra.mxu0 0
      %594 = vmatprep.subr.bf16.mxu0 0
      %595 = vmatpush1.bf16.msra.mxu0 0
      %596 = vmatprep.subr.bf16.mxu0 0
      %597 = vmatpush1.bf16.msra.mxu0 0
      %598 = vmatprep.subr.bf16.mxu0 0
      %599 = vmatpush1.bf16.msra.mxu0 0
      %600 = vmatprep.subr.bf16.mxu0 0
      %601 = vmatpush1.bf16.msra.mxu0 0
      %602 = vmatprep.subr.bf16.mxu0 0
      %603 = vmatpush1.bf16.msra.mxu0 0
      %604 = vmatprep.subr.bf16.mxu0 0
      %605 = vmatpush1.bf16.msra.mxu0 0
      %606 = vmatprep.subr.bf16.mxu0 0
      %607 = vmatpush1.bf16.msra.mxu0 0
      %608 = vmatprep.subr.bf16.mxu0 0
      %609 = vmatpush1.bf16.msra.mxu0 0
      %610 = vmatprep.subr.bf16.mxu0 0
      %611 = vmatpush1.bf16.msra.mxu0 0
      %612 = vmatprep.subr.bf16.mxu0 0
      %613 = vmatpush1.bf16.msra.mxu0 0
      %614 = vmatprep.mubr.bf16.mxu0 0
      %615 = vmatmul.mubr.bf16.gmra.mrb[0].mxu0 %v568
      %v616 = vpop.f32.mrb[0].mxu0
      %v617 = vadd.f32 %v537, %v616
      %v618 = vpop.f32.mrb[0].mxu0
      %v619 = vpop.f32.mrb[0].mxu0
      %v620 = vadd.f32 %v540, %v619
      %v621 = vpop.f32.mrb[0].mxu0
      %622 = vmatprep.mubr.bf16.mxu0 0
      %623 = vmatmul.mubr.bf16.gmra.mrb[0].mxu0 %v571
      %v624 = vpop.f32.mrb[0].mxu0
      %v625 = vadd.f32 %v545, %v624
      %v626 = vpop.f32.mrb[0].mxu0
      %v627 = vpop.f32.mrb[0].mxu0
      %v628 = vadd.f32 %v548, %v627
      %v629 = vpop.f32.mrb[0].mxu0
      %630 = vmatprep.mubr.bf16.mxu0 0
      %631 = vmatmul.mubr.bf16.gmra.mrb[0].mxu0 %v574
      %v632 = vpop.f32.mrb[0].mxu0
      %v633 = vadd.f32 %v553, %v632
      %v634 = vpop.f32.mrb[0].mxu0
      %v635 = vpop.f32.mrb[0].mxu0
      %v636 = vadd.f32 %v556, %v635
      %v637 = vpop.f32.mrb[0].mxu0
      %638 = vmatprep.mubr.bf16.mxu0 0
      %639 = vmatmul.mubr.bf16.gmra.mrb[0].mxu0 %v577
      %v640 = vpop.f32.mrb[0].mxu0
      %v641 = vadd.f32 %v561, %v640
      %v642 = vpop.f32.mrb[0].mxu0
      %v643 = vpop.f32.mrb[0].mxu0
      %v644 = vadd.f32 %v564, %v643
      %v645 = vpop.f32.mrb[0].mxu0
      %646 = vdwg.mxu0
      %vm647 = vcmask 1045504
      %v648 = vrot.slane %v365, 2
      %v649 = vrot.slane %v366, 2
      %v650 = vsel %vm647, %v648, %v649
      %v651 = vrot.slane %v367, 2
      %v652 = vrot.slane %v368, 2
      %v653 = vsel %vm647, %v651, %v652
      %v654 = vrot.slane %v369, 2
      %v655 = vrot.slane %v370, 2
      %v656 = vsel %vm647, %v654, %v655
      %v657 = vrot.slane %v371, 2
      %v658 = vrot.slane %v372, 2
      %v659 = vsel %vm647, %v657, %v658
      %v660 = vrot.slane %v373, 2
      %v661 = vrot.slane %v374, 2
      %v662 = vsel %vm647, %v660, %v661
      %v663 = vrot.slane %v375, 2
      %v664 = vrot.slane %v376, 2
      %v665 = vsel %vm647, %v663, %v664
      %v666 = vrot.slane %v377, 2
      %v667 = vrot.slane %v378, 2
      %v668 = vsel %vm647, %v666, %v667
      %v669 = vrot.slane %v379, 2
      %v670 = vrot.slane %v380, 2
      %v671 = vsel %vm647, %v669, %v670
      %v680 = vpack.c.bf16 %v653, %v650
      %v681 = vpack.c.bf16 %v659, %v656
      %v682 = vpack.c.bf16 %v665, %v662
      %v683 = vpack.c.bf16 %v671, %v668
      %s684 = scalar_lea.vmem %s3, 8
      %v685 = vld [vmem:[%s684] sm:$0xf]
      %v687 = vsel %vm485, %v680, 0
      %v690 = vsel %vm485, %v681, 0
      %v693 = vsel %vm485, %v682, 0
      %v696 = vsel %vm485, %v683, 0
      %v699 = vsel %vm498, %v685, 0
      %701 = vmatprep.subr.bf16.mxu0 0
      %702 = vmatpush1.bf16.msra.mxu0 %v699
      %703 = vmatprep.subr.bf16.mxu0 0
      %704 = vmatpush1.bf16.msra.mxu0 0
      %705 = vmatprep.subr.bf16.mxu0 0
      %706 = vmatpush1.bf16.msra.mxu0 0
      %707 = vmatprep.subr.bf16.mxu0 0
      %708 = vmatpush1.bf16.msra.mxu0 0
      %709 = vmatprep.subr.bf16.mxu0 0
      %710 = vmatpush1.bf16.msra.mxu0 0
      %711 = vmatprep.subr.bf16.mxu0 0
      %712 = vmatpush1.bf16.msra.mxu0 0
      %713 = vmatprep.subr.bf16.mxu0 0
      %714 = vmatpush1.bf16.msra.mxu0 0
      %715 = vmatprep.subr.bf16.mxu0 0
      %716 = vmatpush1.bf16.msra.mxu0 0
      %717 = vmatprep.subr.bf16.mxu0 0
      %718 = vmatpush1.bf16.msra.mxu0 0
      %719 = vmatprep.subr.bf16.mxu0 0
      %720 = vmatpush1.bf16.msra.mxu0 0
      %721 = vmatprep.subr.bf16.mxu0 0
      %722 = vmatpush1.bf16.msra.mxu0 0
      %723 = vmatprep.subr.bf16.mxu0 0
      %724 = vmatpush1.bf16.msra.mxu0 0
      %725 = vmatprep.subr.bf16.mxu0 0
      %726 = vmatpush1.bf16.msra.mxu0 0
      %727 = vmatprep.subr.bf16.mxu0 0
      %728 = vmatpush1.bf16.msra.mxu0 0
      %729 = vmatprep.subr.bf16.mxu0 0
      %730 = vmatpush1.bf16.msra.mxu0 0
      %731 = vmatprep.subr.bf16.mxu0 0
      %732 = vmatpush1.bf16.msra.mxu0 0
      %733 = vmatprep.mubr.bf16.mxu0 0
      %734 = vmatmul.mubr.bf16.gmra.mrb[0].mxu0 %v687
      %v735 = vpop.f32.mrb[0].mxu0
      %v736 = vadd.f32 0.0, %v735
      %v737 = vpop.f32.mrb[0].mxu0
      %v738 = vpop.f32.mrb[0].mxu0
      %v739 = vadd.f32 0.0, %v738
      %v740 = vpop.f32.mrb[0].mxu0
      %741 = vmatprep.mubr.bf16.mxu0 0
      %742 = vmatmul.mubr.bf16.gmra.mrb[0].mxu0 %v690
      %v743 = vpop.f32.mrb[0].mxu0
      %v744 = vadd.f32 0.0, %v743
      %v745 = vpop.f32.mrb[0].mxu0
      %v746 = vpop.f32.mrb[0].mxu0
      %v747 = vadd.f32 0.0, %v746
      %v748 = vpop.f32.mrb[0].mxu0
      %749 = vmatprep.mubr.bf16.mxu0 0
      %750 = vmatmul.mubr.bf16.gmra.mrb[0].mxu0 %v693
      %v751 = vpop.f32.mrb[0].mxu0
      %v752 = vadd.f32 0.0, %v751
      %v753 = vpop.f32.mrb[0].mxu0
      %v754 = vpop.f32.mrb[0].mxu0
      %v755 = vadd.f32 0.0, %v754
      %v756 = vpop.f32.mrb[0].mxu0
      %757 = vmatprep.mubr.bf16.mxu0 0
      %758 = vmatmul.mubr.bf16.gmra.mrb[0].mxu0 %v696
      %v759 = vpop.f32.mrb[0].mxu0
      %v760 = vadd.f32 0.0, %v759
      %v761 = vpop.f32.mrb[0].mxu0
      %v762 = vpop.f32.mrb[0].mxu0
      %v763 = vadd.f32 0.0, %v762
      %v764 = vpop.f32.mrb[0].mxu0
      %765 = vdwg.mxu0
      %v766 = vadd.f32 %v617, %v736
      %v767 = vadd.f32 %v620, %v739
      %v768 = vadd.f32 %v625, %v744
      %v769 = vadd.f32 %v628, %v747
      %v770 = vadd.f32 %v633, %v752
      %v771 = vadd.f32 %v636, %v755
      %v772 = vadd.f32 %v641, %v760
      %v773 = vadd.f32 %v644, %v763
      %v774 = vpack.c.bf16 %v369, %v367
      %v775 = vpack.c.bf16 %v373, %v371
      %v776 = vpack.c.bf16 %v377, %v375
      %v777 = vpack.c.bf16 %v381, %v379
      %s778 = scalar_lea.vmem %s3, 12
      %v779 = vld [vmem:[%s778] sm:$0xf]
      %v781 = vsel %vm485, %v774, 0
      %v784 = vsel %vm485, %v775, 0
      %v787 = vsel %vm485, %v776, 0
      %v790 = vsel %vm485, %v777, 0
      %v793 = vsel %vm498, %v779, 0
      %795 = vmatprep.subr.bf16.mxu0 0
      %796 = vmatpush1.bf16.msra.mxu0 %v793
      %797 = vmatprep.subr.bf16.mxu0 0
      %798 = vmatpush1.bf16.msra.mxu0 0
      %799 = vmatprep.subr.bf16.mxu0 0
      %800 = vmatpush1.bf16.msra.mxu0 0
      %801 = vmatprep.subr.bf16.mxu0 0
      %802 = vmatpush1.bf16.msra.mxu0 0
      %803 = vmatprep.subr.bf16.mxu0 0
      %804 = vmatpush1.bf16.msra.mxu0 0
      %805 = vmatprep.subr.bf16.mxu0 0
      %806 = vmatpush1.bf16.msra.mxu0 0
      %807 = vmatprep.subr.bf16.mxu0 0
      %808 = vmatpush1.bf16.msra.mxu0 0
      %809 = vmatprep.subr.bf16.mxu0 0
      %810 = vmatpush1.bf16.msra.mxu0 0
      %811 = vmatprep.subr.bf16.mxu0 0
      %812 = vmatpush1.bf16.msra.mxu0 0
      %813 = vmatprep.subr.bf16.mxu0 0
      %814 = vmatpush1.bf16.msra.mxu0 0
      %815 = vmatprep.subr.bf16.mxu0 0
      %816 = vmatpush1.bf16.msra.mxu0 0
      %817 = vmatprep.subr.bf16.mxu0 0
      %818 = vmatpush1.bf16.msra.mxu0 0
      %819 = vmatprep.subr.bf16.mxu0 0
      %820 = vmatpush1.bf16.msra.mxu0 0
      %821 = vmatprep.subr.bf16.mxu0 0
      %822 = vmatpush1.bf16.msra.mxu0 0
      %823 = vmatprep.subr.bf16.mxu0 0
      %824 = vmatpush1.bf16.msra.mxu0 0
      %825 = vmatprep.subr.bf16.mxu0 0
      %826 = vmatpush1.bf16.msra.mxu0 0
      %827 = vmatprep.mubr.bf16.mxu0 0
      %828 = vmatmul.mubr.bf16.gmra.mrb[0].mxu0 %v781
      %v829 = vpop.f32.mrb[0].mxu0
      %v830 = vadd.f32 0.0, %v829
      %v831 = vpop.f32.mrb[0].mxu0
      %v832 = vpop.f32.mrb[0].mxu0
      %v833 = vadd.f32 0.0, %v832
      %v834 = vpop.f32.mrb[0].mxu0
      %835 = vmatprep.mubr.bf16.mxu0 0
      %836 = vmatmul.mubr.bf16.gmra.mrb[0].mxu0 %v784
      %v837 = vpop.f32.mrb[0].mxu0
      %v838 = vadd.f32 0.0, %v837
      %v839 = vpop.f32.mrb[0].mxu0
      %v840 = vpop.f32.mrb[0].mxu0
      %v841 = vadd.f32 0.0, %v840
      %v842 = vpop.f32.mrb[0].mxu0
      %843 = vmatprep.mubr.bf16.mxu0 0
      %844 = vmatmul.mubr.bf16.gmra.mrb[0].mxu0 %v787
      %v845 = vpop.f32.mrb[0].mxu0
      %v846 = vadd.f32 0.0, %v845
      %v847 = vpop.f32.mrb[0].mxu0
      %v848 = vpop.f32.mrb[0].mxu0
      %v849 = vadd.f32 0.0, %v848
      %v850 = vpop.f32.mrb[0].mxu0
      %851 = vmatprep.mubr.bf16.mxu0 0
      %852 = vmatmul.mubr.bf16.gmra.mrb[0].mxu0 %v790
      %v853 = vpop.f32.mrb[0].mxu0
      %v854 = vadd.f32 0.0, %v853
      %v855 = vpop.f32.mrb[0].mxu0
      %v856 = vpop.f32.mrb[0].mxu0
      %v857 = vadd.f32 0.0, %v856
      %v858 = vpop.f32.mrb[0].mxu0
      %859 = vdwg.mxu0
      %v860 = vadd.f32 %v766, %v830
      %v861 = vadd.f32 %v767, %v833
      %v862 = vadd.f32 %v768, %v838
      %v863 = vadd.f32 %v769, %v841
      %v864 = vadd.f32 %v770, %v846
      %v865 = vadd.f32 %v771, %v849
      %v866 = vadd.f32 %v772, %v854
      %v867 = vadd.f32 %v773, %v857
      %v870 = vrot.slane %v381, 1
      %v871 = vrot.slane %v382, 1
      %v872 = vsel %vm446, %v870, %v871
      %v874 = vpack.c.bf16 %v455, %v452
      %v875 = vpack.c.bf16 %v461, %v458
      %v876 = vpack.c.bf16 %v467, %v464
      %v877 = vpack.c.bf16 %v872, %v470
      %s878 = scalar_lea.vmem %s3, 16
      %v879 = vld [vmem:[%s878] sm:$0xf]
      %v881 = vsel %vm485, %v874, 0
      %v884 = vsel %vm485, %v875, 0
      %v887 = vsel %vm485, %v876, 0
      %v890 = vsel %vm485, %v877, 0
      %v893 = vsel %vm498, %v879, 0
      %895 = vmatprep.subr.bf16.mxu0 0
      %896 = vmatpush1.bf16.msra.mxu0 %v893
      %897 = vmatprep.subr.bf16.mxu0 0
      %898 = vmatpush1.bf16.msra.mxu0 0
      %899 = vmatprep.subr.bf16.mxu0 0
      %900 = vmatpush1.bf16.msra.mxu0 0
      %901 = vmatprep.subr.bf16.mxu0 0
      %902 = vmatpush1.bf16.msra.mxu0 0
      %903 = vmatprep.subr.bf16.mxu0 0
      %904 = vmatpush1.bf16.msra.mxu0 0
      %905 = vmatprep.subr.bf16.mxu0 0
      %906 = vmatpush1.bf16.msra.mxu0 0
      %907 = vmatprep.subr.bf16.mxu0 0
      %908 = vmatpush1.bf16.msra.mxu0 0
      %909 = vmatprep.subr.bf16.mxu0 0
      %910 = vmatpush1.bf16.msra.mxu0 0
      %911 = vmatprep.subr.bf16.mxu0 0
      %912 = vmatpush1.bf16.msra.mxu0 0
      %913 = vmatprep.subr.bf16.mxu0 0
      %914 = vmatpush1.bf16.msra.mxu0 0
      %915 = vmatprep.subr.bf16.mxu0 0
      %916 = vmatpush1.bf16.msra.mxu0 0
      %917 = vmatprep.subr.bf16.mxu0 0
      %918 = vmatpush1.bf16.msra.mxu0 0
      %919 = vmatprep.subr.bf16.mxu0 0
      %920 = vmatpush1.bf16.msra.mxu0 0
      %921 = vmatprep.subr.bf16.mxu0 0
      %922 = vmatpush1.bf16.msra.mxu0 0
      %923 = vmatprep.subr.bf16.mxu0 0
      %924 = vmatpush1.bf16.msra.mxu0 0
      %925 = vmatprep.subr.bf16.mxu0 0
      %926 = vmatpush1.bf16.msra.mxu0 0
      %927 = vmatprep.mubr.bf16.mxu0 0
      %928 = vmatmul.mubr.bf16.gmra.mrb[0].mxu0 %v881
      %v929 = vpop.f32.mrb[0].mxu0
      %v930 = vadd.f32 0.0, %v929
      %v931 = vpop.f32.mrb[0].mxu0
      %v932 = vpop.f32.mrb[0].mxu0
      %v933 = vadd.f32 0.0, %v932
      %v934 = vpop.f32.mrb[0].mxu0
      %935 = vmatprep.mubr.bf16.mxu0 0
      %936 = vmatmul.mubr.bf16.gmra.mrb[0].mxu0 %v884
      %v937 = vpop.f32.mrb[0].mxu0
      %v938 = vadd.f32 0.0, %v937
      %v939 = vpop.f32.mrb[0].mxu0
      %v940 = vpop.f32.mrb[0].mxu0
      %v941 = vadd.f32 0.0, %v940
      %v942 = vpop.f32.mrb[0].mxu0
      %943 = vmatprep.mubr.bf16.mxu0 0
      %944 = vmatmul.mubr.bf16.gmra.mrb[0].mxu0 %v887
      %v945 = vpop.f32.mrb[0].mxu0
      %v946 = vadd.f32 0.0, %v945
      %v947 = vpop.f32.mrb[0].mxu0
      %v948 = vpop.f32.mrb[0].mxu0
      %v949 = vadd.f32 0.0, %v948
      %v950 = vpop.f32.mrb[0].mxu0
      %951 = vmatprep.mubr.bf16.mxu0 0
      %952 = vmatmul.mubr.bf16.gmra.mrb[0].mxu0 %v890
      %v953 = vpop.f32.mrb[0].mxu0
      %v954 = vadd.f32 0.0, %v953
      %v955 = vpop.f32.mrb[0].mxu0
      %v956 = vpop.f32.mrb[0].mxu0
      %v957 = vadd.f32 0.0, %v956
      %v958 = vpop.f32.mrb[0].mxu0
      %959 = vdwg.mxu0
      %v960 = vadd.f32 %v860, %v930
      %v961 = vadd.f32 %v861, %v933
      %v962 = vadd.f32 %v862, %v938
      %v963 = vadd.f32 %v863, %v941
      %v964 = vadd.f32 %v864, %v946
      %v965 = vadd.f32 %v865, %v949
      %v966 = vadd.f32 %v866, %v954
      %v967 = vadd.f32 %v867, %v957
      %v968 = vrot.slane %v381, 2
      %v969 = vrot.slane %v382, 2
      %v970 = vsel %vm647, %v968, %v969
      %v972 = vpack.c.bf16 %v656, %v653
      %v973 = vpack.c.bf16 %v662, %v659
      %v974 = vpack.c.bf16 %v668, %v665
      %v975 = vpack.c.bf16 %v970, %v671
      %s976 = scalar_lea.vmem %s3, 20
      %v977 = vld [vmem:[%s976] sm:$0xf]
      %v979 = vsel %vm485, %v972, 0
      %v982 = vsel %vm485, %v973, 0
      %v985 = vsel %vm485, %v974, 0
      %v988 = vsel %vm485, %v975, 0
      %v991 = vsel %vm498, %v977, 0
      %993 = vmatprep.subr.bf16.mxu0 0
      %994 = vmatpush1.bf16.msra.mxu0 %v991
      %995 = vmatprep.subr.bf16.mxu0 0
      %996 = vmatpush1.bf16.msra.mxu0 0
      %997 = vmatprep.subr.bf16.mxu0 0
      %998 = vmatpush1.bf16.msra.mxu0 0
      %999 = vmatprep.subr.bf16.mxu0 0
      %1000 = vmatpush1.bf16.msra.mxu0 0
      %1001 = vmatprep.subr.bf16.mxu0 0
      %1002 = vmatpush1.bf16.msra.mxu0 0
      %1003 = vmatprep.subr.bf16.mxu0 0
      %1004 = vmatpush1.bf16.msra.mxu0 0
      %1005 = vmatprep.subr.bf16.mxu0 0
      %1006 = vmatpush1.bf16.msra.mxu0 0
      %1007 = vmatprep.subr.bf16.mxu0 0
      %1008 = vmatpush1.bf16.msra.mxu0 0
      %1009 = vmatprep.subr.bf16.mxu0 0
      %1010 = vmatpush1.bf16.msra.mxu0 0
      %1011 = vmatprep.subr.bf16.mxu0 0
      %1012 = vmatpush1.bf16.msra.mxu0 0
      %1013 = vmatprep.subr.bf16.mxu0 0
      %1014 = vmatpush1.bf16.msra.mxu0 0
      %1015 = vmatprep.subr.bf16.mxu0 0
      %1016 = vmatpush1.bf16.msra.mxu0 0
      %1017 = vmatprep.subr.bf16.mxu0 0
      %1018 = vmatpush1.bf16.msra.mxu0 0
      %1019 = vmatprep.subr.bf16.mxu0 0
      %1020 = vmatpush1.bf16.msra.mxu0 0
      %1021 = vmatprep.subr.bf16.mxu0 0
      %1022 = vmatpush1.bf16.msra.mxu0 0
      %1023 = vmatprep.subr.bf16.mxu0 0
      %1024 = vmatpush1.bf16.msra.mxu0 0
      %1025 = vmatprep.mubr.bf16.mxu0 0
      %1026 = vmatmul.mubr.bf16.gmra.mrb[0].mxu0 %v979
      %v1027 = vpop.f32.mrb[0].mxu0
      %v1028 = vadd.f32 0.0, %v1027
      %v1029 = vpop.f32.mrb[0].mxu0
      %v1030 = vpop.f32.mrb[0].mxu0
      %v1031 = vadd.f32 0.0, %v1030
      %v1032 = vpop.f32.mrb[0].mxu0
      %1033 = vmatprep.mubr.bf16.mxu0 0
      %1034 = vmatmul.mubr.bf16.gmra.mrb[0].mxu0 %v982
      %v1035 = vpop.f32.mrb[0].mxu0
      %v1036 = vadd.f32 0.0, %v1035
      %v1037 = vpop.f32.mrb[0].mxu0
      %v1038 = vpop.f32.mrb[0].mxu0
      %v1039 = vadd.f32 0.0, %v1038
      %v1040 = vpop.f32.mrb[0].mxu0
      %1041 = vmatprep.mubr.bf16.mxu0 0
      %1042 = vmatmul.mubr.bf16.gmra.mrb[0].mxu0 %v985
      %v1043 = vpop.f32.mrb[0].mxu0
      %v1044 = vadd.f32 0.0, %v1043
      %v1045 = vpop.f32.mrb[0].mxu0
      %v1046 = vpop.f32.mrb[0].mxu0
      %v1047 = vadd.f32 0.0, %v1046
      %v1048 = vpop.f32.mrb[0].mxu0
      %1049 = vmatprep.mubr.bf16.mxu0 0
      %1050 = vmatmul.mubr.bf16.gmra.mrb[0].mxu0 %v988
      %v1051 = vpop.f32.mrb[0].mxu0
      %v1052 = vadd.f32 0.0, %v1051
      %v1053 = vpop.f32.mrb[0].mxu0
      %v1054 = vpop.f32.mrb[0].mxu0
      %v1055 = vadd.f32 0.0, %v1054
      %v1056 = vpop.f32.mrb[0].mxu0
      %1057 = vdwg.mxu0
      %v1058 = vadd.f32 %v960, %v1028
      %v1059 = vadd.f32 %v961, %v1031
      %v1060 = vadd.f32 %v962, %v1036
      %v1061 = vadd.f32 %v963, %v1039
      %v1062 = vadd.f32 %v964, %v1044
      %v1063 = vadd.f32 %v965, %v1047
      %v1064 = vadd.f32 %v966, %v1052
      %v1065 = vadd.f32 %v967, %v1055
      %v1066 = vpack.c.bf16 %v383, %v381
      %s1067 = scalar_lea.vmem %s3, 24
      %v1068 = vld [vmem:[%s1067] sm:$0xf]
      %v1070 = vsel %vm485, %v1066, 0
      %v1073 = vsel %vm498, %v1068, 0
      %1075 = vmatprep.subr.bf16.mxu0 0
      %1076 = vmatpush1.bf16.msra.mxu0 %v1073
      %1077 = vmatprep.subr.bf16.mxu0 0
      %1078 = vmatpush1.bf16.msra.mxu0 0
      %1079 = vmatprep.subr.bf16.mxu0 0
      %1080 = vmatpush1.bf16.msra.mxu0 0
      %1081 = vmatprep.subr.bf16.mxu0 0
      %1082 = vmatpush1.bf16.msra.mxu0 0
      %1083 = vmatprep.subr.bf16.mxu0 0
      %1084 = vmatpush1.bf16.msra.mxu0 0
      %1085 = vmatprep.subr.bf16.mxu0 0
      %1086 = vmatpush1.bf16.msra.mxu0 0
      %1087 = vmatprep.subr.bf16.mxu0 0
      %1088 = vmatpush1.bf16.msra.mxu0 0
      %1089 = vmatprep.subr.bf16.mxu0 0
      %1090 = vmatpush1.bf16.msra.mxu0 0
      %1091 = vmatprep.subr.bf16.mxu0 0
      %1092 = vmatpush1.bf16.msra.mxu0 0
      %1093 = vmatprep.subr.bf16.mxu0 0
      %1094 = vmatpush1.bf16.msra.mxu0 0
      %1095 = vmatprep.subr.bf16.mxu0 0
      %1096 = vmatpush1.bf16.msra.mxu0 0
      %1097 = vmatprep.subr.bf16.mxu0 0
      %1098 = vmatpush1.bf16.msra.mxu0 0
      %1099 = vmatprep.subr.bf16.mxu0 0
      %1100 = vmatpush1.bf16.msra.mxu0 0
      %1101 = vmatprep.subr.bf16.mxu0 0
      %1102 = vmatpush1.bf16.msra.mxu0 0
      %1103 = vmatprep.subr.bf16.mxu0 0
      %1104 = vmatpush1.bf16.msra.mxu0 0
      %1105 = vmatprep.subr.bf16.mxu0 0
      %1106 = vmatpush1.bf16.msra.mxu0 0
      %1107 = vmatprep.mubr.bf16.mxu0 0
      %1108 = vmatmul.mubr.bf16.gmra.mrb[0].mxu0 %v571
      %v1109 = vpop.f32.mrb[0].mxu0
      %v1110 = vadd.f32 0.0, %v1109
      %v1111 = vpop.f32.mrb[0].mxu0
      %v1112 = vpop.f32.mrb[0].mxu0
      %v1113 = vadd.f32 0.0, %v1112
      %v1114 = vpop.f32.mrb[0].mxu0
      %1115 = vmatprep.mubr.bf16.mxu0 0
      %1116 = vmatmul.mubr.bf16.gmra.mrb[0].mxu0 %v574
      %v1117 = vpop.f32.mrb[0].mxu0
      %v1118 = vadd.f32 0.0, %v1117
      %v1119 = vpop.f32.mrb[0].mxu0
      %v1120 = vpop.f32.mrb[0].mxu0
      %v1121 = vadd.f32 0.0, %v1120
      %v1122 = vpop.f32.mrb[0].mxu0
      %1123 = vmatprep.mubr.bf16.mxu0 0
      %1124 = vmatmul.mubr.bf16.gmra.mrb[0].mxu0 %v577
      %v1125 = vpop.f32.mrb[0].mxu0
      %v1126 = vadd.f32 0.0, %v1125
      %v1127 = vpop.f32.mrb[0].mxu0
      %v1128 = vpop.f32.mrb[0].mxu0
      %v1129 = vadd.f32 0.0, %v1128
      %v1130 = vpop.f32.mrb[0].mxu0
      %1131 = vmatprep.mubr.bf16.mxu0 0
      %1132 = vmatmul.mubr.bf16.gmra.mrb[0].mxu0 %v1070
      %v1133 = vpop.f32.mrb[0].mxu0
      %v1134 = vadd.f32 0.0, %v1133
      %v1135 = vpop.f32.mrb[0].mxu0
      %v1136 = vpop.f32.mrb[0].mxu0
      %v1137 = vadd.f32 0.0, %v1136
      %v1138 = vpop.f32.mrb[0].mxu0
      %1139 = vdwg.mxu0
      %v1140 = vadd.f32 %v1058, %v1110
      %v1141 = vadd.f32 %v1059, %v1113
      %v1142 = vadd.f32 %v1060, %v1118
      %v1143 = vadd.f32 %v1061, %v1121
      %v1144 = vadd.f32 %v1062, %v1126
      %v1145 = vadd.f32 %v1063, %v1129
      %v1146 = vadd.f32 %v1064, %v1134
      %v1147 = vadd.f32 %v1065, %v1137
      %v1150 = vrot.slane %v383, 1
      %v1151 = vrot.slane %v384, 1
      %v1152 = vsel %vm446, %v1150, %v1151
      %v1154 = vpack.c.bf16 %v1152, %v872
      %s1155 = scalar_lea.vmem %s3, 28
      %v1156 = vld [vmem:[%s1155] sm:$0xf]
      %v1158 = vsel %vm485, %v1154, 0
      %v1161 = vsel %vm498, %v1156, 0
      %1163 = vmatprep.subr.bf16.mxu0 0
      %1164 = vmatpush1.bf16.msra.mxu0 %v1161
      %1165 = vmatprep.subr.bf16.mxu0 0
      %1166 = vmatpush1.bf16.msra.mxu0 0
      %1167 = vmatprep.subr.bf16.mxu0 0
      %1168 = vmatpush1.bf16.msra.mxu0 0
      %1169 = vmatprep.subr.bf16.mxu0 0
      %1170 = vmatpush1.bf16.msra.mxu0 0
      %1171 = vmatprep.subr.bf16.mxu0 0
      %1172 = vmatpush1.bf16.msra.mxu0 0
      %1173 = vmatprep.subr.bf16.mxu0 0
      %1174 = vmatpush1.bf16.msra.mxu0 0
      %1175 = vmatprep.subr.bf16.mxu0 0
      %1176 = vmatpush1.bf16.msra.mxu0 0
      %1177 = vmatprep.subr.bf16.mxu0 0
      %1178 = vmatpush1.bf16.msra.mxu0 0
      %1179 = vmatprep.subr.bf16.mxu0 0
      %1180 = vmatpush1.bf16.msra.mxu0 0
      %1181 = vmatprep.subr.bf16.mxu0 0
      %1182 = vmatpush1.bf16.msra.mxu0 0
      %1183 = vmatprep.subr.bf16.mxu0 0
      %1184 = vmatpush1.bf16.msra.mxu0 0
      %1185 = vmatprep.subr.bf16.mxu0 0
      %1186 = vmatpush1.bf16.msra.mxu0 0
      %1187 = vmatprep.subr.bf16.mxu0 0
      %1188 = vmatpush1.bf16.msra.mxu0 0
      %1189 = vmatprep.subr.bf16.mxu0 0
      %1190 = vmatpush1.bf16.msra.mxu0 0
      %1191 = vmatprep.subr.bf16.mxu0 0
      %1192 = vmatpush1.bf16.msra.mxu0 0
      %1193 = vmatprep.subr.bf16.mxu0 0
      %1194 = vmatpush1.bf16.msra.mxu0 0
      %1195 = vmatprep.mubr.bf16.mxu0 0
      %1196 = vmatmul.mubr.bf16.gmra.mrb[0].mxu0 %v490
      %v1197 = vpop.f32.mrb[0].mxu0
      %v1198 = vadd.f32 0.0, %v1197
      %v1199 = vpop.f32.mrb[0].mxu0
      %v1200 = vpop.f32.mrb[0].mxu0
      %v1201 = vadd.f32 0.0, %v1200
      %v1202 = vpop.f32.mrb[0].mxu0
      %1203 = vmatprep.mubr.bf16.mxu0 0
      %1204 = vmatmul.mubr.bf16.gmra.mrb[0].mxu0 %v493
      %v1205 = vpop.f32.mrb[0].mxu0
      %v1206 = vadd.f32 0.0, %v1205
      %v1207 = vpop.f32.mrb[0].mxu0
      %v1208 = vpop.f32.mrb[0].mxu0
      %v1209 = vadd.f32 0.0, %v1208
      %v1210 = vpop.f32.mrb[0].mxu0
      %1211 = vmatprep.mubr.bf16.mxu0 0
      %1212 = vmatmul.mubr.bf16.gmra.mrb[0].mxu0 %v496
      %v1213 = vpop.f32.mrb[0].mxu0
      %v1214 = vadd.f32 0.0, %v1213
      %v1215 = vpop.f32.mrb[0].mxu0
      %v1216 = vpop.f32.mrb[0].mxu0
      %v1217 = vadd.f32 0.0, %v1216
      %v1218 = vpop.f32.mrb[0].mxu0
      %1219 = vmatprep.mubr.bf16.mxu0 0
      %1220 = vmatmul.mubr.bf16.gmra.mrb[0].mxu0 %v1158
      %v1221 = vpop.f32.mrb[0].mxu0
      %v1222 = vadd.f32 0.0, %v1221
      %v1223 = vpop.f32.mrb[0].mxu0
      %v1224 = vpop.f32.mrb[0].mxu0
      %v1225 = vadd.f32 0.0, %v1224
      %v1226 = vpop.f32.mrb[0].mxu0
      %1227 = vdwg.mxu0
      %v1228 = vadd.f32 %v1140, %v1198
      %v1229 = vadd.f32 %v1141, %v1201
      %v1230 = vadd.f32 %v1142, %v1206
      %v1231 = vadd.f32 %v1143, %v1209
      %v1232 = vadd.f32 %v1144, %v1214
      %v1233 = vadd.f32 %v1145, %v1217
      %v1234 = vadd.f32 %v1146, %v1222
      %v1235 = vadd.f32 %v1147, %v1225
      %v1236 = vrot.slane %v383, 2
      %v1237 = vrot.slane %v384, 2
      %v1238 = vsel %vm647, %v1236, %v1237
      %v1240 = vpack.c.bf16 %v1238, %v970
      %s1241 = scalar_lea.vmem %s3, 32
      %v1242 = vld [vmem:[%s1241] sm:$0xf]
      %v1244 = vsel %vm485, %v1240, 0
      %v1247 = vsel %vm498, %v1242, 0
      %1249 = vmatprep.subr.bf16.mxu0 0
      %1250 = vmatpush1.bf16.msra.mxu0 %v1247
      %1251 = vmatprep.subr.bf16.mxu0 0
      %1252 = vmatpush1.bf16.msra.mxu0 0
      %1253 = vmatprep.subr.bf16.mxu0 0
      %1254 = vmatpush1.bf16.msra.mxu0 0
      %1255 = vmatprep.subr.bf16.mxu0 0
      %1256 = vmatpush1.bf16.msra.mxu0 0
      %1257 = vmatprep.subr.bf16.mxu0 0
      %1258 = vmatpush1.bf16.msra.mxu0 0
      %1259 = vmatprep.subr.bf16.mxu0 0
      %1260 = vmatpush1.bf16.msra.mxu0 0
      %1261 = vmatprep.subr.bf16.mxu0 0
      %1262 = vmatpush1.bf16.msra.mxu0 0
      %1263 = vmatprep.subr.bf16.mxu0 0
      %1264 = vmatpush1.bf16.msra.mxu0 0
      %1265 = vmatprep.subr.bf16.mxu0 0
      %1266 = vmatpush1.bf16.msra.mxu0 0
      %1267 = vmatprep.subr.bf16.mxu0 0
      %1268 = vmatpush1.bf16.msra.mxu0 0
      %1269 = vmatprep.subr.bf16.mxu0 0
      %1270 = vmatpush1.bf16.msra.mxu0 0
      %1271 = vmatprep.subr.bf16.mxu0 0
      %1272 = vmatpush1.bf16.msra.mxu0 0
      %1273 = vmatprep.subr.bf16.mxu0 0
      %1274 = vmatpush1.bf16.msra.mxu0 0
      %1275 = vmatprep.subr.bf16.mxu0 0
      %1276 = vmatpush1.bf16.msra.mxu0 0
      %1277 = vmatprep.subr.bf16.mxu0 0
      %1278 = vmatpush1.bf16.msra.mxu0 0
      %1279 = vmatprep.subr.bf16.mxu0 0
      %1280 = vmatpush1.bf16.msra.mxu0 0
      %1281 = vmatprep.mubr.bf16.mxu0 0
      %1282 = vmatmul.mubr.bf16.gmra.mrb[0].mxu0 %v690
      %v1283 = vpop.f32.mrb[0].mxu0
      %v1284 = vadd.f32 0.0, %v1283
      %v1285 = vpop.f32.mrb[0].mxu0
      %v1286 = vpop.f32.mrb[0].mxu0
      %v1287 = vadd.f32 0.0, %v1286
      %v1288 = vpop.f32.mrb[0].mxu0
      %1289 = vmatprep.mubr.bf16.mxu0 0
      %1290 = vmatmul.mubr.bf16.gmra.mrb[0].mxu0 %v693
      %v1291 = vpop.f32.mrb[0].mxu0
      %v1292 = vadd.f32 0.0, %v1291
      %v1293 = vpop.f32.mrb[0].mxu0
      %v1294 = vpop.f32.mrb[0].mxu0
      %v1295 = vadd.f32 0.0, %v1294
      %v1296 = vpop.f32.mrb[0].mxu0
      %1297 = vmatprep.mubr.bf16.mxu0 0
      %1298 = vmatmul.mubr.bf16.gmra.mrb[0].mxu0 %v696
      %v1299 = vpop.f32.mrb[0].mxu0
      %v1300 = vadd.f32 0.0, %v1299
      %v1301 = vpop.f32.mrb[0].mxu0
      %v1302 = vpop.f32.mrb[0].mxu0
      %v1303 = vadd.f32 0.0, %v1302
      %v1304 = vpop.f32.mrb[0].mxu0
      %1305 = vmatprep.mubr.bf16.mxu0 0
      %1306 = vmatmul.mubr.bf16.gmra.mrb[0].mxu0 %v1244
      %v1307 = vpop.f32.mrb[0].mxu0
      %v1308 = vadd.f32 0.0, %v1307
      %v1309 = vpop.f32.mrb[0].mxu0
      %v1310 = vpop.f32.mrb[0].mxu0
      %v1311 = vadd.f32 0.0, %v1310
      %v1312 = vpop.f32.mrb[0].mxu0
      %1313 = vdwg.mxu0
      %v1314 = vadd.f32 %v1228, %v1284
      %v1315 = vadd.f32 %v1229, %v1287
      %v1316 = vadd.f32 %v1230, %v1292
      %v1317 = vadd.f32 %v1231, %v1295
      %v1318 = vadd.f32 %v1232, %v1300
      %v1319 = vadd.f32 %v1233, %v1303
      %v1320 = vadd.f32 %v1234, %v1308
      %v1321 = vadd.f32 %v1235, %v1311
      %v1322 = vpack.c.bf16 %v387, %v385
      %v1323 = vpack.c.bf16 %v391, %v389
      %v1324 = vpack.c.bf16 %v395, %v393
      %v1325 = vpack.c.bf16 %v399, %v397
      %s1326 = scalar_lea.vmem %s3, 36
      %v1327 = vld [vmem:[%s1326] sm:$0xf]
      %v1329 = vsel %vm485, %v1322, 0
      %v1332 = vsel %vm485, %v1323, 0
      %v1335 = vsel %vm485, %v1324, 0
      %v1338 = vsel %vm485, %v1325, 0
      %v1341 = vsel %vm498, %v1327, 0
      %1343 = vmatprep.subr.bf16.mxu0 0
      %1344 = vmatpush1.bf16.msra.mxu0 %v1341
      %1345 = vmatprep.subr.bf16.mxu0 0
      %1346 = vmatpush1.bf16.msra.mxu0 0
      %1347 = vmatprep.subr.bf16.mxu0 0
      %1348 = vmatpush1.bf16.msra.mxu0 0
      %1349 = vmatprep.subr.bf16.mxu0 0
      %1350 = vmatpush1.bf16.msra.mxu0 0
      %1351 = vmatprep.subr.bf16.mxu0 0
      %1352 = vmatpush1.bf16.msra.mxu0 0
      %1353 = vmatprep.subr.bf16.mxu0 0
      %1354 = vmatpush1.bf16.msra.mxu0 0
      %1355 = vmatprep.subr.bf16.mxu0 0
      %1356 = vmatpush1.bf16.msra.mxu0 0
      %1357 = vmatprep.subr.bf16.mxu0 0
      %1358 = vmatpush1.bf16.msra.mxu0 0
      %1359 = vmatprep.subr.bf16.mxu0 0
      %1360 = vmatpush1.bf16.msra.mxu0 0
      %1361 = vmatprep.subr.bf16.mxu0 0
      %1362 = vmatpush1.bf16.msra.mxu0 0
      %1363 = vmatprep.subr.bf16.mxu0 0
      %1364 = vmatpush1.bf16.msra.mxu0 0
      %1365 = vmatprep.subr.bf16.mxu0 0
      %1366 = vmatpush1.bf16.msra.mxu0 0
      %1367 = vmatprep.subr.bf16.mxu0 0
      %1368 = vmatpush1.bf16.msra.mxu0 0
      %1369 = vmatprep.subr.bf16.mxu0 0
      %1370 = vmatpush1.bf16.msra.mxu0 0
      %1371 = vmatprep.subr.bf16.mxu0 0
      %1372 = vmatpush1.bf16.msra.mxu0 0
      %1373 = vmatprep.subr.bf16.mxu0 0
      %1374 = vmatpush1.bf16.msra.mxu0 0
      %1375 = vmatprep.mubr.bf16.mxu0 0
      %1376 = vmatmul.mubr.bf16.gmra.mrb[0].mxu0 %v1329
      %v1377 = vpop.f32.mrb[0].mxu0
      %v1378 = vadd.f32 0.0, %v1377
      %v1379 = vpop.f32.mrb[0].mxu0
      %v1380 = vpop.f32.mrb[0].mxu0
      %v1381 = vadd.f32 0.0, %v1380
      %v1382 = vpop.f32.mrb[0].mxu0
      %1383 = vmatprep.mubr.bf16.mxu0 0
      %1384 = vmatmul.mubr.bf16.gmra.mrb[0].mxu0 %v1332
      %v1385 = vpop.f32.mrb[0].mxu0
      %v1386 = vadd.f32 0.0, %v1385
      %v1387 = vpop.f32.mrb[0].mxu0
      %v1388 = vpop.f32.mrb[0].mxu0
      %v1389 = vadd.f32 0.0, %v1388
      %v1390 = vpop.f32.mrb[0].mxu0
      %1391 = vmatprep.mubr.bf16.mxu0 0
      %1392 = vmatmul.mubr.bf16.gmra.mrb[0].mxu0 %v1335
      %v1393 = vpop.f32.mrb[0].mxu0
      %v1394 = vadd.f32 0.0, %v1393
      %v1395 = vpop.f32.mrb[0].mxu0
      %v1396 = vpop.f32.mrb[0].mxu0
      %v1397 = vadd.f32 0.0, %v1396
      %v1398 = vpop.f32.mrb[0].mxu0
      %1399 = vmatprep.mubr.bf16.mxu0 0
      %1400 = vmatmul.mubr.bf16.gmra.mrb[0].mxu0 %v1338
      %v1401 = vpop.f32.mrb[0].mxu0
      %v1402 = vadd.f32 0.0, %v1401
      %v1403 = vpop.f32.mrb[0].mxu0
      %v1404 = vpop.f32.mrb[0].mxu0
      %v1405 = vadd.f32 0.0, %v1404
      %v1406 = vpop.f32.mrb[0].mxu0
      %1407 = vdwg.mxu0
      %v1408 = vadd.f32 %v1314, %v1378
      %v1409 = vadd.f32 %v1315, %v1381
      %v1410 = vadd.f32 %v1316, %v1386
      %v1411 = vadd.f32 %v1317, %v1389
      %v1412 = vadd.f32 %v1318, %v1394
      %v1413 = vadd.f32 %v1319, %v1397
      %v1414 = vadd.f32 %v1320, %v1402
      %v1415 = vadd.f32 %v1321, %v1405
      %v1432 = vrot.slane %v385, 1
      %v1433 = vrot.slane %v386, 1
      %v1434 = vsel %vm446, %v1432, %v1433
      %v1435 = vrot.slane %v387, 1
      %v1436 = vrot.slane %v388, 1
      %v1437 = vsel %vm446, %v1435, %v1436
      %v1438 = vrot.slane %v389, 1
      %v1439 = vrot.slane %v390, 1
      %v1440 = vsel %vm446, %v1438, %v1439
      %v1441 = vrot.slane %v391, 1
      %v1442 = vrot.slane %v392, 1
      %v1443 = vsel %vm446, %v1441, %v1442
      %v1444 = vrot.slane %v393, 1
      %v1445 = vrot.slane %v394, 1
      %v1446 = vsel %vm446, %v1444, %v1445
      %v1447 = vrot.slane %v395, 1
      %v1448 = vrot.slane %v396, 1
      %v1449 = vsel %vm446, %v1447, %v1448
      %v1450 = vrot.slane %v397, 1
      %v1451 = vrot.slane %v398, 1
      %v1452 = vsel %vm446, %v1450, %v1451
      %v1453 = vrot.slane %v399, 1
      %v1454 = vrot.slane %v400, 1
      %v1455 = vsel %vm446, %v1453, %v1454
      %v1464 = vpack.c.bf16 %v1437, %v1434
      %v1465 = vpack.c.bf16 %v1443, %v1440
      %v1466 = vpack.c.bf16 %v1449, %v1446
      %v1467 = vpack.c.bf16 %v1455, %v1452
      %s1468 = scalar_lea.vmem %s3, 40
      %v1469 = vld [vmem:[%s1468] sm:$0xf]
      %v1471 = vsel %vm485, %v1464, 0
      %v1474 = vsel %vm485, %v1465, 0
      %v1477 = vsel %vm485, %v1466, 0
      %v1480 = vsel %vm485, %v1467, 0
      %v1483 = vsel %vm498, %v1469, 0
      %1485 = vmatprep.subr.bf16.mxu0 0
      %1486 = vmatpush1.bf16.msra.mxu0 %v1483
      %1487 = vmatprep.subr.bf16.mxu0 0
      %1488 = vmatpush1.bf16.msra.mxu0 0
      %1489 = vmatprep.subr.bf16.mxu0 0
      %1490 = vmatpush1.bf16.msra.mxu0 0
      %1491 = vmatprep.subr.bf16.mxu0 0
      %1492 = vmatpush1.bf16.msra.mxu0 0
      %1493 = vmatprep.subr.bf16.mxu0 0
      %1494 = vmatpush1.bf16.msra.mxu0 0
      %1495 = vmatprep.subr.bf16.mxu0 0
      %1496 = vmatpush1.bf16.msra.mxu0 0
      %1497 = vmatprep.subr.bf16.mxu0 0
      %1498 = vmatpush1.bf16.msra.mxu0 0
      %1499 = vmatprep.subr.bf16.mxu0 0
      %1500 = vmatpush1.bf16.msra.mxu0 0
      %1501 = vmatprep.subr.bf16.mxu0 0
      %1502 = vmatpush1.bf16.msra.mxu0 0
      %1503 = vmatprep.subr.bf16.mxu0 0
      %1504 = vmatpush1.bf16.msra.mxu0 0
      %1505 = vmatprep.subr.bf16.mxu0 0
      %1506 = vmatpush1.bf16.msra.mxu0 0
      %1507 = vmatprep.subr.bf16.mxu0 0
      %1508 = vmatpush1.bf16.msra.mxu0 0
      %1509 = vmatprep.subr.bf16.mxu0 0
      %1510 = vmatpush1.bf16.msra.mxu0 0
      %1511 = vmatprep.subr.bf16.mxu0 0
      %1512 = vmatpush1.bf16.msra.mxu0 0
      %1513 = vmatprep.subr.bf16.mxu0 0
      %1514 = vmatpush1.bf16.msra.mxu0 0
      %1515 = vmatprep.subr.bf16.mxu0 0
      %1516 = vmatpush1.bf16.msra.mxu0 0
      %1517 = vmatprep.mubr.bf16.mxu0 0
      %1518 = vmatmul.mubr.bf16.gmra.mrb[0].mxu0 %v1471
      %v1519 = vpop.f32.mrb[0].mxu0
      %v1520 = vadd.f32 0.0, %v1519
      %v1521 = vpop.f32.mrb[0].mxu0
      %v1522 = vpop.f32.mrb[0].mxu0
      %v1523 = vadd.f32 0.0, %v1522
      %v1524 = vpop.f32.mrb[0].mxu0
      %1525 = vmatprep.mubr.bf16.mxu0 0
      %1526 = vmatmul.mubr.bf16.gmra.mrb[0].mxu0 %v1474
      %v1527 = vpop.f32.mrb[0].mxu0
      %v1528 = vadd.f32 0.0, %v1527
      %v1529 = vpop.f32.mrb[0].mxu0
      %v1530 = vpop.f32.mrb[0].mxu0
      %v1531 = vadd.f32 0.0, %v1530
      %v1532 = vpop.f32.mrb[0].mxu0
      %1533 = vmatprep.mubr.bf16.mxu0 0
      %1534 = vmatmul.mubr.bf16.gmra.mrb[0].mxu0 %v1477
      %v1535 = vpop.f32.mrb[0].mxu0
      %v1536 = vadd.f32 0.0, %v1535
      %v1537 = vpop.f32.mrb[0].mxu0
      %v1538 = vpop.f32.mrb[0].mxu0
      %v1539 = vadd.f32 0.0, %v1538
      %v1540 = vpop.f32.mrb[0].mxu0
      %1541 = vmatprep.mubr.bf16.mxu0 0
      %1542 = vmatmul.mubr.bf16.gmra.mrb[0].mxu0 %v1480
      %v1543 = vpop.f32.mrb[0].mxu0
      %v1544 = vadd.f32 0.0, %v1543
      %v1545 = vpop.f32.mrb[0].mxu0
      %v1546 = vpop.f32.mrb[0].mxu0
      %v1547 = vadd.f32 0.0, %v1546
      %v1548 = vpop.f32.mrb[0].mxu0
      %1549 = vdwg.mxu0
      %v1550 = vadd.f32 %v1408, %v1520
      %v1551 = vadd.f32 %v1409, %v1523
      %v1552 = vadd.f32 %v1410, %v1528
      %v1553 = vadd.f32 %v1411, %v1531
      %v1554 = vadd.f32 %v1412, %v1536
      %v1555 = vadd.f32 %v1413, %v1539
      %v1556 = vadd.f32 %v1414, %v1544
      %v1557 = vadd.f32 %v1415, %v1547
      %v1558 = vrot.slane %v385, 2
      %v1559 = vrot.slane %v386, 2
      %v1560 = vsel %vm647, %v1558, %v1559
      %v1561 = vrot.slane %v387, 2
      %v1562 = vrot.slane %v388, 2
      %v1563 = vsel %vm647, %v1561, %v1562
      %v1564 = vrot.slane %v389, 2
      %v1565 = vrot.slane %v390, 2
      %v1566 = vsel %vm647, %v1564, %v1565
      %v1567 = vrot.slane %v391, 2
      %v1568 = vrot.slane %v392, 2
      %v1569 = vsel %vm647, %v1567, %v1568
      %v1570 = vrot.slane %v393, 2
      %v1571 = vrot.slane %v394, 2
      %v1572 = vsel %vm647, %v1570, %v1571
      %v1573 = vrot.slane %v395, 2
      %v1574 = vrot.slane %v396, 2
      %v1575 = vsel %vm647, %v1573, %v1574
      %v1576 = vrot.slane %v397, 2
      %v1577 = vrot.slane %v398, 2
      %v1578 = vsel %vm647, %v1576, %v1577
      %v1579 = vrot.slane %v399, 2
      %v1580 = vrot.slane %v400, 2
      %v1581 = vsel %vm647, %v1579, %v1580
      %v1590 = vpack.c.bf16 %v1563, %v1560
      %v1591 = vpack.c.bf16 %v1569, %v1566
      %v1592 = vpack.c.bf16 %v1575, %v1572
      %v1593 = vpack.c.bf16 %v1581, %v1578
      %s1594 = scalar_lea.vmem %s3, 44
      %v1595 = vld [vmem:[%s1594] sm:$0xf]
      %v1597 = vsel %vm485, %v1590, 0
      %v1600 = vsel %vm485, %v1591, 0
      %v1603 = vsel %vm485, %v1592, 0
      %v1606 = vsel %vm485, %v1593, 0
      %v1609 = vsel %vm498, %v1595, 0
      %1611 = vmatprep.subr.bf16.mxu0 0
      %1612 = vmatpush1.bf16.msra.mxu0 %v1609
      %1613 = vmatprep.subr.bf16.mxu0 0
      %1614 = vmatpush1.bf16.msra.mxu0 0
      %1615 = vmatprep.subr.bf16.mxu0 0
      %1616 = vmatpush1.bf16.msra.mxu0 0
      %1617 = vmatprep.subr.bf16.mxu0 0
      %1618 = vmatpush1.bf16.msra.mxu0 0
      %1619 = vmatprep.subr.bf16.mxu0 0
      %1620 = vmatpush1.bf16.msra.mxu0 0
      %1621 = vmatprep.subr.bf16.mxu0 0
      %1622 = vmatpush1.bf16.msra.mxu0 0
      %1623 = vmatprep.subr.bf16.mxu0 0
      %1624 = vmatpush1.bf16.msra.mxu0 0
      %1625 = vmatprep.subr.bf16.mxu0 0
      %1626 = vmatpush1.bf16.msra.mxu0 0
      %1627 = vmatprep.subr.bf16.mxu0 0
      %1628 = vmatpush1.bf16.msra.mxu0 0
      %1629 = vmatprep.subr.bf16.mxu0 0
      %1630 = vmatpush1.bf16.msra.mxu0 0
      %1631 = vmatprep.subr.bf16.mxu0 0
      %1632 = vmatpush1.bf16.msra.mxu0 0
      %1633 = vmatprep.subr.bf16.mxu0 0
      %1634 = vmatpush1.bf16.msra.mxu0 0
      %1635 = vmatprep.subr.bf16.mxu0 0
      %1636 = vmatpush1.bf16.msra.mxu0 0
      %1637 = vmatprep.subr.bf16.mxu0 0
      %1638 = vmatpush1.bf16.msra.mxu0 0
      %1639 = vmatprep.subr.bf16.mxu0 0
      %1640 = vmatpush1.bf16.msra.mxu0 0
      %1641 = vmatprep.subr.bf16.mxu0 0
      %1642 = vmatpush1.bf16.msra.mxu0 0
      %1643 = vmatprep.mubr.bf16.mxu0 0
      %1644 = vmatmul.mubr.bf16.gmra.mrb[0].mxu0 %v1597
      %v1645 = vpop.f32.mrb[0].mxu0
      %v1646 = vadd.f32 0.0, %v1645
      %v1647 = vpop.f32.mrb[0].mxu0
      %v1648 = vpop.f32.mrb[0].mxu0
      %v1649 = vadd.f32 0.0, %v1648
      %v1650 = vpop.f32.mrb[0].mxu0
      %1651 = vmatprep.mubr.bf16.mxu0 0
      %1652 = vmatmul.mubr.bf16.gmra.mrb[0].mxu0 %v1600
      %v1653 = vpop.f32.mrb[0].mxu0
      %v1654 = vadd.f32 0.0, %v1653
      %v1655 = vpop.f32.mrb[0].mxu0
      %v1656 = vpop.f32.mrb[0].mxu0
      %v1657 = vadd.f32 0.0, %v1656
      %v1658 = vpop.f32.mrb[0].mxu0
      %1659 = vmatprep.mubr.bf16.mxu0 0
      %1660 = vmatmul.mubr.bf16.gmra.mrb[0].mxu0 %v1603
      %v1661 = vpop.f32.mrb[0].mxu0
      %v1662 = vadd.f32 0.0, %v1661
      %v1663 = vpop.f32.mrb[0].mxu0
      %v1664 = vpop.f32.mrb[0].mxu0
      %v1665 = vadd.f32 0.0, %v1664
      %v1666 = vpop.f32.mrb[0].mxu0
      %1667 = vmatprep.mubr.bf16.mxu0 0
      %1668 = vmatmul.mubr.bf16.gmra.mrb[0].mxu0 %v1606
      %v1669 = vpop.f32.mrb[0].mxu0
      %v1670 = vadd.f32 0.0, %v1669
      %v1671 = vpop.f32.mrb[0].mxu0
      %v1672 = vpop.f32.mrb[0].mxu0
      %v1673 = vadd.f32 0.0, %v1672
      %v1674 = vpop.f32.mrb[0].mxu0
      %1675 = vdwg.mxu0
      %v1676 = vadd.f32 %v1550, %v1646
      %v1677 = vadd.f32 %v1551, %v1649
      %v1678 = vadd.f32 %v1552, %v1654
      %v1679 = vadd.f32 %v1553, %v1657
      %v1680 = vadd.f32 %v1554, %v1662
      %v1681 = vadd.f32 %v1555, %v1665
      %v1682 = vadd.f32 %v1556, %v1670
      %v1683 = vadd.f32 %v1557, %v1673
      %v1684 = vpack.c.bf16 %v389, %v387
      %v1685 = vpack.c.bf16 %v393, %v391
      %v1686 = vpack.c.bf16 %v397, %v395
      %v1687 = vpack.c.bf16 %v401, %v399
      %s1688 = scalar_lea.vmem %s3, 48
      %v1689 = vld [vmem:[%s1688] sm:$0xf]
      %v1691 = vsel %vm485, %v1684, 0
      %v1694 = vsel %vm485, %v1685, 0
      %v1697 = vsel %vm485, %v1686, 0
      %v1700 = vsel %vm485, %v1687, 0
      %v1703 = vsel %vm498, %v1689, 0
      %1705 = vmatprep.subr.bf16.mxu0 0
      %1706 = vmatpush1.bf16.msra.mxu0 %v1703
      %1707 = vmatprep.subr.bf16.mxu0 0
      %1708 = vmatpush1.bf16.msra.mxu0 0
      %1709 = vmatprep.subr.bf16.mxu0 0
      %1710 = vmatpush1.bf16.msra.mxu0 0
      %1711 = vmatprep.subr.bf16.mxu0 0
      %1712 = vmatpush1.bf16.msra.mxu0 0
      %1713 = vmatprep.subr.bf16.mxu0 0
      %1714 = vmatpush1.bf16.msra.mxu0 0
      %1715 = vmatprep.subr.bf16.mxu0 0
      %1716 = vmatpush1.bf16.msra.mxu0 0
      %1717 = vmatprep.subr.bf16.mxu0 0
      %1718 = vmatpush1.bf16.msra.mxu0 0
      %1719 = vmatprep.subr.bf16.mxu0 0
      %1720 = vmatpush1.bf16.msra.mxu0 0
      %1721 = vmatprep.subr.bf16.mxu0 0
      %1722 = vmatpush1.bf16.msra.mxu0 0
      %1723 = vmatprep.subr.bf16.mxu0 0
      %1724 = vmatpush1.bf16.msra.mxu0 0
      %1725 = vmatprep.subr.bf16.mxu0 0
      %1726 = vmatpush1.bf16.msra.mxu0 0
      %1727 = vmatprep.subr.bf16.mxu0 0
      %1728 = vmatpush1.bf16.msra.mxu0 0
      %1729 = vmatprep.subr.bf16.mxu0 0
      %1730 = vmatpush1.bf16.msra.mxu0 0
      %1731 = vmatprep.subr.bf16.mxu0 0
      %1732 = vmatpush1.bf16.msra.mxu0 0
      %1733 = vmatprep.subr.bf16.mxu0 0
      %1734 = vmatpush1.bf16.msra.mxu0 0
      %1735 = vmatprep.subr.bf16.mxu0 0
      %1736 = vmatpush1.bf16.msra.mxu0 0
      %1737 = vmatprep.mubr.bf16.mxu0 0
      %1738 = vmatmul.mubr.bf16.gmra.mrb[0].mxu0 %v1691
      %v1739 = vpop.f32.mrb[0].mxu0
      %v1740 = vadd.f32 0.0, %v1739
      %v1741 = vpop.f32.mrb[0].mxu0
      %v1742 = vpop.f32.mrb[0].mxu0
      %v1743 = vadd.f32 0.0, %v1742
      %v1744 = vpop.f32.mrb[0].mxu0
      %1745 = vmatprep.mubr.bf16.mxu0 0
      %1746 = vmatmul.mubr.bf16.gmra.mrb[0].mxu0 %v1694
      %v1747 = vpop.f32.mrb[0].mxu0
      %v1748 = vadd.f32 0.0, %v1747
      %v1749 = vpop.f32.mrb[0].mxu0
      %v1750 = vpop.f32.mrb[0].mxu0
      %v1751 = vadd.f32 0.0, %v1750
      %v1752 = vpop.f32.mrb[0].mxu0
      %1753 = vmatprep.mubr.bf16.mxu0 0
      %1754 = vmatmul.mubr.bf16.gmra.mrb[0].mxu0 %v1697
      %v1755 = vpop.f32.mrb[0].mxu0
      %v1756 = vadd.f32 0.0, %v1755
      %v1757 = vpop.f32.mrb[0].mxu0
      %v1758 = vpop.f32.mrb[0].mxu0
      %v1759 = vadd.f32 0.0, %v1758
      %v1760 = vpop.f32.mrb[0].mxu0
      %1761 = vmatprep.mubr.bf16.mxu0 0
      %1762 = vmatmul.mubr.bf16.gmra.mrb[0].mxu0 %v1700
      %v1763 = vpop.f32.mrb[0].mxu0
      %v1764 = vadd.f32 0.0, %v1763
      %v1765 = vpop.f32.mrb[0].mxu0
      %v1766 = vpop.f32.mrb[0].mxu0
      %v1767 = vadd.f32 0.0, %v1766
      %v1768 = vpop.f32.mrb[0].mxu0
      %1769 = vdwg.mxu0
      %v1770 = vadd.f32 %v1676, %v1740
      %v1771 = vadd.f32 %v1677, %v1743
      %v1772 = vadd.f32 %v1678, %v1748
      %v1773 = vadd.f32 %v1679, %v1751
      %v1774 = vadd.f32 %v1680, %v1756
      %v1775 = vadd.f32 %v1681, %v1759
      %v1776 = vadd.f32 %v1682, %v1764
      %v1777 = vadd.f32 %v1683, %v1767
      %v1780 = vrot.slane %v401, 1
      %v1781 = vrot.slane %v402, 1
      %v1782 = vsel %vm446, %v1780, %v1781
      %v1784 = vpack.c.bf16 %v1440, %v1437
      %v1785 = vpack.c.bf16 %v1446, %v1443
      %v1786 = vpack.c.bf16 %v1452, %v1449
      %v1787 = vpack.c.bf16 %v1782, %v1455
      %s1788 = scalar_lea.vmem %s3, 52
      %v1789 = vld [vmem:[%s1788] sm:$0xf]
      %v1791 = vsel %vm485, %v1784, 0
      %v1794 = vsel %vm485, %v1785, 0
      %v1797 = vsel %vm485, %v1786, 0
      %v1800 = vsel %vm485, %v1787, 0
      %v1803 = vsel %vm498, %v1789, 0
      %1805 = vmatprep.subr.bf16.mxu0 0
      %1806 = vmatpush1.bf16.msra.mxu0 %v1803
      %1807 = vmatprep.subr.bf16.mxu0 0
      %1808 = vmatpush1.bf16.msra.mxu0 0
      %1809 = vmatprep.subr.bf16.mxu0 0
      %1810 = vmatpush1.bf16.msra.mxu0 0
      %1811 = vmatprep.subr.bf16.mxu0 0
      %1812 = vmatpush1.bf16.msra.mxu0 0
      %1813 = vmatprep.subr.bf16.mxu0 0
      %1814 = vmatpush1.bf16.msra.mxu0 0
      %1815 = vmatprep.subr.bf16.mxu0 0
      %1816 = vmatpush1.bf16.msra.mxu0 0
      %1817 = vmatprep.subr.bf16.mxu0 0
      %1818 = vmatpush1.bf16.msra.mxu0 0
      %1819 = vmatprep.subr.bf16.mxu0 0
      %1820 = vmatpush1.bf16.msra.mxu0 0
      %1821 = vmatprep.subr.bf16.mxu0 0
      %1822 = vmatpush1.bf16.msra.mxu0 0
      %1823 = vmatprep.subr.bf16.mxu0 0
      %1824 = vmatpush1.bf16.msra.mxu0 0
      %1825 = vmatprep.subr.bf16.mxu0 0
      %1826 = vmatpush1.bf16.msra.mxu0 0
      %1827 = vmatprep.subr.bf16.mxu0 0
      %1828 = vmatpush1.bf16.msra.mxu0 0
      %1829 = vmatprep.subr.bf16.mxu0 0
      %1830 = vmatpush1.bf16.msra.mxu0 0
      %1831 = vmatprep.subr.bf16.mxu0 0
      %1832 = vmatpush1.bf16.msra.mxu0 0
      %1833 = vmatprep.subr.bf16.mxu0 0
      %1834 = vmatpush1.bf16.msra.mxu0 0
      %1835 = vmatprep.subr.bf16.mxu0 0
      %1836 = vmatpush1.bf16.msra.mxu0 0
      %1837 = vmatprep.mubr.bf16.mxu0 0
      %1838 = vmatmul.mubr.bf16.gmra.mrb[0].mxu0 %v1791
      %v1839 = vpop.f32.mrb[0].mxu0
      %v1840 = vadd.f32 0.0, %v1839
      %v1841 = vpop.f32.mrb[0].mxu0
      %v1842 = vpop.f32.mrb[0].mxu0
      %v1843 = vadd.f32 0.0, %v1842
      %v1844 = vpop.f32.mrb[0].mxu0
      %1845 = vmatprep.mubr.bf16.mxu0 0
      %1846 = vmatmul.mubr.bf16.gmra.mrb[0].mxu0 %v1794
      %v1847 = vpop.f32.mrb[0].mxu0
      %v1848 = vadd.f32 0.0, %v1847
      %v1849 = vpop.f32.mrb[0].mxu0
      %v1850 = vpop.f32.mrb[0].mxu0
      %v1851 = vadd.f32 0.0, %v1850
      %v1852 = vpop.f32.mrb[0].mxu0
      %1853 = vmatprep.mubr.bf16.mxu0 0
      %1854 = vmatmul.mubr.bf16.gmra.mrb[0].mxu0 %v1797
      %v1855 = vpop.f32.mrb[0].mxu0
      %v1856 = vadd.f32 0.0, %v1855
      %v1857 = vpop.f32.mrb[0].mxu0
      %v1858 = vpop.f32.mrb[0].mxu0
      %v1859 = vadd.f32 0.0, %v1858
      %v1860 = vpop.f32.mrb[0].mxu0
      %1861 = vmatprep.mubr.bf16.mxu0 0
      %1862 = vmatmul.mubr.bf16.gmra.mrb[0].mxu0 %v1800
      %v1863 = vpop.f32.mrb[0].mxu0
      %v1864 = vadd.f32 0.0, %v1863
      %v1865 = vpop.f32.mrb[0].mxu0
      %v1866 = vpop.f32.mrb[0].mxu0
      %v1867 = vadd.f32 0.0, %v1866
      %v1868 = vpop.f32.mrb[0].mxu0
      %1869 = vdwg.mxu0
      %v1870 = vadd.f32 %v1770, %v1840
      %v1871 = vadd.f32 %v1771, %v1843
      %v1872 = vadd.f32 %v1772, %v1848
      %v1873 = vadd.f32 %v1773, %v1851
      %v1874 = vadd.f32 %v1774, %v1856
      %v1875 = vadd.f32 %v1775, %v1859
      %v1876 = vadd.f32 %v1776, %v1864
      %v1877 = vadd.f32 %v1777, %v1867
      %v1878 = vrot.slane %v401, 2
      %v1879 = vrot.slane %v402, 2
      %v1880 = vsel %vm647, %v1878, %v1879
      %v1882 = vpack.c.bf16 %v1566, %v1563
      %v1883 = vpack.c.bf16 %v1572, %v1569
      %v1884 = vpack.c.bf16 %v1578, %v1575
      %v1885 = vpack.c.bf16 %v1880, %v1581
      %s1886 = scalar_lea.vmem %s3, 56
      %v1887 = vld [vmem:[%s1886] sm:$0xf]
      %v1889 = vsel %vm485, %v1882, 0
      %v1892 = vsel %vm485, %v1883, 0
      %v1895 = vsel %vm485, %v1884, 0
      %v1898 = vsel %vm485, %v1885, 0
      %v1901 = vsel %vm498, %v1887, 0
      %1903 = vmatprep.subr.bf16.mxu0 0
      %1904 = vmatpush1.bf16.msra.mxu0 %v1901
      %1905 = vmatprep.subr.bf16.mxu0 0
      %1906 = vmatpush1.bf16.msra.mxu0 0
      %1907 = vmatprep.subr.bf16.mxu0 0
      %1908 = vmatpush1.bf16.msra.mxu0 0
      %1909 = vmatprep.subr.bf16.mxu0 0
      %1910 = vmatpush1.bf16.msra.mxu0 0
      %1911 = vmatprep.subr.bf16.mxu0 0
      %1912 = vmatpush1.bf16.msra.mxu0 0
      %1913 = vmatprep.subr.bf16.mxu0 0
      %1914 = vmatpush1.bf16.msra.mxu0 0
      %1915 = vmatprep.subr.bf16.mxu0 0
      %1916 = vmatpush1.bf16.msra.mxu0 0
      %1917 = vmatprep.subr.bf16.mxu0 0
      %1918 = vmatpush1.bf16.msra.mxu0 0
      %1919 = vmatprep.subr.bf16.mxu0 0
      %1920 = vmatpush1.bf16.msra.mxu0 0
      %1921 = vmatprep.subr.bf16.mxu0 0
      %1922 = vmatpush1.bf16.msra.mxu0 0
      %1923 = vmatprep.subr.bf16.mxu0 0
      %1924 = vmatpush1.bf16.msra.mxu0 0
      %1925 = vmatprep.subr.bf16.mxu0 0
      %1926 = vmatpush1.bf16.msra.mxu0 0
      %1927 = vmatprep.subr.bf16.mxu0 0
      %1928 = vmatpush1.bf16.msra.mxu0 0
      %1929 = vmatprep.subr.bf16.mxu0 0
      %1930 = vmatpush1.bf16.msra.mxu0 0
      %1931 = vmatprep.subr.bf16.mxu0 0
      %1932 = vmatpush1.bf16.msra.mxu0 0
      %1933 = vmatprep.subr.bf16.mxu0 0
      %1934 = vmatpush1.bf16.msra.mxu0 0
      %1935 = vmatprep.mubr.bf16.mxu0 0
      %1936 = vmatmul.mubr.bf16.gmra.mrb[0].mxu0 %v1889
      %v1937 = vpop.f32.mrb[0].mxu0
      %v1938 = vadd.f32 0.0, %v1937
      %v1939 = vpop.f32.mrb[0].mxu0
      %v1940 = vpop.f32.mrb[0].mxu0
      %v1941 = vadd.f32 0.0, %v1940
      %v1942 = vpop.f32.mrb[0].mxu0
      %1943 = vmatprep.mubr.bf16.mxu0 0
      %1944 = vmatmul.mubr.bf16.gmra.mrb[0].mxu0 %v1892
      %v1945 = vpop.f32.mrb[0].mxu0
      %v1946 = vadd.f32 0.0, %v1945
      %v1947 = vpop.f32.mrb[0].mxu0
      %v1948 = vpop.f32.mrb[0].mxu0
      %v1949 = vadd.f32 0.0, %v1948
      %v1950 = vpop.f32.mrb[0].mxu0
      %1951 = vmatprep.mubr.bf16.mxu0 0
      %1952 = vmatmul.mubr.bf16.gmra.mrb[0].mxu0 %v1895
      %v1953 = vpop.f32.mrb[0].mxu0
      %v1954 = vadd.f32 0.0, %v1953
      %v1955 = vpop.f32.mrb[0].mxu0
      %v1956 = vpop.f32.mrb[0].mxu0
      %v1957 = vadd.f32 0.0, %v1956
      %v1958 = vpop.f32.mrb[0].mxu0
      %1959 = vmatprep.mubr.bf16.mxu0 0
      %1960 = vmatmul.mubr.bf16.gmra.mrb[0].mxu0 %v1898
      %v1961 = vpop.f32.mrb[0].mxu0
      %v1962 = vadd.f32 0.0, %v1961
      %v1963 = vpop.f32.mrb[0].mxu0
      %v1964 = vpop.f32.mrb[0].mxu0
      %v1965 = vadd.f32 0.0, %v1964
      %v1966 = vpop.f32.mrb[0].mxu0
      %1967 = vdwg.mxu0
      %v1968 = vadd.f32 %v1870, %v1938
      %v1969 = vadd.f32 %v1871, %v1941
      %v1970 = vadd.f32 %v1872, %v1946
      %v1971 = vadd.f32 %v1873, %v1949
      %v1972 = vadd.f32 %v1874, %v1954
      %v1973 = vadd.f32 %v1875, %v1957
      %v1974 = vadd.f32 %v1876, %v1962
      %v1975 = vadd.f32 %v1877, %v1965
      %v1976 = vpack.c.bf16 %v403, %v401
      %s1977 = scalar_lea.vmem %s3, 60
      %v1978 = vld [vmem:[%s1977] sm:$0xf]
      %v1980 = vsel %vm485, %v1976, 0
      %v1983 = vsel %vm498, %v1978, 0
      %1985 = vmatprep.subr.bf16.mxu0 0
      %1986 = vmatpush1.bf16.msra.mxu0 %v1983
      %1987 = vmatprep.subr.bf16.mxu0 0
      %1988 = vmatpush1.bf16.msra.mxu0 0
      %1989 = vmatprep.subr.bf16.mxu0 0
      %1990 = vmatpush1.bf16.msra.mxu0 0
      %1991 = vmatprep.subr.bf16.mxu0 0
      %1992 = vmatpush1.bf16.msra.mxu0 0
      %1993 = vmatprep.subr.bf16.mxu0 0
      %1994 = vmatpush1.bf16.msra.mxu0 0
      %1995 = vmatprep.subr.bf16.mxu0 0
      %1996 = vmatpush1.bf16.msra.mxu0 0
      %1997 = vmatprep.subr.bf16.mxu0 0
      %1998 = vmatpush1.bf16.msra.mxu0 0
      %1999 = vmatprep.subr.bf16.mxu0 0
      %2000 = vmatpush1.bf16.msra.mxu0 0
      %2001 = vmatprep.subr.bf16.mxu0 0
      %2002 = vmatpush1.bf16.msra.mxu0 0
      %2003 = vmatprep.subr.bf16.mxu0 0
      %2004 = vmatpush1.bf16.msra.mxu0 0
      %2005 = vmatprep.subr.bf16.mxu0 0
      %2006 = vmatpush1.bf16.msra.mxu0 0
      %2007 = vmatprep.subr.bf16.mxu0 0
      %2008 = vmatpush1.bf16.msra.mxu0 0
      %2009 = vmatprep.subr.bf16.mxu0 0
      %2010 = vmatpush1.bf16.msra.mxu0 0
      %2011 = vmatprep.subr.bf16.mxu0 0
      %2012 = vmatpush1.bf16.msra.mxu0 0
      %2013 = vmatprep.subr.bf16.mxu0 0
      %2014 = vmatpush1.bf16.msra.mxu0 0
      %2015 = vmatprep.subr.bf16.mxu0 0
      %2016 = vmatpush1.bf16.msra.mxu0 0
      %2017 = vmatprep.mubr.bf16.mxu0 0
      %2018 = vmatmul.mubr.bf16.gmra.mrb[0].mxu0 %v1332
      %v2019 = vpop.f32.mrb[0].mxu0
      %v2020 = vadd.f32 0.0, %v2019
      %v2021 = vpop.f32.mrb[0].mxu0
      %v2022 = vpop.f32.mrb[0].mxu0
      %v2023 = vadd.f32 0.0, %v2022
      %v2024 = vpop.f32.mrb[0].mxu0
      %2025 = vmatprep.mubr.bf16.mxu0 0
      %2026 = vmatmul.mubr.bf16.gmra.mrb[0].mxu0 %v1335
      %v2027 = vpop.f32.mrb[0].mxu0
      %v2028 = vadd.f32 0.0, %v2027
      %v2029 = vpop.f32.mrb[0].mxu0
      %v2030 = vpop.f32.mrb[0].mxu0
      %v2031 = vadd.f32 0.0, %v2030
      %v2032 = vpop.f32.mrb[0].mxu0
      %2033 = vmatprep.mubr.bf16.mxu0 0
      %2034 = vmatmul.mubr.bf16.gmra.mrb[0].mxu0 %v1338
      %v2035 = vpop.f32.mrb[0].mxu0
      %v2036 = vadd.f32 0.0, %v2035
      %v2037 = vpop.f32.mrb[0].mxu0
      %v2038 = vpop.f32.mrb[0].mxu0
      %v2039 = vadd.f32 0.0, %v2038
      %v2040 = vpop.f32.mrb[0].mxu0
      %2041 = vmatprep.mubr.bf16.mxu0 0
      %2042 = vmatmul.mubr.bf16.gmra.mrb[0].mxu0 %v1980
      %v2043 = vpop.f32.mrb[0].mxu0
      %v2044 = vadd.f32 0.0, %v2043
      %v2045 = vpop.f32.mrb[0].mxu0
      %v2046 = vpop.f32.mrb[0].mxu0
      %v2047 = vadd.f32 0.0, %v2046
      %v2048 = vpop.f32.mrb[0].mxu0
      %2049 = vdwg.mxu0
      %v2050 = vadd.f32 %v1968, %v2020
      %v2051 = vadd.f32 %v1969, %v2023
      %v2052 = vadd.f32 %v1970, %v2028
      %v2053 = vadd.f32 %v1971, %v2031
      %v2054 = vadd.f32 %v1972, %v2036
      %v2055 = vadd.f32 %v1973, %v2039
      %v2056 = vadd.f32 %v1974, %v2044
      %v2057 = vadd.f32 %v1975, %v2047
      %v2060 = vrot.slane %v403, 1
      %v2061 = vrot.slane %v404, 1
      %v2062 = vsel %vm446, %v2060, %v2061
      %v2064 = vpack.c.bf16 %v2062, %v1782
      %s2065 = scalar_lea.vmem %s3, 64
      %v2066 = vld [vmem:[%s2065] sm:$0xf]
      %v2068 = vsel %vm485, %v2064, 0
      %v2071 = vsel %vm498, %v2066, 0
      %2073 = vmatprep.subr.bf16.mxu0 0
      %2074 = vmatpush1.bf16.msra.mxu0 %v2071
      %2075 = vmatprep.subr.bf16.mxu0 0
      %2076 = vmatpush1.bf16.msra.mxu0 0
      %2077 = vmatprep.subr.bf16.mxu0 0
      %2078 = vmatpush1.bf16.msra.mxu0 0
      %2079 = vmatprep.subr.bf16.mxu0 0
      %2080 = vmatpush1.bf16.msra.mxu0 0
      %2081 = vmatprep.subr.bf16.mxu0 0
      %2082 = vmatpush1.bf16.msra.mxu0 0
      %2083 = vmatprep.subr.bf16.mxu0 0
      %2084 = vmatpush1.bf16.msra.mxu0 0
      %2085 = vmatprep.subr.bf16.mxu0 0
      %2086 = vmatpush1.bf16.msra.mxu0 0
      %2087 = vmatprep.subr.bf16.mxu0 0
      %2088 = vmatpush1.bf16.msra.mxu0 0
      %2089 = vmatprep.subr.bf16.mxu0 0
      %2090 = vmatpush1.bf16.msra.mxu0 0
      %2091 = vmatprep.subr.bf16.mxu0 0
      %2092 = vmatpush1.bf16.msra.mxu0 0
      %2093 = vmatprep.subr.bf16.mxu0 0
      %2094 = vmatpush1.bf16.msra.mxu0 0
      %2095 = vmatprep.subr.bf16.mxu0 0
      %2096 = vmatpush1.bf16.msra.mxu0 0
      %2097 = vmatprep.subr.bf16.mxu0 0
      %2098 = vmatpush1.bf16.msra.mxu0 0
      %2099 = vmatprep.subr.bf16.mxu0 0
      %2100 = vmatpush1.bf16.msra.mxu0 0
      %2101 = vmatprep.subr.bf16.mxu0 0
      %2102 = vmatpush1.bf16.msra.mxu0 0
      %2103 = vmatprep.subr.bf16.mxu0 0
      %2104 = vmatpush1.bf16.msra.mxu0 0
      %2105 = vmatprep.mubr.bf16.mxu0 0
      %2106 = vmatmul.mubr.bf16.gmra.mrb[0].mxu0 %v1474
      %v2107 = vpop.f32.mrb[0].mxu0
      %v2108 = vadd.f32 0.0, %v2107
      %v2109 = vpop.f32.mrb[0].mxu0
      %v2110 = vpop.f32.mrb[0].mxu0
      %v2111 = vadd.f32 0.0, %v2110
      %v2112 = vpop.f32.mrb[0].mxu0
      %2113 = vmatprep.mubr.bf16.mxu0 0
      %2114 = vmatmul.mubr.bf16.gmra.mrb[0].mxu0 %v1477
      %v2115 = vpop.f32.mrb[0].mxu0
      %v2116 = vadd.f32 0.0, %v2115
      %v2117 = vpop.f32.mrb[0].mxu0
      %v2118 = vpop.f32.mrb[0].mxu0
      %v2119 = vadd.f32 0.0, %v2118
      %v2120 = vpop.f32.mrb[0].mxu0
      %2121 = vmatprep.mubr.bf16.mxu0 0
      %2122 = vmatmul.mubr.bf16.gmra.mrb[0].mxu0 %v1480
      %v2123 = vpop.f32.mrb[0].mxu0
      %v2124 = vadd.f32 0.0, %v2123
      %v2125 = vpop.f32.mrb[0].mxu0
      %v2126 = vpop.f32.mrb[0].mxu0
      %v2127 = vadd.f32 0.0, %v2126
      %v2128 = vpop.f32.mrb[0].mxu0
      %2129 = vmatprep.mubr.bf16.mxu0 0
      %2130 = vmatmul.mubr.bf16.gmra.mrb[0].mxu0 %v2068
      %v2131 = vpop.f32.mrb[0].mxu0
      %v2132 = vadd.f32 0.0, %v2131
      %v2133 = vpop.f32.mrb[0].mxu0
      %v2134 = vpop.f32.mrb[0].mxu0
      %v2135 = vadd.f32 0.0, %v2134
      %v2136 = vpop.f32.mrb[0].mxu0
      %2137 = vdwg.mxu0
      %v2138 = vadd.f32 %v2050, %v2108
      %v2139 = vadd.f32 %v2051, %v2111
      %v2140 = vadd.f32 %v2052, %v2116
      %v2141 = vadd.f32 %v2053, %v2119
      %v2142 = vadd.f32 %v2054, %v2124
      %v2143 = vadd.f32 %v2055, %v2127
      %v2144 = vadd.f32 %v2056, %v2132
      %v2145 = vadd.f32 %v2057, %v2135
      %v2146 = vrot.slane %v403, 2
      %v2147 = vrot.slane %v404, 2
      %v2148 = vsel %vm647, %v2146, %v2147
      %v2150 = vpack.c.bf16 %v2148, %v1880
      %s2151 = scalar_lea.vmem %s3, 68
      %v2152 = vld [vmem:[%s2151] sm:$0xf]
      %v2154 = vsel %vm485, %v2150, 0
      %v2157 = vsel %vm498, %v2152, 0
      %2159 = vmatprep.subr.bf16.mxu0 0
      %2160 = vmatpush1.bf16.msra.mxu0 %v2157
      %2161 = vmatprep.subr.bf16.mxu0 0
      %2162 = vmatpush1.bf16.msra.mxu0 0
      %2163 = vmatprep.subr.bf16.mxu0 0
      %2164 = vmatpush1.bf16.msra.mxu0 0
      %2165 = vmatprep.subr.bf16.mxu0 0
      %2166 = vmatpush1.bf16.msra.mxu0 0
      %2167 = vmatprep.subr.bf16.mxu0 0
      %2168 = vmatpush1.bf16.msra.mxu0 0
      %2169 = vmatprep.subr.bf16.mxu0 0
      %2170 = vmatpush1.bf16.msra.mxu0 0
      %2171 = vmatprep.subr.bf16.mxu0 0
      %2172 = vmatpush1.bf16.msra.mxu0 0
      %2173 = vmatprep.subr.bf16.mxu0 0
      %2174 = vmatpush1.bf16.msra.mxu0 0
      %2175 = vmatprep.subr.bf16.mxu0 0
      %2176 = vmatpush1.bf16.msra.mxu0 0
      %2177 = vmatprep.subr.bf16.mxu0 0
      %2178 = vmatpush1.bf16.msra.mxu0 0
      %2179 = vmatprep.subr.bf16.mxu0 0
      %2180 = vmatpush1.bf16.msra.mxu0 0
      %2181 = vmatprep.subr.bf16.mxu0 0
      %2182 = vmatpush1.bf16.msra.mxu0 0
      %2183 = vmatprep.subr.bf16.mxu0 0
      %2184 = vmatpush1.bf16.msra.mxu0 0
      %2185 = vmatprep.subr.bf16.mxu0 0
      %2186 = vmatpush1.bf16.msra.mxu0 0
      %2187 = vmatprep.subr.bf16.mxu0 0
      %2188 = vmatpush1.bf16.msra.mxu0 0
      %2189 = vmatprep.subr.bf16.mxu0 0
      %2190 = vmatpush1.bf16.msra.mxu0 0
      %2191 = vmatprep.mubr.bf16.mxu0 0
      %2192 = vmatmul.mubr.bf16.gmra.mrb[0].mxu0 %v1600
      %v2193 = vpop.f32.mrb[0].mxu0
      %v2194 = vadd.f32 0.0, %v2193
      %v2195 = vpop.f32.mrb[0].mxu0
      %v2196 = vpop.f32.mrb[0].mxu0
      %v2197 = vadd.f32 0.0, %v2196
      %v2198 = vpop.f32.mrb[0].mxu0
      %2199 = vmatprep.mubr.bf16.mxu0 0
      %2200 = vmatmul.mubr.bf16.gmra.mrb[0].mxu0 %v1603
      %v2201 = vpop.f32.mrb[0].mxu0
      %v2202 = vadd.f32 0.0, %v2201
      %v2203 = vpop.f32.mrb[0].mxu0
      %v2204 = vpop.f32.mrb[0].mxu0
      %v2205 = vadd.f32 0.0, %v2204
      %v2206 = vpop.f32.mrb[0].mxu0
      %2207 = vmatprep.mubr.bf16.mxu0 0
      %2208 = vmatmul.mubr.bf16.gmra.mrb[0].mxu0 %v1606
      %v2209 = vpop.f32.mrb[0].mxu0
      %v2210 = vadd.f32 0.0, %v2209
      %v2211 = vpop.f32.mrb[0].mxu0
      %v2212 = vpop.f32.mrb[0].mxu0
      %v2213 = vadd.f32 0.0, %v2212
      %v2214 = vpop.f32.mrb[0].mxu0
      %2215 = vmatprep.mubr.bf16.mxu0 0
      %2216 = vmatmul.mubr.bf16.gmra.mrb[0].mxu0 %v2154
      %v2217 = vpop.f32.mrb[0].mxu0
      %v2218 = vadd.f32 0.0, %v2217
      %v2219 = vpop.f32.mrb[0].mxu0
      %v2220 = vpop.f32.mrb[0].mxu0
      %v2221 = vadd.f32 0.0, %v2220
      %v2222 = vpop.f32.mrb[0].mxu0
      %2223 = vdwg.mxu0
      %v2224 = vadd.f32 %v2138, %v2194
      %v2225 = vadd.f32 %v2139, %v2197
      %v2226 = vadd.f32 %v2140, %v2202
      %v2227 = vadd.f32 %v2141, %v2205
      %v2228 = vadd.f32 %v2142, %v2210
      %v2229 = vadd.f32 %v2143, %v2213
      %v2230 = vadd.f32 %v2144, %v2218
      %v2231 = vadd.f32 %v2145, %v2221
      %v2232 = vpack.c.bf16 %v407, %v405
      %v2233 = vpack.c.bf16 %v411, %v409
      %v2234 = vpack.c.bf16 %v415, %v413
      %v2235 = vpack.c.bf16 %v419, %v417
      %s2236 = scalar_lea.vmem %s3, 72
      %v2237 = vld [vmem:[%s2236] sm:$0xf]
      %v2239 = vsel %vm485, %v2232, 0
      %v2242 = vsel %vm485, %v2233, 0
      %v2245 = vsel %vm485, %v2234, 0
      %v2248 = vsel %vm485, %v2235, 0
      %v2251 = vsel %vm498, %v2237, 0
      %2253 = vmatprep.subr.bf16.mxu0 0
      %2254 = vmatpush1.bf16.msra.mxu0 %v2251
      %2255 = vmatprep.subr.bf16.mxu0 0
      %2256 = vmatpush1.bf16.msra.mxu0 0
      %2257 = vmatprep.subr.bf16.mxu0 0
      %2258 = vmatpush1.bf16.msra.mxu0 0
      %2259 = vmatprep.subr.bf16.mxu0 0
      %2260 = vmatpush1.bf16.msra.mxu0 0
      %2261 = vmatprep.subr.bf16.mxu0 0
      %2262 = vmatpush1.bf16.msra.mxu0 0
      %2263 = vmatprep.subr.bf16.mxu0 0
      %2264 = vmatpush1.bf16.msra.mxu0 0
      %2265 = vmatprep.subr.bf16.mxu0 0
      %2266 = vmatpush1.bf16.msra.mxu0 0
      %2267 = vmatprep.subr.bf16.mxu0 0
      %2268 = vmatpush1.bf16.msra.mxu0 0
      %2269 = vmatprep.subr.bf16.mxu0 0
      %2270 = vmatpush1.bf16.msra.mxu0 0
      %2271 = vmatprep.subr.bf16.mxu0 0
      %2272 = vmatpush1.bf16.msra.mxu0 0
      %2273 = vmatprep.subr.bf16.mxu0 0
      %2274 = vmatpush1.bf16.msra.mxu0 0
      %2275 = vmatprep.subr.bf16.mxu0 0
      %2276 = vmatpush1.bf16.msra.mxu0 0
      %2277 = vmatprep.subr.bf16.mxu0 0
      %2278 = vmatpush1.bf16.msra.mxu0 0
      %2279 = vmatprep.subr.bf16.mxu0 0
      %2280 = vmatpush1.bf16.msra.mxu0 0
      %2281 = vmatprep.subr.bf16.mxu0 0
      %2282 = vmatpush1.bf16.msra.mxu0 0
      %2283 = vmatprep.subr.bf16.mxu0 0
      %2284 = vmatpush1.bf16.msra.mxu0 0
      %2285 = vmatprep.mubr.bf16.mxu0 0
      %2286 = vmatmul.mubr.bf16.gmra.mrb[0].mxu0 %v2239
      %v2287 = vpop.f32.mrb[0].mxu0
      %v2288 = vadd.f32 0.0, %v2287
      %v2289 = vpop.f32.mrb[0].mxu0
      %v2290 = vpop.f32.mrb[0].mxu0
      %v2291 = vadd.f32 0.0, %v2290
      %v2292 = vpop.f32.mrb[0].mxu0
      %2293 = vmatprep.mubr.bf16.mxu0 0
      %2294 = vmatmul.mubr.bf16.gmra.mrb[0].mxu0 %v2242
      %v2295 = vpop.f32.mrb[0].mxu0
      %v2296 = vadd.f32 0.0, %v2295
      %v2297 = vpop.f32.mrb[0].mxu0
      %v2298 = vpop.f32.mrb[0].mxu0
      %v2299 = vadd.f32 0.0, %v2298
      %v2300 = vpop.f32.mrb[0].mxu0
      %2301 = vmatprep.mubr.bf16.mxu0 0
      %2302 = vmatmul.mubr.bf16.gmra.mrb[0].mxu0 %v2245
      %v2303 = vpop.f32.mrb[0].mxu0
      %v2304 = vadd.f32 0.0, %v2303
      %v2305 = vpop.f32.mrb[0].mxu0
      %v2306 = vpop.f32.mrb[0].mxu0
      %v2307 = vadd.f32 0.0, %v2306
      %v2308 = vpop.f32.mrb[0].mxu0
      %2309 = vmatprep.mubr.bf16.mxu0 0
      %2310 = vmatmul.mubr.bf16.gmra.mrb[0].mxu0 %v2248
      %v2311 = vpop.f32.mrb[0].mxu0
      %v2312 = vadd.f32 0.0, %v2311
      %v2313 = vpop.f32.mrb[0].mxu0
      %v2314 = vpop.f32.mrb[0].mxu0
      %v2315 = vadd.f32 0.0, %v2314
      %v2316 = vpop.f32.mrb[0].mxu0
      %2317 = vdwg.mxu0
      %v2318 = vadd.f32 %v2224, %v2288
      %v2319 = vadd.f32 %v2225, %v2291
      %v2320 = vadd.f32 %v2226, %v2296
      %v2321 = vadd.f32 %v2227, %v2299
      %v2322 = vadd.f32 %v2228, %v2304
      %v2323 = vadd.f32 %v2229, %v2307
      %v2324 = vadd.f32 %v2230, %v2312
      %v2325 = vadd.f32 %v2231, %v2315
      %v2342 = vrot.slane %v405, 1
      %v2343 = vrot.slane %v406, 1
      %v2344 = vsel %vm446, %v2342, %v2343
      %v2345 = vrot.slane %v407, 1
      %v2346 = vrot.slane %v408, 1
      %v2347 = vsel %vm446, %v2345, %v2346
      %v2348 = vrot.slane %v409, 1
      %v2349 = vrot.slane %v410, 1
      %v2350 = vsel %vm446, %v2348, %v2349
      %v2351 = vrot.slane %v411, 1
      %v2352 = vrot.slane %v412, 1
      %v2353 = vsel %vm446, %v2351, %v2352
      %v2354 = vrot.slane %v413, 1
      %v2355 = vrot.slane %v414, 1
      %v2356 = vsel %vm446, %v2354, %v2355
      %v2357 = vrot.slane %v415, 1
      %v2358 = vrot.slane %v416, 1
      %v2359 = vsel %vm446, %v2357, %v2358
      %v2360 = vrot.slane %v417, 1
      %v2361 = vrot.slane %v418, 1
      %v2362 = vsel %vm446, %v2360, %v2361
      %v2363 = vrot.slane %v419, 1
      %v2364 = vrot.slane %v420, 1
      %v2365 = vsel %vm446, %v2363, %v2364
      %v2374 = vpack.c.bf16 %v2347, %v2344
      %v2375 = vpack.c.bf16 %v2353, %v2350
      %v2376 = vpack.c.bf16 %v2359, %v2356
      %v2377 = vpack.c.bf16 %v2365, %v2362
      %s2378 = scalar_lea.vmem %s3, 76
      %v2379 = vld [vmem:[%s2378] sm:$0xf]
      %v2381 = vsel %vm485, %v2374, 0
      %v2384 = vsel %vm485, %v2375, 0
      %v2387 = vsel %vm485, %v2376, 0
      %v2390 = vsel %vm485, %v2377, 0
      %v2393 = vsel %vm498, %v2379, 0
      %2395 = vmatprep.subr.bf16.mxu0 0
      %2396 = vmatpush1.bf16.msra.mxu0 %v2393
      %2397 = vmatprep.subr.bf16.mxu0 0
      %2398 = vmatpush1.bf16.msra.mxu0 0
      %2399 = vmatprep.subr.bf16.mxu0 0
      %2400 = vmatpush1.bf16.msra.mxu0 0
      %2401 = vmatprep.subr.bf16.mxu0 0
      %2402 = vmatpush1.bf16.msra.mxu0 0
      %2403 = vmatprep.subr.bf16.mxu0 0
      %2404 = vmatpush1.bf16.msra.mxu0 0
      %2405 = vmatprep.subr.bf16.mxu0 0
      %2406 = vmatpush1.bf16.msra.mxu0 0
      %2407 = vmatprep.subr.bf16.mxu0 0
      %2408 = vmatpush1.bf16.msra.mxu0 0
      %2409 = vmatprep.subr.bf16.mxu0 0
      %2410 = vmatpush1.bf16.msra.mxu0 0
      %2411 = vmatprep.subr.bf16.mxu0 0
      %2412 = vmatpush1.bf16.msra.mxu0 0
      %2413 = vmatprep.subr.bf16.mxu0 0
      %2414 = vmatpush1.bf16.msra.mxu0 0
      %2415 = vmatprep.subr.bf16.mxu0 0
      %2416 = vmatpush1.bf16.msra.mxu0 0
      %2417 = vmatprep.subr.bf16.mxu0 0
      %2418 = vmatpush1.bf16.msra.mxu0 0
      %2419 = vmatprep.subr.bf16.mxu0 0
      %2420 = vmatpush1.bf16.msra.mxu0 0
      %2421 = vmatprep.subr.bf16.mxu0 0
      %2422 = vmatpush1.bf16.msra.mxu0 0
      %2423 = vmatprep.subr.bf16.mxu0 0
      %2424 = vmatpush1.bf16.msra.mxu0 0
      %2425 = vmatprep.subr.bf16.mxu0 0
      %2426 = vmatpush1.bf16.msra.mxu0 0
      %2427 = vmatprep.mubr.bf16.mxu0 0
      %2428 = vmatmul.mubr.bf16.gmra.mrb[0].mxu0 %v2381
      %v2429 = vpop.f32.mrb[0].mxu0
      %v2430 = vadd.f32 0.0, %v2429
      %v2431 = vpop.f32.mrb[0].mxu0
      %v2432 = vpop.f32.mrb[0].mxu0
      %v2433 = vadd.f32 0.0, %v2432
      %v2434 = vpop.f32.mrb[0].mxu0
      %2435 = vmatprep.mubr.bf16.mxu0 0
      %2436 = vmatmul.mubr.bf16.gmra.mrb[0].mxu0 %v2384
      %v2437 = vpop.f32.mrb[0].mxu0
      %v2438 = vadd.f32 0.0, %v2437
      %v2439 = vpop.f32.mrb[0].mxu0
      %v2440 = vpop.f32.mrb[0].mxu0
      %v2441 = vadd.f32 0.0, %v2440
      %v2442 = vpop.f32.mrb[0].mxu0
      %2443 = vmatprep.mubr.bf16.mxu0 0
      %2444 = vmatmul.mubr.bf16.gmra.mrb[0].mxu0 %v2387
      %v2445 = vpop.f32.mrb[0].mxu0
      %v2446 = vadd.f32 0.0, %v2445
      %v2447 = vpop.f32.mrb[0].mxu0
      %v2448 = vpop.f32.mrb[0].mxu0
      %v2449 = vadd.f32 0.0, %v2448
      %v2450 = vpop.f32.mrb[0].mxu0
      %2451 = vmatprep.mubr.bf16.mxu0 0
      %2452 = vmatmul.mubr.bf16.gmra.mrb[0].mxu0 %v2390
      %v2453 = vpop.f32.mrb[0].mxu0
      %v2454 = vadd.f32 0.0, %v2453
      %v2455 = vpop.f32.mrb[0].mxu0
      %v2456 = vpop.f32.mrb[0].mxu0
      %v2457 = vadd.f32 0.0, %v2456
      %v2458 = vpop.f32.mrb[0].mxu0
      %2459 = vdwg.mxu0
      %v2460 = vadd.f32 %v2318, %v2430
      %v2461 = vadd.f32 %v2319, %v2433
      %v2462 = vadd.f32 %v2320, %v2438
      %v2463 = vadd.f32 %v2321, %v2441
      %v2464 = vadd.f32 %v2322, %v2446
      %v2465 = vadd.f32 %v2323, %v2449
      %v2466 = vadd.f32 %v2324, %v2454
      %v2467 = vadd.f32 %v2325, %v2457
      %v2468 = vrot.slane %v405, 2
      %v2469 = vrot.slane %v406, 2
      %v2470 = vsel %vm647, %v2468, %v2469
      %v2471 = vrot.slane %v407, 2
      %v2472 = vrot.slane %v408, 2
      %v2473 = vsel %vm647, %v2471, %v2472
      %v2474 = vrot.slane %v409, 2
      %v2475 = vrot.slane %v410, 2
      %v2476 = vsel %vm647, %v2474, %v2475
      %v2477 = vrot.slane %v411, 2
      %v2478 = vrot.slane %v412, 2
      %v2479 = vsel %vm647, %v2477, %v2478
      %v2480 = vrot.slane %v413, 2
      %v2481 = vrot.slane %v414, 2
      %v2482 = vsel %vm647, %v2480, %v2481
      %v2483 = vrot.slane %v415, 2
      %v2484 = vrot.slane %v416, 2
      %v2485 = vsel %vm647, %v2483, %v2484
      %v2486 = vrot.slane %v417, 2
      %v2487 = vrot.slane %v418, 2
      %v2488 = vsel %vm647, %v2486, %v2487
      %v2489 = vrot.slane %v419, 2
      %v2490 = vrot.slane %v420, 2
      %v2491 = vsel %vm647, %v2489, %v2490
      %v2500 = vpack.c.bf16 %v2473, %v2470
      %v2501 = vpack.c.bf16 %v2479, %v2476
      %v2502 = vpack.c.bf16 %v2485, %v2482
      %v2503 = vpack.c.bf16 %v2491, %v2488
      %s2504 = scalar_lea.vmem %s3, 80
      %v2505 = vld [vmem:[%s2504] sm:$0xf]
      %v2507 = vsel %vm485, %v2500, 0
      %v2510 = vsel %vm485, %v2501, 0
      %v2513 = vsel %vm485, %v2502, 0
      %v2516 = vsel %vm485, %v2503, 0
      %v2519 = vsel %vm498, %v2505, 0
      %2521 = vmatprep.subr.bf16.mxu0 0
      %2522 = vmatpush1.bf16.msra.mxu0 %v2519
      %2523 = vmatprep.subr.bf16.mxu0 0
      %2524 = vmatpush1.bf16.msra.mxu0 0
      %2525 = vmatprep.subr.bf16.mxu0 0
      %2526 = vmatpush1.bf16.msra.mxu0 0
      %2527 = vmatprep.subr.bf16.mxu0 0
      %2528 = vmatpush1.bf16.msra.mxu0 0
      %2529 = vmatprep.subr.bf16.mxu0 0
      %2530 = vmatpush1.bf16.msra.mxu0 0
      %2531 = vmatprep.subr.bf16.mxu0 0
      %2532 = vmatpush1.bf16.msra.mxu0 0
      %2533 = vmatprep.subr.bf16.mxu0 0
      %2534 = vmatpush1.bf16.msra.mxu0 0
      %2535 = vmatprep.subr.bf16.mxu0 0
      %2536 = vmatpush1.bf16.msra.mxu0 0
      %2537 = vmatprep.subr.bf16.mxu0 0
      %2538 = vmatpush1.bf16.msra.mxu0 0
      %2539 = vmatprep.subr.bf16.mxu0 0
      %2540 = vmatpush1.bf16.msra.mxu0 0
      %2541 = vmatprep.subr.bf16.mxu0 0
      %2542 = vmatpush1.bf16.msra.mxu0 0
      %2543 = vmatprep.subr.bf16.mxu0 0
      %2544 = vmatpush1.bf16.msra.mxu0 0
      %2545 = vmatprep.subr.bf16.mxu0 0
      %2546 = vmatpush1.bf16.msra.mxu0 0
      %2547 = vmatprep.subr.bf16.mxu0 0
      %2548 = vmatpush1.bf16.msra.mxu0 0
      %2549 = vmatprep.subr.bf16.mxu0 0
      %2550 = vmatpush1.bf16.msra.mxu0 0
      %2551 = vmatprep.subr.bf16.mxu0 0
      %2552 = vmatpush1.bf16.msra.mxu0 0
      %2553 = vmatprep.mubr.bf16.mxu0 0
      %2554 = vmatmul.mubr.bf16.gmra.mrb[0].mxu0 %v2507
      %v2555 = vpop.f32.mrb[0].mxu0
      %v2556 = vadd.f32 0.0, %v2555
      %v2557 = vpop.f32.mrb[0].mxu0
      %v2558 = vpop.f32.mrb[0].mxu0
      %v2559 = vadd.f32 0.0, %v2558
      %v2560 = vpop.f32.mrb[0].mxu0
      %2561 = vmatprep.mubr.bf16.mxu0 0
      %2562 = vmatmul.mubr.bf16.gmra.mrb[0].mxu0 %v2510
      %v2563 = vpop.f32.mrb[0].mxu0
      %v2564 = vadd.f32 0.0, %v2563
      %v2565 = vpop.f32.mrb[0].mxu0
      %v2566 = vpop.f32.mrb[0].mxu0
      %v2567 = vadd.f32 0.0, %v2566
      %v2568 = vpop.f32.mrb[0].mxu0
      %2569 = vmatprep.mubr.bf16.mxu0 0
      %2570 = vmatmul.mubr.bf16.gmra.mrb[0].mxu0 %v2513
      %v2571 = vpop.f32.mrb[0].mxu0
      %v2572 = vadd.f32 0.0, %v2571
      %v2573 = vpop.f32.mrb[0].mxu0
      %v2574 = vpop.f32.mrb[0].mxu0
      %v2575 = vadd.f32 0.0, %v2574
      %v2576 = vpop.f32.mrb[0].mxu0
      %2577 = vmatprep.mubr.bf16.mxu0 0
      %2578 = vmatmul.mubr.bf16.gmra.mrb[0].mxu0 %v2516
      %v2579 = vpop.f32.mrb[0].mxu0
      %v2580 = vadd.f32 0.0, %v2579
      %v2581 = vpop.f32.mrb[0].mxu0
      %v2582 = vpop.f32.mrb[0].mxu0
      %v2583 = vadd.f32 0.0, %v2582
      %v2584 = vpop.f32.mrb[0].mxu0
      %2585 = vdwg.mxu0
      %v2586 = vadd.f32 %v2460, %v2556
      %v2587 = vadd.f32 %v2461, %v2559
      %v2588 = vadd.f32 %v2462, %v2564
      %v2589 = vadd.f32 %v2463, %v2567
      %v2590 = vadd.f32 %v2464, %v2572
      %v2591 = vadd.f32 %v2465, %v2575
      %v2592 = vadd.f32 %v2466, %v2580
      %v2593 = vadd.f32 %v2467, %v2583
      %v2594 = vpack.c.bf16 %v409, %v407
      %v2595 = vpack.c.bf16 %v413, %v411
      %v2596 = vpack.c.bf16 %v417, %v415
      %v2597 = vpack.c.bf16 %v421, %v419
      %s2598 = scalar_lea.vmem %s3, 84
      %v2599 = vld [vmem:[%s2598] sm:$0xf]
      %v2601 = vsel %vm485, %v2594, 0
      %v2604 = vsel %vm485, %v2595, 0
      %v2607 = vsel %vm485, %v2596, 0
      %v2610 = vsel %vm485, %v2597, 0
      %v2613 = vsel %vm498, %v2599, 0
      %2615 = vmatprep.subr.bf16.mxu0 0
      %2616 = vmatpush1.bf16.msra.mxu0 %v2613
      %2617 = vmatprep.subr.bf16.mxu0 0
      %2618 = vmatpush1.bf16.msra.mxu0 0
      %2619 = vmatprep.subr.bf16.mxu0 0
      %2620 = vmatpush1.bf16.msra.mxu0 0
      %2621 = vmatprep.subr.bf16.mxu0 0
      %2622 = vmatpush1.bf16.msra.mxu0 0
      %2623 = vmatprep.subr.bf16.mxu0 0
      %2624 = vmatpush1.bf16.msra.mxu0 0
      %2625 = vmatprep.subr.bf16.mxu0 0
      %2626 = vmatpush1.bf16.msra.mxu0 0
      %2627 = vmatprep.subr.bf16.mxu0 0
      %2628 = vmatpush1.bf16.msra.mxu0 0
      %2629 = vmatprep.subr.bf16.mxu0 0
      %2630 = vmatpush1.bf16.msra.mxu0 0
      %2631 = vmatprep.subr.bf16.mxu0 0
      %2632 = vmatpush1.bf16.msra.mxu0 0
      %2633 = vmatprep.subr.bf16.mxu0 0
      %2634 = vmatpush1.bf16.msra.mxu0 0
      %2635 = vmatprep.subr.bf16.mxu0 0
      %2636 = vmatpush1.bf16.msra.mxu0 0
      %2637 = vmatprep.subr.bf16.mxu0 0
      %2638 = vmatpush1.bf16.msra.mxu0 0
      %2639 = vmatprep.subr.bf16.mxu0 0
      %2640 = vmatpush1.bf16.msra.mxu0 0
      %2641 = vmatprep.subr.bf16.mxu0 0
      %2642 = vmatpush1.bf16.msra.mxu0 0
      %2643 = vmatprep.subr.bf16.mxu0 0
      %2644 = vmatpush1.bf16.msra.mxu0 0
      %2645 = vmatprep.subr.bf16.mxu0 0
      %2646 = vmatpush1.bf16.msra.mxu0 0
      %2647 = vmatprep.mubr.bf16.mxu0 0
      %2648 = vmatmul.mubr.bf16.gmra.mrb[0].mxu0 %v2601
      %v2649 = vpop.f32.mrb[0].mxu0
      %v2650 = vadd.f32 0.0, %v2649
      %v2651 = vpop.f32.mrb[0].mxu0
      %v2652 = vpop.f32.mrb[0].mxu0
      %v2653 = vadd.f32 0.0, %v2652
      %v2654 = vpop.f32.mrb[0].mxu0
      %2655 = vmatprep.mubr.bf16.mxu0 0
      %2656 = vmatmul.mubr.bf16.gmra.mrb[0].mxu0 %v2604
      %v2657 = vpop.f32.mrb[0].mxu0
      %v2658 = vadd.f32 0.0, %v2657
      %v2659 = vpop.f32.mrb[0].mxu0
      %v2660 = vpop.f32.mrb[0].mxu0
      %v2661 = vadd.f32 0.0, %v2660
      %v2662 = vpop.f32.mrb[0].mxu0
      %2663 = vmatprep.mubr.bf16.mxu0 0
      %2664 = vmatmul.mubr.bf16.gmra.mrb[0].mxu0 %v2607
      %v2665 = vpop.f32.mrb[0].mxu0
      %v2666 = vadd.f32 0.0, %v2665
      %v2667 = vpop.f32.mrb[0].mxu0
      %v2668 = vpop.f32.mrb[0].mxu0
      %v2669 = vadd.f32 0.0, %v2668
      %v2670 = vpop.f32.mrb[0].mxu0
      %2671 = vmatprep.mubr.bf16.mxu0 0
      %2672 = vmatmul.mubr.bf16.gmra.mrb[0].mxu0 %v2610
      %v2673 = vpop.f32.mrb[0].mxu0
      %v2674 = vadd.f32 0.0, %v2673
      %v2675 = vpop.f32.mrb[0].mxu0
      %v2676 = vpop.f32.mrb[0].mxu0
      %v2677 = vadd.f32 0.0, %v2676
      %v2678 = vpop.f32.mrb[0].mxu0
      %2679 = vdwg.mxu0
      %v2680 = vadd.f32 %v2586, %v2650
      %v2681 = vadd.f32 %v2587, %v2653
      %v2682 = vadd.f32 %v2588, %v2658
      %v2683 = vadd.f32 %v2589, %v2661
      %v2684 = vadd.f32 %v2590, %v2666
      %v2685 = vadd.f32 %v2591, %v2669
      %v2686 = vadd.f32 %v2592, %v2674
      %v2687 = vadd.f32 %v2593, %v2677
      %v2690 = vrot.slane %v421, 1
      %v2691 = vrot.slane %v422, 1
      %v2692 = vsel %vm446, %v2690, %v2691
      %v2694 = vpack.c.bf16 %v2350, %v2347
      %v2695 = vpack.c.bf16 %v2356, %v2353
      %v2696 = vpack.c.bf16 %v2362, %v2359
      %v2697 = vpack.c.bf16 %v2692, %v2365
      %s2698 = scalar_lea.vmem %s3, 88
      %v2699 = vld [vmem:[%s2698] sm:$0xf]
      %v2701 = vsel %vm485, %v2694, 0
      %v2704 = vsel %vm485, %v2695, 0
      %v2707 = vsel %vm485, %v2696, 0
      %v2710 = vsel %vm485, %v2697, 0
      %v2713 = vsel %vm498, %v2699, 0
      %2715 = vmatprep.subr.bf16.mxu0 0
      %2716 = vmatpush1.bf16.msra.mxu0 %v2713
      %2717 = vmatprep.subr.bf16.mxu0 0
      %2718 = vmatpush1.bf16.msra.mxu0 0
      %2719 = vmatprep.subr.bf16.mxu0 0
      %2720 = vmatpush1.bf16.msra.mxu0 0
      %2721 = vmatprep.subr.bf16.mxu0 0
      %2722 = vmatpush1.bf16.msra.mxu0 0
      %2723 = vmatprep.subr.bf16.mxu0 0
      %2724 = vmatpush1.bf16.msra.mxu0 0
      %2725 = vmatprep.subr.bf16.mxu0 0
      %2726 = vmatpush1.bf16.msra.mxu0 0
      %2727 = vmatprep.subr.bf16.mxu0 0
      %2728 = vmatpush1.bf16.msra.mxu0 0
      %2729 = vmatprep.subr.bf16.mxu0 0
      %2730 = vmatpush1.bf16.msra.mxu0 0
      %2731 = vmatprep.subr.bf16.mxu0 0
      %2732 = vmatpush1.bf16.msra.mxu0 0
      %2733 = vmatprep.subr.bf16.mxu0 0
      %2734 = vmatpush1.bf16.msra.mxu0 0
      %2735 = vmatprep.subr.bf16.mxu0 0
      %2736 = vmatpush1.bf16.msra.mxu0 0
      %2737 = vmatprep.subr.bf16.mxu0 0
      %2738 = vmatpush1.bf16.msra.mxu0 0
      %2739 = vmatprep.subr.bf16.mxu0 0
      %2740 = vmatpush1.bf16.msra.mxu0 0
      %2741 = vmatprep.subr.bf16.mxu0 0
      %2742 = vmatpush1.bf16.msra.mxu0 0
      %2743 = vmatprep.subr.bf16.mxu0 0
      %2744 = vmatpush1.bf16.msra.mxu0 0
      %2745 = vmatprep.subr.bf16.mxu0 0
      %2746 = vmatpush1.bf16.msra.mxu0 0
      %2747 = vmatprep.mubr.bf16.mxu0 0
      %2748 = vmatmul.mubr.bf16.gmra.mrb[0].mxu0 %v2701
      %v2749 = vpop.f32.mrb[0].mxu0
      %v2750 = vadd.f32 0.0, %v2749
      %v2751 = vpop.f32.mrb[0].mxu0
      %v2752 = vpop.f32.mrb[0].mxu0
      %v2753 = vadd.f32 0.0, %v2752
      %v2754 = vpop.f32.mrb[0].mxu0
      %2755 = vmatprep.mubr.bf16.mxu0 0
      %2756 = vmatmul.mubr.bf16.gmra.mrb[0].mxu0 %v2704
      %v2757 = vpop.f32.mrb[0].mxu0
      %v2758 = vadd.f32 0.0, %v2757
      %v2759 = vpop.f32.mrb[0].mxu0
      %v2760 = vpop.f32.mrb[0].mxu0
      %v2761 = vadd.f32 0.0, %v2760
      %v2762 = vpop.f32.mrb[0].mxu0
      %2763 = vmatprep.mubr.bf16.mxu0 0
      %2764 = vmatmul.mubr.bf16.gmra.mrb[0].mxu0 %v2707
      %v2765 = vpop.f32.mrb[0].mxu0
      %v2766 = vadd.f32 0.0, %v2765
      %v2767 = vpop.f32.mrb[0].mxu0
      %v2768 = vpop.f32.mrb[0].mxu0
      %v2769 = vadd.f32 0.0, %v2768
      %v2770 = vpop.f32.mrb[0].mxu0
      %2771 = vmatprep.mubr.bf16.mxu0 0
      %2772 = vmatmul.mubr.bf16.gmra.mrb[0].mxu0 %v2710
      %v2773 = vpop.f32.mrb[0].mxu0
      %v2774 = vadd.f32 0.0, %v2773
      %v2775 = vpop.f32.mrb[0].mxu0
      %v2776 = vpop.f32.mrb[0].mxu0
      %v2777 = vadd.f32 0.0, %v2776
      %v2778 = vpop.f32.mrb[0].mxu0
      %2779 = vdwg.mxu0
      %v2780 = vadd.f32 %v2680, %v2750
      %v2781 = vadd.f32 %v2681, %v2753
      %v2782 = vadd.f32 %v2682, %v2758
      %v2783 = vadd.f32 %v2683, %v2761
      %v2784 = vadd.f32 %v2684, %v2766
      %v2785 = vadd.f32 %v2685, %v2769
      %v2786 = vadd.f32 %v2686, %v2774
      %v2787 = vadd.f32 %v2687, %v2777
      %v2788 = vrot.slane %v421, 2
      %v2789 = vrot.slane %v422, 2
      %v2790 = vsel %vm647, %v2788, %v2789
      %v2792 = vpack.c.bf16 %v2476, %v2473
      %v2793 = vpack.c.bf16 %v2482, %v2479
      %v2794 = vpack.c.bf16 %v2488, %v2485
      %v2795 = vpack.c.bf16 %v2790, %v2491
      %s2796 = scalar_lea.vmem %s3, 92
      %v2797 = vld [vmem:[%s2796] sm:$0xf]
      %v2799 = vsel %vm485, %v2792, 0
      %v2802 = vsel %vm485, %v2793, 0
      %v2805 = vsel %vm485, %v2794, 0
      %v2808 = vsel %vm485, %v2795, 0
      %v2811 = vsel %vm498, %v2797, 0
      %2813 = vmatprep.subr.bf16.mxu0 0
      %2814 = vmatpush1.bf16.msra.mxu0 %v2811
      %2815 = vmatprep.subr.bf16.mxu0 0
      %2816 = vmatpush1.bf16.msra.mxu0 0
      %2817 = vmatprep.subr.bf16.mxu0 0
      %2818 = vmatpush1.bf16.msra.mxu0 0
      %2819 = vmatprep.subr.bf16.mxu0 0
      %2820 = vmatpush1.bf16.msra.mxu0 0
      %2821 = vmatprep.subr.bf16.mxu0 0
      %2822 = vmatpush1.bf16.msra.mxu0 0
      %2823 = vmatprep.subr.bf16.mxu0 0
      %2824 = vmatpush1.bf16.msra.mxu0 0
      %2825 = vmatprep.subr.bf16.mxu0 0
      %2826 = vmatpush1.bf16.msra.mxu0 0
      %2827 = vmatprep.subr.bf16.mxu0 0
      %2828 = vmatpush1.bf16.msra.mxu0 0
      %2829 = vmatprep.subr.bf16.mxu0 0
      %2830 = vmatpush1.bf16.msra.mxu0 0
      %2831 = vmatprep.subr.bf16.mxu0 0
      %2832 = vmatpush1.bf16.msra.mxu0 0
      %2833 = vmatprep.subr.bf16.mxu0 0
      %2834 = vmatpush1.bf16.msra.mxu0 0
      %2835 = vmatprep.subr.bf16.mxu0 0
      %2836 = vmatpush1.bf16.msra.mxu0 0
      %2837 = vmatprep.subr.bf16.mxu0 0
      %2838 = vmatpush1.bf16.msra.mxu0 0
      %2839 = vmatprep.subr.bf16.mxu0 0
      %2840 = vmatpush1.bf16.msra.mxu0 0
      %2841 = vmatprep.subr.bf16.mxu0 0
      %2842 = vmatpush1.bf16.msra.mxu0 0
      %2843 = vmatprep.subr.bf16.mxu0 0
      %2844 = vmatpush1.bf16.msra.mxu0 0
      %2845 = vmatprep.mubr.bf16.mxu0 0
      %2846 = vmatmul.mubr.bf16.gmra.mrb[0].mxu0 %v2799
      %v2847 = vpop.f32.mrb[0].mxu0
      %v2848 = vadd.f32 0.0, %v2847
      %v2849 = vpop.f32.mrb[0].mxu0
      %v2850 = vpop.f32.mrb[0].mxu0
      %v2851 = vadd.f32 0.0, %v2850
      %v2852 = vpop.f32.mrb[0].mxu0
      %2853 = vmatprep.mubr.bf16.mxu0 0
      %2854 = vmatmul.mubr.bf16.gmra.mrb[0].mxu0 %v2802
      %v2855 = vpop.f32.mrb[0].mxu0
      %v2856 = vadd.f32 0.0, %v2855
      %v2857 = vpop.f32.mrb[0].mxu0
      %v2858 = vpop.f32.mrb[0].mxu0
      %v2859 = vadd.f32 0.0, %v2858
      %v2860 = vpop.f32.mrb[0].mxu0
      %2861 = vmatprep.mubr.bf16.mxu0 0
      %2862 = vmatmul.mubr.bf16.gmra.mrb[0].mxu0 %v2805
      %v2863 = vpop.f32.mrb[0].mxu0
      %v2864 = vadd.f32 0.0, %v2863
      %v2865 = vpop.f32.mrb[0].mxu0
      %v2866 = vpop.f32.mrb[0].mxu0
      %v2867 = vadd.f32 0.0, %v2866
      %v2868 = vpop.f32.mrb[0].mxu0
      %2869 = vmatprep.mubr.bf16.mxu0 0
      %2870 = vmatmul.mubr.bf16.gmra.mrb[0].mxu0 %v2808
      %v2871 = vpop.f32.mrb[0].mxu0
      %v2872 = vadd.f32 0.0, %v2871
      %v2873 = vpop.f32.mrb[0].mxu0
      %v2874 = vpop.f32.mrb[0].mxu0
      %v2875 = vadd.f32 0.0, %v2874
      %v2876 = vpop.f32.mrb[0].mxu0
      %2877 = vdwg.mxu0
      %v2878 = vadd.f32 %v2780, %v2848
      %v2879 = vadd.f32 %v2781, %v2851
      %v2880 = vadd.f32 %v2782, %v2856
      %v2881 = vadd.f32 %v2783, %v2859
      %v2882 = vadd.f32 %v2784, %v2864
      %v2883 = vadd.f32 %v2785, %v2867
      %v2884 = vadd.f32 %v2786, %v2872
      %v2885 = vadd.f32 %v2787, %v2875
      %v2886 = vpack.c.bf16 %v423, %v421
      %s2887 = scalar_lea.vmem %s3, 96
      %v2888 = vld [vmem:[%s2887] sm:$0xf]
      %v2890 = vsel %vm485, %v2886, 0
      %v2893 = vsel %vm498, %v2888, 0
      %2895 = vmatprep.subr.bf16.mxu0 0
      %2896 = vmatpush1.bf16.msra.mxu0 %v2893
      %2897 = vmatprep.subr.bf16.mxu0 0
      %2898 = vmatpush1.bf16.msra.mxu0 0
      %2899 = vmatprep.subr.bf16.mxu0 0
      %2900 = vmatpush1.bf16.msra.mxu0 0
      %2901 = vmatprep.subr.bf16.mxu0 0
      %2902 = vmatpush1.bf16.msra.mxu0 0
      %2903 = vmatprep.subr.bf16.mxu0 0
      %2904 = vmatpush1.bf16.msra.mxu0 0
      %2905 = vmatprep.subr.bf16.mxu0 0
      %2906 = vmatpush1.bf16.msra.mxu0 0
      %2907 = vmatprep.subr.bf16.mxu0 0
      %2908 = vmatpush1.bf16.msra.mxu0 0
      %2909 = vmatprep.subr.bf16.mxu0 0
      %2910 = vmatpush1.bf16.msra.mxu0 0
      %2911 = vmatprep.subr.bf16.mxu0 0
      %2912 = vmatpush1.bf16.msra.mxu0 0
      %2913 = vmatprep.subr.bf16.mxu0 0
      %2914 = vmatpush1.bf16.msra.mxu0 0
      %2915 = vmatprep.subr.bf16.mxu0 0
      %2916 = vmatpush1.bf16.msra.mxu0 0
      %2917 = vmatprep.subr.bf16.mxu0 0
      %2918 = vmatpush1.bf16.msra.mxu0 0
      %2919 = vmatprep.subr.bf16.mxu0 0
      %2920 = vmatpush1.bf16.msra.mxu0 0
      %2921 = vmatprep.subr.bf16.mxu0 0
      %2922 = vmatpush1.bf16.msra.mxu0 0
      %2923 = vmatprep.subr.bf16.mxu0 0
      %2924 = vmatpush1.bf16.msra.mxu0 0
      %2925 = vmatprep.subr.bf16.mxu0 0
      %2926 = vmatpush1.bf16.msra.mxu0 0
      %2927 = vmatprep.mubr.bf16.mxu0 0
      %2928 = vmatmul.mubr.bf16.gmra.mrb[0].mxu0 %v2242
      %v2929 = vpop.f32.mrb[0].mxu0
      %v2930 = vadd.f32 0.0, %v2929
      %v2931 = vpop.f32.mrb[0].mxu0
      %v2932 = vpop.f32.mrb[0].mxu0
      %v2933 = vadd.f32 0.0, %v2932
      %v2934 = vpop.f32.mrb[0].mxu0
      %2935 = vmatprep.mubr.bf16.mxu0 0
      %2936 = vmatmul.mubr.bf16.gmra.mrb[0].mxu0 %v2245
      %v2937 = vpop.f32.mrb[0].mxu0
      %v2938 = vadd.f32 0.0, %v2937
      %v2939 = vpop.f32.mrb[0].mxu0
      %v2940 = vpop.f32.mrb[0].mxu0
      %v2941 = vadd.f32 0.0, %v2940
      %v2942 = vpop.f32.mrb[0].mxu0
      %2943 = vmatprep.mubr.bf16.mxu0 0
      %2944 = vmatmul.mubr.bf16.gmra.mrb[0].mxu0 %v2248
      %v2945 = vpop.f32.mrb[0].mxu0
      %v2946 = vadd.f32 0.0, %v2945
      %v2947 = vpop.f32.mrb[0].mxu0
      %v2948 = vpop.f32.mrb[0].mxu0
      %v2949 = vadd.f32 0.0, %v2948
      %v2950 = vpop.f32.mrb[0].mxu0
      %2951 = vmatprep.mubr.bf16.mxu0 0
      %2952 = vmatmul.mubr.bf16.gmra.mrb[0].mxu0 %v2890
      %v2953 = vpop.f32.mrb[0].mxu0
      %v2954 = vadd.f32 0.0, %v2953
      %v2955 = vpop.f32.mrb[0].mxu0
      %v2956 = vpop.f32.mrb[0].mxu0
      %v2957 = vadd.f32 0.0, %v2956
      %v2958 = vpop.f32.mrb[0].mxu0
      %2959 = vdwg.mxu0
      %v2960 = vadd.f32 %v2878, %v2930
      %v2961 = vadd.f32 %v2879, %v2933
      %v2962 = vadd.f32 %v2880, %v2938
      %v2963 = vadd.f32 %v2881, %v2941
      %v2964 = vadd.f32 %v2882, %v2946
      %v2965 = vadd.f32 %v2883, %v2949
      %v2966 = vadd.f32 %v2884, %v2954
      %v2967 = vadd.f32 %v2885, %v2957
      %v2970 = vrot.slane %v423, 1
      %v2971 = vrot.slane %v424, 1
      %v2972 = vsel %vm446, %v2970, %v2971
      %v2974 = vpack.c.bf16 %v2972, %v2692
      %s2975 = scalar_lea.vmem %s3, 100
      %v2976 = vld [vmem:[%s2975] sm:$0xf]
      %v2978 = vsel %vm485, %v2974, 0
      %v2981 = vsel %vm498, %v2976, 0
      %2983 = vmatprep.subr.bf16.mxu0 0
      %2984 = vmatpush1.bf16.msra.mxu0 %v2981
      %2985 = vmatprep.subr.bf16.mxu0 0
      %2986 = vmatpush1.bf16.msra.mxu0 0
      %2987 = vmatprep.subr.bf16.mxu0 0
      %2988 = vmatpush1.bf16.msra.mxu0 0
      %2989 = vmatprep.subr.bf16.mxu0 0
      %2990 = vmatpush1.bf16.msra.mxu0 0
      %2991 = vmatprep.subr.bf16.mxu0 0
      %2992 = vmatpush1.bf16.msra.mxu0 0
      %2993 = vmatprep.subr.bf16.mxu0 0
      %2994 = vmatpush1.bf16.msra.mxu0 0
      %2995 = vmatprep.subr.bf16.mxu0 0
      %2996 = vmatpush1.bf16.msra.mxu0 0
      %2997 = vmatprep.subr.bf16.mxu0 0
      %2998 = vmatpush1.bf16.msra.mxu0 0
      %2999 = vmatprep.subr.bf16.mxu0 0
      %3000 = vmatpush1.bf16.msra.mxu0 0
      %3001 = vmatprep.subr.bf16.mxu0 0
      %3002 = vmatpush1.bf16.msra.mxu0 0
      %3003 = vmatprep.subr.bf16.mxu0 0
      %3004 = vmatpush1.bf16.msra.mxu0 0
      %3005 = vmatprep.subr.bf16.mxu0 0
      %3006 = vmatpush1.bf16.msra.mxu0 0
      %3007 = vmatprep.subr.bf16.mxu0 0
      %3008 = vmatpush1.bf16.msra.mxu0 0
      %3009 = vmatprep.subr.bf16.mxu0 0
      %3010 = vmatpush1.bf16.msra.mxu0 0
      %3011 = vmatprep.subr.bf16.mxu0 0
      %3012 = vmatpush1.bf16.msra.mxu0 0
      %3013 = vmatprep.subr.bf16.mxu0 0
      %3014 = vmatpush1.bf16.msra.mxu0 0
      %3015 = vmatprep.mubr.bf16.mxu0 0
      %3016 = vmatmul.mubr.bf16.gmra.mrb[0].mxu0 %v2384
      %v3017 = vpop.f32.mrb[0].mxu0
      %v3018 = vadd.f32 0.0, %v3017
      %v3019 = vpop.f32.mrb[0].mxu0
      %v3020 = vpop.f32.mrb[0].mxu0
      %v3021 = vadd.f32 0.0, %v3020
      %v3022 = vpop.f32.mrb[0].mxu0
      %3023 = vmatprep.mubr.bf16.mxu0 0
      %3024 = vmatmul.mubr.bf16.gmra.mrb[0].mxu0 %v2387
      %v3025 = vpop.f32.mrb[0].mxu0
      %v3026 = vadd.f32 0.0, %v3025
      %v3027 = vpop.f32.mrb[0].mxu0
      %v3028 = vpop.f32.mrb[0].mxu0
      %v3029 = vadd.f32 0.0, %v3028
      %v3030 = vpop.f32.mrb[0].mxu0
      %3031 = vmatprep.mubr.bf16.mxu0 0
      %3032 = vmatmul.mubr.bf16.gmra.mrb[0].mxu0 %v2390
      %v3033 = vpop.f32.mrb[0].mxu0
      %v3034 = vadd.f32 0.0, %v3033
      %v3035 = vpop.f32.mrb[0].mxu0
      %v3036 = vpop.f32.mrb[0].mxu0
      %v3037 = vadd.f32 0.0, %v3036
      %v3038 = vpop.f32.mrb[0].mxu0
      %3039 = vmatprep.mubr.bf16.mxu0 0
      %3040 = vmatmul.mubr.bf16.gmra.mrb[0].mxu0 %v2978
      %v3041 = vpop.f32.mrb[0].mxu0
      %v3042 = vadd.f32 0.0, %v3041
      %v3043 = vpop.f32.mrb[0].mxu0
      %v3044 = vpop.f32.mrb[0].mxu0
      %v3045 = vadd.f32 0.0, %v3044
      %v3046 = vpop.f32.mrb[0].mxu0
      %3047 = vdwg.mxu0
      %v3048 = vadd.f32 %v2960, %v3018
      %v3049 = vadd.f32 %v2961, %v3021
      %v3050 = vadd.f32 %v2962, %v3026
      %v3051 = vadd.f32 %v2963, %v3029
      %v3052 = vadd.f32 %v2964, %v3034
      %v3053 = vadd.f32 %v2965, %v3037
      %v3054 = vadd.f32 %v2966, %v3042
      %v3055 = vadd.f32 %v2967, %v3045
      %v3056 = vrot.slane %v423, 2
      %v3057 = vrot.slane %v424, 2
      %v3058 = vsel %vm647, %v3056, %v3057
      %v3060 = vpack.c.bf16 %v3058, %v2790
      %s3061 = scalar_lea.vmem %s3, 104
      %v3062 = vld [vmem:[%s3061] sm:$0xf]
      %v3064 = vsel %vm485, %v3060, 0
      %v3067 = vsel %vm498, %v3062, 0
      %3069 = vmatprep.subr.bf16.mxu0 0
      %3070 = vmatpush1.bf16.msra.mxu0 %v3067
      %3071 = vmatprep.subr.bf16.mxu0 0
      %3072 = vmatpush1.bf16.msra.mxu0 0
      %3073 = vmatprep.subr.bf16.mxu0 0
      %3074 = vmatpush1.bf16.msra.mxu0 0
      %3075 = vmatprep.subr.bf16.mxu0 0
      %3076 = vmatpush1.bf16.msra.mxu0 0
      %3077 = vmatprep.subr.bf16.mxu0 0
      %3078 = vmatpush1.bf16.msra.mxu0 0
      %3079 = vmatprep.subr.bf16.mxu0 0
      %3080 = vmatpush1.bf16.msra.mxu0 0
      %3081 = vmatprep.subr.bf16.mxu0 0
      %3082 = vmatpush1.bf16.msra.mxu0 0
      %3083 = vmatprep.subr.bf16.mxu0 0
      %3084 = vmatpush1.bf16.msra.mxu0 0
      %3085 = vmatprep.subr.bf16.mxu0 0
      %3086 = vmatpush1.bf16.msra.mxu0 0
      %3087 = vmatprep.subr.bf16.mxu0 0
      %3088 = vmatpush1.bf16.msra.mxu0 0
      %3089 = vmatprep.subr.bf16.mxu0 0
      %3090 = vmatpush1.bf16.msra.mxu0 0
      %3091 = vmatprep.subr.bf16.mxu0 0
      %3092 = vmatpush1.bf16.msra.mxu0 0
      %3093 = vmatprep.subr.bf16.mxu0 0
      %3094 = vmatpush1.bf16.msra.mxu0 0
      %3095 = vmatprep.subr.bf16.mxu0 0
      %3096 = vmatpush1.bf16.msra.mxu0 0
      %3097 = vmatprep.subr.bf16.mxu0 0
      %3098 = vmatpush1.bf16.msra.mxu0 0
      %3099 = vmatprep.subr.bf16.mxu0 0
      %3100 = vmatpush1.bf16.msra.mxu0 0
      %3101 = vmatprep.mubr.bf16.mxu0 0
      %3102 = vmatmul.mubr.bf16.gmra.mrb[0].mxu0 %v2510
      %v3103 = vpop.f32.mrb[0].mxu0
      %v3104 = vadd.f32 0.0, %v3103
      %v3105 = vpop.f32.mrb[0].mxu0
      %v3106 = vpop.f32.mrb[0].mxu0
      %v3107 = vadd.f32 0.0, %v3106
      %v3108 = vpop.f32.mrb[0].mxu0
      %3109 = vmatprep.mubr.bf16.mxu0 0
      %3110 = vmatmul.mubr.bf16.gmra.mrb[0].mxu0 %v2513
      %v3111 = vpop.f32.mrb[0].mxu0
      %v3112 = vadd.f32 0.0, %v3111
      %v3113 = vpop.f32.mrb[0].mxu0
      %v3114 = vpop.f32.mrb[0].mxu0
      %v3115 = vadd.f32 0.0, %v3114
      %v3116 = vpop.f32.mrb[0].mxu0
      %3117 = vmatprep.mubr.bf16.mxu0 0
      %3118 = vmatmul.mubr.bf16.gmra.mrb[0].mxu0 %v2516
      %v3119 = vpop.f32.mrb[0].mxu0
      %v3120 = vadd.f32 0.0, %v3119
      %v3121 = vpop.f32.mrb[0].mxu0
      %v3122 = vpop.f32.mrb[0].mxu0
      %v3123 = vadd.f32 0.0, %v3122
      %v3124 = vpop.f32.mrb[0].mxu0
      %3125 = vmatprep.mubr.bf16.mxu0 0
      %3126 = vmatmul.mubr.bf16.gmra.mrb[0].mxu0 %v3064
      %v3127 = vpop.f32.mrb[0].mxu0
      %v3128 = vadd.f32 0.0, %v3127
      %v3129 = vpop.f32.mrb[0].mxu0
      %v3130 = vpop.f32.mrb[0].mxu0
      %v3131 = vadd.f32 0.0, %v3130
      %v3132 = vpop.f32.mrb[0].mxu0
      %3133 = vdwg.mxu0
      %v3134 = vadd.f32 %v3048, %v3104
      %v3135 = vadd.f32 %v3049, %v3107
      %v3136 = vadd.f32 %v3050, %v3112
      %v3137 = vadd.f32 %v3051, %v3115
      %v3138 = vadd.f32 %v3052, %v3120
      %v3139 = vadd.f32 %v3053, %v3123
      %v3140 = vadd.f32 %v3054, %v3128
      %v3141 = vadd.f32 %v3055, %v3131
      %3142 = vst [vmem:[%s355] sm:$0xff] %v3134
      %3143 = vst [vmem:[%s355 + $0x8] sm:$0xff] %v3135
      %3144 = vst [vmem:[%s355 + $0x10] sm:$0xff] %v3136
      %3145 = vst [vmem:[%s355 + $0x18] sm:$0xff] %v3137
      %3146 = vst [vmem:[%s355 + $0x20] sm:$0xff] %v3138
      %3147 = vst [vmem:[%s355 + $0x28] sm:$0xff] %v3139
      %3148 = vst [vmem:[%s355 + $0x30] sm:$0xff] %v3140
      %3149 = vst [vmem:[%s355 + $0x38] sm:$0xff] %v3141
      %v3150 = vadd.f32 %v3134, %v3135
      %v3151 = vadd.f32 %v3150, %v3136
      %v3152 = vadd.f32 %v3151, %v3137
      %v3153 = vadd.f32 %v3152, %v3138
      %v3154 = vadd.f32 %v3153, %v3139
      %v3155 = vadd.f32 %v3154, %v3140
      %v3156 = vadd.f32 %v3155, %v3141
      %v3157 = vrot.slane %v3156, 4
      %v3158 = vadd.f32 %v3156, %v3157
      %v3159 = vrot.slane %v3158, 2
      %v3160 = vadd.f32 %v3158, %v3159
      %v3161 = vrot.slane %v3160, 1
      %v3162 = vadd.f32 %v3160, %v3161
      %v3163 = vmul.f32 %v3134, %v3134
      %v3164 = vmul.f32 %v3135, %v3135
      %v3165 = vmul.f32 %v3136, %v3136
      %v3166 = vmul.f32 %v3137, %v3137
      %v3167 = vmul.f32 %v3138, %v3138
      %v3168 = vmul.f32 %v3139, %v3139
      %v3169 = vmul.f32 %v3140, %v3140
      %v3170 = vmul.f32 %v3141, %v3141
      %v3171 = vadd.f32 %v3163, %v3164
      %v3172 = vadd.f32 %v3171, %v3165
      %v3173 = vadd.f32 %v3172, %v3166
      %v3174 = vadd.f32 %v3173, %v3167
      %v3175 = vadd.f32 %v3174, %v3168
      %v3176 = vadd.f32 %v3175, %v3169
      %v3177 = vadd.f32 %v3176, %v3170
      %v3178 = vrot.slane %v3177, 4
      %v3179 = vadd.f32 %v3177, %v3178
      %v3180 = vrot.slane %v3179, 2
      %v3181 = vadd.f32 %v3179, %v3180
      %v3182 = vrot.slane %v3181, 1
      %v3183 = vadd.f32 %v3181, %v3182
      %vm3184 = vcmask 1040384
      %v3185 = vsel %vm3184, %v3162, %v3183
      %3186 = vst [vmem:[%s363] sm:$0x3] %v3185
      %p3187 = scmp.lt.s32.totalorder %s21, 1
      %s3188 = scalar_select %p3187, %s21, 1
      %p3189 = scmp.lt.s32.totalorder %s22, 7
      %s3190 = scalar_select %p3189, %s22, 7
      %s3191 = smul.addr %s3190, 8
      %s3192 = smul.addr %s3188, 64
      %s3193 = sadd.s32 %s3191, %s3192
      %s3194 = smul.addr %s3193, 8
      %s3195 = scalar_lea.vmem %s4, %s3194
      %p3196 = scmp.lt.s32.totalorder %s21, 1
      %s3197 = scalar_select %p3196, %s21, 1
      %p3198 = scmp.lt.s32.totalorder %s22, 7
      %s3199 = scalar_select %p3198, %s22, 7
      %s3200 = smul.addr %s3197, 8
      %s3201 = sadd.s32 %s3199, %s3200
      %s3202 = smul.addr %s3201, 2
      %s3203 = scalar_lea.vmem %s5, %s3202
      // Predicated region
      $region37: #{double_conv3d.4} parent=35 // pred_check
        %p3204 = pneg %p158
      $region38: #{double_conv3d.4} parent=35 // pred_check_branch
        %3206 = sbr.rel (%p3204) target = $region40
      $region39: #{double_conv3d.4} parent=35 // pred_region
        _
      $region40: #{double_conv3d.4} parent=35 // pred_fallthru
        _
      // Predicated region
      $region41: #{double_conv3d.4} parent=35 // pred_check
        %p3207 = pneg %p186
      $region42: #{double_conv3d.4} parent=35 // pred_check_branch
        %3209 = sbr.rel (%p3207) target = $region44
      $region43: #{double_conv3d.4} parent=35 // pred_region
        _
      $region44: #{double_conv3d.4} parent=35 // pred_fallthru
        _
    $region36: #{double_conv3d.4} parent=5 // pred_fallthru
      _
    %p3210 = scmp.le.s32.totalorder 2, %s12
    // Predicated region
    $region45: #{double_conv3d.4} parent=5 // pred_check
      %p3211 = pneg %p3210
    $region46: #{double_conv3d.4} parent=5 // pred_check_branch
      %3213 = sbr.rel (%p3211) target = $region48
    $region47: #{double_conv3d.4} parent=5 // pred_region
      %s3214 = ssub.s32 %s12, 2
      // Predicated region
      $region49: #{double_conv3d.4} parent=47 // pred_check
        %p3215 = pneg %p164
      $region50: #{double_conv3d.4} parent=47 // pred_check_branch
        %3217 = sbr.rel (%p3215) target = $region52
      $region51: #{double_conv3d.4} parent=47 // pred_region
        %p3218 = scmp.lt.s32.totalorder %s23, 1
        %s3219 = scalar_select %p3218, %s23, 1
        %p3220 = scmp.lt.s32.totalorder %s24, 7
        %s3221 = scalar_select %p3220, %s24, 7
        %s3222 = smul.addr %s3221, 8
        %s3223 = smul.addr %s3219, 64
        %s3224 = sadd.s32 %s3222, %s3223
        %s3225 = smul.addr %s3224, 8
        %s3226 = scalar_lea.vmem %s4, %s3225
      $region52: #{double_conv3d.4} parent=47 // pred_fallthru
        _
      // Predicated region
      $region53: #{double_conv3d.4} parent=47 // pred_check
        %p3227 = pneg %p192
      $region54: #{double_conv3d.4} parent=47 // pred_check_branch
        %3229 = sbr.rel (%p3227) target = $region56
      $region55: #{double_conv3d.4} parent=47 // pred_region
        %p3230 = scmp.lt.s32.totalorder %s23, 1
        %s3231 = scalar_select %p3230, %s23, 1
        %p3232 = scmp.lt.s32.totalorder %s24, 7
        %s3233 = scalar_select %p3232, %s24, 7
        %s3234 = smul.addr %s3231, 8
        %s3235 = sadd.s32 %s3233, %s3234
        %s3236 = smul.addr %s3235, 2
        %s3237 = scalar_lea.vmem %s5, %s3236
      $region56: #{double_conv3d.4} parent=47 // pred_fallthru
        _
    $region48: #{double_conv3d.4} parent=5 // pred_fallthru
      _
  $region6: #{double_conv3d.4} parent=0 // loop_footer
    %s16 = sadd.s32 1, %s12
  $region7: #{double_conv3d.4} parent=0 // loop_footer_branch
    %11 = sbr.rel target = $region3
  $region8: #{double_conv3d.4} parent=0 // loop_exit
    _

// kernel: double_conv3d.6
$region0: #{double_conv3d.6}
  #allocation0 [shape = 'u32[]', space=smem, size = 0x4, offset = 0x4, fixed_abs, tag = 'smem constant byte address 0x4 - core index']
  #allocation1 [shape = 'u32[144,128]{1,0:T(1,128)}', space=vmem, size = 0x12000, scoped, tag = 'internal scratch']
  %s0 = inlined_call_operand.vmem [shape: f32[2,10,10,10,128], index: 0, kind: input, shape index: {}, may-alias: {0,1,2}]
  %s1 = inlined_call_operand.vmem [shape: f32[2,10,10,10,128], index: 1, kind: input, shape index: {}, may-alias: {0,1,2}]
  %s2 = inlined_call_operand.vmem [shape: f32[2,10,10,10,128], index: 2, kind: input, shape index: {}, may-alias: {0,1,2}]
  %s3 = inlined_call_operand.vmem [shape: bf16[27,128,128], index: 3, kind: input, shape index: {}]
  %s4 = inlined_call_operand.vmem [shape: f32[2,8,8,8,128], index: 4, kind: output, shape index: {0}]
  %s5 = inlined_call_operand.vmem [shape: f32[2,8,2,128], index: 5, kind: output, shape index: {1}]
  %6 = xla_tuple %s4, %s5
  %s7 = sld [smem:[#allocation0]]
  $region57: #{double_conv3d.6} parent=0
    _
  %s9 = ssub.s32 1, %s7
  %s10 = scalar_select 0, %s9, %s7
  loop: start=0, step=1, limit=18
  $region2: #{double_conv3d.6} parent=0 // loop_pre_header
    _
  $region3: #{double_conv3d.6} parent=0 // loop_header
    %s12 = sphi 0, %s16
    %p13 = scmp.ge.s32.totalorder %s12, 18
    %s19 = sphi 0, %s31
    %s20 = sphi 0, %s27
    %s21 = sphi 0, %s19
    %s22 = sphi 0, %s20
    %s23 = sphi 0, %s21
    %s24 = sphi 0, %s22
    %s36 = sphi 0, %s38
    %s39 = sphi 0, %s36
    %s40 = sphi 0, %s39
    %s56 = sphi 0, %s40
    %s66 = sphi 0, %s68
    %s69 = sphi 0, %s66
    %s70 = sphi 0, %s69
    %s86 = sphi 0, %s70
    %s96 = sphi 0, %s98
    %s99 = sphi 0, %s96
    %s100 = sphi 0, %s99
    %s116 = sphi 0, %s100
    %s120 = sphi 0, %s120
    %s122 = sphi 0, %s120
    %s123 = sphi 0, %s122
    %s137 = sphi 0, %s123
    %s145 = sphi 0, %s147
    %s148 = sphi 0, %s145
    %s149 = sphi 0, %s148
    %s165 = sphi 0, %s149
    %s173 = sphi 0, %s175
    %s176 = sphi 0, %s173
    %s177 = sphi 0, %s176
    %s193 = sphi 0, %s177
  $region4: #{double_conv3d.6} parent=0 // loop_header_branch
    %15 = sbr.rel (%p13) target = $region8
  $region5: #{double_conv3d.6} parent=0 // loop_body
    %s17 = ssub.s32 %s12, 1
    %s18 = ssub.s32 %s12, 2
    %s25 = sadd.s32 1, %s20
    %p26 = scmp.ge.s32.totalorder %s25, 8
    %s27 = scalar_select %p26, 0, %s25
    %s28 = sadd.s32 1, %s19
    %s29 = scalar_select %p26, %s28, %s19
    %p30 = scmp.ge.s32.totalorder %s29, 2
    %s31 = scalar_select %p30, 0, %s29
    %s32 = ssub.s32 %s19, %s31
    %s33 = ssub.s32 %s20, %s27
    %s34 = sor.u32 %s32, %s33
    %p35 = scmp.eq.s32.totalorder %s34, 0
    %s37 = sadd.s32 %s36, 1
    %s38 = scalar_select %p35, %s36, %s37
    %p41 = pneg %p35
    %p42 = scmp.eq.s32.totalorder %s12, 15
    %p43 = por %p41, %p42
    %p44 = scmp.ne.s32.totalorder %s36, %s39
    %p45 = scmp.eq.s32.totalorder %s12, 0
    %p46 = por %p44, %p45
    %p47 = scmp.ne.s32.totalorder %s36, %s39
    %p48 = scmp.eq.s32.totalorder %s17, 15
    %p49 = por %p47, %p48
    %p50 = scmp.ne.s32.totalorder %s39, %s40
    %p51 = scmp.eq.s32.totalorder %s17, 0
    %p52 = por %p50, %p51
    %p53 = scmp.ne.s32.totalorder %s39, %s40
    %p54 = scmp.eq.s32.totalorder %s18, 15
    %p55 = por %p53, %p54
    %p57 = scmp.ne.s32.totalorder %s40, %s56
    %p58 = scmp.eq.s32.totalorder %s18, 0
    %p59 = por %p57, %p58
    %s60 = sadd.s32 %s20, 1
    %s61 = sadd.s32 %s27, 1
    %s62 = ssub.s32 %s19, %s31
    %s63 = ssub.s32 %s60, %s61
    %s64 = sor.u32 %s62, %s63
    %p65 = scmp.eq.s32.totalorder %s64, 0
    %s67 = sadd.s32 %s66, 1
    %s68 = scalar_select %p65, %s66, %s67
    %p71 = pneg %p65
    %p72 = scmp.eq.s32.totalorder %s12, 15
    %p73 = por %p71, %p72
    %p74 = scmp.ne.s32.totalorder %s66, %s69
    %p75 = scmp.eq.s32.totalorder %s12, 0
    %p76 = por %p74, %p75
    %p77 = scmp.ne.s32.totalorder %s66, %s69
    %p78 = scmp.eq.s32.totalorder %s17, 15
    %p79 = por %p77, %p78
    %p80 = scmp.ne.s32.totalorder %s69, %s70
    %p81 = scmp.eq.s32.totalorder %s17, 0
    %p82 = por %p80, %p81
    %p83 = scmp.ne.s32.totalorder %s69, %s70
    %p84 = scmp.eq.s32.totalorder %s18, 15
    %p85 = por %p83, %p84
    %p87 = scmp.ne.s32.totalorder %s70, %s86
    %p88 = scmp.eq.s32.totalorder %s18, 0
    %p89 = por %p87, %p88
    %s90 = sadd.s32 %s20, 2
    %s91 = sadd.s32 %s27, 2
    %s92 = ssub.s32 %s19, %s31
    %s93 = ssub.s32 %s90, %s91
    %s94 = sor.u32 %s92, %s93
    %p95 = scmp.eq.s32.totalorder %s94, 0
    %s97 = sadd.s32 %s96, 1
    %s98 = scalar_select %p95, %s96, %s97
    %p101 = pneg %p95
    %p102 = scmp.eq.s32.totalorder %s12, 15
    %p103 = por %p101, %p102
    %p104 = scmp.ne.s32.totalorder %s96, %s99
    %p105 = scmp.eq.s32.totalorder %s12, 0
    %p106 = por %p104, %p105
    %p107 = scmp.ne.s32.totalorder %s96, %s99
    %p108 = scmp.eq.s32.totalorder %s17, 15
    %p109 = por %p107, %p108
    %p110 = scmp.ne.s32.totalorder %s99, %s100
    %p111 = scmp.eq.s32.totalorder %s17, 0
    %p112 = por %p110, %p111
    %p113 = scmp.ne.s32.totalorder %s99, %s100
    %p114 = scmp.eq.s32.totalorder %s18, 15
    %p115 = por %p113, %p114
    %p117 = scmp.ne.s32.totalorder %s100, %s116
    %p118 = scmp.eq.s32.totalorder %s18, 0
    %p119 = por %p117, %p118
    %s121 = sadd.s32 %s120, 1
    %p124 = scmp.eq.s32.totalorder %s12, 15
    %p125 = scmp.ne.s32.totalorder %s120, %s122
    %p126 = scmp.eq.s32.totalorder %s12, 0
    %p127 = por %p125, %p126
    %p128 = scmp.ne.s32.totalorder %s120, %s122
    %p129 = scmp.eq.s32.totalorder %s17, 15
    %p130 = por %p128, %p129
    %p131 = scmp.ne.s32.totalorder %s122, %s123
    %p132 = scmp.eq.s32.totalorder %s17, 0
    %p133 = por %p131, %p132
    %p134 = scmp.ne.s32.totalorder %s122, %s123
    %p135 = scmp.eq.s32.totalorder %s18, 15
    %p136 = por %p134, %p135
    %p138 = scmp.ne.s32.totalorder %s123, %s137
    %p139 = scmp.eq.s32.totalorder %s18, 0
    %p140 = por %p138, %p139
    %s141 = ssub.s32 %s19, %s31
    %s142 = ssub.s32 %s20, %s27
    %s143 = sor.u32 %s141, %s142
    %p144 = scmp.eq.s32.totalorder %s143, 0
    %s146 = sadd.s32 %s145, 1
    %s147 = scalar_select %p144, %s145, %s146
    %p150 = pneg %p144
    %p151 = scmp.eq.s32.totalorder %s12, 15
    %p152 = por %p150, %p151
    %p153 = scmp.ne.s32.totalorder %s145, %s148
    %p154 = scmp.eq.s32.totalorder %s12, 0
    %p155 = por %p153, %p154
    %p156 = scmp.ne.s32.totalorder %s145, %s148
    %p157 = scmp.eq.s32.totalorder %s17, 15
    %p158 = por %p156, %p157
    %p159 = scmp.ne.s32.totalorder %s148, %s149
    %p160 = scmp.eq.s32.totalorder %s17, 0
    %p161 = por %p159, %p160
    %p162 = scmp.ne.s32.totalorder %s148, %s149
    %p163 = scmp.eq.s32.totalorder %s18, 15
    %p164 = por %p162, %p163
    %p166 = scmp.ne.s32.totalorder %s149, %s165
    %p167 = scmp.eq.s32.totalorder %s18, 0
    %p168 = por %p166, %p167
    %s169 = ssub.s32 %s19, %s31
    %s170 = ssub.s32 %s20, %s27
    %s171 = sor.u32 %s169, %s170
    %p172 = scmp.eq.s32.totalorder %s171, 0
    %s174 = sadd.s32 %s173, 1
    %s175 = scalar_select %p172, %s173, %s174
    %p178 = pneg %p172
    %p179 = scmp.eq.s32.totalorder %s12, 15
    %p180 = por %p178, %p179
    %p181 = scmp.ne.s32.totalorder %s173, %s176
    %p182 = scmp.eq.s32.totalorder %s12, 0
    %p183 = por %p181, %p182
    %p184 = scmp.ne.s32.totalorder %s173, %s176
    %p185 = scmp.eq.s32.totalorder %s17, 15
    %p186 = por %p184, %p185
    %p187 = scmp.ne.s32.totalorder %s176, %s177
    %p188 = scmp.eq.s32.totalorder %s17, 0
    %p189 = por %p187, %p188
    %p190 = scmp.ne.s32.totalorder %s176, %s177
    %p191 = scmp.eq.s32.totalorder %s18, 15
    %p192 = por %p190, %p191
    %p194 = scmp.ne.s32.totalorder %s177, %s193
    %p195 = scmp.eq.s32.totalorder %s18, 0
    %p196 = por %p194, %p195
    %p197 = scmp.le.s32.totalorder 1, %s12
    %p198 = scmp.lt.s32.totalorder %s12, 17
    %p199 = pnand %p197, %p198
    %p200 = pneg %p199
    // Predicated region
    $region9: #{double_conv3d.6} parent=5 // pred_check
      _
    $region10: #{double_conv3d.6} parent=5 // pred_check_branch
      %202 = sbr.rel (%p199) target = $region12
    $region11: #{double_conv3d.6} parent=5 // pred_region
      %s203 = ssub.s32 %s12, 1
      // Predicated region
      $region13: #{double_conv3d.6} parent=11 // pred_check
        %p204 = pneg %p133
      $region14: #{double_conv3d.6} parent=11 // pred_check_branch
        %206 = sbr.rel (%p204) target = $region16
      $region15: #{double_conv3d.6} parent=11 // pred_region
        _
      $region16: #{double_conv3d.6} parent=11 // pred_fallthru
        _
    $region12: #{double_conv3d.6} parent=5 // pred_fallthru
      _
    %p207 = scmp.lt.s32.totalorder %s12, 16
    // Predicated region
    $region17: #{double_conv3d.6} parent=5 // pred_check
      %p208 = pneg %p207
    $region18: #{double_conv3d.6} parent=5 // pred_check_branch
      %210 = sbr.rel (%p208) target = $region20
    $region19: #{double_conv3d.6} parent=5 // pred_region
      // Predicated region
      $region21: #{double_conv3d.6} parent=19 // pred_check
        %p211 = pneg %p46
      $region22: #{double_conv3d.6} parent=19 // pred_check_branch
        %213 = sbr.rel (%p211) target = $region24
      $region23: #{double_conv3d.6} parent=19 // pred_region
        %p214 = scmp.lt.s32.totalorder %s19, 1
        %s215 = scalar_select %p214, %s19, 1
        %p216 = scmp.lt.s32.totalorder %s20, 9
        %s217 = scalar_select %p216, %s20, 9
        %s218 = smul.addr %s217, 20
        %s219 = smul.addr %s215, 200
        %s220 = sadd.s32 %s218, %s219
        %s221 = smul.addr %s220, 8
        %s222 = scalar_lea.vmem %s0, %s221
      $region24: #{double_conv3d.6} parent=19 // pred_fallthru
        _
      // Predicated region
      $region25: #{double_conv3d.6} parent=19 // pred_check
        %p223 = pneg %p76
      $region26: #{double_conv3d.6} parent=19 // pred_check_branch
        %225 = sbr.rel (%p223) target = $region28
      $region27: #{double_conv3d.6} parent=19 // pred_region
        %s226 = sadd.s32 %s20, 1
        %p227 = scmp.lt.s32.totalorder %s19, 1
        %s228 = scalar_select %p227, %s19, 1
        %p229 = scmp.lt.s32.totalorder %s226, 9
        %s230 = scalar_select %p229, %s226, 9
        %s231 = smul.addr %s230, 20
        %s232 = smul.addr %s228, 200
        %s233 = sadd.s32 %s231, %s232
        %s234 = smul.addr %s233, 8
        %s235 = scalar_lea.vmem %s1, %s234
        %s236 = sadd.s32 %s20, 1
      $region28: #{double_conv3d.6} parent=19 // pred_fallthru
        _
      // Predicated region
      $region29: #{double_conv3d.6} parent=19 // pred_check
        %p237 = pneg %p106
      $region30: #{double_conv3d.6} parent=19 // pred_check_branch
        %239 = sbr.rel (%p237) target = $region32
      $region31: #{double_conv3d.6} parent=19 // pred_region
        %s240 = sadd.s32 %s20, 2
        %p241 = scmp.lt.s32.totalorder %s19, 1
        %s242 = scalar_select %p241, %s19, 1
        %p243 = scmp.lt.s32.totalorder %s240, 9
        %s244 = scalar_select %p243, %s240, 9
        %s245 = smul.addr %s244, 20
        %s246 = smul.addr %s242, 200
        %s247 = sadd.s32 %s245, %s246
        %s248 = smul.addr %s247, 8
        %s249 = scalar_lea.vmem %s2, %s248
        %s250 = sadd.s32 %s20, 2
      $region32: #{double_conv3d.6} parent=19 // pred_fallthru
        _
    $region20: #{double_conv3d.6} parent=5 // pred_fallthru
      _
    %p251 = scmp.le.s32.totalorder 1, %s12
    %p252 = scmp.lt.s32.totalorder %s12, 17
    %p253 = pnand %p251, %p252
    %p254 = pneg %p253
    // Predicated region
    $region33: #{double_conv3d.6} parent=5 // pred_check
      _
    $region34: #{double_conv3d.6} parent=5 // pred_check_branch
      %256 = sbr.rel (%p253) target = $region36
    $region35: #{double_conv3d.6} parent=5 // pred_region
      %s257 = ssub.s32 %s12, 1
      %p258 = scmp.lt.s32.totalorder %s21, 1
      %s259 = scalar_select %p258, %s21, 1
      %p260 = scmp.lt.s32.totalorder %s22, 9
      %s261 = scalar_select %p260, %s22, 9
      %s262 = smul.addr %s261, 20
      %s263 = smul.addr %s259, 200
      %s264 = sadd.s32 %s262, %s263
      %s265 = smul.addr %s264, 8
      %s266 = scalar_lea.vmem %s0, %s265
      %p267 = pneg %p52
      %p268 = pneg %p49
      %s269 = sadd.s32 %s22, 1
      %p270 = scmp.lt.s32.totalorder %s21, 1
      %s271 = scalar_select %p270, %s21, 1
      %p272 = scmp.lt.s32.totalorder %s269, 9
      %s273 = scalar_select %p272, %s269, 9
      %s274 = smul.addr %s273, 20
      %s275 = smul.addr %s271, 200
      %s276 = sadd.s32 %s274, %s275
      %s277 = smul.addr %s276, 8
      %s278 = scalar_lea.vmem %s1, %s277
      %p279 = pneg %p82
      %p280 = pneg %p79
      %s281 = sadd.s32 %s22, 2
      %p282 = scmp.lt.s32.totalorder %s21, 1
      %s283 = scalar_select %p282, %s21, 1
      %p284 = scmp.lt.s32.totalorder %s281, 9
      %s285 = scalar_select %p284, %s281, 9
      %s286 = smul.addr %s285, 20
      %s287 = smul.addr %s283, 200
      %s288 = sadd.s32 %s286, %s287
      %s289 = smul.addr %s288, 8
      %s290 = scalar_lea.vmem %s2, %s289
      %p291 = pneg %p112
      %p292 = pneg %p109
      %p293 = pneg %p133
      %p294 = pneg %p130
      %p295 = pneg %p161
      %p296 = pneg %p158
      %p297 = scmp.lt.s32.totalorder %s21, 1
      %s298 = scalar_select %p297, %s21, 1
      %p299 = scmp.lt.s32.totalorder %s22, 7
      %s300 = scalar_select %p299, %s22, 7
      %s301 = smul.addr %s300, 8
      %s302 = smul.addr %s298, 64
      %s303 = sadd.s32 %s301, %s302
      %s304 = smul.addr %s303, 8
      %s305 = scalar_lea.vmem %s4, %s304
      %p306 = pneg %p189
      %p307 = pneg %p186
      %p308 = scmp.lt.s32.totalorder %s21, 1
      %s309 = scalar_select %p308, %s21, 1
      %p310 = scmp.lt.s32.totalorder %s22, 7
      %s311 = scalar_select %p310, %s22, 7
      %s312 = smul.addr %s309, 8
      %s313 = sadd.s32 %s311, %s312
      %s314 = smul.addr %s313, 2
      %s315 = scalar_lea.vmem %s5, %s314
      %p316 = scmp.lt.s32.totalorder %s21, 1
      %s317 = scalar_select %p316, %s21, 1
      %p318 = scmp.lt.s32.totalorder %s22, 9
      %s319 = scalar_select %p318, %s22, 9
      %s320 = smul.addr %s319, 20
      %s321 = smul.addr %s317, 200
      %s322 = sadd.s32 %s320, %s321
      %s323 = smul.addr %s322, 8
      %s324 = scalar_lea.vmem %s0, %s323
      %s325 = sadd.s32 %s22, 1
      %p326 = scmp.lt.s32.totalorder %s21, 1
      %s327 = scalar_select %p326, %s21, 1
      %p328 = scmp.lt.s32.totalorder %s325, 9
      %s329 = scalar_select %p328, %s325, 9
      %s330 = smul.addr %s329, 20
      %s331 = smul.addr %s327, 200
      %s332 = sadd.s32 %s330, %s331
      %s333 = smul.addr %s332, 8
      %s334 = scalar_lea.vmem %s1, %s333
      %s335 = sadd.s32 %s22, 1
      %s336 = sadd.s32 %s22, 2
      %p337 = scmp.lt.s32.totalorder %s21, 1
      %s338 = scalar_select %p337, %s21, 1
      %p339 = scmp.lt.s32.totalorder %s336, 9
      %s340 = scalar_select %p339, %s336, 9
      %s341 = smul.addr %s340, 20
      %s342 = smul.addr %s338, 200
      %s343 = sadd.s32 %s341, %s342
      %s344 = smul.addr %s343, 8
      %s345 = scalar_lea.vmem %s2, %s344
      %s346 = sadd.s32 %s22, 2
      %p347 = scmp.lt.s32.totalorder %s21, 1
      %s348 = scalar_select %p347, %s21, 1
      %p349 = scmp.lt.s32.totalorder %s22, 7
      %s350 = scalar_select %p349, %s22, 7
      %s351 = smul.addr %s350, 8
      %s352 = smul.addr %s348, 64
      %s353 = sadd.s32 %s351, %s352
      %s354 = smul.addr %s353, 8
      %s355 = scalar_lea.vmem %s4, %s354
      %p356 = scmp.lt.s32.totalorder %s21, 1
      %s357 = scalar_select %p356, %s21, 1
      %p358 = scmp.lt.s32.totalorder %s22, 7
      %s359 = scalar_select %p358, %s22, 7
      %s360 = smul.addr %s357, 8
      %s361 = sadd.s32 %s359, %s360
      %s362 = smul.addr %s361, 2
      %s363 = scalar_lea.vmem %s5, %s362
      %v365 = vld [vmem:[%s324] sm:$0xff]
      %v366 = vld [vmem:[%s324 + $0x8] sm:$0x3]
      %v367 = vld [vmem:[%s324 + $0x10] sm:$0xff]
      %v368 = vld [vmem:[%s324 + $0x18] sm:$0x3]
      %v369 = vld [vmem:[%s324 + $0x20] sm:$0xff]
      %v370 = vld [vmem:[%s324 + $0x28] sm:$0x3]
      %v371 = vld [vmem:[%s324 + $0x30] sm:$0xff]
      %v372 = vld [vmem:[%s324 + $0x38] sm:$0x3]
      %v373 = vld [vmem:[%s324 + $0x40] sm:$0xff]
      %v374 = vld [vmem:[%s324 + $0x48] sm:$0x3]
      %v375 = vld [vmem:[%s324 + $0x50] sm:$0xff]
      %v376 = vld [vmem:[%s324 + $0x58] sm:$0x3]
      %v377 = vld [vmem:[%s324 + $0x60] sm:$0xff]
      %v378 = vld [vmem:[%s324 + $0x68] sm:$0x3]
      %v379 = vld [vmem:[%s324 + $0x70] sm:$0xff]
      %v380 = vld [vmem:[%s324 + $0x78] sm:$0x3]
      %v381 = vld [vmem:[%s324 + $0x80] sm:$0xff]
      %v382 = vld [vmem:[%s324 + $0x88] sm:$0x3]
      %v383 = vld [vmem:[%s324 + $0x90] sm:$0xff]
      %v384 = vld [vmem:[%s324 + $0x98] sm:$0x3]
      %v385 = vld [vmem:[%s334] sm:$0xff]
      %v386 = vld [vmem:[%s334 + $0x8] sm:$0x3]
      %v387 = vld [vmem:[%s334 + $0x10] sm:$0xff]
      %v388 = vld [vmem:[%s334 + $0x18] sm:$0x3]
      %v389 = vld [vmem:[%s334 + $0x20] sm:$0xff]
      %v390 = vld [vmem:[%s334 + $0x28] sm:$0x3]
      %v391 = vld [vmem:[%s334 + $0x30] sm:$0xff]
      %v392 = vld [vmem:[%s334 + $0x38] sm:$0x3]
      %v393 = vld [vmem:[%s334 + $0x40] sm:$0xff]
      %v394 = vld [vmem:[%s334 + $0x48] sm:$0x3]
      %v395 = vld [vmem:[%s334 + $0x50] sm:$0xff]
      %v396 = vld [vmem:[%s334 + $0x58] sm:$0x3]
      %v397 = vld [vmem:[%s334 + $0x60] sm:$0xff]
      %v398 = vld [vmem:[%s334 + $0x68] sm:$0x3]
      %v399 = vld [vmem:[%s334 + $0x70] sm:$0xff]
      %v400 = vld [vmem:[%s334 + $0x78] sm:$0x3]
      %v401 = vld [vmem:[%s334 + $0x80] sm:$0xff]
      %v402 = vld [vmem:[%s334 + $0x88] sm:$0x3]
      %v403 = vld [vmem:[%s334 + $0x90] sm:$0xff]
      %v404 = vld [vmem:[%s334 + $0x98] sm:$0x3]
      %v405 = vld [vmem:[%s345] sm:$0xff]
      %v406 = vld [vmem:[%s345 + $0x8] sm:$0x3]
      %v407 = vld [vmem:[%s345 + $0x10] sm:$0xff]
      %v408 = vld [vmem:[%s345 + $0x18] sm:$0x3]
      %v409 = vld [vmem:[%s345 + $0x20] sm:$0xff]
      %v410 = vld [vmem:[%s345 + $0x28] sm:$0x3]
      %v411 = vld [vmem:[%s345 + $0x30] sm:$0xff]
      %v412 = vld [vmem:[%s345 + $0x38] sm:$0x3]
      %v413 = vld [vmem:[%s345 + $0x40] sm:$0xff]
      %v414 = vld [vmem:[%s345 + $0x48] sm:$0x3]
      %v415 = vld [vmem:[%s345 + $0x50] sm:$0xff]
      %v416 = vld [vmem:[%s345 + $0x58] sm:$0x3]
      %v417 = vld [vmem:[%s345 + $0x60] sm:$0xff]
      %v418 = vld [vmem:[%s345 + $0x68] sm:$0x3]
      %v419 = vld [vmem:[%s345 + $0x70] sm:$0xff]
      %v420 = vld [vmem:[%s345 + $0x78] sm:$0x3]
      %v421 = vld [vmem:[%s345 + $0x80] sm:$0xff]
      %v422 = vld [vmem:[%s345 + $0x88] sm:$0x3]
      %v423 = vld [vmem:[%s345 + $0x90] sm:$0xff]
      %v424 = vld [vmem:[%s345 + $0x98] sm:$0x3]
      %v425 = vpack.c.bf16 %v367, %v365
      %v426 = vpack.c.bf16 %v371, %v369
      %v427 = vpack.c.bf16 %v375, %v373
      %v428 = vpack.c.bf16 %v379, %v377
      %v429 = vld [vmem:[%s3] sm:$0xf]
      %v430 = vld [vmem:[%s3 + $0x4] sm:$0xf]
      %v431 = vld [vmem:[%s3 + $0x8] sm:$0xf]
      %v432 = vld [vmem:[%s3 + $0xc] sm:$0xf]
      %v433 = vld [vmem:[%s3 + $0x10] sm:$0xf]
      %v434 = vld [vmem:[%s3 + $0x14] sm:$0xf]
      %v435 = vld [vmem:[%s3 + $0x18] sm:$0xf]
      %v436 = vld [vmem:[%s3 + $0x1c] sm:$0xf]
      %v437 = vld [vmem:[%s3 + $0x20] sm:$0xf]
      %v438 = vld [vmem:[%s3 + $0x24] sm:$0xf]
      %v439 = vld [vmem:[%s3 + $0x28] sm:$0xf]
      %v440 = vld [vmem:[%s3 + $0x2c] sm:$0xf]
      %v441 = vld [vmem:[%s3 + $0x30] sm:$0xf]
      %v442 = vld [vmem:[%s3 + $0x34] sm:$0xf]
      %v443 = vld [vmem:[%s3 + $0x38] sm:$0xf]
      %v444 = vld [vmem:[%s3 + $0x3c] sm:$0xf]
      %vm461 = vcmask 1046528
      %v462 = vrot.slane %v365, 1
      %v463 = vrot.slane %v366, 1
      %v464 = vsel %vm461, %v462, %v463
      %v465 = vrot.slane %v367, 1
      %v466 = vrot.slane %v368, 1
      %v467 = vsel %vm461, %v465, %v466
      %v468 = vrot.slane %v369, 1
      %v469 = vrot.slane %v370, 1
      %v470 = vsel %vm461, %v468, %v469
      %v471 = vrot.slane %v371, 1
      %v472 = vrot.slane %v372, 1
      %v473 = vsel %vm461, %v471, %v472
      %v474 = vrot.slane %v373, 1
      %v475 = vrot.slane %v374, 1
      %v476 = vsel %vm461, %v474, %v475
      %v477 = vrot.slane %v375, 1
      %v478 = vrot.slane %v376, 1
      %v479 = vsel %vm461, %v477, %v478
      %v480 = vrot.slane %v377, 1
      %v481 = vrot.slane %v378, 1
      %v482 = vsel %vm461, %v480, %v481
      %v483 = vrot.slane %v379, 1
      %v484 = vrot.slane %v380, 1
      %v485 = vsel %vm461, %v483, %v484
      %v494 = vpack.c.bf16 %v467, %v464
      %v495 = vpack.c.bf16 %v473, %v470
      %v496 = vpack.c.bf16 %v479, %v476
      %v497 = vpack.c.bf16 %v485, %v482
      %s498 = scalar_lea.vmem %s3, 64
      %v499 = vld [vmem:[%s498] sm:$0xf]
      %v500 = vld [vmem:[%s498 + $0x4] sm:$0xf]
      %v501 = vld [vmem:[%s498 + $0x8] sm:$0xf]
      %v502 = vld [vmem:[%s498 + $0xc] sm:$0xf]
      %v503 = vld [vmem:[%s498 + $0x10] sm:$0xf]
      %v504 = vld [vmem:[%s498 + $0x14] sm:$0xf]
      %v505 = vld [vmem:[%s498 + $0x18] sm:$0xf]
      %v506 = vld [vmem:[%s498 + $0x1c] sm:$0xf]
      %v507 = vld [vmem:[%s498 + $0x20] sm:$0xf]
      %v508 = vld [vmem:[%s498 + $0x24] sm:$0xf]
      %v509 = vld [vmem:[%s498 + $0x28] sm:$0xf]
      %v510 = vld [vmem:[%s498 + $0x2c] sm:$0xf]
      %v511 = vld [vmem:[%s498 + $0x30] sm:$0xf]
      %v512 = vld [vmem:[%s498 + $0x34] sm:$0xf]
      %v513 = vld [vmem:[%s498 + $0x38] sm:$0xf]
      %v514 = vld [vmem:[%s498 + $0x3c] sm:$0xf]
      %v531 = vunpack.c.l.b16 %v499
      %v532 = vunpack.c.l.b16 %v500
      %v533 = vunpack.c.l.b16 %v501
      %v534 = vunpack.c.l.b16 %v502
      %v535 = vunpack.c.l.b16 %v503
      %v536 = vunpack.c.l.b16 %v504
      %v537 = vunpack.c.l.b16 %v505
      %v538 = vunpack.c.l.b16 %v506
      %v539 = vunpack.c.l.b16 %v507
      %v540 = vunpack.c.l.b16 %v508
      %v541 = vunpack.c.l.b16 %v509
      %v542 = vunpack.c.l.b16 %v510
      %v543 = vunpack.c.l.b16 %v511
      %v544 = vunpack.c.l.b16 %v512
      %v545 = vunpack.c.l.b16 %v513
      %v546 = vunpack.c.l.b16 %v514
      %v547 = vpack.c.b16 %v532, %v531
      %v548 = vpack.c.b16 %v534, %v533
      %v549 = vpack.c.b16 %v536, %v535
      %v550 = vpack.c.b16 %v538, %v537
      %v551 = vpack.c.b16 %v540, %v539
      %v552 = vpack.c.b16 %v542, %v541
      %v553 = vpack.c.b16 %v544, %v543
      %v554 = vpack.c.b16 %v546, %v545
      %563 = vmatprep.subr.bf16.mxu0 0
      %564 = vmatpush1.bf16.msra.mxu0 %v547
      %565 = vmatprep.subr.bf16.mxu0 0
      %566 = vmatpush1.bf16.msra.mxu0 %v548
      %567 = vmatprep.subr.bf16.mxu0 0
      %568 = vmatpush1.bf16.msra.mxu0 %v549
      %569 = vmatprep.subr.bf16.mxu0 0
      %570 = vmatpush1.bf16.msra.mxu0 %v550
      %571 = vmatprep.subr.bf16.mxu0 0
      %572 = vmatpush1.bf16.msra.mxu0 %v551
      %573 = vmatprep.subr.bf16.mxu0 0
      %574 = vmatpush1.bf16.msra.mxu0 %v552
      %575 = vmatprep.subr.bf16.mxu0 0
      %576 = vmatpush1.bf16.msra.mxu0 %v553
      %577 = vmatprep.subr.bf16.mxu0 0
      %578 = vmatpush1.bf16.msra.mxu0 %v554
      %579 = vmatprep.subr.bf16.mxu0 0
      %580 = vmatpush1.bf16.msra.mxu0 0
      %581 = vmatprep.subr.bf16.mxu0 0
      %582 = vmatpush1.bf16.msra.mxu0 0
      %583 = vmatprep.subr.bf16.mxu0 0
      %584 = vmatpush1.bf16.msra.mxu0 0
      %585 = vmatprep.subr.bf16.mxu0 0
      %586 = vmatpush1.bf16.msra.mxu0 0
      %587 = vmatprep.subr.bf16.mxu0 0
      %588 = vmatpush1.bf16.msra.mxu0 0
      %589 = vmatprep.subr.bf16.mxu0 0
      %590 = vmatpush1.bf16.msra.mxu0 0
      %591 = vmatprep.subr.bf16.mxu0 0
      %592 = vmatpush1.bf16.msra.mxu0 0
      %593 = vmatprep.subr.bf16.mxu0 0
      %594 = vmatpush1.bf16.msra.mxu0 0
      %595 = vmatprep.mubr.bf16.mxu0 0
      %596 = vmatmul.mubr.bf16.gmra.mrb[0].mxu0 %v494
      %v597 = vpop.f32.mrb[0].mxu0
      %v598 = vadd.f32 0.0, %v597
      %v599 = vpop.f32.mrb[0].mxu0
      %v600 = vpop.f32.mrb[0].mxu0
      %v601 = vadd.f32 0.0, %v600
      %v602 = vpop.f32.mrb[0].mxu0
      %603 = vmatprep.mubr.bf16.mxu0 0
      %604 = vmatmul.mubr.bf16.gmra.mrb[0].mxu0 %v495
      %v605 = vpop.f32.mrb[0].mxu0
      %v606 = vadd.f32 0.0, %v605
      %v607 = vpop.f32.mrb[0].mxu0
      %v608 = vpop.f32.mrb[0].mxu0
      %v609 = vadd.f32 0.0, %v608
      %v610 = vpop.f32.mrb[0].mxu0
      %611 = vmatprep.mubr.bf16.mxu0 0
      %612 = vmatmul.mubr.bf16.gmra.mrb[0].mxu0 %v496
      %v613 = vpop.f32.mrb[0].mxu0
      %v614 = vadd.f32 0.0, %v613
      %v615 = vpop.f32.mrb[0].mxu0
      %v616 = vpop.f32.mrb[0].mxu0
      %v617 = vadd.f32 0.0, %v616
      %v618 = vpop.f32.mrb[0].mxu0
      %619 = vmatprep.mubr.bf16.mxu0 0
      %620 = vmatmul.mubr.bf16.gmra.mrb[0].mxu0 %v497
      %v621 = vpop.f32.mrb[0].mxu0
      %v622 = vadd.f32 0.0, %v621
      %v623 = vpop.f32.mrb[0].mxu0
      %v624 = vpop.f32.mrb[0].mxu0
      %v625 = vadd.f32 0.0, %v624
      %v626 = vpop.f32.mrb[0].mxu0
      %627 = vdwg.mxu0
      %v644 = vunpack.c.l.b16 %v429
      %v645 = vunpack.c.l.b16 %v430
      %v646 = vunpack.c.l.b16 %v431
      %v647 = vunpack.c.l.b16 %v432
      %v648 = vunpack.c.l.b16 %v433
      %v649 = vunpack.c.l.b16 %v434
      %v650 = vunpack.c.l.b16 %v435
      %v651 = vunpack.c.l.b16 %v436
      %v652 = vunpack.c.l.b16 %v437
      %v653 = vunpack.c.l.b16 %v438
      %v654 = vunpack.c.l.b16 %v439
      %v655 = vunpack.c.l.b16 %v440
      %v656 = vunpack.c.l.b16 %v441
      %v657 = vunpack.c.l.b16 %v442
      %v658 = vunpack.c.l.b16 %v443
      %v659 = vunpack.c.l.b16 %v444
      %v660 = vpack.c.b16 %v645, %v644
      %v661 = vpack.c.b16 %v647, %v646
      %v662 = vpack.c.b16 %v649, %v648
      %v663 = vpack.c.b16 %v651, %v650
      %v664 = vpack.c.b16 %v653, %v652
      %v665 = vpack.c.b16 %v655, %v654
      %v666 = vpack.c.b16 %v657, %v656
      %v667 = vpack.c.b16 %v659, %v658
      %676 = vmatprep.subr.bf16.mxu0 0
      %677 = vmatpush1.bf16.msra.mxu0 %v660
      %678 = vmatprep.subr.bf16.mxu0 0
      %679 = vmatpush1.bf16.msra.mxu0 %v661
      %680 = vmatprep.subr.bf16.mxu0 0
      %681 = vmatpush1.bf16.msra.mxu0 %v662
      %682 = vmatprep.subr.bf16.mxu0 0
      %683 = vmatpush1.bf16.msra.mxu0 %v663
      %684 = vmatprep.subr.bf16.mxu0 0
      %685 = vmatpush1.bf16.msra.mxu0 %v664
      %686 = vmatprep.subr.bf16.mxu0 0
      %687 = vmatpush1.bf16.msra.mxu0 %v665
      %688 = vmatprep.subr.bf16.mxu0 0
      %689 = vmatpush1.bf16.msra.mxu0 %v666
      %690 = vmatprep.subr.bf16.mxu0 0
      %691 = vmatpush1.bf16.msra.mxu0 %v667
      %692 = vmatprep.subr.bf16.mxu0 0
      %693 = vmatpush1.bf16.msra.mxu0 0
      %694 = vmatprep.subr.bf16.mxu0 0
      %695 = vmatpush1.bf16.msra.mxu0 0
      %696 = vmatprep.subr.bf16.mxu0 0
      %697 = vmatpush1.bf16.msra.mxu0 0
      %698 = vmatprep.subr.bf16.mxu0 0
      %699 = vmatpush1.bf16.msra.mxu0 0
      %700 = vmatprep.subr.bf16.mxu0 0
      %701 = vmatpush1.bf16.msra.mxu0 0
      %702 = vmatprep.subr.bf16.mxu0 0
      %703 = vmatpush1.bf16.msra.mxu0 0
      %704 = vmatprep.subr.bf16.mxu0 0
      %705 = vmatpush1.bf16.msra.mxu0 0
      %706 = vmatprep.subr.bf16.mxu0 0
      %707 = vmatpush1.bf16.msra.mxu0 0
      %708 = vmatprep.mubr.bf16.mxu0 0
      %709 = vmatmul.mubr.bf16.gmra.mrb[0].mxu0 %v425
      %v710 = vpop.f32.mrb[0].mxu0
      %v711 = vadd.f32 %v598, %v710
      %v712 = vpop.f32.mrb[0].mxu0
      %v713 = vpop.f32.mrb[0].mxu0
      %v714 = vadd.f32 %v601, %v713
      %v715 = vpop.f32.mrb[0].mxu0
      %716 = vmatprep.mubr.bf16.mxu0 0
      %717 = vmatmul.mubr.bf16.gmra.mrb[0].mxu0 %v426
      %v718 = vpop.f32.mrb[0].mxu0
      %v719 = vadd.f32 %v606, %v718
      %v720 = vpop.f32.mrb[0].mxu0
      %v721 = vpop.f32.mrb[0].mxu0
      %v722 = vadd.f32 %v609, %v721
      %v723 = vpop.f32.mrb[0].mxu0
      %724 = vmatprep.mubr.bf16.mxu0 0
      %725 = vmatmul.mubr.bf16.gmra.mrb[0].mxu0 %v427
      %v726 = vpop.f32.mrb[0].mxu0
      %v727 = vadd.f32 %v614, %v726
      %v728 = vpop.f32.mrb[0].mxu0
      %v729 = vpop.f32.mrb[0].mxu0
      %v730 = vadd.f32 %v617, %v729
      %v731 = vpop.f32.mrb[0].mxu0
      %732 = vmatprep.mubr.bf16.mxu0 0
      %733 = vmatmul.mubr.bf16.gmra.mrb[0].mxu0 %v428
      %v734 = vpop.f32.mrb[0].mxu0
      %v735 = vadd.f32 %v622, %v734
      %v736 = vpop.f32.mrb[0].mxu0
      %v737 = vpop.f32.mrb[0].mxu0
      %v738 = vadd.f32 %v625, %v737
      %v739 = vpop.f32.mrb[0].mxu0
      %740 = vdwg.mxu0
      %vm741 = vcmask 1045504
      %v742 = vrot.slane %v365, 2
      %v743 = vrot.slane %v366, 2
      %v744 = vsel %vm741, %v742, %v743
      %v745 = vrot.slane %v367, 2
      %v746 = vrot.slane %v368, 2
      %v747 = vsel %vm741, %v745, %v746
      %v748 = vrot.slane %v369, 2
      %v749 = vrot.slane %v370, 2
      %v750 = vsel %vm741, %v748, %v749
      %v751 = vrot.slane %v371, 2
      %v752 = vrot.slane %v372, 2
      %v753 = vsel %vm741, %v751, %v752
      %v754 = vrot.slane %v373, 2
      %v755 = vrot.slane %v374, 2
      %v756 = vsel %vm741, %v754, %v755
      %v757 = vrot.slane %v375, 2
      %v758 = vrot.slane %v376, 2
      %v759 = vsel %vm741, %v757, %v758
      %v760 = vrot.slane %v377, 2
      %v761 = vrot.slane %v378, 2
      %v762 = vsel %vm741, %v760, %v761
      %v763 = vrot.slane %v379, 2
      %v764 = vrot.slane %v380, 2
      %v765 = vsel %vm741, %v763, %v764
      %v774 = vpack.c.bf16 %v747, %v744
      %v775 = vpack.c.bf16 %v753, %v750
      %v776 = vpack.c.bf16 %v759, %v756
      %v777 = vpack.c.bf16 %v765, %v762
      %s778 = scalar_lea.vmem %s3, 128
      %v779 = vld [vmem:[%s778] sm:$0xf]
      %v780 = vld [vmem:[%s778 + $0x4] sm:$0xf]
      %v781 = vld [vmem:[%s778 + $0x8] sm:$0xf]
      %v782 = vld [vmem:[%s778 + $0xc] sm:$0xf]
      %v783 = vld [vmem:[%s778 + $0x10] sm:$0xf]
      %v784 = vld [vmem:[%s778 + $0x14] sm:$0xf]
      %v785 = vld [vmem:[%s778 + $0x18] sm:$0xf]
      %v786 = vld [vmem:[%s778 + $0x1c] sm:$0xf]
      %v787 = vld [vmem:[%s778 + $0x20] sm:$0xf]
      %v788 = vld [vmem:[%s778 + $0x24] sm:$0xf]
      %v789 = vld [vmem:[%s778 + $0x28] sm:$0xf]
      %v790 = vld [vmem:[%s778 + $0x2c] sm:$0xf]
      %v791 = vld [vmem:[%s778 + $0x30] sm:$0xf]
      %v792 = vld [vmem:[%s778 + $0x34] sm:$0xf]
      %v793 = vld [vmem:[%s778 + $0x38] sm:$0xf]
      %v794 = vld [vmem:[%s778 + $0x3c] sm:$0xf]
      %v811 = vunpack.c.l.b16 %v779
      %v812 = vunpack.c.l.b16 %v780
      %v813 = vunpack.c.l.b16 %v781
      %v814 = vunpack.c.l.b16 %v782
      %v815 = vunpack.c.l.b16 %v783
      %v816 = vunpack.c.l.b16 %v784
      %v817 = vunpack.c.l.b16 %v785
      %v818 = vunpack.c.l.b16 %v786
      %v819 = vunpack.c.l.b16 %v787
      %v820 = vunpack.c.l.b16 %v788
      %v821 = vunpack.c.l.b16 %v789
      %v822 = vunpack.c.l.b16 %v790
      %v823 = vunpack.c.l.b16 %v791
      %v824 = vunpack.c.l.b16 %v792
      %v825 = vunpack.c.l.b16 %v793
      %v826 = vunpack.c.l.b16 %v794
      %v827 = vpack.c.b16 %v812, %v811
      %v828 = vpack.c.b16 %v814, %v813
      %v829 = vpack.c.b16 %v816, %v815
      %v830 = vpack.c.b16 %v818, %v817
      %v831 = vpack.c.b16 %v820, %v819
      %v832 = vpack.c.b16 %v822, %v821
      %v833 = vpack.c.b16 %v824, %v823
      %v834 = vpack.c.b16 %v826, %v825
      %843 = vmatprep.subr.bf16.mxu0 0
      %844 = vmatpush1.bf16.msra.mxu0 %v827
      %845 = vmatprep.subr.bf16.mxu0 0
      %846 = vmatpush1.bf16.msra.mxu0 %v828
      %847 = vmatprep.subr.bf16.mxu0 0
      %848 = vmatpush1.bf16.msra.mxu0 %v829
      %849 = vmatprep.subr.bf16.mxu0 0
      %850 = vmatpush1.bf16.msra.mxu0 %v830
      %851 = vmatprep.subr.bf16.mxu0 0
      %852 = vmatpush1.bf16.msra.mxu0 %v831
      %853 = vmatprep.subr.bf16.mxu0 0
      %854 = vmatpush1.bf16.msra.mxu0 %v832
      %855 = vmatprep.subr.bf16.mxu0 0
      %856 = vmatpush1.bf16.msra.mxu0 %v833
      %857 = vmatprep.subr.bf16.mxu0 0
      %858 = vmatpush1.bf16.msra.mxu0 %v834
      %859 = vmatprep.subr.bf16.mxu0 0
      %860 = vmatpush1.bf16.msra.mxu0 0
      %861 = vmatprep.subr.bf16.mxu0 0
      %862 = vmatpush1.bf16.msra.mxu0 0
      %863 = vmatprep.subr.bf16.mxu0 0
      %864 = vmatpush1.bf16.msra.mxu0 0
      %865 = vmatprep.subr.bf16.mxu0 0
      %866 = vmatpush1.bf16.msra.mxu0 0
      %867 = vmatprep.subr.bf16.mxu0 0
      %868 = vmatpush1.bf16.msra.mxu0 0
      %869 = vmatprep.subr.bf16.mxu0 0
      %870 = vmatpush1.bf16.msra.mxu0 0
      %871 = vmatprep.subr.bf16.mxu0 0
      %872 = vmatpush1.bf16.msra.mxu0 0
      %873 = vmatprep.subr.bf16.mxu0 0
      %874 = vmatpush1.bf16.msra.mxu0 0
      %875 = vmatprep.mubr.bf16.mxu0 0
      %876 = vmatmul.mubr.bf16.gmra.mrb[0].mxu0 %v774
      %v877 = vpop.f32.mrb[0].mxu0
      %v878 = vadd.f32 0.0, %v877
      %v879 = vpop.f32.mrb[0].mxu0
      %v880 = vpop.f32.mrb[0].mxu0
      %v881 = vadd.f32 0.0, %v880
      %v882 = vpop.f32.mrb[0].mxu0
      %883 = vmatprep.mubr.bf16.mxu0 0
      %884 = vmatmul.mubr.bf16.gmra.mrb[0].mxu0 %v775
      %v885 = vpop.f32.mrb[0].mxu0
      %v886 = vadd.f32 0.0, %v885
      %v887 = vpop.f32.mrb[0].mxu0
      %v888 = vpop.f32.mrb[0].mxu0
      %v889 = vadd.f32 0.0, %v888
      %v890 = vpop.f32.mrb[0].mxu0
      %891 = vmatprep.mubr.bf16.mxu0 0
      %892 = vmatmul.mubr.bf16.gmra.mrb[0].mxu0 %v776
      %v893 = vpop.f32.mrb[0].mxu0
      %v894 = vadd.f32 0.0, %v893
      %v895 = vpop.f32.mrb[0].mxu0
      %v896 = vpop.f32.mrb[0].mxu0
      %v897 = vadd.f32 0.0, %v896
      %v898 = vpop.f32.mrb[0].mxu0
      %899 = vmatprep.mubr.bf16.mxu0 0
      %900 = vmatmul.mubr.bf16.gmra.mrb[0].mxu0 %v777
      %v901 = vpop.f32.mrb[0].mxu0
      %v902 = vadd.f32 0.0, %v901
      %v903 = vpop.f32.mrb[0].mxu0
      %v904 = vpop.f32.mrb[0].mxu0
      %v905 = vadd.f32 0.0, %v904
      %v906 = vpop.f32.mrb[0].mxu0
      %907 = vdwg.mxu0
      %v908 = vadd.f32 %v711, %v878
      %v909 = vadd.f32 %v714, %v881
      %v910 = vadd.f32 %v719, %v886
      %v911 = vadd.f32 %v722, %v889
      %v912 = vadd.f32 %v727, %v894
      %v913 = vadd.f32 %v730, %v897
      %v914 = vadd.f32 %v735, %v902
      %v915 = vadd.f32 %v738, %v905
      %v916 = vpack.c.bf16 %v369, %v367
      %v917 = vpack.c.bf16 %v373, %v371
      %v918 = vpack.c.bf16 %v377, %v375
      %v919 = vpack.c.bf16 %v381, %v379
      %s920 = scalar_lea.vmem %s3, 192
      %v921 = vld [vmem:[%s920] sm:$0xf]
      %v922 = vld [vmem:[%s920 + $0x4] sm:$0xf]
      %v923 = vld [vmem:[%s920 + $0x8] sm:$0xf]
      %v924 = vld [vmem:[%s920 + $0xc] sm:$0xf]
      %v925 = vld [vmem:[%s920 + $0x10] sm:$0xf]
      %v926 = vld [vmem:[%s920 + $0x14] sm:$0xf]
      %v927 = vld [vmem:[%s920 + $0x18] sm:$0xf]
      %v928 = vld [vmem:[%s920 + $0x1c] sm:$0xf]
      %v929 = vld [vmem:[%s920 + $0x20] sm:$0xf]
      %v930 = vld [vmem:[%s920 + $0x24] sm:$0xf]
      %v931 = vld [vmem:[%s920 + $0x28] sm:$0xf]
      %v932 = vld [vmem:[%s920 + $0x2c] sm:$0xf]
      %v933 = vld [vmem:[%s920 + $0x30] sm:$0xf]
      %v934 = vld [vmem:[%s920 + $0x34] sm:$0xf]
      %v935 = vld [vmem:[%s920 + $0x38] sm:$0xf]
      %v936 = vld [vmem:[%s920 + $0x3c] sm:$0xf]
      %v953 = vunpack.c.l.b16 %v921
      %v954 = vunpack.c.l.b16 %v922
      %v955 = vunpack.c.l.b16 %v923
      %v956 = vunpack.c.l.b16 %v924
      %v957 = vunpack.c.l.b16 %v925
      %v958 = vunpack.c.l.b16 %v926
      %v959 = vunpack.c.l.b16 %v927
      %v960 = vunpack.c.l.b16 %v928
      %v961 = vunpack.c.l.b16 %v929
      %v962 = vunpack.c.l.b16 %v930
      %v963 = vunpack.c.l.b16 %v931
      %v964 = vunpack.c.l.b16 %v932
      %v965 = vunpack.c.l.b16 %v933
      %v966 = vunpack.c.l.b16 %v934
      %v967 = vunpack.c.l.b16 %v935
      %v968 = vunpack.c.l.b16 %v936
      %v969 = vpack.c.b16 %v954, %v953
      %v970 = vpack.c.b16 %v956, %v955
      %v971 = vpack.c.b16 %v958, %v957
      %v972 = vpack.c.b16 %v960, %v959
      %v973 = vpack.c.b16 %v962, %v961
      %v974 = vpack.c.b16 %v964, %v963
      %v975 = vpack.c.b16 %v966, %v965
      %v976 = vpack.c.b16 %v968, %v967
      %985 = vmatprep.subr.bf16.mxu0 0
      %986 = vmatpush1.bf16.msra.mxu0 %v969
      %987 = vmatprep.subr.bf16.mxu0 0
      %988 = vmatpush1.bf16.msra.mxu0 %v970
      %989 = vmatprep.subr.bf16.mxu0 0
      %990 = vmatpush1.bf16.msra.mxu0 %v971
      %991 = vmatprep.subr.bf16.mxu0 0
      %992 = vmatpush1.bf16.msra.mxu0 %v972
      %993 = vmatprep.subr.bf16.mxu0 0
      %994 = vmatpush1.bf16.msra.mxu0 %v973
      %995 = vmatprep.subr.bf16.mxu0 0
      %996 = vmatpush1.bf16.msra.mxu0 %v974
      %997 = vmatprep.subr.bf16.mxu0 0
      %998 = vmatpush1.bf16.msra.mxu0 %v975
      %999 = vmatprep.subr.bf16.mxu0 0
      %1000 = vmatpush1.bf16.msra.mxu0 %v976
      %1001 = vmatprep.subr.bf16.mxu0 0
      %1002 = vmatpush1.bf16.msra.mxu0 0
      %1003 = vmatprep.subr.bf16.mxu0 0
      %1004 = vmatpush1.bf16.msra.mxu0 0
      %1005 = vmatprep.subr.bf16.mxu0 0
      %1006 = vmatpush1.bf16.msra.mxu0 0
      %1007 = vmatprep.subr.bf16.mxu0 0
      %1008 = vmatpush1.bf16.msra.mxu0 0
      %1009 = vmatprep.subr.bf16.mxu0 0
      %1010 = vmatpush1.bf16.msra.mxu0 0
      %1011 = vmatprep.subr.bf16.mxu0 0
      %1012 = vmatpush1.bf16.msra.mxu0 0
      %1013 = vmatprep.subr.bf16.mxu0 0
      %1014 = vmatpush1.bf16.msra.mxu0 0
      %1015 = vmatprep.subr.bf16.mxu0 0
      %1016 = vmatpush1.bf16.msra.mxu0 0
      %1017 = vmatprep.mubr.bf16.mxu0 0
      %1018 = vmatmul.mubr.bf16.gmra.mrb[0].mxu0 %v916
      %v1019 = vpop.f32.mrb[0].mxu0
      %v1020 = vadd.f32 0.0, %v1019
      %v1021 = vpop.f32.mrb[0].mxu0
      %v1022 = vpop.f32.mrb[0].mxu0
      %v1023 = vadd.f32 0.0, %v1022
      %v1024 = vpop.f32.mrb[0].mxu0
      %1025 = vmatprep.mubr.bf16.mxu0 0
      %1026 = vmatmul.mubr.bf16.gmra.mrb[0].mxu0 %v917
      %v1027 = vpop.f32.mrb[0].mxu0
      %v1028 = vadd.f32 0.0, %v1027
      %v1029 = vpop.f32.mrb[0].mxu0
      %v1030 = vpop.f32.mrb[0].mxu0
      %v1031 = vadd.f32 0.0, %v1030
      %v1032 = vpop.f32.mrb[0].mxu0
      %1033 = vmatprep.mubr.bf16.mxu0 0
      %1034 = vmatmul.mubr.bf16.gmra.mrb[0].mxu0 %v918
      %v1035 = vpop.f32.mrb[0].mxu0
      %v1036 = vadd.f32 0.0, %v1035
      %v1037 = vpop.f32.mrb[0].mxu0
      %v1038 = vpop.f32.mrb[0].mxu0
      %v1039 = vadd.f32 0.0, %v1038
      %v1040 = vpop.f32.mrb[0].mxu0
      %1041 = vmatprep.mubr.bf16.mxu0 0
      %1042 = vmatmul.mubr.bf16.gmra.mrb[0].mxu0 %v919
      %v1043 = vpop.f32.mrb[0].mxu0
      %v1044 = vadd.f32 0.0, %v1043
      %v1045 = vpop.f32.mrb[0].mxu0
      %v1046 = vpop.f32.mrb[0].mxu0
      %v1047 = vadd.f32 0.0, %v1046
      %v1048 = vpop.f32.mrb[0].mxu0
      %1049 = vdwg.mxu0
      %v1050 = vadd.f32 %v908, %v1020
      %v1051 = vadd.f32 %v909, %v1023
      %v1052 = vadd.f32 %v910, %v1028
      %v1053 = vadd.f32 %v911, %v1031
      %v1054 = vadd.f32 %v912, %v1036
      %v1055 = vadd.f32 %v913, %v1039
      %v1056 = vadd.f32 %v914, %v1044
      %v1057 = vadd.f32 %v915, %v1047
      %v1060 = vrot.slane %v381, 1
      %v1061 = vrot.slane %v382, 1
      %v1062 = vsel %vm461, %v1060, %v1061
      %v1064 = vpack.c.bf16 %v470, %v467
      %v1065 = vpack.c.bf16 %v476, %v473
      %v1066 = vpack.c.bf16 %v482, %v479
      %v1067 = vpack.c.bf16 %v1062, %v485
      %s1068 = scalar_lea.vmem %s3, 256
      %v1069 = vld [vmem:[%s1068] sm:$0xf]
      %v1070 = vld [vmem:[%s1068 + $0x4] sm:$0xf]
      %v1071 = vld [vmem:[%s1068 + $0x8] sm:$0xf]
      %v1072 = vld [vmem:[%s1068 + $0xc] sm:$0xf]
      %v1073 = vld [vmem:[%s1068 + $0x10] sm:$0xf]
      %v1074 = vld [vmem:[%s1068 + $0x14] sm:$0xf]
      %v1075 = vld [vmem:[%s1068 + $0x18] sm:$0xf]
      %v1076 = vld [vmem:[%s1068 + $0x1c] sm:$0xf]
      %v1077 = vld [vmem:[%s1068 + $0x20] sm:$0xf]
      %v1078 = vld [vmem:[%s1068 + $0x24] sm:$0xf]
      %v1079 = vld [vmem:[%s1068 + $0x28] sm:$0xf]
      %v1080 = vld [vmem:[%s1068 + $0x2c] sm:$0xf]
      %v1081 = vld [vmem:[%s1068 + $0x30] sm:$0xf]
      %v1082 = vld [vmem:[%s1068 + $0x34] sm:$0xf]
      %v1083 = vld [vmem:[%s1068 + $0x38] sm:$0xf]
      %v1084 = vld [vmem:[%s1068 + $0x3c] sm:$0xf]
      %v1101 = vunpack.c.l.b16 %v1069
      %v1102 = vunpack.c.l.b16 %v1070
      %v1103 = vunpack.c.l.b16 %v1071
      %v1104 = vunpack.c.l.b16 %v1072
      %v1105 = vunpack.c.l.b16 %v1073
      %v1106 = vunpack.c.l.b16 %v1074
      %v1107 = vunpack.c.l.b16 %v1075
      %v1108 = vunpack.c.l.b16 %v1076
      %v1109 = vunpack.c.l.b16 %v1077
      %v1110 = vunpack.c.l.b16 %v1078
      %v1111 = vunpack.c.l.b16 %v1079
      %v1112 = vunpack.c.l.b16 %v1080
      %v1113 = vunpack.c.l.b16 %v1081
      %v1114 = vunpack.c.l.b16 %v1082
      %v1115 = vunpack.c.l.b16 %v1083
      %v1116 = vunpack.c.l.b16 %v1084
      %v1117 = vpack.c.b16 %v1102, %v1101
      %v1118 = vpack.c.b16 %v1104, %v1103
      %v1119 = vpack.c.b16 %v1106, %v1105
      %v1120 = vpack.c.b16 %v1108, %v1107
      %v1121 = vpack.c.b16 %v1110, %v1109
      %v1122 = vpack.c.b16 %v1112, %v1111
      %v1123 = vpack.c.b16 %v1114, %v1113
      %v1124 = vpack.c.b16 %v1116, %v1115
      %1133 = vmatprep.subr.bf16.mxu0 0
      %1134 = vmatpush1.bf16.msra.mxu0 %v1117
      %1135 = vmatprep.subr.bf16.mxu0 0
      %1136 = vmatpush1.bf16.msra.mxu0 %v1118
      %1137 = vmatprep.subr.bf16.mxu0 0
      %1138 = vmatpush1.bf16.msra.mxu0 %v1119
      %1139 = vmatprep.subr.bf16.mxu0 0
      %1140 = vmatpush1.bf16.msra.mxu0 %v1120
      %1141 = vmatprep.subr.bf16.mxu0 0
      %1142 = vmatpush1.bf16.msra.mxu0 %v1121
      %1143 = vmatprep.subr.bf16.mxu0 0
      %1144 = vmatpush1.bf16.msra.mxu0 %v1122
      %1145 = vmatprep.subr.bf16.mxu0 0
      %1146 = vmatpush1.bf16.msra.mxu0 %v1123
      %1147 = vmatprep.subr.bf16.mxu0 0
      %1148 = vmatpush1.bf16.msra.mxu0 %v1124
      %1149 = vmatprep.subr.bf16.mxu0 0
      %1150 = vmatpush1.bf16.msra.mxu0 0
      %1151 = vmatprep.subr.bf16.mxu0 0
      %1152 = vmatpush1.bf16.msra.mxu0 0
      %1153 = vmatprep.subr.bf16.mxu0 0
      %1154 = vmatpush1.bf16.msra.mxu0 0
      %1155 = vmatprep.subr.bf16.mxu0 0
      %1156 = vmatpush1.bf16.msra.mxu0 0
      %1157 = vmatprep.subr.bf16.mxu0 0
      %1158 = vmatpush1.bf16.msra.mxu0 0
      %1159 = vmatprep.subr.bf16.mxu0 0
      %1160 = vmatpush1.bf16.msra.mxu0 0
      %1161 = vmatprep.subr.bf16.mxu0 0
      %1162 = vmatpush1.bf16.msra.mxu0 0
      %1163 = vmatprep.subr.bf16.mxu0 0
      %1164 = vmatpush1.bf16.msra.mxu0 0
      %1165 = vmatprep.mubr.bf16.mxu0 0
      %1166 = vmatmul.mubr.bf16.gmra.mrb[0].mxu0 %v1064
      %v1167 = vpop.f32.mrb[0].mxu0
      %v1168 = vadd.f32 0.0, %v1167
      %v1169 = vpop.f32.mrb[0].mxu0
      %v1170 = vpop.f32.mrb[0].mxu0
      %v1171 = vadd.f32 0.0, %v1170
      %v1172 = vpop.f32.mrb[0].mxu0
      %1173 = vmatprep.mubr.bf16.mxu0 0
      %1174 = vmatmul.mubr.bf16.gmra.mrb[0].mxu0 %v1065
      %v1175 = vpop.f32.mrb[0].mxu0
      %v1176 = vadd.f32 0.0, %v1175
      %v1177 = vpop.f32.mrb[0].mxu0
      %v1178 = vpop.f32.mrb[0].mxu0
      %v1179 = vadd.f32 0.0, %v1178
      %v1180 = vpop.f32.mrb[0].mxu0
      %1181 = vmatprep.mubr.bf16.mxu0 0
      %1182 = vmatmul.mubr.bf16.gmra.mrb[0].mxu0 %v1066
      %v1183 = vpop.f32.mrb[0].mxu0
      %v1184 = vadd.f32 0.0, %v1183
      %v1185 = vpop.f32.mrb[0].mxu0
      %v1186 = vpop.f32.mrb[0].mxu0
      %v1187 = vadd.f32 0.0, %v1186
      %v1188 = vpop.f32.mrb[0].mxu0
      %1189 = vmatprep.mubr.bf16.mxu0 0
      %1190 = vmatmul.mubr.bf16.gmra.mrb[0].mxu0 %v1067
      %v1191 = vpop.f32.mrb[0].mxu0
      %v1192 = vadd.f32 0.0, %v1191
      %v1193 = vpop.f32.mrb[0].mxu0
      %v1194 = vpop.f32.mrb[0].mxu0
      %v1195 = vadd.f32 0.0, %v1194
      %v1196 = vpop.f32.mrb[0].mxu0
      %1197 = vdwg.mxu0
      %v1198 = vadd.f32 %v1050, %v1168
      %v1199 = vadd.f32 %v1051, %v1171
      %v1200 = vadd.f32 %v1052, %v1176
      %v1201 = vadd.f32 %v1053, %v1179
      %v1202 = vadd.f32 %v1054, %v1184
      %v1203 = vadd.f32 %v1055, %v1187
      %v1204 = vadd.f32 %v1056, %v1192
      %v1205 = vadd.f32 %v1057, %v1195
      %v1206 = vrot.slane %v381, 2
      %v1207 = vrot.slane %v382, 2
      %v1208 = vsel %vm741, %v1206, %v1207
      %v1210 = vpack.c.bf16 %v750, %v747
      %v1211 = vpack.c.bf16 %v756, %v753
      %v1212 = vpack.c.bf16 %v762, %v759
      %v1213 = vpack.c.bf16 %v1208, %v765
      %s1214 = scalar_lea.vmem %s3, 320
      %v1215 = vld [vmem:[%s1214] sm:$0xf]
      %v1216 = vld [vmem:[%s1214 + $0x4] sm:$0xf]
      %v1217 = vld [vmem:[%s1214 + $0x8] sm:$0xf]
      %v1218 = vld [vmem:[%s1214 + $0xc] sm:$0xf]
      %v1219 = vld [vmem:[%s1214 + $0x10] sm:$0xf]
      %v1220 = vld [vmem:[%s1214 + $0x14] sm:$0xf]
      %v1221 = vld [vmem:[%s1214 + $0x18] sm:$0xf]
      %v1222 = vld [vmem:[%s1214 + $0x1c] sm:$0xf]
      %v1223 = vld [vmem:[%s1214 + $0x20] sm:$0xf]
      %v1224 = vld [vmem:[%s1214 + $0x24] sm:$0xf]
      %v1225 = vld [vmem:[%s1214 + $0x28] sm:$0xf]
      %v1226 = vld [vmem:[%s1214 + $0x2c] sm:$0xf]
      %v1227 = vld [vmem:[%s1214 + $0x30] sm:$0xf]
      %v1228 = vld [vmem:[%s1214 + $0x34] sm:$0xf]
      %v1229 = vld [vmem:[%s1214 + $0x38] sm:$0xf]
      %v1230 = vld [vmem:[%s1214 + $0x3c] sm:$0xf]
      %v1247 = vunpack.c.l.b16 %v1215
      %v1248 = vunpack.c.l.b16 %v1216
      %v1249 = vunpack.c.l.b16 %v1217
      %v1250 = vunpack.c.l.b16 %v1218
      %v1251 = vunpack.c.l.b16 %v1219
      %v1252 = vunpack.c.l.b16 %v1220
      %v1253 = vunpack.c.l.b16 %v1221
      %v1254 = vunpack.c.l.b16 %v1222
      %v1255 = vunpack.c.l.b16 %v1223
      %v1256 = vunpack.c.l.b16 %v1224
      %v1257 = vunpack.c.l.b16 %v1225
      %v1258 = vunpack.c.l.b16 %v1226
      %v1259 = vunpack.c.l.b16 %v1227
      %v1260 = vunpack.c.l.b16 %v1228
      %v1261 = vunpack.c.l.b16 %v1229
      %v1262 = vunpack.c.l.b16 %v1230
      %v1263 = vpack.c.b16 %v1248, %v1247
      %v1264 = vpack.c.b16 %v1250, %v1249
      %v1265 = vpack.c.b16 %v1252, %v1251
      %v1266 = vpack.c.b16 %v1254, %v1253
      %v1267 = vpack.c.b16 %v1256, %v1255
      %v1268 = vpack.c.b16 %v1258, %v1257
      %v1269 = vpack.c.b16 %v1260, %v1259
      %v1270 = vpack.c.b16 %v1262, %v1261
      %1279 = vmatprep.subr.bf16.mxu0 0
      %1280 = vmatpush1.bf16.msra.mxu0 %v1263
      %1281 = vmatprep.subr.bf16.mxu0 0
      %1282 = vmatpush1.bf16.msra.mxu0 %v1264
      %1283 = vmatprep.subr.bf16.mxu0 0
      %1284 = vmatpush1.bf16.msra.mxu0 %v1265
      %1285 = vmatprep.subr.bf16.mxu0 0
      %1286 = vmatpush1.bf16.msra.mxu0 %v1266
      %1287 = vmatprep.subr.bf16.mxu0 0
      %1288 = vmatpush1.bf16.msra.mxu0 %v1267
      %1289 = vmatprep.subr.bf16.mxu0 0
      %1290 = vmatpush1.bf16.msra.mxu0 %v1268
      %1291 = vmatprep.subr.bf16.mxu0 0
      %1292 = vmatpush1.bf16.msra.mxu0 %v1269
      %1293 = vmatprep.subr.bf16.mxu0 0
      %1294 = vmatpush1.bf16.msra.mxu0 %v1270
      %1295 = vmatprep.subr.bf16.mxu0 0
      %1296 = vmatpush1.bf16.msra.mxu0 0
      %1297 = vmatprep.subr.bf16.mxu0 0
      %1298 = vmatpush1.bf16.msra.mxu0 0
      %1299 = vmatprep.subr.bf16.mxu0 0
      %1300 = vmatpush1.bf16.msra.mxu0 0
      %1301 = vmatprep.subr.bf16.mxu0 0
      %1302 = vmatpush1.bf16.msra.mxu0 0
      %1303 = vmatprep.subr.bf16.mxu0 0
      %1304 = vmatpush1.bf16.msra.mxu0 0
      %1305 = vmatprep.subr.bf16.mxu0 0
      %1306 = vmatpush1.bf16.msra.mxu0 0
      %1307 = vmatprep.subr.bf16.mxu0 0
      %1308 = vmatpush1.bf16.msra.mxu0 0
      %1309 = vmatprep.subr.bf16.mxu0 0
      %1310 = vmatpush1.bf16.msra.mxu0 0
      %1311 = vmatprep.mubr.bf16.mxu0 0
      %1312 = vmatmul.mubr.bf16.gmra.mrb[0].mxu0 %v1210
      %v1313 = vpop.f32.mrb[0].mxu0
      %v1314 = vadd.f32 0.0, %v1313
      %v1315 = vpop.f32.mrb[0].mxu0
      %v1316 = vpop.f32.mrb[0].mxu0
      %v1317 = vadd.f32 0.0, %v1316
      %v1318 = vpop.f32.mrb[0].mxu0
      %1319 = vmatprep.mubr.bf16.mxu0 0
      %1320 = vmatmul.mubr.bf16.gmra.mrb[0].mxu0 %v1211
      %v1321 = vpop.f32.mrb[0].mxu0
      %v1322 = vadd.f32 0.0, %v1321
      %v1323 = vpop.f32.mrb[0].mxu0
      %v1324 = vpop.f32.mrb[0].mxu0
      %v1325 = vadd.f32 0.0, %v1324
      %v1326 = vpop.f32.mrb[0].mxu0
      %1327 = vmatprep.mubr.bf16.mxu0 0
      %1328 = vmatmul.mubr.bf16.gmra.mrb[0].mxu0 %v1212
      %v1329 = vpop.f32.mrb[0].mxu0
      %v1330 = vadd.f32 0.0, %v1329
      %v1331 = vpop.f32.mrb[0].mxu0
      %v1332 = vpop.f32.mrb[0].mxu0
      %v1333 = vadd.f32 0.0, %v1332
      %v1334 = vpop.f32.mrb[0].mxu0
      %1335 = vmatprep.mubr.bf16.mxu0 0
      %1336 = vmatmul.mubr.bf16.gmra.mrb[0].mxu0 %v1213
      %v1337 = vpop.f32.mrb[0].mxu0
      %v1338 = vadd.f32 0.0, %v1337
      %v1339 = vpop.f32.mrb[0].mxu0
      %v1340 = vpop.f32.mrb[0].mxu0
      %v1341 = vadd.f32 0.0, %v1340
      %v1342 = vpop.f32.mrb[0].mxu0
      %1343 = vdwg.mxu0
      %v1344 = vadd.f32 %v1198, %v1314
      %v1345 = vadd.f32 %v1199, %v1317
      %v1346 = vadd.f32 %v1200, %v1322
      %v1347 = vadd.f32 %v1201, %v1325
      %v1348 = vadd.f32 %v1202, %v1330
      %v1349 = vadd.f32 %v1203, %v1333
      %v1350 = vadd.f32 %v1204, %v1338
      %v1351 = vadd.f32 %v1205, %v1341
      %v1352 = vpack.c.bf16 %v383, %v381
      %s1353 = scalar_lea.vmem %s3, 384
      %v1354 = vld [vmem:[%s1353] sm:$0xf]
      %v1355 = vld [vmem:[%s1353 + $0x4] sm:$0xf]
      %v1356 = vld [vmem:[%s1353 + $0x8] sm:$0xf]
      %v1357 = vld [vmem:[%s1353 + $0xc] sm:$0xf]
      %v1358 = vld [vmem:[%s1353 + $0x10] sm:$0xf]
      %v1359 = vld [vmem:[%s1353 + $0x14] sm:$0xf]
      %v1360 = vld [vmem:[%s1353 + $0x18] sm:$0xf]
      %v1361 = vld [vmem:[%s1353 + $0x1c] sm:$0xf]
      %v1362 = vld [vmem:[%s1353 + $0x20] sm:$0xf]
      %v1363 = vld [vmem:[%s1353 + $0x24] sm:$0xf]
      %v1364 = vld [vmem:[%s1353 + $0x28] sm:$0xf]
      %v1365 = vld [vmem:[%s1353 + $0x2c] sm:$0xf]
      %v1366 = vld [vmem:[%s1353 + $0x30] sm:$0xf]
      %v1367 = vld [vmem:[%s1353 + $0x34] sm:$0xf]
      %v1368 = vld [vmem:[%s1353 + $0x38] sm:$0xf]
      %v1369 = vld [vmem:[%s1353 + $0x3c] sm:$0xf]
      %v1386 = vunpack.c.l.b16 %v1354
      %v1387 = vunpack.c.l.b16 %v1355
      %v1388 = vunpack.c.l.b16 %v1356
      %v1389 = vunpack.c.l.b16 %v1357
      %v1390 = vunpack.c.l.b16 %v1358
      %v1391 = vunpack.c.l.b16 %v1359
      %v1392 = vunpack.c.l.b16 %v1360
      %v1393 = vunpack.c.l.b16 %v1361
      %v1394 = vunpack.c.l.b16 %v1362
      %v1395 = vunpack.c.l.b16 %v1363
      %v1396 = vunpack.c.l.b16 %v1364
      %v1397 = vunpack.c.l.b16 %v1365
      %v1398 = vunpack.c.l.b16 %v1366
      %v1399 = vunpack.c.l.b16 %v1367
      %v1400 = vunpack.c.l.b16 %v1368
      %v1401 = vunpack.c.l.b16 %v1369
      %v1402 = vpack.c.b16 %v1387, %v1386
      %v1403 = vpack.c.b16 %v1389, %v1388
      %v1404 = vpack.c.b16 %v1391, %v1390
      %v1405 = vpack.c.b16 %v1393, %v1392
      %v1406 = vpack.c.b16 %v1395, %v1394
      %v1407 = vpack.c.b16 %v1397, %v1396
      %v1408 = vpack.c.b16 %v1399, %v1398
      %v1409 = vpack.c.b16 %v1401, %v1400
      %1418 = vmatprep.subr.bf16.mxu0 0
      %1419 = vmatpush1.bf16.msra.mxu0 %v1402
      %1420 = vmatprep.subr.bf16.mxu0 0
      %1421 = vmatpush1.bf16.msra.mxu0 %v1403
      %1422 = vmatprep.subr.bf16.mxu0 0
      %1423 = vmatpush1.bf16.msra.mxu0 %v1404
      %1424 = vmatprep.subr.bf16.mxu0 0
      %1425 = vmatpush1.bf16.msra.mxu0 %v1405
      %1426 = vmatprep.subr.bf16.mxu0 0
      %1427 = vmatpush1.bf16.msra.mxu0 %v1406
      %1428 = vmatprep.subr.bf16.mxu0 0
      %1429 = vmatpush1.bf16.msra.mxu0 %v1407
      %1430 = vmatprep.subr.bf16.mxu0 0
      %1431 = vmatpush1.bf16.msra.mxu0 %v1408
      %1432 = vmatprep.subr.bf16.mxu0 0
      %1433 = vmatpush1.bf16.msra.mxu0 %v1409
      %1434 = vmatprep.subr.bf16.mxu0 0
      %1435 = vmatpush1.bf16.msra.mxu0 0
      %1436 = vmatprep.subr.bf16.mxu0 0
      %1437 = vmatpush1.bf16.msra.mxu0 0
      %1438 = vmatprep.subr.bf16.mxu0 0
      %1439 = vmatpush1.bf16.msra.mxu0 0
      %1440 = vmatprep.subr.bf16.mxu0 0
      %1441 = vmatpush1.bf16.msra.mxu0 0
      %1442 = vmatprep.subr.bf16.mxu0 0
      %1443 = vmatpush1.bf16.msra.mxu0 0
      %1444 = vmatprep.subr.bf16.mxu0 0
      %1445 = vmatpush1.bf16.msra.mxu0 0
      %1446 = vmatprep.subr.bf16.mxu0 0
      %1447 = vmatpush1.bf16.msra.mxu0 0
      %1448 = vmatprep.subr.bf16.mxu0 0
      %1449 = vmatpush1.bf16.msra.mxu0 0
      %1450 = vmatprep.mubr.bf16.mxu0 0
      %1451 = vmatmul.mubr.bf16.gmra.mrb[0].mxu0 %v426
      %v1452 = vpop.f32.mrb[0].mxu0
      %v1453 = vadd.f32 0.0, %v1452
      %v1454 = vpop.f32.mrb[0].mxu0
      %v1455 = vpop.f32.mrb[0].mxu0
      %v1456 = vadd.f32 0.0, %v1455
      %v1457 = vpop.f32.mrb[0].mxu0
      %1458 = vmatprep.mubr.bf16.mxu0 0
      %1459 = vmatmul.mubr.bf16.gmra.mrb[0].mxu0 %v427
      %v1460 = vpop.f32.mrb[0].mxu0
      %v1461 = vadd.f32 0.0, %v1460
      %v1462 = vpop.f32.mrb[0].mxu0
      %v1463 = vpop.f32.mrb[0].mxu0
      %v1464 = vadd.f32 0.0, %v1463
      %v1465 = vpop.f32.mrb[0].mxu0
      %1466 = vmatprep.mubr.bf16.mxu0 0
      %1467 = vmatmul.mubr.bf16.gmra.mrb[0].mxu0 %v428
      %v1468 = vpop.f32.mrb[0].mxu0
      %v1469 = vadd.f32 0.0, %v1468
      %v1470 = vpop.f32.mrb[0].mxu0
      %v1471 = vpop.f32.mrb[0].mxu0
      %v1472 = vadd.f32 0.0, %v1471
      %v1473 = vpop.f32.mrb[0].mxu0
      %1474 = vmatprep.mubr.bf16.mxu0 0
      %1475 = vmatmul.mubr.bf16.gmra.mrb[0].mxu0 %v1352
      %v1476 = vpop.f32.mrb[0].mxu0
      %v1477 = vadd.f32 0.0, %v1476
      %v1478 = vpop.f32.mrb[0].mxu0
      %v1479 = vpop.f32.mrb[0].mxu0
      %v1480 = vadd.f32 0.0, %v1479
      %v1481 = vpop.f32.mrb[0].mxu0
      %1482 = vdwg.mxu0
      %v1483 = vadd.f32 %v1344, %v1453
      %v1484 = vadd.f32 %v1345, %v1456
      %v1485 = vadd.f32 %v1346, %v1461
      %v1486 = vadd.f32 %v1347, %v1464
      %v1487 = vadd.f32 %v1348, %v1469
      %v1488 = vadd.f32 %v1349, %v1472
      %v1489 = vadd.f32 %v1350, %v1477
      %v1490 = vadd.f32 %v1351, %v1480
      %v1493 = vrot.slane %v383, 1
      %v1494 = vrot.slane %v384, 1
      %v1495 = vsel %vm461, %v1493, %v1494
      %v1497 = vpack.c.bf16 %v1495, %v1062
      %s1498 = scalar_lea.vmem %s3, 448
      %v1499 = vld [vmem:[%s1498] sm:$0xf]
      %v1500 = vld [vmem:[%s1498 + $0x4] sm:$0xf]
      %v1501 = vld [vmem:[%s1498 + $0x8] sm:$0xf]
      %v1502 = vld [vmem:[%s1498 + $0xc] sm:$0xf]
      %v1503 = vld [vmem:[%s1498 + $0x10] sm:$0xf]
      %v1504 = vld [vmem:[%s1498 + $0x14] sm:$0xf]
      %v1505 = vld [vmem:[%s1498 + $0x18] sm:$0xf]
      %v1506 = vld [vmem:[%s1498 + $0x1c] sm:$0xf]
      %v1507 = vld [vmem:[%s1498 + $0x20] sm:$0xf]
      %v1508 = vld [vmem:[%s1498 + $0x24] sm:$0xf]
      %v1509 = vld [vmem:[%s1498 + $0x28] sm:$0xf]
      %v1510 = vld [vmem:[%s1498 + $0x2c] sm:$0xf]
      %v1511 = vld [vmem:[%s1498 + $0x30] sm:$0xf]
      %v1512 = vld [vmem:[%s1498 + $0x34] sm:$0xf]
      %v1513 = vld [vmem:[%s1498 + $0x38] sm:$0xf]
      %v1514 = vld [vmem:[%s1498 + $0x3c] sm:$0xf]
      %v1531 = vunpack.c.l.b16 %v1499
      %v1532 = vunpack.c.l.b16 %v1500
      %v1533 = vunpack.c.l.b16 %v1501
      %v1534 = vunpack.c.l.b16 %v1502
      %v1535 = vunpack.c.l.b16 %v1503
      %v1536 = vunpack.c.l.b16 %v1504
      %v1537 = vunpack.c.l.b16 %v1505
      %v1538 = vunpack.c.l.b16 %v1506
      %v1539 = vunpack.c.l.b16 %v1507
      %v1540 = vunpack.c.l.b16 %v1508
      %v1541 = vunpack.c.l.b16 %v1509
      %v1542 = vunpack.c.l.b16 %v1510
      %v1543 = vunpack.c.l.b16 %v1511
      %v1544 = vunpack.c.l.b16 %v1512
      %v1545 = vunpack.c.l.b16 %v1513
      %v1546 = vunpack.c.l.b16 %v1514
      %v1547 = vpack.c.b16 %v1532, %v1531
      %v1548 = vpack.c.b16 %v1534, %v1533
      %v1549 = vpack.c.b16 %v1536, %v1535
      %v1550 = vpack.c.b16 %v1538, %v1537
      %v1551 = vpack.c.b16 %v1540, %v1539
      %v1552 = vpack.c.b16 %v1542, %v1541
      %v1553 = vpack.c.b16 %v1544, %v1543
      %v1554 = vpack.c.b16 %v1546, %v1545
      %1563 = vmatprep.subr.bf16.mxu0 0
      %1564 = vmatpush1.bf16.msra.mxu0 %v1547
      %1565 = vmatprep.subr.bf16.mxu0 0
      %1566 = vmatpush1.bf16.msra.mxu0 %v1548
      %1567 = vmatprep.subr.bf16.mxu0 0
      %1568 = vmatpush1.bf16.msra.mxu0 %v1549
      %1569 = vmatprep.subr.bf16.mxu0 0
      %1570 = vmatpush1.bf16.msra.mxu0 %v1550
      %1571 = vmatprep.subr.bf16.mxu0 0
      %1572 = vmatpush1.bf16.msra.mxu0 %v1551
      %1573 = vmatprep.subr.bf16.mxu0 0
      %1574 = vmatpush1.bf16.msra.mxu0 %v1552
      %1575 = vmatprep.subr.bf16.mxu0 0
      %1576 = vmatpush1.bf16.msra.mxu0 %v1553
      %1577 = vmatprep.subr.bf16.mxu0 0
      %1578 = vmatpush1.bf16.msra.mxu0 %v1554
      %1579 = vmatprep.subr.bf16.mxu0 0
      %1580 = vmatpush1.bf16.msra.mxu0 0
      %1581 = vmatprep.subr.bf16.mxu0 0
      %1582 = vmatpush1.bf16.msra.mxu0 0
      %1583 = vmatprep.subr.bf16.mxu0 0
      %1584 = vmatpush1.bf16.msra.mxu0 0
      %1585 = vmatprep.subr.bf16.mxu0 0
      %1586 = vmatpush1.bf16.msra.mxu0 0
      %1587 = vmatprep.subr.bf16.mxu0 0
      %1588 = vmatpush1.bf16.msra.mxu0 0
      %1589 = vmatprep.subr.bf16.mxu0 0
      %1590 = vmatpush1.bf16.msra.mxu0 0
      %1591 = vmatprep.subr.bf16.mxu0 0
      %1592 = vmatpush1.bf16.msra.mxu0 0
      %1593 = vmatprep.subr.bf16.mxu0 0
      %1594 = vmatpush1.bf16.msra.mxu0 0
      %1595 = vmatprep.mubr.bf16.mxu0 0
      %1596 = vmatmul.mubr.bf16.gmra.mrb[0].mxu0 %v495
      %v1597 = vpop.f32.mrb[0].mxu0
      %v1598 = vadd.f32 0.0, %v1597
      %v1599 = vpop.f32.mrb[0].mxu0
      %v1600 = vpop.f32.mrb[0].mxu0
      %v1601 = vadd.f32 0.0, %v1600
      %v1602 = vpop.f32.mrb[0].mxu0
      %1603 = vmatprep.mubr.bf16.mxu0 0
      %1604 = vmatmul.mubr.bf16.gmra.mrb[0].mxu0 %v496
      %v1605 = vpop.f32.mrb[0].mxu0
      %v1606 = vadd.f32 0.0, %v1605
      %v1607 = vpop.f32.mrb[0].mxu0
      %v1608 = vpop.f32.mrb[0].mxu0
      %v1609 = vadd.f32 0.0, %v1608
      %v1610 = vpop.f32.mrb[0].mxu0
      %1611 = vmatprep.mubr.bf16.mxu0 0
      %1612 = vmatmul.mubr.bf16.gmra.mrb[0].mxu0 %v497
      %v1613 = vpop.f32.mrb[0].mxu0
      %v1614 = vadd.f32 0.0, %v1613
      %v1615 = vpop.f32.mrb[0].mxu0
      %v1616 = vpop.f32.mrb[0].mxu0
      %v1617 = vadd.f32 0.0, %v1616
      %v1618 = vpop.f32.mrb[0].mxu0
      %1619 = vmatprep.mubr.bf16.mxu0 0
      %1620 = vmatmul.mubr.bf16.gmra.mrb[0].mxu0 %v1497
      %v1621 = vpop.f32.mrb[0].mxu0
      %v1622 = vadd.f32 0.0, %v1621
      %v1623 = vpop.f32.mrb[0].mxu0
      %v1624 = vpop.f32.mrb[0].mxu0
      %v1625 = vadd.f32 0.0, %v1624
      %v1626 = vpop.f32.mrb[0].mxu0
      %1627 = vdwg.mxu0
      %v1628 = vadd.f32 %v1483, %v1598
      %v1629 = vadd.f32 %v1484, %v1601
      %v1630 = vadd.f32 %v1485, %v1606
      %v1631 = vadd.f32 %v1486, %v1609
      %v1632 = vadd.f32 %v1487, %v1614
      %v1633 = vadd.f32 %v1488, %v1617
      %v1634 = vadd.f32 %v1489, %v1622
      %v1635 = vadd.f32 %v1490, %v1625
      %v1636 = vrot.slane %v383, 2
      %v1637 = vrot.slane %v384, 2
      %v1638 = vsel %vm741, %v1636, %v1637
      %v1640 = vpack.c.bf16 %v1638, %v1208
      %s1641 = scalar_lea.vmem %s3, 512
      %v1642 = vld [vmem:[%s1641] sm:$0xf]
      %v1643 = vld [vmem:[%s1641 + $0x4] sm:$0xf]
      %v1644 = vld [vmem:[%s1641 + $0x8] sm:$0xf]
      %v1645 = vld [vmem:[%s1641 + $0xc] sm:$0xf]
      %v1646 = vld [vmem:[%s1641 + $0x10] sm:$0xf]
      %v1647 = vld [vmem:[%s1641 + $0x14] sm:$0xf]
      %v1648 = vld [vmem:[%s1641 + $0x18] sm:$0xf]
      %v1649 = vld [vmem:[%s1641 + $0x1c] sm:$0xf]
      %v1650 = vld [vmem:[%s1641 + $0x20] sm:$0xf]
      %v1651 = vld [vmem:[%s1641 + $0x24] sm:$0xf]
      %v1652 = vld [vmem:[%s1641 + $0x28] sm:$0xf]
      %v1653 = vld [vmem:[%s1641 + $0x2c] sm:$0xf]
      %v1654 = vld [vmem:[%s1641 + $0x30] sm:$0xf]
      %v1655 = vld [vmem:[%s1641 + $0x34] sm:$0xf]
      %v1656 = vld [vmem:[%s1641 + $0x38] sm:$0xf]
      %v1657 = vld [vmem:[%s1641 + $0x3c] sm:$0xf]
      %v1674 = vunpack.c.l.b16 %v1642
      %v1675 = vunpack.c.l.b16 %v1643
      %v1676 = vunpack.c.l.b16 %v1644
      %v1677 = vunpack.c.l.b16 %v1645
      %v1678 = vunpack.c.l.b16 %v1646
      %v1679 = vunpack.c.l.b16 %v1647
      %v1680 = vunpack.c.l.b16 %v1648
      %v1681 = vunpack.c.l.b16 %v1649
      %v1682 = vunpack.c.l.b16 %v1650
      %v1683 = vunpack.c.l.b16 %v1651
      %v1684 = vunpack.c.l.b16 %v1652
      %v1685 = vunpack.c.l.b16 %v1653
      %v1686 = vunpack.c.l.b16 %v1654
      %v1687 = vunpack.c.l.b16 %v1655
      %v1688 = vunpack.c.l.b16 %v1656
      %v1689 = vunpack.c.l.b16 %v1657
      %v1690 = vpack.c.b16 %v1675, %v1674
      %v1691 = vpack.c.b16 %v1677, %v1676
      %v1692 = vpack.c.b16 %v1679, %v1678
      %v1693 = vpack.c.b16 %v1681, %v1680
      %v1694 = vpack.c.b16 %v1683, %v1682
      %v1695 = vpack.c.b16 %v1685, %v1684
      %v1696 = vpack.c.b16 %v1687, %v1686
      %v1697 = vpack.c.b16 %v1689, %v1688
      %1706 = vmatprep.subr.bf16.mxu0 0
      %1707 = vmatpush1.bf16.msra.mxu0 %v1690
      %1708 = vmatprep.subr.bf16.mxu0 0
      %1709 = vmatpush1.bf16.msra.mxu0 %v1691
      %1710 = vmatprep.subr.bf16.mxu0 0
      %1711 = vmatpush1.bf16.msra.mxu0 %v1692
      %1712 = vmatprep.subr.bf16.mxu0 0
      %1713 = vmatpush1.bf16.msra.mxu0 %v1693
      %1714 = vmatprep.subr.bf16.mxu0 0
      %1715 = vmatpush1.bf16.msra.mxu0 %v1694
      %1716 = vmatprep.subr.bf16.mxu0 0
      %1717 = vmatpush1.bf16.msra.mxu0 %v1695
      %1718 = vmatprep.subr.bf16.mxu0 0
      %1719 = vmatpush1.bf16.msra.mxu0 %v1696
      %1720 = vmatprep.subr.bf16.mxu0 0
      %1721 = vmatpush1.bf16.msra.mxu0 %v1697
      %1722 = vmatprep.subr.bf16.mxu0 0
      %1723 = vmatpush1.bf16.msra.mxu0 0
      %1724 = vmatprep.subr.bf16.mxu0 0
      %1725 = vmatpush1.bf16.msra.mxu0 0
      %1726 = vmatprep.subr.bf16.mxu0 0
      %1727 = vmatpush1.bf16.msra.mxu0 0
      %1728 = vmatprep.subr.bf16.mxu0 0
      %1729 = vmatpush1.bf16.msra.mxu0 0
      %1730 = vmatprep.subr.bf16.mxu0 0
      %1731 = vmatpush1.bf16.msra.mxu0 0
      %1732 = vmatprep.subr.bf16.mxu0 0
      %1733 = vmatpush1.bf16.msra.mxu0 0
      %1734 = vmatprep.subr.bf16.mxu0 0
      %1735 = vmatpush1.bf16.msra.mxu0 0
      %1736 = vmatprep.subr.bf16.mxu0 0
      %1737 = vmatpush1.bf16.msra.mxu0 0
      %1738 = vmatprep.mubr.bf16.mxu0 0
      %1739 = vmatmul.mubr.bf16.gmra.mrb[0].mxu0 %v775
      %v1740 = vpop.f32.mrb[0].mxu0
      %v1741 = vadd.f32 0.0, %v1740
      %v1742 = vpop.f32.mrb[0].mxu0
      %v1743 = vpop.f32.mrb[0].mxu0
      %v1744 = vadd.f32 0.0, %v1743
      %v1745 = vpop.f32.mrb[0].mxu0
      %1746 = vmatprep.mubr.bf16.mxu0 0
      %1747 = vmatmul.mubr.bf16.gmra.mrb[0].mxu0 %v776
      %v1748 = vpop.f32.mrb[0].mxu0
      %v1749 = vadd.f32 0.0, %v1748
      %v1750 = vpop.f32.mrb[0].mxu0
      %v1751 = vpop.f32.mrb[0].mxu0
      %v1752 = vadd.f32 0.0, %v1751
      %v1753 = vpop.f32.mrb[0].mxu0
      %1754 = vmatprep.mubr.bf16.mxu0 0
      %1755 = vmatmul.mubr.bf16.gmra.mrb[0].mxu0 %v777
      %v1756 = vpop.f32.mrb[0].mxu0
      %v1757 = vadd.f32 0.0, %v1756
      %v1758 = vpop.f32.mrb[0].mxu0
      %v1759 = vpop.f32.mrb[0].mxu0
      %v1760 = vadd.f32 0.0, %v1759
      %v1761 = vpop.f32.mrb[0].mxu0
      %1762 = vmatprep.mubr.bf16.mxu0 0
      %1763 = vmatmul.mubr.bf16.gmra.mrb[0].mxu0 %v1640
      %v1764 = vpop.f32.mrb[0].mxu0
      %v1765 = vadd.f32 0.0, %v1764
      %v1766 = vpop.f32.mrb[0].mxu0
      %v1767 = vpop.f32.mrb[0].mxu0
      %v1768 = vadd.f32 0.0, %v1767
      %v1769 = vpop.f32.mrb[0].mxu0
      %1770 = vdwg.mxu0
      %v1771 = vadd.f32 %v1628, %v1741
      %v1772 = vadd.f32 %v1629, %v1744
      %v1773 = vadd.f32 %v1630, %v1749
      %v1774 = vadd.f32 %v1631, %v1752
      %v1775 = vadd.f32 %v1632, %v1757
      %v1776 = vadd.f32 %v1633, %v1760
      %v1777 = vadd.f32 %v1634, %v1765
      %v1778 = vadd.f32 %v1635, %v1768
      %v1779 = vpack.c.bf16 %v387, %v385
      %v1780 = vpack.c.bf16 %v391, %v389
      %v1781 = vpack.c.bf16 %v395, %v393
      %v1782 = vpack.c.bf16 %v399, %v397
      %s1783 = scalar_lea.vmem %s3, 576
      %v1784 = vld [vmem:[%s1783] sm:$0xf]
      %v1785 = vld [vmem:[%s1783 + $0x4] sm:$0xf]
      %v1786 = vld [vmem:[%s1783 + $0x8] sm:$0xf]
      %v1787 = vld [vmem:[%s1783 + $0xc] sm:$0xf]
      %v1788 = vld [vmem:[%s1783 + $0x10] sm:$0xf]
      %v1789 = vld [vmem:[%s1783 + $0x14] sm:$0xf]
      %v1790 = vld [vmem:[%s1783 + $0x18] sm:$0xf]
      %v1791 = vld [vmem:[%s1783 + $0x1c] sm:$0xf]
      %v1792 = vld [vmem:[%s1783 + $0x20] sm:$0xf]
      %v1793 = vld [vmem:[%s1783 + $0x24] sm:$0xf]
      %v1794 = vld [vmem:[%s1783 + $0x28] sm:$0xf]
      %v1795 = vld [vmem:[%s1783 + $0x2c] sm:$0xf]
      %v1796 = vld [vmem:[%s1783 + $0x30] sm:$0xf]
      %v1797 = vld [vmem:[%s1783 + $0x34] sm:$0xf]
      %v1798 = vld [vmem:[%s1783 + $0x38] sm:$0xf]
      %v1799 = vld [vmem:[%s1783 + $0x3c] sm:$0xf]
      %v1816 = vunpack.c.l.b16 %v1784
      %v1817 = vunpack.c.l.b16 %v1785
      %v1818 = vunpack.c.l.b16 %v1786
      %v1819 = vunpack.c.l.b16 %v1787
      %v1820 = vunpack.c.l.b16 %v1788
      %v1821 = vunpack.c.l.b16 %v1789
      %v1822 = vunpack.c.l.b16 %v1790
      %v1823 = vunpack.c.l.b16 %v1791
      %v1824 = vunpack.c.l.b16 %v1792
      %v1825 = vunpack.c.l.b16 %v1793
      %v1826 = vunpack.c.l.b16 %v1794
      %v1827 = vunpack.c.l.b16 %v1795
      %v1828 = vunpack.c.l.b16 %v1796
      %v1829 = vunpack.c.l.b16 %v1797
      %v1830 = vunpack.c.l.b16 %v1798
      %v1831 = vunpack.c.l.b16 %v1799
      %v1832 = vpack.c.b16 %v1817, %v1816
      %v1833 = vpack.c.b16 %v1819, %v1818
      %v1834 = vpack.c.b16 %v1821, %v1820
      %v1835 = vpack.c.b16 %v1823, %v1822
      %v1836 = vpack.c.b16 %v1825, %v1824
      %v1837 = vpack.c.b16 %v1827, %v1826
      %v1838 = vpack.c.b16 %v1829, %v1828
      %v1839 = vpack.c.b16 %v1831, %v1830
      %1848 = vmatprep.subr.bf16.mxu0 0
      %1849 = vmatpush1.bf16.msra.mxu0 %v1832
      %1850 = vmatprep.subr.bf16.mxu0 0
      %1851 = vmatpush1.bf16.msra.mxu0 %v1833
      %1852 = vmatprep.subr.bf16.mxu0 0
      %1853 = vmatpush1.bf16.msra.mxu0 %v1834
      %1854 = vmatprep.subr.bf16.mxu0 0
      %1855 = vmatpush1.bf16.msra.mxu0 %v1835
      %1856 = vmatprep.subr.bf16.mxu0 0
      %1857 = vmatpush1.bf16.msra.mxu0 %v1836
      %1858 = vmatprep.subr.bf16.mxu0 0
      %1859 = vmatpush1.bf16.msra.mxu0 %v1837
      %1860 = vmatprep.subr.bf16.mxu0 0
      %1861 = vmatpush1.bf16.msra.mxu0 %v1838
      %1862 = vmatprep.subr.bf16.mxu0 0
      %1863 = vmatpush1.bf16.msra.mxu0 %v1839
      %1864 = vmatprep.subr.bf16.mxu0 0
      %1865 = vmatpush1.bf16.msra.mxu0 0
      %1866 = vmatprep.subr.bf16.mxu0 0
      %1867 = vmatpush1.bf16.msra.mxu0 0
      %1868 = vmatprep.subr.bf16.mxu0 0
      %1869 = vmatpush1.bf16.msra.mxu0 0
      %1870 = vmatprep.subr.bf16.mxu0 0
      %1871 = vmatpush1.bf16.msra.mxu0 0
      %1872 = vmatprep.subr.bf16.mxu0 0
      %1873 = vmatpush1.bf16.msra.mxu0 0
      %1874 = vmatprep.subr.bf16.mxu0 0
      %1875 = vmatpush1.bf16.msra.mxu0 0
      %1876 = vmatprep.subr.bf16.mxu0 0
      %1877 = vmatpush1.bf16.msra.mxu0 0
      %1878 = vmatprep.subr.bf16.mxu0 0
      %1879 = vmatpush1.bf16.msra.mxu0 0
      %1880 = vmatprep.mubr.bf16.mxu0 0
      %1881 = vmatmul.mubr.bf16.gmra.mrb[0].mxu0 %v1779
      %v1882 = vpop.f32.mrb[0].mxu0
      %v1883 = vadd.f32 0.0, %v1882
      %v1884 = vpop.f32.mrb[0].mxu0
      %v1885 = vpop.f32.mrb[0].mxu0
      %v1886 = vadd.f32 0.0, %v1885
      %v1887 = vpop.f32.mrb[0].mxu0
      %1888 = vmatprep.mubr.bf16.mxu0 0
      %1889 = vmatmul.mubr.bf16.gmra.mrb[0].mxu0 %v1780
      %v1890 = vpop.f32.mrb[0].mxu0
      %v1891 = vadd.f32 0.0, %v1890
      %v1892 = vpop.f32.mrb[0].mxu0
      %v1893 = vpop.f32.mrb[0].mxu0
      %v1894 = vadd.f32 0.0, %v1893
      %v1895 = vpop.f32.mrb[0].mxu0
      %1896 = vmatprep.mubr.bf16.mxu0 0
      %1897 = vmatmul.mubr.bf16.gmra.mrb[0].mxu0 %v1781
      %v1898 = vpop.f32.mrb[0].mxu0
      %v1899 = vadd.f32 0.0, %v1898
      %v1900 = vpop.f32.mrb[0].mxu0
      %v1901 = vpop.f32.mrb[0].mxu0
      %v1902 = vadd.f32 0.0, %v1901
      %v1903 = vpop.f32.mrb[0].mxu0
      %1904 = vmatprep.mubr.bf16.mxu0 0
      %1905 = vmatmul.mubr.bf16.gmra.mrb[0].mxu0 %v1782
      %v1906 = vpop.f32.mrb[0].mxu0
      %v1907 = vadd.f32 0.0, %v1906
      %v1908 = vpop.f32.mrb[0].mxu0
      %v1909 = vpop.f32.mrb[0].mxu0
      %v1910 = vadd.f32 0.0, %v1909
      %v1911 = vpop.f32.mrb[0].mxu0
      %1912 = vdwg.mxu0
      %v1913 = vadd.f32 %v1771, %v1883
      %v1914 = vadd.f32 %v1772, %v1886
      %v1915 = vadd.f32 %v1773, %v1891
      %v1916 = vadd.f32 %v1774, %v1894
      %v1917 = vadd.f32 %v1775, %v1899
      %v1918 = vadd.f32 %v1776, %v1902
      %v1919 = vadd.f32 %v1777, %v1907
      %v1920 = vadd.f32 %v1778, %v1910
      %v1937 = vrot.slane %v385, 1
      %v1938 = vrot.slane %v386, 1
      %v1939 = vsel %vm461, %v1937, %v1938
      %v1940 = vrot.slane %v387, 1
      %v1941 = vrot.slane %v388, 1
      %v1942 = vsel %vm461, %v1940, %v1941
      %v1943 = vrot.slane %v389, 1
      %v1944 = vrot.slane %v390, 1
      %v1945 = vsel %vm461, %v1943, %v1944
      %v1946 = vrot.slane %v391, 1
      %v1947 = vrot.slane %v392, 1
      %v1948 = vsel %vm461, %v1946, %v1947
      %v1949 = vrot.slane %v393, 1
      %v1950 = vrot.slane %v394, 1
      %v1951 = vsel %vm461, %v1949, %v1950
      %v1952 = vrot.slane %v395, 1
      %v1953 = vrot.slane %v396, 1
      %v1954 = vsel %vm461, %v1952, %v1953
      %v1955 = vrot.slane %v397, 1
      %v1956 = vrot.slane %v398, 1
      %v1957 = vsel %vm461, %v1955, %v1956
      %v1958 = vrot.slane %v399, 1
      %v1959 = vrot.slane %v400, 1
      %v1960 = vsel %vm461, %v1958, %v1959
      %v1969 = vpack.c.bf16 %v1942, %v1939
      %v1970 = vpack.c.bf16 %v1948, %v1945
      %v1971 = vpack.c.bf16 %v1954, %v1951
      %v1972 = vpack.c.bf16 %v1960, %v1957
      %s1973 = scalar_lea.vmem %s3, 640
      %v1974 = vld [vmem:[%s1973] sm:$0xf]
      %v1975 = vld [vmem:[%s1973 + $0x4] sm:$0xf]
      %v1976 = vld [vmem:[%s1973 + $0x8] sm:$0xf]
      %v1977 = vld [vmem:[%s1973 + $0xc] sm:$0xf]
      %v1978 = vld [vmem:[%s1973 + $0x10] sm:$0xf]
      %v1979 = vld [vmem:[%s1973 + $0x14] sm:$0xf]
      %v1980 = vld [vmem:[%s1973 + $0x18] sm:$0xf]
      %v1981 = vld [vmem:[%s1973 + $0x1c] sm:$0xf]
      %v1982 = vld [vmem:[%s1973 + $0x20] sm:$0xf]
      %v1983 = vld [vmem:[%s1973 + $0x24] sm:$0xf]
      %v1984 = vld [vmem:[%s1973 + $0x28] sm:$0xf]
      %v1985 = vld [vmem:[%s1973 + $0x2c] sm:$0xf]
      %v1986 = vld [vmem:[%s1973 + $0x30] sm:$0xf]
      %v1987 = vld [vmem:[%s1973 + $0x34] sm:$0xf]
      %v1988 = vld [vmem:[%s1973 + $0x38] sm:$0xf]
      %v1989 = vld [vmem:[%s1973 + $0x3c] sm:$0xf]
      %v2006 = vunpack.c.l.b16 %v1974
      %v2007 = vunpack.c.l.b16 %v1975
      %v2008 = vunpack.c.l.b16 %v1976
      %v2009 = vunpack.c.l.b16 %v1977
      %v2010 = vunpack.c.l.b16 %v1978
      %v2011 = vunpack.c.l.b16 %v1979
      %v2012 = vunpack.c.l.b16 %v1980
      %v2013 = vunpack.c.l.b16 %v1981
      %v2014 = vunpack.c.l.b16 %v1982
      %v2015 = vunpack.c.l.b16 %v1983
      %v2016 = vunpack.c.l.b16 %v1984
      %v2017 = vunpack.c.l.b16 %v1985
      %v2018 = vunpack.c.l.b16 %v1986
      %v2019 = vunpack.c.l.b16 %v1987
      %v2020 = vunpack.c.l.b16 %v1988
      %v2021 = vunpack.c.l.b16 %v1989
      %v2022 = vpack.c.b16 %v2007, %v2006
      %v2023 = vpack.c.b16 %v2009, %v2008
      %v2024 = vpack.c.b16 %v2011, %v2010
      %v2025 = vpack.c.b16 %v2013, %v2012
      %v2026 = vpack.c.b16 %v2015, %v2014
      %v2027 = vpack.c.b16 %v2017, %v2016
      %v2028 = vpack.c.b16 %v2019, %v2018
      %v2029 = vpack.c.b16 %v2021, %v2020
      %2038 = vmatprep.subr.bf16.mxu0 0
      %2039 = vmatpush1.bf16.msra.mxu0 %v2022
      %2040 = vmatprep.subr.bf16.mxu0 0
      %2041 = vmatpush1.bf16.msra.mxu0 %v2023
      %2042 = vmatprep.subr.bf16.mxu0 0
      %2043 = vmatpush1.bf16.msra.mxu0 %v2024
      %2044 = vmatprep.subr.bf16.mxu0 0
      %2045 = vmatpush1.bf16.msra.mxu0 %v2025
      %2046 = vmatprep.subr.bf16.mxu0 0
      %2047 = vmatpush1.bf16.msra.mxu0 %v2026
      %2048 = vmatprep.subr.bf16.mxu0 0
      %2049 = vmatpush1.bf16.msra.mxu0 %v2027
      %2050 = vmatprep.subr.bf16.mxu0 0
      %2051 = vmatpush1.bf16.msra.mxu0 %v2028
      %2052 = vmatprep.subr.bf16.mxu0 0
      %2053 = vmatpush1.bf16.msra.mxu0 %v2029
      %2054 = vmatprep.subr.bf16.mxu0 0
      %2055 = vmatpush1.bf16.msra.mxu0 0
      %2056 = vmatprep.subr.bf16.mxu0 0
      %2057 = vmatpush1.bf16.msra.mxu0 0
      %2058 = vmatprep.subr.bf16.mxu0 0
      %2059 = vmatpush1.bf16.msra.mxu0 0
      %2060 = vmatprep.subr.bf16.mxu0 0
      %2061 = vmatpush1.bf16.msra.mxu0 0
      %2062 = vmatprep.subr.bf16.mxu0 0
      %2063 = vmatpush1.bf16.msra.mxu0 0
      %2064 = vmatprep.subr.bf16.mxu0 0
      %2065 = vmatpush1.bf16.msra.mxu0 0
      %2066 = vmatprep.subr.bf16.mxu0 0
      %2067 = vmatpush1.bf16.msra.mxu0 0
      %2068 = vmatprep.subr.bf16.mxu0 0
      %2069 = vmatpush1.bf16.msra.mxu0 0
      %2070 = vmatprep.mubr.bf16.mxu0 0
      %2071 = vmatmul.mubr.bf16.gmra.mrb[0].mxu0 %v1969
      %v2072 = vpop.f32.mrb[0].mxu0
      %v2073 = vadd.f32 0.0, %v2072
      %v2074 = vpop.f32.mrb[0].mxu0
      %v2075 = vpop.f32.mrb[0].mxu0
      %v2076 = vadd.f32 0.0, %v2075
      %v2077 = vpop.f32.mrb[0].mxu0
      %2078 = vmatprep.mubr.bf16.mxu0 0
      %2079 = vmatmul.mubr.bf16.gmra.mrb[0].mxu0 %v1970
      %v2080 = vpop.f32.mrb[0].mxu0
      %v2081 = vadd.f32 0.0, %v2080
      %v2082 = vpop.f32.mrb[0].mxu0
      %v2083 = vpop.f32.mrb[0].mxu0
      %v2084 = vadd.f32 0.0, %v2083
      %v2085 = vpop.f32.mrb[0].mxu0
      %2086 = vmatprep.mubr.bf16.mxu0 0
      %2087 = vmatmul.mubr.bf16.gmra.mrb[0].mxu0 %v1971
      %v2088 = vpop.f32.mrb[0].mxu0
      %v2089 = vadd.f32 0.0, %v2088
      %v2090 = vpop.f32.mrb[0].mxu0
      %v2091 = vpop.f32.mrb[0].mxu0
      %v2092 = vadd.f32 0.0, %v2091
      %v2093 = vpop.f32.mrb[0].mxu0
      %2094 = vmatprep.mubr.bf16.mxu0 0
      %2095 = vmatmul.mubr.bf16.gmra.mrb[0].mxu0 %v1972
      %v2096 = vpop.f32.mrb[0].mxu0
      %v2097 = vadd.f32 0.0, %v2096
      %v2098 = vpop.f32.mrb[0].mxu0
      %v2099 = vpop.f32.mrb[0].mxu0
      %v2100 = vadd.f32 0.0, %v2099
      %v2101 = vpop.f32.mrb[0].mxu0
      %2102 = vdwg.mxu0
      %v2103 = vadd.f32 %v1913, %v2073
      %v2104 = vadd.f32 %v1914, %v2076
      %v2105 = vadd.f32 %v1915, %v2081
      %v2106 = vadd.f32 %v1916, %v2084
      %v2107 = vadd.f32 %v1917, %v2089
      %v2108 = vadd.f32 %v1918, %v2092
      %v2109 = vadd.f32 %v1919, %v2097
      %v2110 = vadd.f32 %v1920, %v2100
      %v2111 = vrot.slane %v385, 2
      %v2112 = vrot.slane %v386, 2
      %v2113 = vsel %vm741, %v2111, %v2112
      %v2114 = vrot.slane %v387, 2
      %v2115 = vrot.slane %v388, 2
      %v2116 = vsel %vm741, %v2114, %v2115
      %v2117 = vrot.slane %v389, 2
      %v2118 = vrot.slane %v390, 2
      %v2119 = vsel %vm741, %v2117, %v2118
      %v2120 = vrot.slane %v391, 2
      %v2121 = vrot.slane %v392, 2
      %v2122 = vsel %vm741, %v2120, %v2121
      %v2123 = vrot.slane %v393, 2
      %v2124 = vrot.slane %v394, 2
      %v2125 = vsel %vm741, %v2123, %v2124
      %v2126 = vrot.slane %v395, 2
      %v2127 = vrot.slane %v396, 2
      %v2128 = vsel %vm741, %v2126, %v2127
      %v2129 = vrot.slane %v397, 2
      %v2130 = vrot.slane %v398, 2
      %v2131 = vsel %vm741, %v2129, %v2130
      %v2132 = vrot.slane %v399, 2
      %v2133 = vrot.slane %v400, 2
      %v2134 = vsel %vm741, %v2132, %v2133
      %v2143 = vpack.c.bf16 %v2116, %v2113
      %v2144 = vpack.c.bf16 %v2122, %v2119
      %v2145 = vpack.c.bf16 %v2128, %v2125
      %v2146 = vpack.c.bf16 %v2134, %v2131
      %s2147 = scalar_lea.vmem %s3, 704
      %v2148 = vld [vmem:[%s2147] sm:$0xf]
      %v2149 = vld [vmem:[%s2147 + $0x4] sm:$0xf]
      %v2150 = vld [vmem:[%s2147 + $0x8] sm:$0xf]
      %v2151 = vld [vmem:[%s2147 + $0xc] sm:$0xf]
      %v2152 = vld [vmem:[%s2147 + $0x10] sm:$0xf]
      %v2153 = vld [vmem:[%s2147 + $0x14] sm:$0xf]
      %v2154 = vld [vmem:[%s2147 + $0x18] sm:$0xf]
      %v2155 = vld [vmem:[%s2147 + $0x1c] sm:$0xf]
      %v2156 = vld [vmem:[%s2147 + $0x20] sm:$0xf]
      %v2157 = vld [vmem:[%s2147 + $0x24] sm:$0xf]
      %v2158 = vld [vmem:[%s2147 + $0x28] sm:$0xf]
      %v2159 = vld [vmem:[%s2147 + $0x2c] sm:$0xf]
      %v2160 = vld [vmem:[%s2147 + $0x30] sm:$0xf]
      %v2161 = vld [vmem:[%s2147 + $0x34] sm:$0xf]
      %v2162 = vld [vmem:[%s2147 + $0x38] sm:$0xf]
      %v2163 = vld [vmem:[%s2147 + $0x3c] sm:$0xf]
      %v2180 = vunpack.c.l.b16 %v2148
      %v2181 = vunpack.c.l.b16 %v2149
      %v2182 = vunpack.c.l.b16 %v2150
      %v2183 = vunpack.c.l.b16 %v2151
      %v2184 = vunpack.c.l.b16 %v2152
      %v2185 = vunpack.c.l.b16 %v2153
      %v2186 = vunpack.c.l.b16 %v2154
      %v2187 = vunpack.c.l.b16 %v2155
      %v2188 = vunpack.c.l.b16 %v2156
      %v2189 = vunpack.c.l.b16 %v2157
      %v2190 = vunpack.c.l.b16 %v2158
      %v2191 = vunpack.c.l.b16 %v2159
      %v2192 = vunpack.c.l.b16 %v2160
      %v2193 = vunpack.c.l.b16 %v2161
      %v2194 = vunpack.c.l.b16 %v2162
      %v2195 = vunpack.c.l.b16 %v2163
      %v2196 = vpack.c.b16 %v2181, %v2180
      %v2197 = vpack.c.b16 %v2183, %v2182
      %v2198 = vpack.c.b16 %v2185, %v2184
      %v2199 = vpack.c.b16 %v2187, %v2186
      %v2200 = vpack.c.b16 %v2189, %v2188
      %v2201 = vpack.c.b16 %v2191, %v2190
      %v2202 = vpack.c.b16 %v2193, %v2192
      %v2203 = vpack.c.b16 %v2195, %v2194
      %2212 = vmatprep.subr.bf16.mxu0 0
      %2213 = vmatpush1.bf16.msra.mxu0 %v2196
      %2214 = vmatprep.subr.bf16.mxu0 0
      %2215 = vmatpush1.bf16.msra.mxu0 %v2197
      %2216 = vmatprep.subr.bf16.mxu0 0
      %2217 = vmatpush1.bf16.msra.mxu0 %v2198
      %2218 = vmatprep.subr.bf16.mxu0 0
      %2219 = vmatpush1.bf16.msra.mxu0 %v2199
      %2220 = vmatprep.subr.bf16.mxu0 0
      %2221 = vmatpush1.bf16.msra.mxu0 %v2200
      %2222 = vmatprep.subr.bf16.mxu0 0
      %2223 = vmatpush1.bf16.msra.mxu0 %v2201
      %2224 = vmatprep.subr.bf16.mxu0 0
      %2225 = vmatpush1.bf16.msra.mxu0 %v2202
      %2226 = vmatprep.subr.bf16.mxu0 0
      %2227 = vmatpush1.bf16.msra.mxu0 %v2203
      %2228 = vmatprep.subr.bf16.mxu0 0
      %2229 = vmatpush1.bf16.msra.mxu0 0
      %2230 = vmatprep.subr.bf16.mxu0 0
      %2231 = vmatpush1.bf16.msra.mxu0 0
      %2232 = vmatprep.subr.bf16.mxu0 0
      %2233 = vmatpush1.bf16.msra.mxu0 0
      %2234 = vmatprep.subr.bf16.mxu0 0
      %2235 = vmatpush1.bf16.msra.mxu0 0
      %2236 = vmatprep.subr.bf16.mxu0 0
      %2237 = vmatpush1.bf16.msra.mxu0 0
      %2238 = vmatprep.subr.bf16.mxu0 0
      %2239 = vmatpush1.bf16.msra.mxu0 0
      %2240 = vmatprep.subr.bf16.mxu0 0
      %2241 = vmatpush1.bf16.msra.mxu0 0
      %2242 = vmatprep.subr.bf16.mxu0 0
      %2243 = vmatpush1.bf16.msra.mxu0 0
      %2244 = vmatprep.mubr.bf16.mxu0 0
      %2245 = vmatmul.mubr.bf16.gmra.mrb[0].mxu0 %v2143
      %v2246 = vpop.f32.mrb[0].mxu0
      %v2247 = vadd.f32 0.0, %v2246
      %v2248 = vpop.f32.mrb[0].mxu0
      %v2249 = vpop.f32.mrb[0].mxu0
      %v2250 = vadd.f32 0.0, %v2249
      %v2251 = vpop.f32.mrb[0].mxu0
      %2252 = vmatprep.mubr.bf16.mxu0 0
      %2253 = vmatmul.mubr.bf16.gmra.mrb[0].mxu0 %v2144
      %v2254 = vpop.f32.mrb[0].mxu0
      %v2255 = vadd.f32 0.0, %v2254
      %v2256 = vpop.f32.mrb[0].mxu0
      %v2257 = vpop.f32.mrb[0].mxu0
      %v2258 = vadd.f32 0.0, %v2257
      %v2259 = vpop.f32.mrb[0].mxu0
      %2260 = vmatprep.mubr.bf16.mxu0 0
      %2261 = vmatmul.mubr.bf16.gmra.mrb[0].mxu0 %v2145
      %v2262 = vpop.f32.mrb[0].mxu0
      %v2263 = vadd.f32 0.0, %v2262
      %v2264 = vpop.f32.mrb[0].mxu0
      %v2265 = vpop.f32.mrb[0].mxu0
      %v2266 = vadd.f32 0.0, %v2265
      %v2267 = vpop.f32.mrb[0].mxu0
      %2268 = vmatprep.mubr.bf16.mxu0 0
      %2269 = vmatmul.mubr.bf16.gmra.mrb[0].mxu0 %v2146
      %v2270 = vpop.f32.mrb[0].mxu0
      %v2271 = vadd.f32 0.0, %v2270
      %v2272 = vpop.f32.mrb[0].mxu0
      %v2273 = vpop.f32.mrb[0].mxu0
      %v2274 = vadd.f32 0.0, %v2273
      %v2275 = vpop.f32.mrb[0].mxu0
      %2276 = vdwg.mxu0
      %v2277 = vadd.f32 %v2103, %v2247
      %v2278 = vadd.f32 %v2104, %v2250
      %v2279 = vadd.f32 %v2105, %v2255
      %v2280 = vadd.f32 %v2106, %v2258
      %v2281 = vadd.f32 %v2107, %v2263
      %v2282 = vadd.f32 %v2108, %v2266
      %v2283 = vadd.f32 %v2109, %v2271
      %v2284 = vadd.f32 %v2110, %v2274
      %v2285 = vpack.c.bf16 %v389, %v387
      %v2286 = vpack.c.bf16 %v393, %v391
      %v2287 = vpack.c.bf16 %v397, %v395
      %v2288 = vpack.c.bf16 %v401, %v399
      %s2289 = scalar_lea.vmem %s3, 768
      %v2290 = vld [vmem:[%s2289] sm:$0xf]
      %v2291 = vld [vmem:[%s2289 + $0x4] sm:$0xf]
      %v2292 = vld [vmem:[%s2289 + $0x8] sm:$0xf]
      %v2293 = vld [vmem:[%s2289 + $0xc] sm:$0xf]
      %v2294 = vld [vmem:[%s2289 + $0x10] sm:$0xf]
      %v2295 = vld [vmem:[%s2289 + $0x14] sm:$0xf]
      %v2296 = vld [vmem:[%s2289 + $0x18] sm:$0xf]
      %v2297 = vld [vmem:[%s2289 + $0x1c] sm:$0xf]
      %v2298 = vld [vmem:[%s2289 + $0x20] sm:$0xf]
      %v2299 = vld [vmem:[%s2289 + $0x24] sm:$0xf]
      %v2300 = vld [vmem:[%s2289 + $0x28] sm:$0xf]
      %v2301 = vld [vmem:[%s2289 + $0x2c] sm:$0xf]
      %v2302 = vld [vmem:[%s2289 + $0x30] sm:$0xf]
      %v2303 = vld [vmem:[%s2289 + $0x34] sm:$0xf]
      %v2304 = vld [vmem:[%s2289 + $0x38] sm:$0xf]
      %v2305 = vld [vmem:[%s2289 + $0x3c] sm:$0xf]
      %v2322 = vunpack.c.l.b16 %v2290
      %v2323 = vunpack.c.l.b16 %v2291
      %v2324 = vunpack.c.l.b16 %v2292
      %v2325 = vunpack.c.l.b16 %v2293
      %v2326 = vunpack.c.l.b16 %v2294
      %v2327 = vunpack.c.l.b16 %v2295
      %v2328 = vunpack.c.l.b16 %v2296
      %v2329 = vunpack.c.l.b16 %v2297
      %v2330 = vunpack.c.l.b16 %v2298
      %v2331 = vunpack.c.l.b16 %v2299
      %v2332 = vunpack.c.l.b16 %v2300
      %v2333 = vunpack.c.l.b16 %v2301
      %v2334 = vunpack.c.l.b16 %v2302
      %v2335 = vunpack.c.l.b16 %v2303
      %v2336 = vunpack.c.l.b16 %v2304
      %v2337 = vunpack.c.l.b16 %v2305
      %v2338 = vpack.c.b16 %v2323, %v2322
      %v2339 = vpack.c.b16 %v2325, %v2324
      %v2340 = vpack.c.b16 %v2327, %v2326
      %v2341 = vpack.c.b16 %v2329, %v2328
      %v2342 = vpack.c.b16 %v2331, %v2330
      %v2343 = vpack.c.b16 %v2333, %v2332
      %v2344 = vpack.c.b16 %v2335, %v2334
      %v2345 = vpack.c.b16 %v2337, %v2336
      %2354 = vmatprep.subr.bf16.mxu0 0
      %2355 = vmatpush1.bf16.msra.mxu0 %v2338
      %2356 = vmatprep.subr.bf16.mxu0 0
      %2357 = vmatpush1.bf16.msra.mxu0 %v2339
      %2358 = vmatprep.subr.bf16.mxu0 0
      %2359 = vmatpush1.bf16.msra.mxu0 %v2340
      %2360 = vmatprep.subr.bf16.mxu0 0
      %2361 = vmatpush1.bf16.msra.mxu0 %v2341
      %2362 = vmatprep.subr.bf16.mxu0 0
      %2363 = vmatpush1.bf16.msra.mxu0 %v2342
      %2364 = vmatprep.subr.bf16.mxu0 0
      %2365 = vmatpush1.bf16.msra.mxu0 %v2343
      %2366 = vmatprep.subr.bf16.mxu0 0
      %2367 = vmatpush1.bf16.msra.mxu0 %v2344
      %2368 = vmatprep.subr.bf16.mxu0 0
      %2369 = vmatpush1.bf16.msra.mxu0 %v2345
      %2370 = vmatprep.subr.bf16.mxu0 0
      %2371 = vmatpush1.bf16.msra.mxu0 0
      %2372 = vmatprep.subr.bf16.mxu0 0
      %2373 = vmatpush1.bf16.msra.mxu0 0
      %2374 = vmatprep.subr.bf16.mxu0 0
      %2375 = vmatpush1.bf16.msra.mxu0 0
      %2376 = vmatprep.subr.bf16.mxu0 0
      %2377 = vmatpush1.bf16.msra.mxu0 0
      %2378 = vmatprep.subr.bf16.mxu0 0
      %2379 = vmatpush1.bf16.msra.mxu0 0
      %2380 = vmatprep.subr.bf16.mxu0 0
      %2381 = vmatpush1.bf16.msra.mxu0 0
      %2382 = vmatprep.subr.bf16.mxu0 0
      %2383 = vmatpush1.bf16.msra.mxu0 0
      %2384 = vmatprep.subr.bf16.mxu0 0
      %2385 = vmatpush1.bf16.msra.mxu0 0
      %2386 = vmatprep.mubr.bf16.mxu0 0
      %2387 = vmatmul.mubr.bf16.gmra.mrb[0].mxu0 %v2285
      %v2388 = vpop.f32.mrb[0].mxu0
      %v2389 = vadd.f32 0.0, %v2388
      %v2390 = vpop.f32.mrb[0].mxu0
      %v2391 = vpop.f32.mrb[0].mxu0
      %v2392 = vadd.f32 0.0, %v2391
      %v2393 = vpop.f32.mrb[0].mxu0
      %2394 = vmatprep.mubr.bf16.mxu0 0
      %2395 = vmatmul.mubr.bf16.gmra.mrb[0].mxu0 %v2286
      %v2396 = vpop.f32.mrb[0].mxu0
      %v2397 = vadd.f32 0.0, %v2396
      %v2398 = vpop.f32.mrb[0].mxu0
      %v2399 = vpop.f32.mrb[0].mxu0
      %v2400 = vadd.f32 0.0, %v2399
      %v2401 = vpop.f32.mrb[0].mxu0
      %2402 = vmatprep.mubr.bf16.mxu0 0
      %2403 = vmatmul.mubr.bf16.gmra.mrb[0].mxu0 %v2287
      %v2404 = vpop.f32.mrb[0].mxu0
      %v2405 = vadd.f32 0.0, %v2404
      %v2406 = vpop.f32.mrb[0].mxu0
      %v2407 = vpop.f32.mrb[0].mxu0
      %v2408 = vadd.f32 0.0, %v2407
      %v2409 = vpop.f32.mrb[0].mxu0
      %2410 = vmatprep.mubr.bf16.mxu0 0
      %2411 = vmatmul.mubr.bf16.gmra.mrb[0].mxu0 %v2288
      %v2412 = vpop.f32.mrb[0].mxu0
      %v2413 = vadd.f32 0.0, %v2412
      %v2414 = vpop.f32.mrb[0].mxu0
      %v2415 = vpop.f32.mrb[0].mxu0
      %v2416 = vadd.f32 0.0, %v2415
      %v2417 = vpop.f32.mrb[0].mxu0
      %2418 = vdwg.mxu0
      %v2419 = vadd.f32 %v2277, %v2389
      %v2420 = vadd.f32 %v2278, %v2392
      %v2421 = vadd.f32 %v2279, %v2397
      %v2422 = vadd.f32 %v2280, %v2400
      %v2423 = vadd.f32 %v2281, %v2405
      %v2424 = vadd.f32 %v2282, %v2408
      %v2425 = vadd.f32 %v2283, %v2413
      %v2426 = vadd.f32 %v2284, %v2416
      %v2429 = vrot.slane %v401, 1
      %v2430 = vrot.slane %v402, 1
      %v2431 = vsel %vm461, %v2429, %v2430
      %v2433 = vpack.c.bf16 %v1945, %v1942
      %v2434 = vpack.c.bf16 %v1951, %v1948
      %v2435 = vpack.c.bf16 %v1957, %v1954
      %v2436 = vpack.c.bf16 %v2431, %v1960
      %s2437 = scalar_lea.vmem %s3, 832
      %v2438 = vld [vmem:[%s2437] sm:$0xf]
      %v2439 = vld [vmem:[%s2437 + $0x4] sm:$0xf]
      %v2440 = vld [vmem:[%s2437 + $0x8] sm:$0xf]
      %v2441 = vld [vmem:[%s2437 + $0xc] sm:$0xf]
      %v2442 = vld [vmem:[%s2437 + $0x10] sm:$0xf]
      %v2443 = vld [vmem:[%s2437 + $0x14] sm:$0xf]
      %v2444 = vld [vmem:[%s2437 + $0x18] sm:$0xf]
      %v2445 = vld [vmem:[%s2437 + $0x1c] sm:$0xf]
      %v2446 = vld [vmem:[%s2437 + $0x20] sm:$0xf]
      %v2447 = vld [vmem:[%s2437 + $0x24] sm:$0xf]
      %v2448 = vld [vmem:[%s2437 + $0x28] sm:$0xf]
      %v2449 = vld [vmem:[%s2437 + $0x2c] sm:$0xf]
      %v2450 = vld [vmem:[%s2437 + $0x30] sm:$0xf]
      %v2451 = vld [vmem:[%s2437 + $0x34] sm:$0xf]
      %v2452 = vld [vmem:[%s2437 + $0x38] sm:$0xf]
      %v2453 = vld [vmem:[%s2437 + $0x3c] sm:$0xf]
      %v2470 = vunpack.c.l.b16 %v2438
      %v2471 = vunpack.c.l.b16 %v2439
      %v2472 = vunpack.c.l.b16 %v2440
      %v2473 = vunpack.c.l.b16 %v2441
      %v2474 = vunpack.c.l.b16 %v2442
      %v2475 = vunpack.c.l.b16 %v2443
      %v2476 = vunpack.c.l.b16 %v2444
      %v2477 = vunpack.c.l.b16 %v2445
      %v2478 = vunpack.c.l.b16 %v2446
      %v2479 = vunpack.c.l.b16 %v2447
      %v2480 = vunpack.c.l.b16 %v2448
      %v2481 = vunpack.c.l.b16 %v2449
      %v2482 = vunpack.c.l.b16 %v2450
      %v2483 = vunpack.c.l.b16 %v2451
      %v2484 = vunpack.c.l.b16 %v2452
      %v2485 = vunpack.c.l.b16 %v2453
      %v2486 = vpack.c.b16 %v2471, %v2470
      %v2487 = vpack.c.b16 %v2473, %v2472
      %v2488 = vpack.c.b16 %v2475, %v2474
      %v2489 = vpack.c.b16 %v2477, %v2476
      %v2490 = vpack.c.b16 %v2479, %v2478
      %v2491 = vpack.c.b16 %v2481, %v2480
      %v2492 = vpack.c.b16 %v2483, %v2482
      %v2493 = vpack.c.b16 %v2485, %v2484
      %2502 = vmatprep.subr.bf16.mxu0 0
      %2503 = vmatpush1.bf16.msra.mxu0 %v2486
      %2504 = vmatprep.subr.bf16.mxu0 0
      %2505 = vmatpush1.bf16.msra.mxu0 %v2487
      %2506 = vmatprep.subr.bf16.mxu0 0
      %2507 = vmatpush1.bf16.msra.mxu0 %v2488
      %2508 = vmatprep.subr.bf16.mxu0 0
      %2509 = vmatpush1.bf16.msra.mxu0 %v2489
      %2510 = vmatprep.subr.bf16.mxu0 0
      %2511 = vmatpush1.bf16.msra.mxu0 %v2490
      %2512 = vmatprep.subr.bf16.mxu0 0
      %2513 = vmatpush1.bf16.msra.mxu0 %v2491
      %2514 = vmatprep.subr.bf16.mxu0 0
      %2515 = vmatpush1.bf16.msra.mxu0 %v2492
      %2516 = vmatprep.subr.bf16.mxu0 0
      %2517 = vmatpush1.bf16.msra.mxu0 %v2493
      %2518 = vmatprep.subr.bf16.mxu0 0
      %2519 = vmatpush1.bf16.msra.mxu0 0
      %2520 = vmatprep.subr.bf16.mxu0 0
      %2521 = vmatpush1.bf16.msra.mxu0 0
      %2522 = vmatprep.subr.bf16.mxu0 0
      %2523 = vmatpush1.bf16.msra.mxu0 0
      %2524 = vmatprep.subr.bf16.mxu0 0
      %2525 = vmatpush1.bf16.msra.mxu0 0
      %2526 = vmatprep.subr.bf16.mxu0 0
      %2527 = vmatpush1.bf16.msra.mxu0 0
      %2528 = vmatprep.subr.bf16.mxu0 0
      %2529 = vmatpush1.bf16.msra.mxu0 0
      %2530 = vmatprep.subr.bf16.mxu0 0
      %2531 = vmatpush1.bf16.msra.mxu0 0
      %2532 = vmatprep.subr.bf16.mxu0 0
      %2533 = vmatpush1.bf16.msra.mxu0 0
      %2534 = vmatprep.mubr.bf16.mxu0 0
      %2535 = vmatmul.mubr.bf16.gmra.mrb[0].mxu0 %v2433
      %v2536 = vpop.f32.mrb[0].mxu0
      %v2537 = vadd.f32 0.0, %v2536
      %v2538 = vpop.f32.mrb[0].mxu0
      %v2539 = vpop.f32.mrb[0].mxu0
      %v2540 = vadd.f32 0.0, %v2539
      %v2541 = vpop.f32.mrb[0].mxu0
      %2542 = vmatprep.mubr.bf16.mxu0 0
      %2543 = vmatmul.mubr.bf16.gmra.mrb[0].mxu0 %v2434
      %v2544 = vpop.f32.mrb[0].mxu0
      %v2545 = vadd.f32 0.0, %v2544
      %v2546 = vpop.f32.mrb[0].mxu0
      %v2547 = vpop.f32.mrb[0].mxu0
      %v2548 = vadd.f32 0.0, %v2547
      %v2549 = vpop.f32.mrb[0].mxu0
      %2550 = vmatprep.mubr.bf16.mxu0 0
      %2551 = vmatmul.mubr.bf16.gmra.mrb[0].mxu0 %v2435
      %v2552 = vpop.f32.mrb[0].mxu0
      %v2553 = vadd.f32 0.0, %v2552
      %v2554 = vpop.f32.mrb[0].mxu0
      %v2555 = vpop.f32.mrb[0].mxu0
      %v2556 = vadd.f32 0.0, %v2555
      %v2557 = vpop.f32.mrb[0].mxu0
      %2558 = vmatprep.mubr.bf16.mxu0 0
      %2559 = vmatmul.mubr.bf16.gmra.mrb[0].mxu0 %v2436
      %v2560 = vpop.f32.mrb[0].mxu0
      %v2561 = vadd.f32 0.0, %v2560
      %v2562 = vpop.f32.mrb[0].mxu0
      %v2563 = vpop.f32.mrb[0].mxu0
      %v2564 = vadd.f32 0.0, %v2563
      %v2565 = vpop.f32.mrb[0].mxu0
      %2566 = vdwg.mxu0
      %v2567 = vadd.f32 %v2419, %v2537
      %v2568 = vadd.f32 %v2420, %v2540
      %v2569 = vadd.f32 %v2421, %v2545
      %v2570 = vadd.f32 %v2422, %v2548
      %v2571 = vadd.f32 %v2423, %v2553
      %v2572 = vadd.f32 %v2424, %v2556
      %v2573 = vadd.f32 %v2425, %v2561
      %v2574 = vadd.f32 %v2426, %v2564
      %v2575 = vrot.slane %v401, 2
      %v2576 = vrot.slane %v402, 2
      %v2577 = vsel %vm741, %v2575, %v2576
      %v2579 = vpack.c.bf16 %v2119, %v2116
      %v2580 = vpack.c.bf16 %v2125, %v2122
      %v2581 = vpack.c.bf16 %v2131, %v2128
      %v2582 = vpack.c.bf16 %v2577, %v2134
      %s2583 = scalar_lea.vmem %s3, 896
      %v2584 = vld [vmem:[%s2583] sm:$0xf]
      %v2585 = vld [vmem:[%s2583 + $0x4] sm:$0xf]
      %v2586 = vld [vmem:[%s2583 + $0x8] sm:$0xf]
      %v2587 = vld [vmem:[%s2583 + $0xc] sm:$0xf]
      %v2588 = vld [vmem:[%s2583 + $0x10] sm:$0xf]
      %v2589 = vld [vmem:[%s2583 + $0x14] sm:$0xf]
      %v2590 = vld [vmem:[%s2583 + $0x18] sm:$0xf]
      %v2591 = vld [vmem:[%s2583 + $0x1c] sm:$0xf]
      %v2592 = vld [vmem:[%s2583 + $0x20] sm:$0xf]
      %v2593 = vld [vmem:[%s2583 + $0x24] sm:$0xf]
      %v2594 = vld [vmem:[%s2583 + $0x28] sm:$0xf]
      %v2595 = vld [vmem:[%s2583 + $0x2c] sm:$0xf]
      %v2596 = vld [vmem:[%s2583 + $0x30] sm:$0xf]
      %v2597 = vld [vmem:[%s2583 + $0x34] sm:$0xf]
      %v2598 = vld [vmem:[%s2583 + $0x38] sm:$0xf]
      %v2599 = vld [vmem:[%s2583 + $0x3c] sm:$0xf]
      %v2616 = vunpack.c.l.b16 %v2584
      %v2617 = vunpack.c.l.b16 %v2585
      %v2618 = vunpack.c.l.b16 %v2586
      %v2619 = vunpack.c.l.b16 %v2587
      %v2620 = vunpack.c.l.b16 %v2588
      %v2621 = vunpack.c.l.b16 %v2589
      %v2622 = vunpack.c.l.b16 %v2590
      %v2623 = vunpack.c.l.b16 %v2591
      %v2624 = vunpack.c.l.b16 %v2592
      %v2625 = vunpack.c.l.b16 %v2593
      %v2626 = vunpack.c.l.b16 %v2594
      %v2627 = vunpack.c.l.b16 %v2595
      %v2628 = vunpack.c.l.b16 %v2596
      %v2629 = vunpack.c.l.b16 %v2597
      %v2630 = vunpack.c.l.b16 %v2598
      %v2631 = vunpack.c.l.b16 %v2599
      %v2632 = vpack.c.b16 %v2617, %v2616
      %v2633 = vpack.c.b16 %v2619, %v2618
      %v2634 = vpack.c.b16 %v2621, %v2620
      %v2635 = vpack.c.b16 %v2623, %v2622
      %v2636 = vpack.c.b16 %v2625, %v2624
      %v2637 = vpack.c.b16 %v2627, %v2626
      %v2638 = vpack.c.b16 %v2629, %v2628
      %v2639 = vpack.c.b16 %v2631, %v2630
      %2648 = vmatprep.subr.bf16.mxu0 0
      %2649 = vmatpush1.bf16.msra.mxu0 %v2632
      %2650 = vmatprep.subr.bf16.mxu0 0
      %2651 = vmatpush1.bf16.msra.mxu0 %v2633
      %2652 = vmatprep.subr.bf16.mxu0 0
      %2653 = vmatpush1.bf16.msra.mxu0 %v2634
      %2654 = vmatprep.subr.bf16.mxu0 0
      %2655 = vmatpush1.bf16.msra.mxu0 %v2635
      %2656 = vmatprep.subr.bf16.mxu0 0
      %2657 = vmatpush1.bf16.msra.mxu0 %v2636
      %2658 = vmatprep.subr.bf16.mxu0 0
      %2659 = vmatpush1.bf16.msra.mxu0 %v2637
      %2660 = vmatprep.subr.bf16.mxu0 0
      %2661 = vmatpush1.bf16.msra.mxu0 %v2638
      %2662 = vmatprep.subr.bf16.mxu0 0
      %2663 = vmatpush1.bf16.msra.mxu0 %v2639
      %2664 = vmatprep.subr.bf16.mxu0 0
      %2665 = vmatpush1.bf16.msra.mxu0 0
      %2666 = vmatprep.subr.bf16.mxu0 0
      %2667 = vmatpush1.bf16.msra.mxu0 0
      %2668 = vmatprep.subr.bf16.mxu0 0
      %2669 = vmatpush1.bf16.msra.mxu0 0
      %2670 = vmatprep.subr.bf16.mxu0 0
      %2671 = vmatpush1.bf16.msra.mxu0 0
      %2672 = vmatprep.subr.bf16.mxu0 0
      %2673 = vmatpush1.bf16.msra.mxu0 0
      %2674 = vmatprep.subr.bf16.mxu0 0
      %2675 = vmatpush1.bf16.msra.mxu0 0
      %2676 = vmatprep.subr.bf16.mxu0 0
      %2677 = vmatpush1.bf16.msra.mxu0 0
      %2678 = vmatprep.subr.bf16.mxu0 0
      %2679 = vmatpush1.bf16.msra.mxu0 0
      %2680 = vmatprep.mubr.bf16.mxu0 0
      %2681 = vmatmul.mubr.bf16.gmra.mrb[0].mxu0 %v2579
      %v2682 = vpop.f32.mrb[0].mxu0
      %v2683 = vadd.f32 0.0, %v2682
      %v2684 = vpop.f32.mrb[0].mxu0
      %v2685 = vpop.f32.mrb[0].mxu0
      %v2686 = vadd.f32 0.0, %v2685
      %v2687 = vpop.f32.mrb[0].mxu0
      %2688 = vmatprep.mubr.bf16.mxu0 0
      %2689 = vmatmul.mubr.bf16.gmra.mrb[0].mxu0 %v2580
      %v2690 = vpop.f32.mrb[0].mxu0
      %v2691 = vadd.f32 0.0, %v2690
      %v2692 = vpop.f32.mrb[0].mxu0
      %v2693 = vpop.f32.mrb[0].mxu0
      %v2694 = vadd.f32 0.0, %v2693
      %v2695 = vpop.f32.mrb[0].mxu0
      %2696 = vmatprep.mubr.bf16.mxu0 0
      %2697 = vmatmul.mubr.bf16.gmra.mrb[0].mxu0 %v2581
      %v2698 = vpop.f32.mrb[0].mxu0
      %v2699 = vadd.f32 0.0, %v2698
      %v2700 = vpop.f32.mrb[0].mxu0
      %v2701 = vpop.f32.mrb[0].mxu0
      %v2702 = vadd.f32 0.0, %v2701
      %v2703 = vpop.f32.mrb[0].mxu0
      %2704 = vmatprep.mubr.bf16.mxu0 0
      %2705 = vmatmul.mubr.bf16.gmra.mrb[0].mxu0 %v2582
      %v2706 = vpop.f32.mrb[0].mxu0
      %v2707 = vadd.f32 0.0, %v2706
      %v2708 = vpop.f32.mrb[0].mxu0
      %v2709 = vpop.f32.mrb[0].mxu0
      %v2710 = vadd.f32 0.0, %v2709
      %v2711 = vpop.f32.mrb[0].mxu0
      %2712 = vdwg.mxu0
      %v2713 = vadd.f32 %v2567, %v2683
      %v2714 = vadd.f32 %v2568, %v2686
      %v2715 = vadd.f32 %v2569, %v2691
      %v2716 = vadd.f32 %v2570, %v2694
      %v2717 = vadd.f32 %v2571, %v2699
      %v2718 = vadd.f32 %v2572, %v2702
      %v2719 = vadd.f32 %v2573, %v2707
      %v2720 = vadd.f32 %v2574, %v2710
      %v2721 = vpack.c.bf16 %v403, %v401
      %s2722 = scalar_lea.vmem %s3, 960
      %v2723 = vld [vmem:[%s2722] sm:$0xf]
      %v2724 = vld [vmem:[%s2722 + $0x4] sm:$0xf]
      %v2725 = vld [vmem:[%s2722 + $0x8] sm:$0xf]
      %v2726 = vld [vmem:[%s2722 + $0xc] sm:$0xf]
      %v2727 = vld [vmem:[%s2722 + $0x10] sm:$0xf]
      %v2728 = vld [vmem:[%s2722 + $0x14] sm:$0xf]
      %v2729 = vld [vmem:[%s2722 + $0x18] sm:$0xf]
      %v2730 = vld [vmem:[%s2722 + $0x1c] sm:$0xf]
      %v2731 = vld [vmem:[%s2722 + $0x20] sm:$0xf]
      %v2732 = vld [vmem:[%s2722 + $0x24] sm:$0xf]
      %v2733 = vld [vmem:[%s2722 + $0x28] sm:$0xf]
      %v2734 = vld [vmem:[%s2722 + $0x2c] sm:$0xf]
      %v2735 = vld [vmem:[%s2722 + $0x30] sm:$0xf]
      %v2736 = vld [vmem:[%s2722 + $0x34] sm:$0xf]
      %v2737 = vld [vmem:[%s2722 + $0x38] sm:$0xf]
      %v2738 = vld [vmem:[%s2722 + $0x3c] sm:$0xf]
      %v2755 = vunpack.c.l.b16 %v2723
      %v2756 = vunpack.c.l.b16 %v2724
      %v2757 = vunpack.c.l.b16 %v2725
      %v2758 = vunpack.c.l.b16 %v2726
      %v2759 = vunpack.c.l.b16 %v2727
      %v2760 = vunpack.c.l.b16 %v2728
      %v2761 = vunpack.c.l.b16 %v2729
      %v2762 = vunpack.c.l.b16 %v2730
      %v2763 = vunpack.c.l.b16 %v2731
      %v2764 = vunpack.c.l.b16 %v2732
      %v2765 = vunpack.c.l.b16 %v2733
      %v2766 = vunpack.c.l.b16 %v2734
      %v2767 = vunpack.c.l.b16 %v2735
      %v2768 = vunpack.c.l.b16 %v2736
      %v2769 = vunpack.c.l.b16 %v2737
      %v2770 = vunpack.c.l.b16 %v2738
      %v2771 = vpack.c.b16 %v2756, %v2755
      %v2772 = vpack.c.b16 %v2758, %v2757
      %v2773 = vpack.c.b16 %v2760, %v2759
      %v2774 = vpack.c.b16 %v2762, %v2761
      %v2775 = vpack.c.b16 %v2764, %v2763
      %v2776 = vpack.c.b16 %v2766, %v2765
      %v2777 = vpack.c.b16 %v2768, %v2767
      %v2778 = vpack.c.b16 %v2770, %v2769
      %2787 = vmatprep.subr.bf16.mxu0 0
      %2788 = vmatpush1.bf16.msra.mxu0 %v2771
      %2789 = vmatprep.subr.bf16.mxu0 0
      %2790 = vmatpush1.bf16.msra.mxu0 %v2772
      %2791 = vmatprep.subr.bf16.mxu0 0
      %2792 = vmatpush1.bf16.msra.mxu0 %v2773
      %2793 = vmatprep.subr.bf16.mxu0 0
      %2794 = vmatpush1.bf16.msra.mxu0 %v2774
      %2795 = vmatprep.subr.bf16.mxu0 0
      %2796 = vmatpush1.bf16.msra.mxu0 %v2775
      %2797 = vmatprep.subr.bf16.mxu0 0
      %2798 = vmatpush1.bf16.msra.mxu0 %v2776
      %2799 = vmatprep.subr.bf16.mxu0 0
      %2800 = vmatpush1.bf16.msra.mxu0 %v2777
      %2801 = vmatprep.subr.bf16.mxu0 0
      %2802 = vmatpush1.bf16.msra.mxu0 %v2778
      %2803 = vmatprep.subr.bf16.mxu0 0
      %2804 = vmatpush1.bf16.msra.mxu0 0
      %2805 = vmatprep.subr.bf16.mxu0 0
      %2806 = vmatpush1.bf16.msra.mxu0 0
      %2807 = vmatprep.subr.bf16.mxu0 0
      %2808 = vmatpush1.bf16.msra.mxu0 0
      %2809 = vmatprep.subr.bf16.mxu0 0
      %2810 = vmatpush1.bf16.msra.mxu0 0
      %2811 = vmatprep.subr.bf16.mxu0 0
      %2812 = vmatpush1.bf16.msra.mxu0 0
      %2813 = vmatprep.subr.bf16.mxu0 0
      %2814 = vmatpush1.bf16.msra.mxu0 0
      %2815 = vmatprep.subr.bf16.mxu0 0
      %2816 = vmatpush1.bf16.msra.mxu0 0
      %2817 = vmatprep.subr.bf16.mxu0 0
      %2818 = vmatpush1.bf16.msra.mxu0 0
      %2819 = vmatprep.mubr.bf16.mxu0 0
      %2820 = vmatmul.mubr.bf16.gmra.mrb[0].mxu0 %v1780
      %v2821 = vpop.f32.mrb[0].mxu0
      %v2822 = vadd.f32 0.0, %v2821
      %v2823 = vpop.f32.mrb[0].mxu0
      %v2824 = vpop.f32.mrb[0].mxu0
      %v2825 = vadd.f32 0.0, %v2824
      %v2826 = vpop.f32.mrb[0].mxu0
      %2827 = vmatprep.mubr.bf16.mxu0 0
      %2828 = vmatmul.mubr.bf16.gmra.mrb[0].mxu0 %v1781
      %v2829 = vpop.f32.mrb[0].mxu0
      %v2830 = vadd.f32 0.0, %v2829
      %v2831 = vpop.f32.mrb[0].mxu0
      %v2832 = vpop.f32.mrb[0].mxu0
      %v2833 = vadd.f32 0.0, %v2832
      %v2834 = vpop.f32.mrb[0].mxu0
      %2835 = vmatprep.mubr.bf16.mxu0 0
      %2836 = vmatmul.mubr.bf16.gmra.mrb[0].mxu0 %v1782
      %v2837 = vpop.f32.mrb[0].mxu0
      %v2838 = vadd.f32 0.0, %v2837
      %v2839 = vpop.f32.mrb[0].mxu0
      %v2840 = vpop.f32.mrb[0].mxu0
      %v2841 = vadd.f32 0.0, %v2840
      %v2842 = vpop.f32.mrb[0].mxu0
      %2843 = vmatprep.mubr.bf16.mxu0 0
      %2844 = vmatmul.mubr.bf16.gmra.mrb[0].mxu0 %v2721
      %v2845 = vpop.f32.mrb[0].mxu0
      %v2846 = vadd.f32 0.0, %v2845
      %v2847 = vpop.f32.mrb[0].mxu0
      %v2848 = vpop.f32.mrb[0].mxu0
      %v2849 = vadd.f32 0.0, %v2848
      %v2850 = vpop.f32.mrb[0].mxu0
      %2851 = vdwg.mxu0
      %v2852 = vadd.f32 %v2713, %v2822
      %v2853 = vadd.f32 %v2714, %v2825
      %v2854 = vadd.f32 %v2715, %v2830
      %v2855 = vadd.f32 %v2716, %v2833
      %v2856 = vadd.f32 %v2717, %v2838
      %v2857 = vadd.f32 %v2718, %v2841
      %v2858 = vadd.f32 %v2719, %v2846
      %v2859 = vadd.f32 %v2720, %v2849
      %v2862 = vrot.slane %v403, 1
      %v2863 = vrot.slane %v404, 1
      %v2864 = vsel %vm461, %v2862, %v2863
      %v2866 = vpack.c.bf16 %v2864, %v2431
      %s2867 = scalar_lea.vmem %s3, 1024
      %v2868 = vld [vmem:[%s2867] sm:$0xf]
      %v2869 = vld [vmem:[%s2867 + $0x4] sm:$0xf]
      %v2870 = vld [vmem:[%s2867 + $0x8] sm:$0xf]
      %v2871 = vld [vmem:[%s2867 + $0xc] sm:$0xf]
      %v2872 = vld [vmem:[%s2867 + $0x10] sm:$0xf]
      %v2873 = vld [vmem:[%s2867 + $0x14] sm:$0xf]
      %v2874 = vld [vmem:[%s2867 + $0x18] sm:$0xf]
      %v2875 = vld [vmem:[%s2867 + $0x1c] sm:$0xf]
      %v2876 = vld [vmem:[%s2867 + $0x20] sm:$0xf]
      %v2877 = vld [vmem:[%s2867 + $0x24] sm:$0xf]
      %v2878 = vld [vmem:[%s2867 + $0x28] sm:$0xf]
      %v2879 = vld [vmem:[%s2867 + $0x2c] sm:$0xf]
      %v2880 = vld [vmem:[%s2867 + $0x30] sm:$0xf]
      %v2881 = vld [vmem:[%s2867 + $0x34] sm:$0xf]
      %v2882 = vld [vmem:[%s2867 + $0x38] sm:$0xf]
      %v2883 = vld [vmem:[%s2867 + $0x3c] sm:$0xf]
      %v2900 = vunpack.c.l.b16 %v2868
      %v2901 = vunpack.c.l.b16 %v2869
      %v2902 = vunpack.c.l.b16 %v2870
      %v2903 = vunpack.c.l.b16 %v2871
      %v2904 = vunpack.c.l.b16 %v2872
      %v2905 = vunpack.c.l.b16 %v2873
      %v2906 = vunpack.c.l.b16 %v2874
      %v2907 = vunpack.c.l.b16 %v2875
      %v2908 = vunpack.c.l.b16 %v2876
      %v2909 = vunpack.c.l.b16 %v2877
      %v2910 = vunpack.c.l.b16 %v2878
      %v2911 = vunpack.c.l.b16 %v2879
      %v2912 = vunpack.c.l.b16 %v2880
      %v2913 = vunpack.c.l.b16 %v2881
      %v2914 = vunpack.c.l.b16 %v2882
      %v2915 = vunpack.c.l.b16 %v2883
      %v2916 = vpack.c.b16 %v2901, %v2900
      %v2917 = vpack.c.b16 %v2903, %v2902
      %v2918 = vpack.c.b16 %v2905, %v2904
      %v2919 = vpack.c.b16 %v2907, %v2906
      %v2920 = vpack.c.b16 %v2909, %v2908
      %v2921 = vpack.c.b16 %v2911, %v2910
      %v2922 = vpack.c.b16 %v2913, %v2912
      %v2923 = vpack.c.b16 %v2915, %v2914
      %2932 = vmatprep.subr.bf16.mxu0 0
      %2933 = vmatpush1.bf16.msra.mxu0 %v2916
      %2934 = vmatprep.subr.bf16.mxu0 0
      %2935 = vmatpush1.bf16.msra.mxu0 %v2917
      %2936 = vmatprep.subr.bf16.mxu0 0
      %2937 = vmatpush1.bf16.msra.mxu0 %v2918
      %2938 = vmatprep.subr.bf16.mxu0 0
      %2939 = vmatpush1.bf16.msra.mxu0 %v2919
      %2940 = vmatprep.subr.bf16.mxu0 0
      %2941 = vmatpush1.bf16.msra.mxu0 %v2920
      %2942 = vmatprep.subr.bf16.mxu0 0
      %2943 = vmatpush1.bf16.msra.mxu0 %v2921
      %2944 = vmatprep.subr.bf16.mxu0 0
      %2945 = vmatpush1.bf16.msra.mxu0 %v2922
      %2946 = vmatprep.subr.bf16.mxu0 0
      %2947 = vmatpush1.bf16.msra.mxu0 %v2923
      %2948 = vmatprep.subr.bf16.mxu0 0
      %2949 = vmatpush1.bf16.msra.mxu0 0
      %2950 = vmatprep.subr.bf16.mxu0 0
      %2951 = vmatpush1.bf16.msra.mxu0 0
      %2952 = vmatprep.subr.bf16.mxu0 0
      %2953 = vmatpush1.bf16.msra.mxu0 0
      %2954 = vmatprep.subr.bf16.mxu0 0
      %2955 = vmatpush1.bf16.msra.mxu0 0
      %2956 = vmatprep.subr.bf16.mxu0 0
      %2957 = vmatpush1.bf16.msra.mxu0 0
      %2958 = vmatprep.subr.bf16.mxu0 0
      %2959 = vmatpush1.bf16.msra.mxu0 0
      %2960 = vmatprep.subr.bf16.mxu0 0
      %2961 = vmatpush1.bf16.msra.mxu0 0
      %2962 = vmatprep.subr.bf16.mxu0 0
      %2963 = vmatpush1.bf16.msra.mxu0 0
      %2964 = vmatprep.mubr.bf16.mxu0 0
      %2965 = vmatmul.mubr.bf16.gmra.mrb[0].mxu0 %v1970
      %v2966 = vpop.f32.mrb[0].mxu0
      %v2967 = vadd.f32 0.0, %v2966
      %v2968 = vpop.f32.mrb[0].mxu0
      %v2969 = vpop.f32.mrb[0].mxu0
      %v2970 = vadd.f32 0.0, %v2969
      %v2971 = vpop.f32.mrb[0].mxu0
      %2972 = vmatprep.mubr.bf16.mxu0 0
      %2973 = vmatmul.mubr.bf16.gmra.mrb[0].mxu0 %v1971
      %v2974 = vpop.f32.mrb[0].mxu0
      %v2975 = vadd.f32 0.0, %v2974
      %v2976 = vpop.f32.mrb[0].mxu0
      %v2977 = vpop.f32.mrb[0].mxu0
      %v2978 = vadd.f32 0.0, %v2977
      %v2979 = vpop.f32.mrb[0].mxu0
      %2980 = vmatprep.mubr.bf16.mxu0 0
      %2981 = vmatmul.mubr.bf16.gmra.mrb[0].mxu0 %v1972
      %v2982 = vpop.f32.mrb[0].mxu0
      %v2983 = vadd.f32 0.0, %v2982
      %v2984 = vpop.f32.mrb[0].mxu0
      %v2985 = vpop.f32.mrb[0].mxu0
      %v2986 = vadd.f32 0.0, %v2985
      %v2987 = vpop.f32.mrb[0].mxu0
      %2988 = vmatprep.mubr.bf16.mxu0 0
      %2989 = vmatmul.mubr.bf16.gmra.mrb[0].mxu0 %v2866
      %v2990 = vpop.f32.mrb[0].mxu0
      %v2991 = vadd.f32 0.0, %v2990
      %v2992 = vpop.f32.mrb[0].mxu0
      %v2993 = vpop.f32.mrb[0].mxu0
      %v2994 = vadd.f32 0.0, %v2993
      %v2995 = vpop.f32.mrb[0].mxu0
      %2996 = vdwg.mxu0
      %v2997 = vadd.f32 %v2852, %v2967
      %v2998 = vadd.f32 %v2853, %v2970
      %v2999 = vadd.f32 %v2854, %v2975
      %v3000 = vadd.f32 %v2855, %v2978
      %v3001 = vadd.f32 %v2856, %v2983
      %v3002 = vadd.f32 %v2857, %v2986
      %v3003 = vadd.f32 %v2858, %v2991
      %v3004 = vadd.f32 %v2859, %v2994
      %v3005 = vrot.slane %v403, 2
      %v3006 = vrot.slane %v404, 2
      %v3007 = vsel %vm741, %v3005, %v3006
      %v3009 = vpack.c.bf16 %v3007, %v2577
      %s3010 = scalar_lea.vmem %s3, 1088
      %v3011 = vld [vmem:[%s3010] sm:$0xf]
      %v3012 = vld [vmem:[%s3010 + $0x4] sm:$0xf]
      %v3013 = vld [vmem:[%s3010 + $0x8] sm:$0xf]
      %v3014 = vld [vmem:[%s3010 + $0xc] sm:$0xf]
      %v3015 = vld [vmem:[%s3010 + $0x10] sm:$0xf]
      %v3016 = vld [vmem:[%s3010 + $0x14] sm:$0xf]
      %v3017 = vld [vmem:[%s3010 + $0x18] sm:$0xf]
      %v3018 = vld [vmem:[%s3010 + $0x1c] sm:$0xf]
      %v3019 = vld [vmem:[%s3010 + $0x20] sm:$0xf]
      %v3020 = vld [vmem:[%s3010 + $0x24] sm:$0xf]
      %v3021 = vld [vmem:[%s3010 + $0x28] sm:$0xf]
      %v3022 = vld [vmem:[%s3010 + $0x2c] sm:$0xf]
      %v3023 = vld [vmem:[%s3010 + $0x30] sm:$0xf]
      %v3024 = vld [vmem:[%s3010 + $0x34] sm:$0xf]
      %v3025 = vld [vmem:[%s3010 + $0x38] sm:$0xf]
      %v3026 = vld [vmem:[%s3010 + $0x3c] sm:$0xf]
      %v3043 = vunpack.c.l.b16 %v3011
      %v3044 = vunpack.c.l.b16 %v3012
      %v3045 = vunpack.c.l.b16 %v3013
      %v3046 = vunpack.c.l.b16 %v3014
      %v3047 = vunpack.c.l.b16 %v3015
      %v3048 = vunpack.c.l.b16 %v3016
      %v3049 = vunpack.c.l.b16 %v3017
      %v3050 = vunpack.c.l.b16 %v3018
      %v3051 = vunpack.c.l.b16 %v3019
      %v3052 = vunpack.c.l.b16 %v3020
      %v3053 = vunpack.c.l.b16 %v3021
      %v3054 = vunpack.c.l.b16 %v3022
      %v3055 = vunpack.c.l.b16 %v3023
      %v3056 = vunpack.c.l.b16 %v3024
      %v3057 = vunpack.c.l.b16 %v3025
      %v3058 = vunpack.c.l.b16 %v3026
      %v3059 = vpack.c.b16 %v3044, %v3043
      %v3060 = vpack.c.b16 %v3046, %v3045
      %v3061 = vpack.c.b16 %v3048, %v3047
      %v3062 = vpack.c.b16 %v3050, %v3049
      %v3063 = vpack.c.b16 %v3052, %v3051
      %v3064 = vpack.c.b16 %v3054, %v3053
      %v3065 = vpack.c.b16 %v3056, %v3055
      %v3066 = vpack.c.b16 %v3058, %v3057
      %3075 = vmatprep.subr.bf16.mxu0 0
      %3076 = vmatpush1.bf16.msra.mxu0 %v3059
      %3077 = vmatprep.subr.bf16.mxu0 0
      %3078 = vmatpush1.bf16.msra.mxu0 %v3060
      %3079 = vmatprep.subr.bf16.mxu0 0
      %3080 = vmatpush1.bf16.msra.mxu0 %v3061
      %3081 = vmatprep.subr.bf16.mxu0 0
      %3082 = vmatpush1.bf16.msra.mxu0 %v3062
      %3083 = vmatprep.subr.bf16.mxu0 0
      %3084 = vmatpush1.bf16.msra.mxu0 %v3063
      %3085 = vmatprep.subr.bf16.mxu0 0
      %3086 = vmatpush1.bf16.msra.mxu0 %v3064
      %3087 = vmatprep.subr.bf16.mxu0 0
      %3088 = vmatpush1.bf16.msra.mxu0 %v3065
      %3089 = vmatprep.subr.bf16.mxu0 0
      %3090 = vmatpush1.bf16.msra.mxu0 %v3066
      %3091 = vmatprep.subr.bf16.mxu0 0
      %3092 = vmatpush1.bf16.msra.mxu0 0
      %3093 = vmatprep.subr.bf16.mxu0 0
      %3094 = vmatpush1.bf16.msra.mxu0 0
      %3095 = vmatprep.subr.bf16.mxu0 0
      %3096 = vmatpush1.bf16.msra.mxu0 0
      %3097 = vmatprep.subr.bf16.mxu0 0
      %3098 = vmatpush1.bf16.msra.mxu0 0
      %3099 = vmatprep.subr.bf16.mxu0 0
      %3100 = vmatpush1.bf16.msra.mxu0 0
      %3101 = vmatprep.subr.bf16.mxu0 0
      %3102 = vmatpush1.bf16.msra.mxu0 0
      %3103 = vmatprep.subr.bf16.mxu0 0
      %3104 = vmatpush1.bf16.msra.mxu0 0
      %3105 = vmatprep.subr.bf16.mxu0 0
      %3106 = vmatpush1.bf16.msra.mxu0 0
      %3107 = vmatprep.mubr.bf16.mxu0 0
      %3108 = vmatmul.mubr.bf16.gmra.mrb[0].mxu0 %v2144
      %v3109 = vpop.f32.mrb[0].mxu0
      %v3110 = vadd.f32 0.0, %v3109
      %v3111 = vpop.f32.mrb[0].mxu0
      %v3112 = vpop.f32.mrb[0].mxu0
      %v3113 = vadd.f32 0.0, %v3112
      %v3114 = vpop.f32.mrb[0].mxu0
      %3115 = vmatprep.mubr.bf16.mxu0 0
      %3116 = vmatmul.mubr.bf16.gmra.mrb[0].mxu0 %v2145
      %v3117 = vpop.f32.mrb[0].mxu0
      %v3118 = vadd.f32 0.0, %v3117
      %v3119 = vpop.f32.mrb[0].mxu0
      %v3120 = vpop.f32.mrb[0].mxu0
      %v3121 = vadd.f32 0.0, %v3120
      %v3122 = vpop.f32.mrb[0].mxu0
      %3123 = vmatprep.mubr.bf16.mxu0 0
      %3124 = vmatmul.mubr.bf16.gmra.mrb[0].mxu0 %v2146
      %v3125 = vpop.f32.mrb[0].mxu0
      %v3126 = vadd.f32 0.0, %v3125
      %v3127 = vpop.f32.mrb[0].mxu0
      %v3128 = vpop.f32.mrb[0].mxu0
      %v3129 = vadd.f32 0.0, %v3128
      %v3130 = vpop.f32.mrb[0].mxu0
      %3131 = vmatprep.mubr.bf16.mxu0 0
      %3132 = vmatmul.mubr.bf16.gmra.mrb[0].mxu0 %v3009
      %v3133 = vpop.f32.mrb[0].mxu0
      %v3134 = vadd.f32 0.0, %v3133
      %v3135 = vpop.f32.mrb[0].mxu0
      %v3136 = vpop.f32.mrb[0].mxu0
      %v3137 = vadd.f32 0.0, %v3136
      %v3138 = vpop.f32.mrb[0].mxu0
      %3139 = vdwg.mxu0
      %v3140 = vadd.f32 %v2997, %v3110
      %v3141 = vadd.f32 %v2998, %v3113
      %v3142 = vadd.f32 %v2999, %v3118
      %v3143 = vadd.f32 %v3000, %v3121
      %v3144 = vadd.f32 %v3001, %v3126
      %v3145 = vadd.f32 %v3002, %v3129
      %v3146 = vadd.f32 %v3003, %v3134
      %v3147 = vadd.f32 %v3004, %v3137
      %v3148 = vpack.c.bf16 %v407, %v405
      %v3149 = vpack.c.bf16 %v411, %v409
      %v3150 = vpack.c.bf16 %v415, %v413
      %v3151 = vpack.c.bf16 %v419, %v417
      %s3152 = scalar_lea.vmem %s3, 1152
      %v3153 = vld [vmem:[%s3152] sm:$0xf]
      %v3154 = vld [vmem:[%s3152 + $0x4] sm:$0xf]
      %v3155 = vld [vmem:[%s3152 + $0x8] sm:$0xf]
      %v3156 = vld [vmem:[%s3152 + $0xc] sm:$0xf]
      %v3157 = vld [vmem:[%s3152 + $0x10] sm:$0xf]
      %v3158 = vld [vmem:[%s3152 + $0x14] sm:$0xf]
      %v3159 = vld [vmem:[%s3152 + $0x18] sm:$0xf]
      %v3160 = vld [vmem:[%s3152 + $0x1c] sm:$0xf]
      %v3161 = vld [vmem:[%s3152 + $0x20] sm:$0xf]
      %v3162 = vld [vmem:[%s3152 + $0x24] sm:$0xf]
      %v3163 = vld [vmem:[%s3152 + $0x28] sm:$0xf]
      %v3164 = vld [vmem:[%s3152 + $0x2c] sm:$0xf]
      %v3165 = vld [vmem:[%s3152 + $0x30] sm:$0xf]
      %v3166 = vld [vmem:[%s3152 + $0x34] sm:$0xf]
      %v3167 = vld [vmem:[%s3152 + $0x38] sm:$0xf]
      %v3168 = vld [vmem:[%s3152 + $0x3c] sm:$0xf]
      %v3185 = vunpack.c.l.b16 %v3153
      %v3186 = vunpack.c.l.b16 %v3154
      %v3187 = vunpack.c.l.b16 %v3155
      %v3188 = vunpack.c.l.b16 %v3156
      %v3189 = vunpack.c.l.b16 %v3157
      %v3190 = vunpack.c.l.b16 %v3158
      %v3191 = vunpack.c.l.b16 %v3159
      %v3192 = vunpack.c.l.b16 %v3160
      %v3193 = vunpack.c.l.b16 %v3161
      %v3194 = vunpack.c.l.b16 %v3162
      %v3195 = vunpack.c.l.b16 %v3163
      %v3196 = vunpack.c.l.b16 %v3164
      %v3197 = vunpack.c.l.b16 %v3165
      %v3198 = vunpack.c.l.b16 %v3166
      %v3199 = vunpack.c.l.b16 %v3167
      %v3200 = vunpack.c.l.b16 %v3168
      %v3201 = vpack.c.b16 %v3186, %v3185
      %v3202 = vpack.c.b16 %v3188, %v3187
      %v3203 = vpack.c.b16 %v3190, %v3189
      %v3204 = vpack.c.b16 %v3192, %v3191
      %v3205 = vpack.c.b16 %v3194, %v3193
      %v3206 = vpack.c.b16 %v3196, %v3195
      %v3207 = vpack.c.b16 %v3198, %v3197
      %v3208 = vpack.c.b16 %v3200, %v3199
      %3217 = vmatprep.subr.bf16.mxu0 0
      %3218 = vmatpush1.bf16.msra.mxu0 %v3201
      %3219 = vmatprep.subr.bf16.mxu0 0
      %3220 = vmatpush1.bf16.msra.mxu0 %v3202
      %3221 = vmatprep.subr.bf16.mxu0 0
      %3222 = vmatpush1.bf16.msra.mxu0 %v3203
      %3223 = vmatprep.subr.bf16.mxu0 0
      %3224 = vmatpush1.bf16.msra.mxu0 %v3204
      %3225 = vmatprep.subr.bf16.mxu0 0
      %3226 = vmatpush1.bf16.msra.mxu0 %v3205
      %3227 = vmatprep.subr.bf16.mxu0 0
      %3228 = vmatpush1.bf16.msra.mxu0 %v3206
      %3229 = vmatprep.subr.bf16.mxu0 0
      %3230 = vmatpush1.bf16.msra.mxu0 %v3207
      %3231 = vmatprep.subr.bf16.mxu0 0
      %3232 = vmatpush1.bf16.msra.mxu0 %v3208
      %3233 = vmatprep.subr.bf16.mxu0 0
      %3234 = vmatpush1.bf16.msra.mxu0 0
      %3235 = vmatprep.subr.bf16.mxu0 0
      %3236 = vmatpush1.bf16.msra.mxu0 0
      %3237 = vmatprep.subr.bf16.mxu0 0
      %3238 = vmatpush1.bf16.msra.mxu0 0
      %3239 = vmatprep.subr.bf16.mxu0 0
      %3240 = vmatpush1.bf16.msra.mxu0 0
      %3241 = vmatprep.subr.bf16.mxu0 0
      %3242 = vmatpush1.bf16.msra.mxu0 0
      %3243 = vmatprep.subr.bf16.mxu0 0
      %3244 = vmatpush1.bf16.msra.mxu0 0
      %3245 = vmatprep.subr.bf16.mxu0 0
      %3246 = vmatpush1.bf16.msra.mxu0 0
      %3247 = vmatprep.subr.bf16.mxu0 0
      %3248 = vmatpush1.bf16.msra.mxu0 0
      %3249 = vmatprep.mubr.bf16.mxu0 0
      %3250 = vmatmul.mubr.bf16.gmra.mrb[0].mxu0 %v3148
      %v3251 = vpop.f32.mrb[0].mxu0
      %v3252 = vadd.f32 0.0, %v3251
      %v3253 = vpop.f32.mrb[0].mxu0
      %v3254 = vpop.f32.mrb[0].mxu0
      %v3255 = vadd.f32 0.0, %v3254
      %v3256 = vpop.f32.mrb[0].mxu0
      %3257 = vmatprep.mubr.bf16.mxu0 0
      %3258 = vmatmul.mubr.bf16.gmra.mrb[0].mxu0 %v3149
      %v3259 = vpop.f32.mrb[0].mxu0
      %v3260 = vadd.f32 0.0, %v3259
      %v3261 = vpop.f32.mrb[0].mxu0
      %v3262 = vpop.f32.mrb[0].mxu0
      %v3263 = vadd.f32 0.0, %v3262
      %v3264 = vpop.f32.mrb[0].mxu0
      %3265 = vmatprep.mubr.bf16.mxu0 0
      %3266 = vmatmul.mubr.bf16.gmra.mrb[0].mxu0 %v3150
      %v3267 = vpop.f32.mrb[0].mxu0
      %v3268 = vadd.f32 0.0, %v3267
      %v3269 = vpop.f32.mrb[0].mxu0
      %v3270 = vpop.f32.mrb[0].mxu0
      %v3271 = vadd.f32 0.0, %v3270
      %v3272 = vpop.f32.mrb[0].mxu0
      %3273 = vmatprep.mubr.bf16.mxu0 0
      %3274 = vmatmul.mubr.bf16.gmra.mrb[0].mxu0 %v3151
      %v3275 = vpop.f32.mrb[0].mxu0
      %v3276 = vadd.f32 0.0, %v3275
      %v3277 = vpop.f32.mrb[0].mxu0
      %v3278 = vpop.f32.mrb[0].mxu0
      %v3279 = vadd.f32 0.0, %v3278
      %v3280 = vpop.f32.mrb[0].mxu0
      %3281 = vdwg.mxu0
      %v3282 = vadd.f32 %v3140, %v3252
      %v3283 = vadd.f32 %v3141, %v3255
      %v3284 = vadd.f32 %v3142, %v3260
      %v3285 = vadd.f32 %v3143, %v3263
      %v3286 = vadd.f32 %v3144, %v3268
      %v3287 = vadd.f32 %v3145, %v3271
      %v3288 = vadd.f32 %v3146, %v3276
      %v3289 = vadd.f32 %v3147, %v3279
      %v3306 = vrot.slane %v405, 1
      %v3307 = vrot.slane %v406, 1
      %v3308 = vsel %vm461, %v3306, %v3307
      %v3309 = vrot.slane %v407, 1
      %v3310 = vrot.slane %v408, 1
      %v3311 = vsel %vm461, %v3309, %v3310
      %v3312 = vrot.slane %v409, 1
      %v3313 = vrot.slane %v410, 1
      %v3314 = vsel %vm461, %v3312, %v3313
      %v3315 = vrot.slane %v411, 1
      %v3316 = vrot.slane %v412, 1
      %v3317 = vsel %vm461, %v3315, %v3316
      %v3318 = vrot.slane %v413, 1
      %v3319 = vrot.slane %v414, 1
      %v3320 = vsel %vm461, %v3318, %v3319
      %v3321 = vrot.slane %v415, 1
      %v3322 = vrot.slane %v416, 1
      %v3323 = vsel %vm461, %v3321, %v3322
      %v3324 = vrot.slane %v417, 1
      %v3325 = vrot.slane %v418, 1
      %v3326 = vsel %vm461, %v3324, %v3325
      %v3327 = vrot.slane %v419, 1
      %v3328 = vrot.slane %v420, 1
      %v3329 = vsel %vm461, %v3327, %v3328
      %v3338 = vpack.c.bf16 %v3311, %v3308
      %v3339 = vpack.c.bf16 %v3317, %v3314
      %v3340 = vpack.c.bf16 %v3323, %v3320
      %v3341 = vpack.c.bf16 %v3329, %v3326
      %s3342 = scalar_lea.vmem %s3, 1216
      %v3343 = vld [vmem:[%s3342] sm:$0xf]
      %v3344 = vld [vmem:[%s3342 + $0x4] sm:$0xf]
      %v3345 = vld [vmem:[%s3342 + $0x8] sm:$0xf]
      %v3346 = vld [vmem:[%s3342 + $0xc] sm:$0xf]
      %v3347 = vld [vmem:[%s3342 + $0x10] sm:$0xf]
      %v3348 = vld [vmem:[%s3342 + $0x14] sm:$0xf]
      %v3349 = vld [vmem:[%s3342 + $0x18] sm:$0xf]
      %v3350 = vld [vmem:[%s3342 + $0x1c] sm:$0xf]
      %v3351 = vld [vmem:[%s3342 + $0x20] sm:$0xf]
      %v3352 = vld [vmem:[%s3342 + $0x24] sm:$0xf]
      %v3353 = vld [vmem:[%s3342 + $0x28] sm:$0xf]
      %v3354 = vld [vmem:[%s3342 + $0x2c] sm:$0xf]
      %v3355 = vld [vmem:[%s3342 + $0x30] sm:$0xf]
      %v3356 = vld [vmem:[%s3342 + $0x34] sm:$0xf]
      %v3357 = vld [vmem:[%s3342 + $0x38] sm:$0xf]
      %v3358 = vld [vmem:[%s3342 + $0x3c] sm:$0xf]
      %v3375 = vunpack.c.l.b16 %v3343
      %v3376 = vunpack.c.l.b16 %v3344
      %v3377 = vunpack.c.l.b16 %v3345
      %v3378 = vunpack.c.l.b16 %v3346
      %v3379 = vunpack.c.l.b16 %v3347
      %v3380 = vunpack.c.l.b16 %v3348
      %v3381 = vunpack.c.l.b16 %v3349
      %v3382 = vunpack.c.l.b16 %v3350
      %v3383 = vunpack.c.l.b16 %v3351
      %v3384 = vunpack.c.l.b16 %v3352
      %v3385 = vunpack.c.l.b16 %v3353
      %v3386 = vunpack.c.l.b16 %v3354
      %v3387 = vunpack.c.l.b16 %v3355
      %v3388 = vunpack.c.l.b16 %v3356
      %v3389 = vunpack.c.l.b16 %v3357
      %v3390 = vunpack.c.l.b16 %v3358
      %v3391 = vpack.c.b16 %v3376, %v3375
      %v3392 = vpack.c.b16 %v3378, %v3377
      %v3393 = vpack.c.b16 %v3380, %v3379
      %v3394 = vpack.c.b16 %v3382, %v3381
      %v3395 = vpack.c.b16 %v3384, %v3383
      %v3396 = vpack.c.b16 %v3386, %v3385
      %v3397 = vpack.c.b16 %v3388, %v3387
      %v3398 = vpack.c.b16 %v3390, %v3389
      %3407 = vmatprep.subr.bf16.mxu0 0
      %3408 = vmatpush1.bf16.msra.mxu0 %v3391
      %3409 = vmatprep.subr.bf16.mxu0 0
      %3410 = vmatpush1.bf16.msra.mxu0 %v3392
      %3411 = vmatprep.subr.bf16.mxu0 0
      %3412 = vmatpush1.bf16.msra.mxu0 %v3393
      %3413 = vmatprep.subr.bf16.mxu0 0
      %3414 = vmatpush1.bf16.msra.mxu0 %v3394
      %3415 = vmatprep.subr.bf16.mxu0 0
      %3416 = vmatpush1.bf16.msra.mxu0 %v3395
      %3417 = vmatprep.subr.bf16.mxu0 0
      %3418 = vmatpush1.bf16.msra.mxu0 %v3396
      %3419 = vmatprep.subr.bf16.mxu0 0
      %3420 = vmatpush1.bf16.msra.mxu0 %v3397
      %3421 = vmatprep.subr.bf16.mxu0 0
      %3422 = vmatpush1.bf16.msra.mxu0 %v3398
      %3423 = vmatprep.subr.bf16.mxu0 0
      %3424 = vmatpush1.bf16.msra.mxu0 0
      %3425 = vmatprep.subr.bf16.mxu0 0
      %3426 = vmatpush1.bf16.msra.mxu0 0
      %3427 = vmatprep.subr.bf16.mxu0 0
      %3428 = vmatpush1.bf16.msra.mxu0 0
      %3429 = vmatprep.subr.bf16.mxu0 0
      %3430 = vmatpush1.bf16.msra.mxu0 0
      %3431 = vmatprep.subr.bf16.mxu0 0
      %3432 = vmatpush1.bf16.msra.mxu0 0
      %3433 = vmatprep.subr.bf16.mxu0 0
      %3434 = vmatpush1.bf16.msra.mxu0 0
      %3435 = vmatprep.subr.bf16.mxu0 0
      %3436 = vmatpush1.bf16.msra.mxu0 0
      %3437 = vmatprep.subr.bf16.mxu0 0
      %3438 = vmatpush1.bf16.msra.mxu0 0
      %3439 = vmatprep.mubr.bf16.mxu0 0
      %3440 = vmatmul.mubr.bf16.gmra.mrb[0].mxu0 %v3338
      %v3441 = vpop.f32.mrb[0].mxu0
      %v3442 = vadd.f32 0.0, %v3441
      %v3443 = vpop.f32.mrb[0].mxu0
      %v3444 = vpop.f32.mrb[0].mxu0
      %v3445 = vadd.f32 0.0, %v3444
      %v3446 = vpop.f32.mrb[0].mxu0
      %3447 = vmatprep.mubr.bf16.mxu0 0
      %3448 = vmatmul.mubr.bf16.gmra.mrb[0].mxu0 %v3339
      %v3449 = vpop.f32.mrb[0].mxu0
      %v3450 = vadd.f32 0.0, %v3449
      %v3451 = vpop.f32.mrb[0].mxu0
      %v3452 = vpop.f32.mrb[0].mxu0
      %v3453 = vadd.f32 0.0, %v3452
      %v3454 = vpop.f32.mrb[0].mxu0
      %3455 = vmatprep.mubr.bf16.mxu0 0
      %3456 = vmatmul.mubr.bf16.gmra.mrb[0].mxu0 %v3340
      %v3457 = vpop.f32.mrb[0].mxu0
      %v3458 = vadd.f32 0.0, %v3457
      %v3459 = vpop.f32.mrb[0].mxu0
      %v3460 = vpop.f32.mrb[0].mxu0
      %v3461 = vadd.f32 0.0, %v3460
      %v3462 = vpop.f32.mrb[0].mxu0
      %3463 = vmatprep.mubr.bf16.mxu0 0
      %3464 = vmatmul.mubr.bf16.gmra.mrb[0].mxu0 %v3341
      %v3465 = vpop.f32.mrb[0].mxu0
      %v3466 = vadd.f32 0.0, %v3465
      %v3467 = vpop.f32.mrb[0].mxu0
      %v3468 = vpop.f32.mrb[0].mxu0
      %v3469 = vadd.f32 0.0, %v3468
      %v3470 = vpop.f32.mrb[0].mxu0
      %3471 = vdwg.mxu0
      %v3472 = vadd.f32 %v3282, %v3442
      %v3473 = vadd.f32 %v3283, %v3445
      %v3474 = vadd.f32 %v3284, %v3450
      %v3475 = vadd.f32 %v3285, %v3453
      %v3476 = vadd.f32 %v3286, %v3458
      %v3477 = vadd.f32 %v3287, %v3461
      %v3478 = vadd.f32 %v3288, %v3466
      %v3479 = vadd.f32 %v3289, %v3469
      %v3480 = vrot.slane %v405, 2
      %v3481 = vrot.slane %v406, 2
      %v3482 = vsel %vm741, %v3480, %v3481
      %v3483 = vrot.slane %v407, 2
      %v3484 = vrot.slane %v408, 2
      %v3485 = vsel %vm741, %v3483, %v3484
      %v3486 = vrot.slane %v409, 2
      %v3487 = vrot.slane %v410, 2
      %v3488 = vsel %vm741, %v3486, %v3487
      %v3489 = vrot.slane %v411, 2
      %v3490 = vrot.slane %v412, 2
      %v3491 = vsel %vm741, %v3489, %v3490
      %v3492 = vrot.slane %v413, 2
      %v3493 = vrot.slane %v414, 2
      %v3494 = vsel %vm741, %v3492, %v3493
      %v3495 = vrot.slane %v415, 2
      %v3496 = vrot.slane %v416, 2
      %v3497 = vsel %vm741, %v3495, %v3496
      %v3498 = vrot.slane %v417, 2
      %v3499 = vrot.slane %v418, 2
      %v3500 = vsel %vm741, %v3498, %v3499
      %v3501 = vrot.slane %v419, 2
      %v3502 = vrot.slane %v420, 2
      %v3503 = vsel %vm741, %v3501, %v3502
      %v3512 = vpack.c.bf16 %v3485, %v3482
      %v3513 = vpack.c.bf16 %v3491, %v3488
      %v3514 = vpack.c.bf16 %v3497, %v3494
      %v3515 = vpack.c.bf16 %v3503, %v3500
      %s3516 = scalar_lea.vmem %s3, 1280
      %v3517 = vld [vmem:[%s3516] sm:$0xf]
      %v3518 = vld [vmem:[%s3516 + $0x4] sm:$0xf]
      %v3519 = vld [vmem:[%s3516 + $0x8] sm:$0xf]
      %v3520 = vld [vmem:[%s3516 + $0xc] sm:$0xf]
      %v3521 = vld [vmem:[%s3516 + $0x10] sm:$0xf]
      %v3522 = vld [vmem:[%s3516 + $0x14] sm:$0xf]
      %v3523 = vld [vmem:[%s3516 + $0x18] sm:$0xf]
      %v3524 = vld [vmem:[%s3516 + $0x1c] sm:$0xf]
      %v3525 = vld [vmem:[%s3516 + $0x20] sm:$0xf]
      %v3526 = vld [vmem:[%s3516 + $0x24] sm:$0xf]
      %v3527 = vld [vmem:[%s3516 + $0x28] sm:$0xf]
      %v3528 = vld [vmem:[%s3516 + $0x2c] sm:$0xf]
      %v3529 = vld [vmem:[%s3516 + $0x30] sm:$0xf]
      %v3530 = vld [vmem:[%s3516 + $0x34] sm:$0xf]
      %v3531 = vld [vmem:[%s3516 + $0x38] sm:$0xf]
      %v3532 = vld [vmem:[%s3516 + $0x3c] sm:$0xf]
      %v3549 = vunpack.c.l.b16 %v3517
      %v3550 = vunpack.c.l.b16 %v3518
      %v3551 = vunpack.c.l.b16 %v3519
      %v3552 = vunpack.c.l.b16 %v3520
      %v3553 = vunpack.c.l.b16 %v3521
      %v3554 = vunpack.c.l.b16 %v3522
      %v3555 = vunpack.c.l.b16 %v3523
      %v3556 = vunpack.c.l.b16 %v3524
      %v3557 = vunpack.c.l.b16 %v3525
      %v3558 = vunpack.c.l.b16 %v3526
      %v3559 = vunpack.c.l.b16 %v3527
      %v3560 = vunpack.c.l.b16 %v3528
      %v3561 = vunpack.c.l.b16 %v3529
      %v3562 = vunpack.c.l.b16 %v3530
      %v3563 = vunpack.c.l.b16 %v3531
      %v3564 = vunpack.c.l.b16 %v3532
      %v3565 = vpack.c.b16 %v3550, %v3549
      %v3566 = vpack.c.b16 %v3552, %v3551
      %v3567 = vpack.c.b16 %v3554, %v3553
      %v3568 = vpack.c.b16 %v3556, %v3555
      %v3569 = vpack.c.b16 %v3558, %v3557
      %v3570 = vpack.c.b16 %v3560, %v3559
      %v3571 = vpack.c.b16 %v3562, %v3561
      %v3572 = vpack.c.b16 %v3564, %v3563
      %3581 = vmatprep.subr.bf16.mxu0 0
      %3582 = vmatpush1.bf16.msra.mxu0 %v3565
      %3583 = vmatprep.subr.bf16.mxu0 0
      %3584 = vmatpush1.bf16.msra.mxu0 %v3566
      %3585 = vmatprep.subr.bf16.mxu0 0
      %3586 = vmatpush1.bf16.msra.mxu0 %v3567
      %3587 = vmatprep.subr.bf16.mxu0 0
      %3588 = vmatpush1.bf16.msra.mxu0 %v3568
      %3589 = vmatprep.subr.bf16.mxu0 0
      %3590 = vmatpush1.bf16.msra.mxu0 %v3569
      %3591 = vmatprep.subr.bf16.mxu0 0
      %3592 = vmatpush1.bf16.msra.mxu0 %v3570
      %3593 = vmatprep.subr.bf16.mxu0 0
      %3594 = vmatpush1.bf16.msra.mxu0 %v3571
      %3595 = vmatprep.subr.bf16.mxu0 0
      %3596 = vmatpush1.bf16.msra.mxu0 %v3572
      %3597 = vmatprep.subr.bf16.mxu0 0
      %3598 = vmatpush1.bf16.msra.mxu0 0
      %3599 = vmatprep.subr.bf16.mxu0 0
      %3600 = vmatpush1.bf16.msra.mxu0 0
      %3601 = vmatprep.subr.bf16.mxu0 0
      %3602 = vmatpush1.bf16.msra.mxu0 0
      %3603 = vmatprep.subr.bf16.mxu0 0
      %3604 = vmatpush1.bf16.msra.mxu0 0
      %3605 = vmatprep.subr.bf16.mxu0 0
      %3606 = vmatpush1.bf16.msra.mxu0 0
      %3607 = vmatprep.subr.bf16.mxu0 0
      %3608 = vmatpush1.bf16.msra.mxu0 0
      %3609 = vmatprep.subr.bf16.mxu0 0
      %3610 = vmatpush1.bf16.msra.mxu0 0
      %3611 = vmatprep.subr.bf16.mxu0 0
      %3612 = vmatpush1.bf16.msra.mxu0 0
      %3613 = vmatprep.mubr.bf16.mxu0 0
      %3614 = vmatmul.mubr.bf16.gmra.mrb[0].mxu0 %v3512
      %v3615 = vpop.f32.mrb[0].mxu0
      %v3616 = vadd.f32 0.0, %v3615
      %v3617 = vpop.f32.mrb[0].mxu0
      %v3618 = vpop.f32.mrb[0].mxu0
      %v3619 = vadd.f32 0.0, %v3618
      %v3620 = vpop.f32.mrb[0].mxu0
      %3621 = vmatprep.mubr.bf16.mxu0 0
      %3622 = vmatmul.mubr.bf16.gmra.mrb[0].mxu0 %v3513
      %v3623 = vpop.f32.mrb[0].mxu0
      %v3624 = vadd.f32 0.0, %v3623
      %v3625 = vpop.f32.mrb[0].mxu0
      %v3626 = vpop.f32.mrb[0].mxu0
      %v3627 = vadd.f32 0.0, %v3626
      %v3628 = vpop.f32.mrb[0].mxu0
      %3629 = vmatprep.mubr.bf16.mxu0 0
      %3630 = vmatmul.mubr.bf16.gmra.mrb[0].mxu0 %v3514
      %v3631 = vpop.f32.mrb[0].mxu0
      %v3632 = vadd.f32 0.0, %v3631
      %v3633 = vpop.f32.mrb[0].mxu0
      %v3634 = vpop.f32.mrb[0].mxu0
      %v3635 = vadd.f32 0.0, %v3634
      %v3636 = vpop.f32.mrb[0].mxu0
      %3637 = vmatprep.mubr.bf16.mxu0 0
      %3638 = vmatmul.mubr.bf16.gmra.mrb[0].mxu0 %v3515
      %v3639 = vpop.f32.mrb[0].mxu0
      %v3640 = vadd.f32 0.0, %v3639
      %v3641 = vpop.f32.mrb[0].mxu0
      %v3642 = vpop.f32.mrb[0].mxu0
      %v3643 = vadd.f32 0.0, %v3642
      %v3644 = vpop.f32.mrb[0].mxu0
      %3645 = vdwg.mxu0
      %v3646 = vadd.f32 %v3472, %v3616
      %v3647 = vadd.f32 %v3473, %v3619
      %v3648 = vadd.f32 %v3474, %v3624
      %v3649 = vadd.f32 %v3475, %v3627
      %v3650 = vadd.f32 %v3476, %v3632
      %v3651 = vadd.f32 %v3477, %v3635
      %v3652 = vadd.f32 %v3478, %v3640
      %v3653 = vadd.f32 %v3479, %v3643
      %v3654 = vpack.c.bf16 %v409, %v407
      %v3655 = vpack.c.bf16 %v413, %v411
      %v3656 = vpack.c.bf16 %v417, %v415
      %v3657 = vpack.c.bf16 %v421, %v419
      %s3658 = scalar_lea.vmem %s3, 1344
      %v3659 = vld [vmem:[%s3658] sm:$0xf]
      %v3660 = vld [vmem:[%s3658 + $0x4] sm:$0xf]
      %v3661 = vld [vmem:[%s3658 + $0x8] sm:$0xf]
      %v3662 = vld [vmem:[%s3658 + $0xc] sm:$0xf]
      %v3663 = vld [vmem:[%s3658 + $0x10] sm:$0xf]
      %v3664 = vld [vmem:[%s3658 + $0x14] sm:$0xf]
      %v3665 = vld [vmem:[%s3658 + $0x18] sm:$0xf]
      %v3666 = vld [vmem:[%s3658 + $0x1c] sm:$0xf]
      %v3667 = vld [vmem:[%s3658 + $0x20] sm:$0xf]
      %v3668 = vld [vmem:[%s3658 + $0x24] sm:$0xf]
      %v3669 = vld [vmem:[%s3658 + $0x28] sm:$0xf]
      %v3670 = vld [vmem:[%s3658 + $0x2c] sm:$0xf]
      %v3671 = vld [vmem:[%s3658 + $0x30] sm:$0xf]
      %v3672 = vld [vmem:[%s3658 + $0x34] sm:$0xf]
      %v3673 = vld [vmem:[%s3658 + $0x38] sm:$0xf]
      %v3674 = vld [vmem:[%s3658 + $0x3c] sm:$0xf]
      %v3691 = vunpack.c.l.b16 %v3659
      %v3692 = vunpack.c.l.b16 %v3660
      %v3693 = vunpack.c.l.b16 %v3661
      %v3694 = vunpack.c.l.b16 %v3662
      %v3695 = vunpack.c.l.b16 %v3663
      %v3696 = vunpack.c.l.b16 %v3664
      %v3697 = vunpack.c.l.b16 %v3665
      %v3698 = vunpack.c.l.b16 %v3666
      %v3699 = vunpack.c.l.b16 %v3667
      %v3700 = vunpack.c.l.b16 %v3668
      %v3701 = vunpack.c.l.b16 %v3669
      %v3702 = vunpack.c.l.b16 %v3670
      %v3703 = vunpack.c.l.b16 %v3671
      %v3704 = vunpack.c.l.b16 %v3672
      %v3705 = vunpack.c.l.b16 %v3673
      %v3706 = vunpack.c.l.b16 %v3674
      %v3707 = vpack.c.b16 %v3692, %v3691
      %v3708 = vpack.c.b16 %v3694, %v3693
      %v3709 = vpack.c.b16 %v3696, %v3695
      %v3710 = vpack.c.b16 %v3698, %v3697
      %v3711 = vpack.c.b16 %v3700, %v3699
      %v3712 = vpack.c.b16 %v3702, %v3701
      %v3713 = vpack.c.b16 %v3704, %v3703
      %v3714 = vpack.c.b16 %v3706, %v3705
      %3723 = vmatprep.subr.bf16.mxu0 0
      %3724 = vmatpush1.bf16.msra.mxu0 %v3707
      %3725 = vmatprep.subr.bf16.mxu0 0
      %3726 = vmatpush1.bf16.msra.mxu0 %v3708
      %3727 = vmatprep.subr.bf16.mxu0 0
      %3728 = vmatpush1.bf16.msra.mxu0 %v3709
      %3729 = vmatprep.subr.bf16.mxu0 0
      %3730 = vmatpush1.bf16.msra.mxu0 %v3710
      %3731 = vmatprep.subr.bf16.mxu0 0
      %3732 = vmatpush1.bf16.msra.mxu0 %v3711
      %3733 = vmatprep.subr.bf16.mxu0 0
      %3734 = vmatpush1.bf16.msra.mxu0 %v3712
      %3735 = vmatprep.subr.bf16.mxu0 0
      %3736 = vmatpush1.bf16.msra.mxu0 %v3713
      %3737 = vmatprep.subr.bf16.mxu0 0
      %3738 = vmatpush1.bf16.msra.mxu0 %v3714
      %3739 = vmatprep.subr.bf16.mxu0 0
      %3740 = vmatpush1.bf16.msra.mxu0 0
      %3741 = vmatprep.subr.bf16.mxu0 0
      %3742 = vmatpush1.bf16.msra.mxu0 0
      %3743 = vmatprep.subr.bf16.mxu0 0
      %3744 = vmatpush1.bf16.msra.mxu0 0
      %3745 = vmatprep.subr.bf16.mxu0 0
      %3746 = vmatpush1.bf16.msra.mxu0 0
      %3747 = vmatprep.subr.bf16.mxu0 0
      %3748 = vmatpush1.bf16.msra.mxu0 0
      %3749 = vmatprep.subr.bf16.mxu0 0
      %3750 = vmatpush1.bf16.msra.mxu0 0
      %3751 = vmatprep.subr.bf16.mxu0 0
      %3752 = vmatpush1.bf16.msra.mxu0 0
      %3753 = vmatprep.subr.bf16.mxu0 0
      %3754 = vmatpush1.bf16.msra.mxu0 0
      %3755 = vmatprep.mubr.bf16.mxu0 0
      %3756 = vmatmul.mubr.bf16.gmra.mrb[0].mxu0 %v3654
      %v3757 = vpop.f32.mrb[0].mxu0
      %v3758 = vadd.f32 0.0, %v3757
      %v3759 = vpop.f32.mrb[0].mxu0
      %v3760 = vpop.f32.mrb[0].mxu0
      %v3761 = vadd.f32 0.0, %v3760
      %v3762 = vpop.f32.mrb[0].mxu0
      %3763 = vmatprep.mubr.bf16.mxu0 0
      %3764 = vmatmul.mubr.bf16.gmra.mrb[0].mxu0 %v3655
      %v3765 = vpop.f32.mrb[0].mxu0
      %v3766 = vadd.f32 0.0, %v3765
      %v3767 = vpop.f32.mrb[0].mxu0
      %v3768 = vpop.f32.mrb[0].mxu0
      %v3769 = vadd.f32 0.0, %v3768
      %v3770 = vpop.f32.mrb[0].mxu0
      %3771 = vmatprep.mubr.bf16.mxu0 0
      %3772 = vmatmul.mubr.bf16.gmra.mrb[0].mxu0 %v3656
      %v3773 = vpop.f32.mrb[0].mxu0
      %v3774 = vadd.f32 0.0, %v3773
      %v3775 = vpop.f32.mrb[0].mxu0
      %v3776 = vpop.f32.mrb[0].mxu0
      %v3777 = vadd.f32 0.0, %v3776
      %v3778 = vpop.f32.mrb[0].mxu0
      %3779 = vmatprep.mubr.bf16.mxu0 0
      %3780 = vmatmul.mubr.bf16.gmra.mrb[0].mxu0 %v3657
      %v3781 = vpop.f32.mrb[0].mxu0
      %v3782 = vadd.f32 0.0, %v3781
      %v3783 = vpop.f32.mrb[0].mxu0
      %v3784 = vpop.f32.mrb[0].mxu0
      %v3785 = vadd.f32 0.0, %v3784
      %v3786 = vpop.f32.mrb[0].mxu0
      %3787 = vdwg.mxu0
      %v3788 = vadd.f32 %v3646, %v3758
      %v3789 = vadd.f32 %v3647, %v3761
      %v3790 = vadd.f32 %v3648, %v3766
      %v3791 = vadd.f32 %v3649, %v3769
      %v3792 = vadd.f32 %v3650, %v3774
      %v3793 = vadd.f32 %v3651, %v3777
      %v3794 = vadd.f32 %v3652, %v3782
      %v3795 = vadd.f32 %v3653, %v3785
      %v3798 = vrot.slane %v421, 1
      %v3799 = vrot.slane %v422, 1
      %v3800 = vsel %vm461, %v3798, %v3799
      %v3802 = vpack.c.bf16 %v3314, %v3311
      %v3803 = vpack.c.bf16 %v3320, %v3317
      %v3804 = vpack.c.bf16 %v3326, %v3323
      %v3805 = vpack.c.bf16 %v3800, %v3329
      %s3806 = scalar_lea.vmem %s3, 1408
      %v3807 = vld [vmem:[%s3806] sm:$0xf]
      %v3808 = vld [vmem:[%s3806 + $0x4] sm:$0xf]
      %v3809 = vld [vmem:[%s3806 + $0x8] sm:$0xf]
      %v3810 = vld [vmem:[%s3806 + $0xc] sm:$0xf]
      %v3811 = vld [vmem:[%s3806 + $0x10] sm:$0xf]
      %v3812 = vld [vmem:[%s3806 + $0x14] sm:$0xf]
      %v3813 = vld [vmem:[%s3806 + $0x18] sm:$0xf]
      %v3814 = vld [vmem:[%s3806 + $0x1c] sm:$0xf]
      %v3815 = vld [vmem:[%s3806 + $0x20] sm:$0xf]
      %v3816 = vld [vmem:[%s3806 + $0x24] sm:$0xf]
      %v3817 = vld [vmem:[%s3806 + $0x28] sm:$0xf]
      %v3818 = vld [vmem:[%s3806 + $0x2c] sm:$0xf]
      %v3819 = vld [vmem:[%s3806 + $0x30] sm:$0xf]
      %v3820 = vld [vmem:[%s3806 + $0x34] sm:$0xf]
      %v3821 = vld [vmem:[%s3806 + $0x38] sm:$0xf]
      %v3822 = vld [vmem:[%s3806 + $0x3c] sm:$0xf]
      %v3839 = vunpack.c.l.b16 %v3807
      %v3840 = vunpack.c.l.b16 %v3808
      %v3841 = vunpack.c.l.b16 %v3809
      %v3842 = vunpack.c.l.b16 %v3810
      %v3843 = vunpack.c.l.b16 %v3811
      %v3844 = vunpack.c.l.b16 %v3812
      %v3845 = vunpack.c.l.b16 %v3813
      %v3846 = vunpack.c.l.b16 %v3814
      %v3847 = vunpack.c.l.b16 %v3815
      %v3848 = vunpack.c.l.b16 %v3816
      %v3849 = vunpack.c.l.b16 %v3817
      %v3850 = vunpack.c.l.b16 %v3818
      %v3851 = vunpack.c.l.b16 %v3819
      %v3852 = vunpack.c.l.b16 %v3820
      %v3853 = vunpack.c.l.b16 %v3821
      %v3854 = vunpack.c.l.b16 %v3822
      %v3855 = vpack.c.b16 %v3840, %v3839
      %v3856 = vpack.c.b16 %v3842, %v3841
      %v3857 = vpack.c.b16 %v3844, %v3843
      %v3858 = vpack.c.b16 %v3846, %v3845
      %v3859 = vpack.c.b16 %v3848, %v3847
      %v3860 = vpack.c.b16 %v3850, %v3849
      %v3861 = vpack.c.b16 %v3852, %v3851
      %v3862 = vpack.c.b16 %v3854, %v3853
      %3871 = vmatprep.subr.bf16.mxu0 0
      %3872 = vmatpush1.bf16.msra.mxu0 %v3855
      %3873 = vmatprep.subr.bf16.mxu0 0
      %3874 = vmatpush1.bf16.msra.mxu0 %v3856
      %3875 = vmatprep.subr.bf16.mxu0 0
      %3876 = vmatpush1.bf16.msra.mxu0 %v3857
      %3877 = vmatprep.subr.bf16.mxu0 0
      %3878 = vmatpush1.bf16.msra.mxu0 %v3858
      %3879 = vmatprep.subr.bf16.mxu0 0
      %3880 = vmatpush1.bf16.msra.mxu0 %v3859
      %3881 = vmatprep.subr.bf16.mxu0 0
      %3882 = vmatpush1.bf16.msra.mxu0 %v3860
      %3883 = vmatprep.subr.bf16.mxu0 0
      %3884 = vmatpush1.bf16.msra.mxu0 %v3861
      %3885 = vmatprep.subr.bf16.mxu0 0
      %3886 = vmatpush1.bf16.msra.mxu0 %v3862
      %3887 = vmatprep.subr.bf16.mxu0 0
      %3888 = vmatpush1.bf16.msra.mxu0 0
      %3889 = vmatprep.subr.bf16.mxu0 0
      %3890 = vmatpush1.bf16.msra.mxu0 0
      %3891 = vmatprep.subr.bf16.mxu0 0
      %3892 = vmatpush1.bf16.msra.mxu0 0
      %3893 = vmatprep.subr.bf16.mxu0 0
      %3894 = vmatpush1.bf16.msra.mxu0 0
      %3895 = vmatprep.subr.bf16.mxu0 0
      %3896 = vmatpush1.bf16.msra.mxu0 0
      %3897 = vmatprep.subr.bf16.mxu0 0
      %3898 = vmatpush1.bf16.msra.mxu0 0
      %3899 = vmatprep.subr.bf16.mxu0 0
      %3900 = vmatpush1.bf16.msra.mxu0 0
      %3901 = vmatprep.subr.bf16.mxu0 0
      %3902 = vmatpush1.bf16.msra.mxu0 0
      %3903 = vmatprep.mubr.bf16.mxu0 0
      %3904 = vmatmul.mubr.bf16.gmra.mrb[0].mxu0 %v3802
      %v3905 = vpop.f32.mrb[0].mxu0
      %v3906 = vadd.f32 0.0, %v3905
      %v3907 = vpop.f32.mrb[0].mxu0
      %v3908 = vpop.f32.mrb[0].mxu0
      %v3909 = vadd.f32 0.0, %v3908
      %v3910 = vpop.f32.mrb[0].mxu0
      %3911 = vmatprep.mubr.bf16.mxu0 0
      %3912 = vmatmul.mubr.bf16.gmra.mrb[0].mxu0 %v3803
      %v3913 = vpop.f32.mrb[0].mxu0
      %v3914 = vadd.f32 0.0, %v3913
      %v3915 = vpop.f32.mrb[0].mxu0
      %v3916 = vpop.f32.mrb[0].mxu0
      %v3917 = vadd.f32 0.0, %v3916
      %v3918 = vpop.f32.mrb[0].mxu0
      %3919 = vmatprep.mubr.bf16.mxu0 0
      %3920 = vmatmul.mubr.bf16.gmra.mrb[0].mxu0 %v3804
      %v3921 = vpop.f32.mrb[0].mxu0
      %v3922 = vadd.f32 0.0, %v3921
      %v3923 = vpop.f32.mrb[0].mxu0
      %v3924 = vpop.f32.mrb[0].mxu0
      %v3925 = vadd.f32 0.0, %v3924
      %v3926 = vpop.f32.mrb[0].mxu0
      %3927 = vmatprep.mubr.bf16.mxu0 0
      %3928 = vmatmul.mubr.bf16.gmra.mrb[0].mxu0 %v3805
      %v3929 = vpop.f32.mrb[0].mxu0
      %v3930 = vadd.f32 0.0, %v3929
      %v3931 = vpop.f32.mrb[0].mxu0
      %v3932 = vpop.f32.mrb[0].mxu0
      %v3933 = vadd.f32 0.0, %v3932
      %v3934 = vpop.f32.mrb[0].mxu0
      %3935 = vdwg.mxu0
      %v3936 = vadd.f32 %v3788, %v3906
      %v3937 = vadd.f32 %v3789, %v3909
      %v3938 = vadd.f32 %v3790, %v3914
      %v3939 = vadd.f32 %v3791, %v3917
      %v3940 = vadd.f32 %v3792, %v3922
      %v3941 = vadd.f32 %v3793, %v3925
      %v3942 = vadd.f32 %v3794, %v3930
      %v3943 = vadd.f32 %v3795, %v3933
      %v3944 = vrot.slane %v421, 2
      %v3945 = vrot.slane %v422, 2
      %v3946 = vsel %vm741, %v3944, %v3945
      %v3948 = vpack.c.bf16 %v3488, %v3485
      %v3949 = vpack.c.bf16 %v3494, %v3491
      %v3950 = vpack.c.bf16 %v3500, %v3497
      %v3951 = vpack.c.bf16 %v3946, %v3503
      %s3952 = scalar_lea.vmem %s3, 1472
      %v3953 = vld [vmem:[%s3952] sm:$0xf]
      %v3954 = vld [vmem:[%s3952 + $0x4] sm:$0xf]
      %v3955 = vld [vmem:[%s3952 + $0x8] sm:$0xf]
      %v3956 = vld [vmem:[%s3952 + $0xc] sm:$0xf]
      %v3957 = vld [vmem:[%s3952 + $0x10] sm:$0xf]
      %v3958 = vld [vmem:[%s3952 + $0x14] sm:$0xf]
      %v3959 = vld [vmem:[%s3952 + $0x18] sm:$0xf]
      %v3960 = vld [vmem:[%s3952 + $0x1c] sm:$0xf]
      %v3961 = vld [vmem:[%s3952 + $0x20] sm:$0xf]
      %v3962 = vld [vmem:[%s3952 + $0x24] sm:$0xf]
      %v3963 = vld [vmem:[%s3952 + $0x28] sm:$0xf]
      %v3964 = vld [vmem:[%s3952 + $0x2c] sm:$0xf]
      %v3965 = vld [vmem:[%s3952 + $0x30] sm:$0xf]
      %v3966 = vld [vmem:[%s3952 + $0x34] sm:$0xf]
      %v3967 = vld [vmem:[%s3952 + $0x38] sm:$0xf]
      %v3968 = vld [vmem:[%s3952 + $0x3c] sm:$0xf]
      %v3985 = vunpack.c.l.b16 %v3953
      %v3986 = vunpack.c.l.b16 %v3954
      %v3987 = vunpack.c.l.b16 %v3955
      %v3988 = vunpack.c.l.b16 %v3956
      %v3989 = vunpack.c.l.b16 %v3957
      %v3990 = vunpack.c.l.b16 %v3958
      %v3991 = vunpack.c.l.b16 %v3959
      %v3992 = vunpack.c.l.b16 %v3960
      %v3993 = vunpack.c.l.b16 %v3961
      %v3994 = vunpack.c.l.b16 %v3962
      %v3995 = vunpack.c.l.b16 %v3963
      %v3996 = vunpack.c.l.b16 %v3964
      %v3997 = vunpack.c.l.b16 %v3965
      %v3998 = vunpack.c.l.b16 %v3966
      %v3999 = vunpack.c.l.b16 %v3967
      %v4000 = vunpack.c.l.b16 %v3968
      %v4001 = vpack.c.b16 %v3986, %v3985
      %v4002 = vpack.c.b16 %v3988, %v3987
      %v4003 = vpack.c.b16 %v3990, %v3989
      %v4004 = vpack.c.b16 %v3992, %v3991
      %v4005 = vpack.c.b16 %v3994, %v3993
      %v4006 = vpack.c.b16 %v3996, %v3995
      %v4007 = vpack.c.b16 %v3998, %v3997
      %v4008 = vpack.c.b16 %v4000, %v3999
      %4017 = vmatprep.subr.bf16.mxu0 0
      %4018 = vmatpush1.bf16.msra.mxu0 %v4001
      %4019 = vmatprep.subr.bf16.mxu0 0
      %4020 = vmatpush1.bf16.msra.mxu0 %v4002
      %4021 = vmatprep.subr.bf16.mxu0 0
      %4022 = vmatpush1.bf16.msra.mxu0 %v4003
      %4023 = vmatprep.subr.bf16.mxu0 0
      %4024 = vmatpush1.bf16.msra.mxu0 %v4004
      %4025 = vmatprep.subr.bf16.mxu0 0
      %4026 = vmatpush1.bf16.msra.mxu0 %v4005
      %4027 = vmatprep.subr.bf16.mxu0 0
      %4028 = vmatpush1.bf16.msra.mxu0 %v4006
      %4029 = vmatprep.subr.bf16.mxu0 0
      %4030 = vmatpush1.bf16.msra.mxu0 %v4007
      %4031 = vmatprep.subr.bf16.mxu0 0
      %4032 = vmatpush1.bf16.msra.mxu0 %v4008
      %4033 = vmatprep.subr.bf16.mxu0 0
      %4034 = vmatpush1.bf16.msra.mxu0 0
      %4035 = vmatprep.subr.bf16.mxu0 0
      %4036 = vmatpush1.bf16.msra.mxu0 0
      %4037 = vmatprep.subr.bf16.mxu0 0
      %4038 = vmatpush1.bf16.msra.mxu0 0
      %4039 = vmatprep.subr.bf16.mxu0 0
      %4040 = vmatpush1.bf16.msra.mxu0 0
      %4041 = vmatprep.subr.bf16.mxu0 0
      %4042 = vmatpush1.bf16.msra.mxu0 0
      %4043 = vmatprep.subr.bf16.mxu0 0
      %4044 = vmatpush1.bf16.msra.mxu0 0
      %4045 = vmatprep.subr.bf16.mxu0 0
      %4046 = vmatpush1.bf16.msra.mxu0 0
      %4047 = vmatprep.subr.bf16.mxu0 0
      %4048 = vmatpush1.bf16.msra.mxu0 0
      %4049 = vmatprep.mubr.bf16.mxu0 0
      %4050 = vmatmul.mubr.bf16.gmra.mrb[0].mxu0 %v3948
      %v4051 = vpop.f32.mrb[0].mxu0
      %v4052 = vadd.f32 0.0, %v4051
      %v4053 = vpop.f32.mrb[0].mxu0
      %v4054 = vpop.f32.mrb[0].mxu0
      %v4055 = vadd.f32 0.0, %v4054
      %v4056 = vpop.f32.mrb[0].mxu0
      %4057 = vmatprep.mubr.bf16.mxu0 0
      %4058 = vmatmul.mubr.bf16.gmra.mrb[0].mxu0 %v3949
      %v4059 = vpop.f32.mrb[0].mxu0
      %v4060 = vadd.f32 0.0, %v4059
      %v4061 = vpop.f32.mrb[0].mxu0
      %v4062 = vpop.f32.mrb[0].mxu0
      %v4063 = vadd.f32 0.0, %v4062
      %v4064 = vpop.f32.mrb[0].mxu0
      %4065 = vmatprep.mubr.bf16.mxu0 0
      %4066 = vmatmul.mubr.bf16.gmra.mrb[0].mxu0 %v3950
      %v4067 = vpop.f32.mrb[0].mxu0
      %v4068 = vadd.f32 0.0, %v4067
      %v4069 = vpop.f32.mrb[0].mxu0
      %v4070 = vpop.f32.mrb[0].mxu0
      %v4071 = vadd.f32 0.0, %v4070
      %v4072 = vpop.f32.mrb[0].mxu0
      %4073 = vmatprep.mubr.bf16.mxu0 0
      %4074 = vmatmul.mubr.bf16.gmra.mrb[0].mxu0 %v3951
      %v4075 = vpop.f32.mrb[0].mxu0
      %v4076 = vadd.f32 0.0, %v4075
      %v4077 = vpop.f32.mrb[0].mxu0
      %v4078 = vpop.f32.mrb[0].mxu0
      %v4079 = vadd.f32 0.0, %v4078
      %v4080 = vpop.f32.mrb[0].mxu0
      %4081 = vdwg.mxu0
      %v4082 = vadd.f32 %v3936, %v4052
      %v4083 = vadd.f32 %v3937, %v4055
      %v4084 = vadd.f32 %v3938, %v4060
      %v4085 = vadd.f32 %v3939, %v4063
      %v4086 = vadd.f32 %v3940, %v4068
      %v4087 = vadd.f32 %v3941, %v4071
      %v4088 = vadd.f32 %v3942, %v4076
      %v4089 = vadd.f32 %v3943, %v4079
      %v4090 = vpack.c.bf16 %v423, %v421
      %s4091 = scalar_lea.vmem %s3, 1536
      %v4092 = vld [vmem:[%s4091] sm:$0xf]
      %v4093 = vld [vmem:[%s4091 + $0x4] sm:$0xf]
      %v4094 = vld [vmem:[%s4091 + $0x8] sm:$0xf]
      %v4095 = vld [vmem:[%s4091 + $0xc] sm:$0xf]
      %v4096 = vld [vmem:[%s4091 + $0x10] sm:$0xf]
      %v4097 = vld [vmem:[%s4091 + $0x14] sm:$0xf]
      %v4098 = vld [vmem:[%s4091 + $0x18] sm:$0xf]
      %v4099 = vld [vmem:[%s4091 + $0x1c] sm:$0xf]
      %v4100 = vld [vmem:[%s4091 + $0x20] sm:$0xf]
      %v4101 = vld [vmem:[%s4091 + $0x24] sm:$0xf]
      %v4102 = vld [vmem:[%s4091 + $0x28] sm:$0xf]
      %v4103 = vld [vmem:[%s4091 + $0x2c] sm:$0xf]
      %v4104 = vld [vmem:[%s4091 + $0x30] sm:$0xf]
      %v4105 = vld [vmem:[%s4091 + $0x34] sm:$0xf]
      %v4106 = vld [vmem:[%s4091 + $0x38] sm:$0xf]
      %v4107 = vld [vmem:[%s4091 + $0x3c] sm:$0xf]
      %v4124 = vunpack.c.l.b16 %v4092
      %v4125 = vunpack.c.l.b16 %v4093
      %v4126 = vunpack.c.l.b16 %v4094
      %v4127 = vunpack.c.l.b16 %v4095
      %v4128 = vunpack.c.l.b16 %v4096
      %v4129 = vunpack.c.l.b16 %v4097
      %v4130 = vunpack.c.l.b16 %v4098
      %v4131 = vunpack.c.l.b16 %v4099
      %v4132 = vunpack.c.l.b16 %v4100
      %v4133 = vunpack.c.l.b16 %v4101
      %v4134 = vunpack.c.l.b16 %v4102
      %v4135 = vunpack.c.l.b16 %v4103
      %v4136 = vunpack.c.l.b16 %v4104
      %v4137 = vunpack.c.l.b16 %v4105
      %v4138 = vunpack.c.l.b16 %v4106
      %v4139 = vunpack.c.l.b16 %v4107
      %v4140 = vpack.c.b16 %v4125, %v4124
      %v4141 = vpack.c.b16 %v4127, %v4126
      %v4142 = vpack.c.b16 %v4129, %v4128
      %v4143 = vpack.c.b16 %v4131, %v4130
      %v4144 = vpack.c.b16 %v4133, %v4132
      %v4145 = vpack.c.b16 %v4135, %v4134
      %v4146 = vpack.c.b16 %v4137, %v4136
      %v4147 = vpack.c.b16 %v4139, %v4138
      %4156 = vmatprep.subr.bf16.mxu0 0
      %4157 = vmatpush1.bf16.msra.mxu0 %v4140
      %4158 = vmatprep.subr.bf16.mxu0 0
      %4159 = vmatpush1.bf16.msra.mxu0 %v4141
      %4160 = vmatprep.subr.bf16.mxu0 0
      %4161 = vmatpush1.bf16.msra.mxu0 %v4142
      %4162 = vmatprep.subr.bf16.mxu0 0
      %4163 = vmatpush1.bf16.msra.mxu0 %v4143
      %4164 = vmatprep.subr.bf16.mxu0 0
      %4165 = vmatpush1.bf16.msra.mxu0 %v4144
      %4166 = vmatprep.subr.bf16.mxu0 0
      %4167 = vmatpush1.bf16.msra.mxu0 %v4145
      %4168 = vmatprep.subr.bf16.mxu0 0
      %4169 = vmatpush1.bf16.msra.mxu0 %v4146
      %4170 = vmatprep.subr.bf16.mxu0 0
      %4171 = vmatpush1.bf16.msra.mxu0 %v4147
      %4172 = vmatprep.subr.bf16.mxu0 0
      %4173 = vmatpush1.bf16.msra.mxu0 0
      %4174 = vmatprep.subr.bf16.mxu0 0
      %4175 = vmatpush1.bf16.msra.mxu0 0
      %4176 = vmatprep.subr.bf16.mxu0 0
      %4177 = vmatpush1.bf16.msra.mxu0 0
      %4178 = vmatprep.subr.bf16.mxu0 0
      %4179 = vmatpush1.bf16.msra.mxu0 0
      %4180 = vmatprep.subr.bf16.mxu0 0
      %4181 = vmatpush1.bf16.msra.mxu0 0
      %4182 = vmatprep.subr.bf16.mxu0 0
      %4183 = vmatpush1.bf16.msra.mxu0 0
      %4184 = vmatprep.subr.bf16.mxu0 0
      %4185 = vmatpush1.bf16.msra.mxu0 0
      %4186 = vmatprep.subr.bf16.mxu0 0
      %4187 = vmatpush1.bf16.msra.mxu0 0
      %4188 = vmatprep.mubr.bf16.mxu0 0
      %4189 = vmatmul.mubr.bf16.gmra.mrb[0].mxu0 %v3149
      %v4190 = vpop.f32.mrb[0].mxu0
      %v4191 = vadd.f32 0.0, %v4190
      %v4192 = vpop.f32.mrb[0].mxu0
      %v4193 = vpop.f32.mrb[0].mxu0
      %v4194 = vadd.f32 0.0, %v4193
      %v4195 = vpop.f32.mrb[0].mxu0
      %4196 = vmatprep.mubr.bf16.mxu0 0
      %4197 = vmatmul.mubr.bf16.gmra.mrb[0].mxu0 %v3150
      %v4198 = vpop.f32.mrb[0].mxu0
      %v4199 = vadd.f32 0.0, %v4198
      %v4200 = vpop.f32.mrb[0].mxu0
      %v4201 = vpop.f32.mrb[0].mxu0
      %v4202 = vadd.f32 0.0, %v4201
      %v4203 = vpop.f32.mrb[0].mxu0
      %4204 = vmatprep.mubr.bf16.mxu0 0
      %4205 = vmatmul.mubr.bf16.gmra.mrb[0].mxu0 %v3151
      %v4206 = vpop.f32.mrb[0].mxu0
      %v4207 = vadd.f32 0.0, %v4206
      %v4208 = vpop.f32.mrb[0].mxu0
      %v4209 = vpop.f32.mrb[0].mxu0
      %v4210 = vadd.f32 0.0, %v4209
      %v4211 = vpop.f32.mrb[0].mxu0
      %4212 = vmatprep.mubr.bf16.mxu0 0
      %4213 = vmatmul.mubr.bf16.gmra.mrb[0].mxu0 %v4090
      %v4214 = vpop.f32.mrb[0].mxu0
      %v4215 = vadd.f32 0.0, %v4214
      %v4216 = vpop.f32.mrb[0].mxu0
      %v4217 = vpop.f32.mrb[0].mxu0
      %v4218 = vadd.f32 0.0, %v4217
      %v4219 = vpop.f32.mrb[0].mxu0
      %4220 = vdwg.mxu0
      %v4221 = vadd.f32 %v4082, %v4191
      %v4222 = vadd.f32 %v4083, %v4194
      %v4223 = vadd.f32 %v4084, %v4199
      %v4224 = vadd.f32 %v4085, %v4202
      %v4225 = vadd.f32 %v4086, %v4207
      %v4226 = vadd.f32 %v4087, %v4210
      %v4227 = vadd.f32 %v4088, %v4215
      %v4228 = vadd.f32 %v4089, %v4218
      %v4231 = vrot.slane %v423, 1
      %v4232 = vrot.slane %v424, 1
      %v4233 = vsel %vm461, %v4231, %v4232
      %v4235 = vpack.c.bf16 %v4233, %v3800
      %s4236 = scalar_lea.vmem %s3, 1600
      %v4237 = vld [vmem:[%s4236] sm:$0xf]
      %v4238 = vld [vmem:[%s4236 + $0x4] sm:$0xf]
      %v4239 = vld [vmem:[%s4236 + $0x8] sm:$0xf]
      %v4240 = vld [vmem:[%s4236 + $0xc] sm:$0xf]
      %v4241 = vld [vmem:[%s4236 + $0x10] sm:$0xf]
      %v4242 = vld [vmem:[%s4236 + $0x14] sm:$0xf]
      %v4243 = vld [vmem:[%s4236 + $0x18] sm:$0xf]
      %v4244 = vld [vmem:[%s4236 + $0x1c] sm:$0xf]
      %v4245 = vld [vmem:[%s4236 + $0x20] sm:$0xf]
      %v4246 = vld [vmem:[%s4236 + $0x24] sm:$0xf]
      %v4247 = vld [vmem:[%s4236 + $0x28] sm:$0xf]
      %v4248 = vld [vmem:[%s4236 + $0x2c] sm:$0xf]
      %v4249 = vld [vmem:[%s4236 + $0x30] sm:$0xf]
      %v4250 = vld [vmem:[%s4236 + $0x34] sm:$0xf]
      %v4251 = vld [vmem:[%s4236 + $0x38] sm:$0xf]
      %v4252 = vld [vmem:[%s4236 + $0x3c] sm:$0xf]
      %v4269 = vunpack.c.l.b16 %v4237
      %v4270 = vunpack.c.l.b16 %v4238
      %v4271 = vunpack.c.l.b16 %v4239
      %v4272 = vunpack.c.l.b16 %v4240
      %v4273 = vunpack.c.l.b16 %v4241
      %v4274 = vunpack.c.l.b16 %v4242
      %v4275 = vunpack.c.l.b16 %v4243
      %v4276 = vunpack.c.l.b16 %v4244
      %v4277 = vunpack.c.l.b16 %v4245
      %v4278 = vunpack.c.l.b16 %v4246
      %v4279 = vunpack.c.l.b16 %v4247
      %v4280 = vunpack.c.l.b16 %v4248
      %v4281 = vunpack.c.l.b16 %v4249
      %v4282 = vunpack.c.l.b16 %v4250
      %v4283 = vunpack.c.l.b16 %v4251
      %v4284 = vunpack.c.l.b16 %v4252
      %v4285 = vpack.c.b16 %v4270, %v4269
      %v4286 = vpack.c.b16 %v4272, %v4271
      %v4287 = vpack.c.b16 %v4274, %v4273
      %v4288 = vpack.c.b16 %v4276, %v4275
      %v4289 = vpack.c.b16 %v4278, %v4277
      %v4290 = vpack.c.b16 %v4280, %v4279
      %v4291 = vpack.c.b16 %v4282, %v4281
      %v4292 = vpack.c.b16 %v4284, %v4283
      %4301 = vmatprep.subr.bf16.mxu0 0
      %4302 = vmatpush1.bf16.msra.mxu0 %v4285
      %4303 = vmatprep.subr.bf16.mxu0 0
      %4304 = vmatpush1.bf16.msra.mxu0 %v4286
      %4305 = vmatprep.subr.bf16.mxu0 0
      %4306 = vmatpush1.bf16.msra.mxu0 %v4287
      %4307 = vmatprep.subr.bf16.mxu0 0
      %4308 = vmatpush1.bf16.msra.mxu0 %v4288
      %4309 = vmatprep.subr.bf16.mxu0 0
      %4310 = vmatpush1.bf16.msra.mxu0 %v4289
      %4311 = vmatprep.subr.bf16.mxu0 0
      %4312 = vmatpush1.bf16.msra.mxu0 %v4290
      %4313 = vmatprep.subr.bf16.mxu0 0
      %4314 = vmatpush1.bf16.msra.mxu0 %v4291
      %4315 = vmatprep.subr.bf16.mxu0 0
      %4316 = vmatpush1.bf16.msra.mxu0 %v4292
      %4317 = vmatprep.subr.bf16.mxu0 0
      %4318 = vmatpush1.bf16.msra.mxu0 0
      %4319 = vmatprep.subr.bf16.mxu0 0
      %4320 = vmatpush1.bf16.msra.mxu0 0
      %4321 = vmatprep.subr.bf16.mxu0 0
      %4322 = vmatpush1.bf16.msra.mxu0 0
      %4323 = vmatprep.subr.bf16.mxu0 0
      %4324 = vmatpush1.bf16.msra.mxu0 0
      %4325 = vmatprep.subr.bf16.mxu0 0
      %4326 = vmatpush1.bf16.msra.mxu0 0
      %4327 = vmatprep.subr.bf16.mxu0 0
      %4328 = vmatpush1.bf16.msra.mxu0 0
      %4329 = vmatprep.subr.bf16.mxu0 0
      %4330 = vmatpush1.bf16.msra.mxu0 0
      %4331 = vmatprep.subr.bf16.mxu0 0
      %4332 = vmatpush1.bf16.msra.mxu0 0
      %4333 = vmatprep.mubr.bf16.mxu0 0
      %4334 = vmatmul.mubr.bf16.gmra.mrb[0].mxu0 %v3339
      %v4335 = vpop.f32.mrb[0].mxu0
      %v4336 = vadd.f32 0.0, %v4335
      %v4337 = vpop.f32.mrb[0].mxu0
      %v4338 = vpop.f32.mrb[0].mxu0
      %v4339 = vadd.f32 0.0, %v4338
      %v4340 = vpop.f32.mrb[0].mxu0
      %4341 = vmatprep.mubr.bf16.mxu0 0
      %4342 = vmatmul.mubr.bf16.gmra.mrb[0].mxu0 %v3340
      %v4343 = vpop.f32.mrb[0].mxu0
      %v4344 = vadd.f32 0.0, %v4343
      %v4345 = vpop.f32.mrb[0].mxu0
      %v4346 = vpop.f32.mrb[0].mxu0
      %v4347 = vadd.f32 0.0, %v4346
      %v4348 = vpop.f32.mrb[0].mxu0
      %4349 = vmatprep.mubr.bf16.mxu0 0
      %4350 = vmatmul.mubr.bf16.gmra.mrb[0].mxu0 %v3341
      %v4351 = vpop.f32.mrb[0].mxu0
      %v4352 = vadd.f32 0.0, %v4351
      %v4353 = vpop.f32.mrb[0].mxu0
      %v4354 = vpop.f32.mrb[0].mxu0
      %v4355 = vadd.f32 0.0, %v4354
      %v4356 = vpop.f32.mrb[0].mxu0
      %4357 = vmatprep.mubr.bf16.mxu0 0
      %4358 = vmatmul.mubr.bf16.gmra.mrb[0].mxu0 %v4235
      %v4359 = vpop.f32.mrb[0].mxu0
      %v4360 = vadd.f32 0.0, %v4359
      %v4361 = vpop.f32.mrb[0].mxu0
      %v4362 = vpop.f32.mrb[0].mxu0
      %v4363 = vadd.f32 0.0, %v4362
      %v4364 = vpop.f32.mrb[0].mxu0
      %4365 = vdwg.mxu0
      %v4366 = vadd.f32 %v4221, %v4336
      %v4367 = vadd.f32 %v4222, %v4339
      %v4368 = vadd.f32 %v4223, %v4344
      %v4369 = vadd.f32 %v4224, %v4347
      %v4370 = vadd.f32 %v4225, %v4352
      %v4371 = vadd.f32 %v4226, %v4355
      %v4372 = vadd.f32 %v4227, %v4360
      %v4373 = vadd.f32 %v4228, %v4363
      %v4374 = vrot.slane %v423, 2
      %v4375 = vrot.slane %v424, 2
      %v4376 = vsel %vm741, %v4374, %v4375
      %v4378 = vpack.c.bf16 %v4376, %v3946
      %s4379 = scalar_lea.vmem %s3, 1664
      %v4380 = vld [vmem:[%s4379] sm:$0xf]
      %v4381 = vld [vmem:[%s4379 + $0x4] sm:$0xf]
      %v4382 = vld [vmem:[%s4379 + $0x8] sm:$0xf]
      %v4383 = vld [vmem:[%s4379 + $0xc] sm:$0xf]
      %v4384 = vld [vmem:[%s4379 + $0x10] sm:$0xf]
      %v4385 = vld [vmem:[%s4379 + $0x14] sm:$0xf]
      %v4386 = vld [vmem:[%s4379 + $0x18] sm:$0xf]
      %v4387 = vld [vmem:[%s4379 + $0x1c] sm:$0xf]
      %v4388 = vld [vmem:[%s4379 + $0x20] sm:$0xf]
      %v4389 = vld [vmem:[%s4379 + $0x24] sm:$0xf]
      %v4390 = vld [vmem:[%s4379 + $0x28] sm:$0xf]
      %v4391 = vld [vmem:[%s4379 + $0x2c] sm:$0xf]
      %v4392 = vld [vmem:[%s4379 + $0x30] sm:$0xf]
      %v4393 = vld [vmem:[%s4379 + $0x34] sm:$0xf]
      %v4394 = vld [vmem:[%s4379 + $0x38] sm:$0xf]
      %v4395 = vld [vmem:[%s4379 + $0x3c] sm:$0xf]
      %v4412 = vunpack.c.l.b16 %v4380
      %v4413 = vunpack.c.l.b16 %v4381
      %v4414 = vunpack.c.l.b16 %v4382
      %v4415 = vunpack.c.l.b16 %v4383
      %v4416 = vunpack.c.l.b16 %v4384
      %v4417 = vunpack.c.l.b16 %v4385
      %v4418 = vunpack.c.l.b16 %v4386
      %v4419 = vunpack.c.l.b16 %v4387
      %v4420 = vunpack.c.l.b16 %v4388
      %v4421 = vunpack.c.l.b16 %v4389
      %v4422 = vunpack.c.l.b16 %v4390
      %v4423 = vunpack.c.l.b16 %v4391
      %v4424 = vunpack.c.l.b16 %v4392
      %v4425 = vunpack.c.l.b16 %v4393
      %v4426 = vunpack.c.l.b16 %v4394
      %v4427 = vunpack.c.l.b16 %v4395
      %v4428 = vpack.c.b16 %v4413, %v4412
      %v4429 = vpack.c.b16 %v4415, %v4414
      %v4430 = vpack.c.b16 %v4417, %v4416
      %v4431 = vpack.c.b16 %v4419, %v4418
      %v4432 = vpack.c.b16 %v4421, %v4420
      %v4433 = vpack.c.b16 %v4423, %v4422
      %v4434 = vpack.c.b16 %v4425, %v4424
      %v4435 = vpack.c.b16 %v4427, %v4426
      %4444 = vmatprep.subr.bf16.mxu0 0
      %4445 = vmatpush1.bf16.msra.mxu0 %v4428
      %4446 = vmatprep.subr.bf16.mxu0 0
      %4447 = vmatpush1.bf16.msra.mxu0 %v4429
      %4448 = vmatprep.subr.bf16.mxu0 0
      %4449 = vmatpush1.bf16.msra.mxu0 %v4430
      %4450 = vmatprep.subr.bf16.mxu0 0
      %4451 = vmatpush1.bf16.msra.mxu0 %v4431
      %4452 = vmatprep.subr.bf16.mxu0 0
      %4453 = vmatpush1.bf16.msra.mxu0 %v4432
      %4454 = vmatprep.subr.bf16.mxu0 0
      %4455 = vmatpush1.bf16.msra.mxu0 %v4433
      %4456 = vmatprep.subr.bf16.mxu0 0
      %4457 = vmatpush1.bf16.msra.mxu0 %v4434
      %4458 = vmatprep.subr.bf16.mxu0 0
      %4459 = vmatpush1.bf16.msra.mxu0 %v4435
      %4460 = vmatprep.subr.bf16.mxu0 0
      %4461 = vmatpush1.bf16.msra.mxu0 0
      %4462 = vmatprep.subr.bf16.mxu0 0
      %4463 = vmatpush1.bf16.msra.mxu0 0
      %4464 = vmatprep.subr.bf16.mxu0 0
      %4465 = vmatpush1.bf16.msra.mxu0 0
      %4466 = vmatprep.subr.bf16.mxu0 0
      %4467 = vmatpush1.bf16.msra.mxu0 0
      %4468 = vmatprep.subr.bf16.mxu0 0
      %4469 = vmatpush1.bf16.msra.mxu0 0
      %4470 = vmatprep.subr.bf16.mxu0 0
      %4471 = vmatpush1.bf16.msra.mxu0 0
      %4472 = vmatprep.subr.bf16.mxu0 0
      %4473 = vmatpush1.bf16.msra.mxu0 0
      %4474 = vmatprep.subr.bf16.mxu0 0
      %4475 = vmatpush1.bf16.msra.mxu0 0
      %4476 = vmatprep.mubr.bf16.mxu0 0
      %4477 = vmatmul.mubr.bf16.gmra.mrb[0].mxu0 %v3513
      %v4478 = vpop.f32.mrb[0].mxu0
      %v4479 = vadd.f32 0.0, %v4478
      %v4480 = vpop.f32.mrb[0].mxu0
      %v4481 = vpop.f32.mrb[0].mxu0
      %v4482 = vadd.f32 0.0, %v4481
      %v4483 = vpop.f32.mrb[0].mxu0
      %4484 = vmatprep.mubr.bf16.mxu0 0
      %4485 = vmatmul.mubr.bf16.gmra.mrb[0].mxu0 %v3514
      %v4486 = vpop.f32.mrb[0].mxu0
      %v4487 = vadd.f32 0.0, %v4486
      %v4488 = vpop.f32.mrb[0].mxu0
      %v4489 = vpop.f32.mrb[0].mxu0
      %v4490 = vadd.f32 0.0, %v4489
      %v4491 = vpop.f32.mrb[0].mxu0
      %4492 = vmatprep.mubr.bf16.mxu0 0
      %4493 = vmatmul.mubr.bf16.gmra.mrb[0].mxu0 %v3515
      %v4494 = vpop.f32.mrb[0].mxu0
      %v4495 = vadd.f32 0.0, %v4494
      %v4496 = vpop.f32.mrb[0].mxu0
      %v4497 = vpop.f32.mrb[0].mxu0
      %v4498 = vadd.f32 0.0, %v4497
      %v4499 = vpop.f32.mrb[0].mxu0
      %4500 = vmatprep.mubr.bf16.mxu0 0
      %4501 = vmatmul.mubr.bf16.gmra.mrb[0].mxu0 %v4378
      %v4502 = vpop.f32.mrb[0].mxu0
      %v4503 = vadd.f32 0.0, %v4502
      %v4504 = vpop.f32.mrb[0].mxu0
      %v4505 = vpop.f32.mrb[0].mxu0
      %v4506 = vadd.f32 0.0, %v4505
      %v4507 = vpop.f32.mrb[0].mxu0
      %4508 = vdwg.mxu0
      %v4509 = vadd.f32 %v4366, %v4479
      %v4510 = vadd.f32 %v4367, %v4482
      %v4511 = vadd.f32 %v4368, %v4487
      %v4512 = vadd.f32 %v4369, %v4490
      %v4513 = vadd.f32 %v4370, %v4495
      %v4514 = vadd.f32 %v4371, %v4498
      %v4515 = vadd.f32 %v4372, %v4503
      %v4516 = vadd.f32 %v4373, %v4506
      %4517 = vst [vmem:[%s355] sm:$0xff] %v4509
      %4518 = vst [vmem:[%s355 + $0x8] sm:$0xff] %v4510
      %4519 = vst [vmem:[%s355 + $0x10] sm:$0xff] %v4511
      %4520 = vst [vmem:[%s355 + $0x18] sm:$0xff] %v4512
      %4521 = vst [vmem:[%s355 + $0x20] sm:$0xff] %v4513
      %4522 = vst [vmem:[%s355 + $0x28] sm:$0xff] %v4514
      %4523 = vst [vmem:[%s355 + $0x30] sm:$0xff] %v4515
      %4524 = vst [vmem:[%s355 + $0x38] sm:$0xff] %v4516
      %v4525 = vadd.f32 %v4509, %v4510
      %v4526 = vadd.f32 %v4525, %v4511
      %v4527 = vadd.f32 %v4526, %v4512
      %v4528 = vadd.f32 %v4527, %v4513
      %v4529 = vadd.f32 %v4528, %v4514
      %v4530 = vadd.f32 %v4529, %v4515
      %v4531 = vadd.f32 %v4530, %v4516
      %v4532 = vrot.slane %v4531, 4
      %v4533 = vadd.f32 %v4531, %v4532
      %v4534 = vrot.slane %v4533, 2
      %v4535 = vadd.f32 %v4533, %v4534
      %v4536 = vrot.slane %v4535, 1
      %v4537 = vadd.f32 %v4535, %v4536
      %v4538 = vmul.f32 %v4509, %v4509
      %v4539 = vmul.f32 %v4510, %v4510
      %v4540 = vmul.f32 %v4511, %v4511
      %v4541 = vmul.f32 %v4512, %v4512
      %v4542 = vmul.f32 %v4513, %v4513
      %v4543 = vmul.f32 %v4514, %v4514
      %v4544 = vmul.f32 %v4515, %v4515
      %v4545 = vmul.f32 %v4516, %v4516
      %v4546 = vadd.f32 %v4538, %v4539
      %v4547 = vadd.f32 %v4546, %v4540
      %v4548 = vadd.f32 %v4547, %v4541
      %v4549 = vadd.f32 %v4548, %v4542
      %v4550 = vadd.f32 %v4549, %v4543
      %v4551 = vadd.f32 %v4550, %v4544
      %v4552 = vadd.f32 %v4551, %v4545
      %v4553 = vrot.slane %v4552, 4
      %v4554 = vadd.f32 %v4552, %v4553
      %v4555 = vrot.slane %v4554, 2
      %v4556 = vadd.f32 %v4554, %v4555
      %v4557 = vrot.slane %v4556, 1
      %v4558 = vadd.f32 %v4556, %v4557
      %vm4559 = vcmask 1040384
      %v4560 = vsel %vm4559, %v4537, %v4558
      %4561 = vst [vmem:[%s363] sm:$0x3] %v4560
      %p4562 = scmp.lt.s32.totalorder %s21, 1
      %s4563 = scalar_select %p4562, %s21, 1
      %p4564 = scmp.lt.s32.totalorder %s22, 7
      %s4565 = scalar_select %p4564, %s22, 7
      %s4566 = smul.addr %s4565, 8
      %s4567 = smul.addr %s4563, 64
      %s4568 = sadd.s32 %s4566, %s4567
      %s4569 = smul.addr %s4568, 8
      %s4570 = scalar_lea.vmem %s4, %s4569
      %p4571 = scmp.lt.s32.totalorder %s21, 1
      %s4572 = scalar_select %p4571, %s21, 1
      %p4573 = scmp.lt.s32.totalorder %s22, 7
      %s4574 = scalar_select %p4573, %s22, 7
      %s4575 = smul.addr %s4572, 8
      %s4576 = sadd.s32 %s4574, %s4575
      %s4577 = smul.addr %s4576, 2
      %s4578 = scalar_lea.vmem %s5, %s4577
      // Predicated region
      $region37: #{double_conv3d.6} parent=35 // pred_check
        %p4579 = pneg %p158
      $region38: #{double_conv3d.6} parent=35 // pred_check_branch
        %4581 = sbr.rel (%p4579) target = $region40
      $region39: #{double_conv3d.6} parent=35 // pred_region
        _
      $region40: #{double_conv3d.6} parent=35 // pred_fallthru
        _
      // Predicated region
      $region41: #{double_conv3d.6} parent=35 // pred_check
        %p4582 = pneg %p186
      $region42: #{double_conv3d.6} parent=35 // pred_check_branch
        %4584 = sbr.rel (%p4582) target = $region44
      $region43: #{double_conv3d.6} parent=35 // pred_region
        _
      $region44: #{double_conv3d.6} parent=35 // pred_fallthru
        _
    $region36: #{double_conv3d.6} parent=5 // pred_fallthru
      _
    %p4585 = scmp.le.s32.totalorder 2, %s12
    // Predicated region
    $region45: #{double_conv3d.6} parent=5 // pred_check
      %p4586 = pneg %p4585
    $region46: #{double_conv3d.6} parent=5 // pred_check_branch
      %4588 = sbr.rel (%p4586) target = $region48
    $region47: #{double_conv3d.6} parent=5 // pred_region
      %s4589 = ssub.s32 %s12, 2
      // Predicated region
      $region49: #{double_conv3d.6} parent=47 // pred_check
        %p4590 = pneg %p164
      $region50: #{double_conv3d.6} parent=47 // pred_check_branch
        %4592 = sbr.rel (%p4590) target = $region52
      $region51: #{double_conv3d.6} parent=47 // pred_region
        %p4593 = scmp.lt.s32.totalorder %s23, 1
        %s4594 = scalar_select %p4593, %s23, 1
        %p4595 = scmp.lt.s32.totalorder %s24, 7
        %s4596 = scalar_select %p4595, %s24, 7
        %s4597 = smul.addr %s4596, 8
        %s4598 = smul.addr %s4594, 64
        %s4599 = sadd.s32 %s4597, %s4598
        %s4600 = smul.addr %s4599, 8
        %s4601 = scalar_lea.vmem %s4, %s4600
      $region52: #{double_conv3d.6} parent=47 // pred_fallthru
        _
      // Predicated region
      $region53: #{double_conv3d.6} parent=47 // pred_check
        %p4602 = pneg %p192
      $region54: #{double_conv3d.6} parent=47 // pred_check_branch
        %4604 = sbr.rel (%p4602) target = $region56
      $region55: #{double_conv3d.6} parent=47 // pred_region
        %p4605 = scmp.lt.s32.totalorder %s23, 1
        %s4606 = scalar_select %p4605, %s23, 1
        %p4607 = scmp.lt.s32.totalorder %s24, 7
        %s4608 = scalar_select %p4607, %s24, 7
        %s4609 = smul.addr %s4606, 8
        %s4610 = sadd.s32 %s4608, %s4609
        %s4611 = smul.addr %s4610, 2
        %s4612 = scalar_lea.vmem %s5, %s4611
      $region56: #{double_conv3d.6} parent=47 // pred_fallthru
        _
    $region48: #{double_conv3d.6} parent=5 // pred_fallthru
      _
  $region6: #{double_conv3d.6} parent=0 // loop_footer
    %s16 = sadd.s32 1, %s12
  $region7: #{double_conv3d.6} parent=0 // loop_footer_branch
    %11 = sbr.rel target = $region3
  $region8: #{double_conv3d.6} parent=0 // loop_exit
    _

</llo_original>
